<compile_context>
chip_gen: v7x
topology: tpu7x:2x2x1
jax: 0.10.0
libtpu: 0.0.40
codegen_flags: <defaults>
</compile_context>

<pallas_src>
import functools

import jax
import jax.numpy as jnp
from jax.experimental import pallas as pl
from jax.experimental.pallas import tpu as pltpu


# -----------------------------------------------------------------------------
# Per-generation budgets (trace time).  Conservative defaults are v7x-safe.
# -----------------------------------------------------------------------------
def _budgets():
    tm_target, vmem_limit = 512, 32 * 1024 * 1024          # v7x-safe defaults
    try:
        info = pltpu.get_tpu_info()
        vmem = int(getattr(info, "vmem_capacity_bytes", 0) or 0)
        if vmem >= 100 * 1024 * 1024:                       # v5e / v6e: 128 MiB
            tm_target, vmem_limit = 1024, 64 * 1024 * 1024
    except Exception:
        pass
    return tm_target, vmem_limit


_TM_TARGET, _VMEM_LIMIT = _budgets()


def _round_up(x, m):
    return ((x + m - 1) // m) * m


def _choose_tile(M):
    """Row tile: multiple of 16 (bf16 sublane pack) with an even (>=2) step count
    so dimension_semantics=('parallel',) can shard across both v7x TensorCores."""
    nsteps = max(2, pl.cdiv(M, _TM_TARGET))
    if nsteps % 2:
        nsteps += 1
    tm = _round_up(pl.cdiv(M, nsteps), 16)
    return min(tm, _round_up(M, 16))


# -----------------------------------------------------------------------------
# Kernel 1: tiled (rows, K) @ (K, Cout) + bias (+ReLU)  -- used for c1 / c2
# -----------------------------------------------------------------------------
def _conv_bias_act_kernel(x_ref, w_ref, b_ref, o_ref, *, relu):
    acc = jnp.dot(x_ref[...], w_ref[...], preferred_element_type=jnp.float32)
    acc = acc + b_ref[...]                       # (1, Cout) broadcasts over rows
    if relu:
        acc = jnp.maximum(acc, 0.0)
    o_ref[...] = acc.astype(o_ref.dtype)


def _im2col(x, KH, KW, stride, padding):
    """x: (N, H, W, Cin) -> (N*OH*OW, KH*KW*Cin), feature order (kh, kw, cin)."""
    N, H, W, Cin = x.shape
    xp = jnp.pad(x, ((0, 0), (padding, padding), (padding, padding), (0, 0)))
    OH = (H + 2 * padding - KH) // stride + 1
    OW = (W + 2 * padding - KW) // stride + 1
    taps = []
    for kh in range(KH):
        for kw in range(KW):
            taps.append(xp[:, kh:kh + stride * OH:stride,
                           kw:kw + stride * OW:stride, :])
    patches = jnp.stack(taps, axis=3).reshape(N * OH * OW, KH * KW * Cin)
    return patches, OH, OW


def conv2d(x, w_mat, bias2d, KH, KW, stride, padding, relu,
           out_dtype=jnp.bfloat16):
    """Conv2d + bias (+ReLU) via im2col + tiled MXU matmul.  Returns NHWC."""
    x = x.astype(jnp.bfloat16)
    N = x.shape[0]
    patches, OH, OW = _im2col(x, KH, KW, stride, padding)
    M, K = patches.shape
    Cout = w_mat.shape[1]
    tm = _choose_tile(M)

    out = pl.pallas_call(
        functools.partial(_conv_bias_act_kernel, relu=relu),
        out_shape=jax.ShapeDtypeStruct((M, Cout), out_dtype),
        grid_spec=pltpu.PrefetchScalarGridSpec(
            num_scalar_prefetch=0,
            grid=(pl.cdiv(M, tm),),                      # ragged last tile is fine
            in_specs=[
                pl.BlockSpec((tm, K), lambda i: (i, 0)),     # patch row tile
                pl.BlockSpec((K, Cout), lambda i: (0, 0)),   # weights (resident)
                pl.BlockSpec((1, Cout), lambda i: (0, 0)),   # bias
            ],
            out_specs=pl.BlockSpec((tm, Cout), lambda i: (i, 0)),
        ),
        compiler_params=pltpu.CompilerParams(
            dimension_semantics=("parallel",),
            vmem_limit_bytes=_VMEM_LIMIT),
    )(patches, w_mat, bias2d)
    return out.reshape(N, OH, OW, Cout)


# -----------------------------------------------------------------------------
# Kernel 2: fused encoder tail  conv3x3+ReLU -> ResBlock -> ResBlock
#   One grid step = one image.  All 3x3 patches are formed on-chip from a
#   zero-ringed f32 halo scratch; intermediates never leave VMEM.
# -----------------------------------------------------------------------------
def _tail_kernel(x_ref, w3_ref, b3_ref,
                 w1a_ref, b1a_ref, w1b_ref, b1b_ref,
                 w2a_ref, b2a_ref, w2b_ref, b2b_ref,
                 o_ref, xpad_ref, *, H, W, C, col0):
    HW = H * W

    def conv3x3(w_ref, b_ref):
        # 9 shifted taps of the halo buffer, each a (HW, C)bf16 @ (C, Cout)bf16
        # MXU matmul accumulated in f32.
        cout = w_ref.shape[1]
        acc = jnp.zeros((HW, cout), jnp.float32)
        for kh in range(3):
            for kw in range(3):
                tap = xpad_ref[kh:kh + H, col0 - 1 + kw:col0 - 1 + kw + W, :]
                tap = tap.reshape(HW, C).astype(jnp.bfloat16)
                wk = w_ref[(kh * 3 + kw) * C:(kh * 3 + kw + 1) * C, :]
                acc = acc + jnp.dot(tap, wk, preferred_element_type=jnp.float32)
        return acc + b_ref[...]

    def to_padded(act_f32):                    # (HW, C) f32 -> halo interior
        xpad_ref[1:H + 1, col0:col0 + W, :] = act_f32.reshape(H, W, C)

    # Zero the halo ring once per grid step (interior is overwritten per stage).
    xpad_ref[...] = jnp.zeros_like(xpad_ref)

    # ---- c3: conv3x3 + ReLU --------------------------------------------------
    xpad_ref[1:H + 1, col0:col0 + W, :] = x_ref[0].astype(jnp.float32)
    h = jnp.maximum(conv3x3(w3_ref, b3_ref), 0.0)            # (HW, C) f32

    # ---- ResBlock 1: relu(conv1x1(relu(conv3x3(h))) + h) ----------------------
    to_padded(h)
    t = jnp.maximum(conv3x3(w1a_ref, b1a_ref), 0.0)          # (HW, Cmid) f32
    r = jnp.dot(t.astype(jnp.bfloat16), w1b_ref[...],
                preferred_element_type=jnp.float32) + b1b_ref[...]
    h = jnp.maximum(r + h, 0.0)                               # residual is f32, in-reg

    # ---- ResBlock 2 ------------------------------------------------------------
    to_padded(h)
    t = jnp.maximum(conv3x3(w2a_ref, b2a_ref), 0.0)
    r = jnp.dot(t.astype(jnp.bfloat16), w2b_ref[...],
                preferred_element_type=jnp.float32) + b2b_ref[...]
    h = jnp.maximum(r + h, 0.0)

    o_ref[...] = h.reshape(1, H, W, C).astype(o_ref.dtype)


def _encoder_tail_fallback(x, p):
    """Generic (slow) path: per-layer im2col kernels.  Only used when the fused
    kernel's layout preconditions don't hold."""
    h = conv2d(x, p["c3_w"], p["c3_b"], 3, 3, 1, 1, relu=True)
    for a, b in (("r1a", "r1b"), ("r2a", "r2b")):
        t = conv2d(h, p[a + "_w"], p[a + "_b"], 3, 3, 1, 1, relu=True)
        r = conv2d(t, p[b + "_w"], p[b + "_b"], 1, 1, 1, 0, relu=False,
                   out_dtype=jnp.float32)
        h = jnp.maximum(r + h.astype(jnp.float32), 0.0).astype(jnp.bfloat16)
    return h.astype(jnp.float32)


def encoder_tail(x, p):
    """Fused c3 + ResBlock + ResBlock.  x: (N, H, W, C) bf16 -> (N, H, W, C) f32."""
    N, H, W, C = x.shape
    Cmid = p["r1a_w"].shape[1]
    col0 = 8                                     # f32-sublane-aligned interior start
    Wbuf = _round_up(W + col0 + 1, 8)            # room for the kw=2 tap
    scratch_bytes = (H + 2) * Wbuf * C * 4
    if (W % 8 != 0) or scratch_bytes > 4 * 1024 * 1024:
        # TODO(synk): halo-row-tiled fused path for W%8 != 0 / very large maps.
        return _encoder_tail_fallback(x, p)

    kernel = functools.partial(_tail_kernel, H=H, W=W, C=C, col0=col0)
    return pl.pallas_call(
        kernel,
        out_shape=jax.ShapeDtypeStruct((N, H, W, C), jnp.float32),
        grid_spec=pltpu.PrefetchScalarGridSpec(
            num_scalar_prefetch=0,
            grid=(N,),                                         # one image per step
            in_specs=[
                pl.BlockSpec((1, H, W, C), lambda n: (n, 0, 0, 0)),   # activations
                pl.BlockSpec((9 * C, C), lambda n: (0, 0)),           # c3 weights
                pl.BlockSpec((1, C), lambda n: (0, 0)),               # c3 bias
                pl.BlockSpec((9 * C, Cmid), lambda n: (0, 0)),        # rb1 3x3 w
                pl.BlockSpec((1, Cmid), lambda n: (0, 0)),            # rb1 3x3 b
                pl.BlockSpec((Cmid, C), lambda n: (0, 0)),            # rb1 1x1 w
                pl.BlockSpec((1, C), lambda n: (0, 0)),               # rb1 1x1 b
                pl.BlockSpec((9 * C, Cmid), lambda n: (0, 0)),        # rb2 3x3 w
                pl.BlockSpec((1, Cmid), lambda n: (0, 0)),            # rb2 3x3 b
                pl.BlockSpec((Cmid, C), lambda n: (0, 0)),            # rb2 1x1 w
                pl.BlockSpec((1, C), lambda n: (0, 0)),               # rb2 1x1 b
            ],
            out_specs=pl.BlockSpec((1, H, W, C), lambda n: (n, 0, 0, 0)),
            scratch_shapes=[pltpu.VMEM((H + 2, Wbuf, C), jnp.float32)],
        ),
        compiler_params=pltpu.CompilerParams(
            dimension_semantics=("parallel",),
            vmem_limit_bytes=_VMEM_LIMIT),
    )(x, p["c3_w"], p["c3_b"],
      p["r1a_w"], p["r1a_b"], p["r1b_w"], p["r1b_b"],
      p["r2a_w"], p["r2a_b"], p["r2b_w"], p["r2b_b"])


# -----------------------------------------------------------------------------
# Parameters (PyTorch Conv2d layout in, matmul layout out)
# -----------------------------------------------------------------------------
def init_params(key, input_channels=3, n_hid=64):
    shapes = {
        "c1": (n_hid, input_channels, 4, 4),
        "c2": (2 * n_hid, n_hid, 4, 4),
        "c3": (2 * n_hid, 2 * n_hid, 3, 3),
        "r1a": (2 * n_hid // 4, 2 * n_hid, 3, 3),
        "r1b": (2 * n_hid, 2 * n_hid // 4, 1, 1),
        "r2a": (2 * n_hid // 4, 2 * n_hid, 3, 3),
        "r2b": (2 * n_hid, 2 * n_hid // 4, 1, 1),
    }
    params = {}
    keys = jax.random.split(key, 2 * len(shapes))
    for i, (name, shp) in enumerate(shapes.items()):
        fan_in = shp[1] * shp[2] * shp[3]
        scale = 1.0 / jnp.sqrt(jnp.float32(fan_in))
        params[name + "_w"] = scale * jax.random.normal(keys[2 * i], shp, jnp.float32)
        params[name + "_b"] = scale * jax.random.normal(keys[2 * i + 1], (shp[0],),
                                                        jnp.float32)
    return params


def prepare_params(raw):
    """Hoisted, one-time weight prep: (Cout,Cin,KH,KW) -> (KH*KW*Cin, Cout) bf16
    in (kh, kw, cin) feature order; bias -> (1, Cout) f32."""
    prepped = {}
    for name in ("c1", "c2", "c3", "r1a", "r1b", "r2a", "r2b"):
        w = raw[name + "_w"]
        b = raw[name + "_b"]
        Cout, Cin, KH, KW = w.shape
        w_mat = jnp.transpose(w, (2, 3, 1, 0)).reshape(KH * KW * Cin, Cout)
        prepped[name + "_w"] = w_mat.astype(jnp.bfloat16)
        prepped[name + "_b"] = b.reshape(1, Cout).astype(jnp.float32)
    return prepped


# -----------------------------------------------------------------------------
# Forward pass
# -----------------------------------------------------------------------------
def deepmind_encoder_forward(p, x_nhwc):
    """x_nhwc: (N, H, W, Cin).  Returns NHWC f32 of shape (N, H/4, W/4, 2*n_hid)."""
    h = x_nhwc.astype(jnp.bfloat16)
    h = conv2d(h, p["c1_w"], p["c1_b"], 4, 4, stride=2, padding=1, relu=True)
    h = conv2d(h, p["c2_w"], p["c2_b"], 4, 4, stride=2, padding=1, relu=True)
    return encoder_tail(h, p)          # fused c3 + ResBlock + ResBlock, f32 out


# -----------------------------------------------------------------------------
# Pure-JAX reference (same dtype policy: bf16 conv inputs/weights, f32 accum)
# -----------------------------------------------------------------------------
def _reference_forward(raw, x_nhwc):
    def conv(x, name, stride, padding, relu):
        w = jnp.transpose(raw[name + "_w"], (2, 3, 1, 0)).astype(jnp.bfloat16)
        y = jax.lax.conv_general_dilated(
            x.astype(jnp.bfloat16), w,
            window_strides=(stride, stride),
            padding=[(padding, padding), (padding, padding)],
            dimension_numbers=("NHWC", "HWIO", "NHWC"),
            preferred_element_type=jnp.float32)
        y = y + raw[name + "_b"].reshape(1, 1, 1, -1)
        return jnp.maximum(y, 0.0) if relu else y

    h = conv(x_nhwc, "c1", 2, 1, True).astype(jnp.bfloat16)
    h = conv(h, "c2", 2, 1, True).astype(jnp.bfloat16)
    h = conv(h, "c3", 1, 1, True)                                   # f32
    for a, b in (("r1a", "r1b"), ("r2a", "r2b")):
        t = conv(h, a, 1, 1, True)
        r = conv(t, b, 1, 0, False)
        h = jnp.maximum(r + h, 0.0)
    return h


if __name__ == "__main__":
    key = jax.random.PRNGKey(0)
    k_x, k_p = jax.random.split(key)

    input_channels, n_hid = 3, 64          # module defaults (Cout=128 lane-dense)
    N, H, W = 2, 32, 32                    # small deterministic example

    x_nchw = jax.random.normal(k_x, (N, input_channels, H, W), jnp.float32)
    x_nhwc = jnp.transpose(x_nchw, (0, 2, 3, 1))

    raw = init_params(k_p, input_channels=input_channels, n_hid=n_hid)
    params = prepare_params(raw)           # one-time weight transpose/cast

    fwd = jax.jit(deepmind_encoder_forward)
    out_nhwc = fwd(params, x_nhwc)
    jax.block_until_ready(out_nhwc)
    out_nchw = jnp.transpose(out_nhwc, (0, 3, 1, 2))

    assert out_nchw.shape == (N, 2 * n_hid, H // 4, W // 4), out_nchw.shape
    assert bool(jnp.all(jnp.isfinite(out_nchw)))

    # Numerical check vs. a pure-JAX reference with the same dtype policy.
    ref = _reference_forward(raw, x_nhwc)
    max_err = float(jnp.max(jnp.abs(out_nhwc - ref)))
    assert max_err < 5e-2, f"max abs error vs reference: {max_err}"

    print("KERNEL_OK")
</pallas_src>

<mosaic_0001>
module attributes {stable_mosaic.version = 11 : i64} {
  func.func @_conv_bias_act_kernel(%arg0: i32, %arg1: memref<256x48xbf16, #tpu.memory_space<vmem>>, %arg2: memref<48x64xbf16, #tpu.memory_space<vmem>>, %arg3: memref<1x64xf32, #tpu.memory_space<vmem>>, %arg4: memref<256x64xbf16, #tpu.memory_space<vmem>>) attributes {dimension_semantics = [#tpu.dimension_semantics<parallel>], iteration_bounds = array<i64: 2>, scalar_prefetch = 0 : i64, scratch_operands = 0 : i64, tpu.core_type = #tpu.core_type<tc>, window_params = [{transform_indices = @transform_0, window_bounds = array<i64: 256, 48>}, {pipeline_mode = #tpu.pipeline_mode<synchronous>, transform_indices = @transform_1, window_bounds = array<i64: 48, 64>}, {pipeline_mode = #tpu.pipeline_mode<synchronous>, transform_indices = @transform_2, window_bounds = array<i64: 1, 64>}, {transform_indices = @transform_3, window_bounds = array<i64: 256, 64>}]} {
    %c0 = arith.constant 0 : index
    %c0_0 = arith.constant 0 : index
    %0 = vector.load %arg1[%c0, %c0_0] : memref<256x48xbf16, #tpu.memory_space<vmem>>, vector<256x48xbf16>
    %c0_1 = arith.constant 0 : index
    %c0_2 = arith.constant 0 : index
    %1 = vector.load %arg2[%c0_1, %c0_2] : memref<48x64xbf16, #tpu.memory_space<vmem>>, vector<48x64xbf16>
    %cst = arith.constant dense<0.000000e+00> : vector<256x64xf32>
    %2 = tpu.matmul %0, %1, %cst {dimension_numbers = #tpu.dot_dimension_numbers<[1], [0], [0], [1], [0, 0, 1, 1], [], []>} : vector<256x48xbf16>, vector<48x64xbf16>, vector<256x64xf32> -> vector<256x64xf32>
    %c0_3 = arith.constant 0 : index
    %c0_4 = arith.constant 0 : index
    %3 = vector.load %arg3[%c0_3, %c0_4] : memref<1x64xf32, #tpu.memory_space<vmem>>, vector<1x64xf32>
    %4 = vector.broadcast %3 : vector<1x64xf32> to vector<256x64xf32>
    %5 = arith.addf %2, %4 : vector<256x64xf32>
    %cst_5 = arith.constant 0.000000e+00 : f32
    %6 = vector.broadcast %cst_5 : f32 to vector<256x64xf32>
    %7 = arith.maximumf %5, %6 : vector<256x64xf32>
    %8 = arith.truncf %7 : vector<256x64xf32> to vector<256x64xbf16>
    %c0_6 = arith.constant 0 : index
    %c0_7 = arith.constant 0 : index
    %9 = vector.load %arg4[%c0_6, %c0_7] : memref<256x64xbf16, #tpu.memory_space<vmem>>, vector<256x64xbf16>
    tpu.vector_store %arg4[%c0_6, %c0_7], %8 {strides = array<i32>} : memref<256x64xbf16, #tpu.memory_space<vmem>>, vector<256x64xbf16>,
    return
  }
  func.func @transform_0(%arg0: i32) -> (i32, i32) {
    %c0_i32 = arith.constant 0 : i32
    %c0_i32_0 = arith.constant 0 : i32
    return %arg0, %c0_i32 : i32, i32
  }
  func.func @transform_1(%arg0: i32) -> (i32, i32) {
    %c0_i32 = arith.constant 0 : i32
    %c0_i32_0 = arith.constant 0 : i32
    %c0_i32_1 = arith.constant 0 : i32
    return %c0_i32, %c0_i32_0 : i32, i32
  }
  func.func @transform_2(%arg0: i32) -> (i32, i32) {
    %c0_i32 = arith.constant 0 : i32
    %c0_i32_0 = arith.constant 0 : i32
    %c0_i32_1 = arith.constant 0 : i32
    return %c0_i32, %c0_i32_0 : i32, i32
  }
  func.func @transform_3(%arg0: i32) -> (i32, i32) {
    %c0_i32 = arith.constant 0 : i32
    %c0_i32_0 = arith.constant 0 : i32
    return %arg0, %c0_i32 : i32, i32
  }
}

module attributes {stable_mosaic.version = 11 : i64} {
  func.func @_conv_bias_act_kernel(%arg0: i32, %arg1: memref<64x1024xbf16, #tpu.memory_space<vmem>>, %arg2: memref<1024x128xbf16, #tpu.memory_space<vmem>>, %arg3: memref<1x128xf32, #tpu.memory_space<vmem>>, %arg4: memref<64x128xbf16, #tpu.memory_space<vmem>>) attributes {dimension_semantics = [#tpu.dimension_semantics<parallel>], iteration_bounds = array<i64: 2>, scalar_prefetch = 0 : i64, scratch_operands = 0 : i64, tpu.core_type = #tpu.core_type<tc>, window_params = [{transform_indices = @transform_0, window_bounds = array<i64: 64, 1024>}, {pipeline_mode = #tpu.pipeline_mode<synchronous>, transform_indices = @transform_1, window_bounds = array<i64: 1024, 128>}, {pipeline_mode = #tpu.pipeline_mode<synchronous>, transform_indices = @transform_2, window_bounds = array<i64: 1, 128>}, {transform_indices = @transform_3, window_bounds = array<i64: 64, 128>}]} {
    %c0 = arith.constant 0 : index
    %c0_0 = arith.constant 0 : index
    %0 = vector.load %arg1[%c0, %c0_0] : memref<64x1024xbf16, #tpu.memory_space<vmem>>, vector<64x1024xbf16>
    %c0_1 = arith.constant 0 : index
    %c0_2 = arith.constant 0 : index
    %1 = vector.load %arg2[%c0_1, %c0_2] : memref<1024x128xbf16, #tpu.memory_space<vmem>>, vector<1024x128xbf16>
    %cst = arith.constant dense<0.000000e+00> : vector<64x128xf32>
    %2 = tpu.matmul %0, %1, %cst {dimension_numbers = #tpu.dot_dimension_numbers<[1], [0], [0], [1], [0, 0, 1, 1], [], []>} : vector<64x1024xbf16>, vector<1024x128xbf16>, vector<64x128xf32> -> vector<64x128xf32>
    %c0_3 = arith.constant 0 : index
    %c0_4 = arith.constant 0 : index
    %3 = vector.load %arg3[%c0_3, %c0_4] : memref<1x128xf32, #tpu.memory_space<vmem>>, vector<1x128xf32>
    %4 = vector.broadcast %3 : vector<1x128xf32> to vector<64x128xf32>
    %5 = arith.addf %2, %4 : vector<64x128xf32>
    %cst_5 = arith.constant 0.000000e+00 : f32
    %6 = vector.broadcast %cst_5 : f32 to vector<64x128xf32>
    %7 = arith.maximumf %5, %6 : vector<64x128xf32>
    %8 = arith.truncf %7 : vector<64x128xf32> to vector<64x128xbf16>
    %c0_6 = arith.constant 0 : index
    %c0_7 = arith.constant 0 : index
    %9 = vector.load %arg4[%c0_6, %c0_7] : memref<64x128xbf16, #tpu.memory_space<vmem>>, vector<64x128xbf16>
    tpu.vector_store %arg4[%c0_6, %c0_7], %8 {strides = array<i32>} : memref<64x128xbf16, #tpu.memory_space<vmem>>, vector<64x128xbf16>,
    return
  }
  func.func @transform_0(%arg0: i32) -> (i32, i32) {
    %c0_i32 = arith.constant 0 : i32
    %c0_i32_0 = arith.constant 0 : i32
    return %arg0, %c0_i32 : i32, i32
  }
  func.func @transform_1(%arg0: i32) -> (i32, i32) {
    %c0_i32 = arith.constant 0 : i32
    %c0_i32_0 = arith.constant 0 : i32
    %c0_i32_1 = arith.constant 0 : i32
    return %c0_i32, %c0_i32_0 : i32, i32
  }
  func.func @transform_2(%arg0: i32) -> (i32, i32) {
    %c0_i32 = arith.constant 0 : i32
    %c0_i32_0 = arith.constant 0 : i32
    %c0_i32_1 = arith.constant 0 : i32
    return %c0_i32, %c0_i32_0 : i32, i32
  }
  func.func @transform_3(%arg0: i32) -> (i32, i32) {
    %c0_i32 = arith.constant 0 : i32
    %c0_i32_0 = arith.constant 0 : i32
    return %arg0, %c0_i32 : i32, i32
  }
}

module attributes {stable_mosaic.version = 11 : i64} {
  func.func @_tail_kernel(%arg0: i32, %arg1: memref<1x8x8x128xbf16, #tpu.memory_space<vmem>>, %arg2: memref<1152x128xbf16, #tpu.memory_space<vmem>>, %arg3: memref<1x128xf32, #tpu.memory_space<vmem>>, %arg4: memref<1152x32xbf16, #tpu.memory_space<vmem>>, %arg5: memref<1x32xf32, #tpu.memory_space<vmem>>, %arg6: memref<32x128xbf16, #tpu.memory_space<vmem>>, %arg7: memref<1x128xf32, #tpu.memory_space<vmem>>, %arg8: memref<1152x32xbf16, #tpu.memory_space<vmem>>, %arg9: memref<1x32xf32, #tpu.memory_space<vmem>>, %arg10: memref<32x128xbf16, #tpu.memory_space<vmem>>, %arg11: memref<1x128xf32, #tpu.memory_space<vmem>>, %arg12: memref<1x8x8x128xf32, #tpu.memory_space<vmem>>, %arg13: memref<10x24x128xf32, #tpu.memory_space<vmem>>) attributes {dimension_semantics = [#tpu.dimension_semantics<parallel>], iteration_bounds = array<i64: 2>, scalar_prefetch = 0 : i64, scratch_operands = 1 : i64, tpu.core_type = #tpu.core_type<tc>, window_params = [{transform_indices = @transform_0, window_bounds = array<i64: 1, 8, 8, 128>}, {pipeline_mode = #tpu.pipeline_mode<synchronous>, transform_indices = @transform_1, window_bounds = array<i64: 1152, 128>}, {pipeline_mode = #tpu.pipeline_mode<synchronous>, transform_indices = @transform_2, window_bounds = array<i64: 1, 128>}, {pipeline_mode = #tpu.pipeline_mode<synchronous>, transform_indices = @transform_3, window_bounds = array<i64: 1152, 32>}, {pipeline_mode = #tpu.pipeline_mode<synchronous>, transform_indices = @transform_4, window_bounds = array<i64: 1, 32>}, {pipeline_mode = #tpu.pipeline_mode<synchronous>, transform_indices = @transform_5, window_bounds = array<i64: 32, 128>}, {pipeline_mode = #tpu.pipeline_mode<synchronous>, transform_indices = @transform_6, window_bounds = array<i64: 1, 128>}, {pipeline_mode = #tpu.pipeline_mode<synchronous>, transform_indices = @transform_7, window_bounds = array<i64: 1152, 32>}, {pipeline_mode = #tpu.pipeline_mode<synchronous>, transform_indices = @transform_8, window_bounds = array<i64: 1, 32>}, {pipeline_mode = #tpu.pipeline_mode<synchronous>, transform_indices = @transform_9, window_bounds = array<i64: 32, 128>}, {pipeline_mode = #tpu.pipeline_mode<synchronous>, transform_indices = @transform_10, window_bounds = array<i64: 1, 128>}, {transform_indices = @transform_11, window_bounds = array<i64: 1, 8, 8, 128>}]} {
    %cst = arith.constant 0.000000e+00 : f32
    %0 = vector.broadcast %cst : f32 to vector<10x24x128xf32>
    %c0 = arith.constant 0 : index
    %c0_0 = arith.constant 0 : index
    %c0_1 = arith.constant 0 : index
    %1 = vector.load %arg13[%c0, %c0_0, %c0_1] : memref<10x24x128xf32, #tpu.memory_space<vmem>>, vector<10x24x128xf32>
    tpu.vector_store %arg13[%c0, %c0_0, %c0_1], %0 {strides = array<i32>} : memref<10x24x128xf32, #tpu.memory_space<vmem>>, vector<10x24x128xf32>,
    %c0_2 = arith.constant 0 : index
    %c0_3 = arith.constant 0 : index
    %c0_4 = arith.constant 0 : index
    %c0_5 = arith.constant 0 : index
    %2 = vector.load %arg1[%c0_2, %c0_3, %c0_4, %c0_5] : memref<1x8x8x128xbf16, #tpu.memory_space<vmem>>, vector<1x8x8x128xbf16>
    %3 = vector.shape_cast %2 : vector<1x8x8x128xbf16> to vector<8x8x128xbf16>
    %4 = arith.extf %3 : vector<8x8x128xbf16> to vector<8x8x128xf32>
    %c1 = arith.constant 1 : index
    %c8 = arith.constant 8 : index
    %c0_6 = arith.constant 0 : index
    %5 = vector.load %arg13[%c1, %c8, %c0_6] : memref<10x24x128xf32, #tpu.memory_space<vmem>>, vector<8x8x128xf32>
    tpu.vector_store %arg13[%c1, %c8, %c0_6], %4 {strides = array<i32>} : memref<10x24x128xf32, #tpu.memory_space<vmem>>, vector<8x8x128xf32>,
    %cst_7 = arith.constant 0.000000e+00 : f32
    %6 = vector.broadcast %cst_7 : f32 to vector<64x128xf32>
    %c0_8 = arith.constant 0 : index
    %c7 = arith.constant 7 : index
    %c0_9 = arith.constant 0 : index
    %7 = vector.load %arg13[%c0_8, %c7, %c0_9] : memref<10x24x128xf32, #tpu.memory_space<vmem>>, vector<8x8x128xf32>
    %8 = vector.shape_cast %7 : vector<8x8x128xf32> to vector<64x128xf32>
    %9 = arith.truncf %8 : vector<64x128xf32> to vector<64x128xbf16>
    %c0_10 = arith.constant 0 : index
    %c0_11 = arith.constant 0 : index
    %10 = vector.load %arg2[%c0_10, %c0_11] : memref<1152x128xbf16, #tpu.memory_space<vmem>>, vector<128x128xbf16>
    %cst_12 = arith.constant dense<0.000000e+00> : vector<64x128xf32>
    %11 = tpu.matmul %9, %10, %cst_12 {dimension_numbers = #tpu.dot_dimension_numbers<[1], [0], [0], [1], [0, 0, 1, 1], [], []>} : vector<64x128xbf16>, vector<128x128xbf16>, vector<64x128xf32> -> vector<64x128xf32>
    %12 = arith.addf %6, %11 : vector<64x128xf32>
    %c0_13 = arith.constant 0 : index
    %c8_14 = arith.constant 8 : index
    %c0_15 = arith.constant 0 : index
    %13 = vector.load %arg13[%c0_13, %c8_14, %c0_15] : memref<10x24x128xf32, #tpu.memory_space<vmem>>, vector<8x8x128xf32>
    %14 = vector.shape_cast %13 : vector<8x8x128xf32> to vector<64x128xf32>
    %15 = arith.truncf %14 : vector<64x128xf32> to vector<64x128xbf16>
    %c128 = arith.constant 128 : index
    %c0_16 = arith.constant 0 : index
    %16 = vector.load %arg2[%c128, %c0_16] : memref<1152x128xbf16, #tpu.memory_space<vmem>>, vector<128x128xbf16>
    %cst_17 = arith.constant dense<0.000000e+00> : vector<64x128xf32>
    %17 = tpu.matmul %15, %16, %cst_17 {dimension_numbers = #tpu.dot_dimension_numbers<[1], [0], [0], [1], [0, 0, 1, 1], [], []>} : vector<64x128xbf16>, vector<128x128xbf16>, vector<64x128xf32> -> vector<64x128xf32>
    %18 = arith.addf %12, %17 : vector<64x128xf32>
    %c0_18 = arith.constant 0 : index
    %c9 = arith.constant 9 : index
    %c0_19 = arith.constant 0 : index
    %19 = vector.load %arg13[%c0_18, %c9, %c0_19] : memref<10x24x128xf32, #tpu.memory_space<vmem>>, vector<8x8x128xf32>
    %20 = vector.shape_cast %19 : vector<8x8x128xf32> to vector<64x128xf32>
    %21 = arith.truncf %20 : vector<64x128xf32> to vector<64x128xbf16>
    %c256 = arith.constant 256 : index
    %c0_20 = arith.constant 0 : index
    %22 = vector.load %arg2[%c256, %c0_20] : memref<1152x128xbf16, #tpu.memory_space<vmem>>, vector<128x128xbf16>
    %cst_21 = arith.constant dense<0.000000e+00> : vector<64x128xf32>
    %23 = tpu.matmul %21, %22, %cst_21 {dimension_numbers = #tpu.dot_dimension_numbers<[1], [0], [0], [1], [0, 0, 1, 1], [], []>} : vector<64x128xbf16>, vector<128x128xbf16>, vector<64x128xf32> -> vector<64x128xf32>
    %24 = arith.addf %18, %23 : vector<64x128xf32>
    %c1_22 = arith.constant 1 : index
    %c7_23 = arith.constant 7 : index
    %c0_24 = arith.constant 0 : index
    %25 = vector.load %arg13[%c1_22, %c7_23, %c0_24] : memref<10x24x128xf32, #tpu.memory_space<vmem>>, vector<8x8x128xf32>
    %26 = vector.shape_cast %25 : vector<8x8x128xf32> to vector<64x128xf32>
    %27 = arith.truncf %26 : vector<64x128xf32> to vector<64x128xbf16>
    %c384 = arith.constant 384 : index
    %c0_25 = arith.constant 0 : index
    %28 = vector.load %arg2[%c384, %c0_25] : memref<1152x128xbf16, #tpu.memory_space<vmem>>, vector<128x128xbf16>
    %cst_26 = arith.constant dense<0.000000e+00> : vector<64x128xf32>
    %29 = tpu.matmul %27, %28, %cst_26 {dimension_numbers = #tpu.dot_dimension_numbers<[1], [0], [0], [1], [0, 0, 1, 1], [], []>} : vector<64x128xbf16>, vector<128x128xbf16>, vector<64x128xf32> -> vector<64x128xf32>
    %30 = arith.addf %24, %29 : vector<64x128xf32>
    %c1_27 = arith.constant 1 : index
    %c8_28 = arith.constant 8 : index
    %c0_29 = arith.constant 0 : index
    %31 = vector.load %arg13[%c1_27, %c8_28, %c0_29] : memref<10x24x128xf32, #tpu.memory_space<vmem>>, vector<8x8x128xf32>
    %32 = vector.shape_cast %31 : vector<8x8x128xf32> to vector<64x128xf32>
    %33 = arith.truncf %32 : vector<64x128xf32> to vector<64x128xbf16>
    %c512 = arith.constant 512 : index
    %c0_30 = arith.constant 0 : index
    %34 = vector.load %arg2[%c512, %c0_30] : memref<1152x128xbf16, #tpu.memory_space<vmem>>, vector<128x128xbf16>
    %cst_31 = arith.constant dense<0.000000e+00> : vector<64x128xf32>
    %35 = tpu.matmul %33, %34, %cst_31 {dimension_numbers = #tpu.dot_dimension_numbers<[1], [0], [0], [1], [0, 0, 1, 1], [], []>} : vector<64x128xbf16>, vector<128x128xbf16>, vector<64x128xf32> -> vector<64x128xf32>
    %36 = arith.addf %30, %35 : vector<64x128xf32>
    %c1_32 = arith.constant 1 : index
    %c9_33 = arith.constant 9 : index
    %c0_34 = arith.constant 0 : index
    %37 = vector.load %arg13[%c1_32, %c9_33, %c0_34] : memref<10x24x128xf32, #tpu.memory_space<vmem>>, vector<8x8x128xf32>
    %38 = vector.shape_cast %37 : vector<8x8x128xf32> to vector<64x128xf32>
    %39 = arith.truncf %38 : vector<64x128xf32> to vector<64x128xbf16>
    %c640 = arith.constant 640 : index
    %c0_35 = arith.constant 0 : index
    %40 = vector.load %arg2[%c640, %c0_35] : memref<1152x128xbf16, #tpu.memory_space<vmem>>, vector<128x128xbf16>
    %cst_36 = arith.constant dense<0.000000e+00> : vector<64x128xf32>
    %41 = tpu.matmul %39, %40, %cst_36 {dimension_numbers = #tpu.dot_dimension_numbers<[1], [0], [0], [1], [0, 0, 1, 1], [], []>} : vector<64x128xbf16>, vector<128x128xbf16>, vector<64x128xf32> -> vector<64x128xf32>
    %42 = arith.addf %36, %41 : vector<64x128xf32>
    %c2 = arith.constant 2 : index
    %c7_37 = arith.constant 7 : index
    %c0_38 = arith.constant 0 : index
    %43 = vector.load %arg13[%c2, %c7_37, %c0_38] : memref<10x24x128xf32, #tpu.memory_space<vmem>>, vector<8x8x128xf32>
    %44 = vector.shape_cast %43 : vector<8x8x128xf32> to vector<64x128xf32>
    %45 = arith.truncf %44 : vector<64x128xf32> to vector<64x128xbf16>
    %c768 = arith.constant 768 : index
    %c0_39 = arith.constant 0 : index
    %46 = vector.load %arg2[%c768, %c0_39] : memref<1152x128xbf16, #tpu.memory_space<vmem>>, vector<128x128xbf16>
    %cst_40 = arith.constant dense<0.000000e+00> : vector<64x128xf32>
    %47 = tpu.matmul %45, %46, %cst_40 {dimension_numbers = #tpu.dot_dimension_numbers<[1], [0], [0], [1], [0, 0, 1, 1], [], []>} : vector<64x128xbf16>, vector<128x128xbf16>, vector<64x128xf32> -> vector<64x128xf32>
    %48 = arith.addf %42, %47 : vector<64x128xf32>
    %c2_41 = arith.constant 2 : index
    %c8_42 = arith.constant 8 : index
    %c0_43 = arith.constant 0 : index
    %49 = vector.load %arg13[%c2_41, %c8_42, %c0_43] : memref<10x24x128xf32, #tpu.memory_space<vmem>>, vector<8x8x128xf32>
    %50 = vector.shape_cast %49 : vector<8x8x128xf32> to vector<64x128xf32>
    %51 = arith.truncf %50 : vector<64x128xf32> to vector<64x128xbf16>
    %c896 = arith.constant 896 : index
    %c0_44 = arith.constant 0 : index
    %52 = vector.load %arg2[%c896, %c0_44] : memref<1152x128xbf16, #tpu.memory_space<vmem>>, vector<128x128xbf16>
    %cst_45 = arith.constant dense<0.000000e+00> : vector<64x128xf32>
    %53 = tpu.matmul %51, %52, %cst_45 {dimension_numbers = #tpu.dot_dimension_numbers<[1], [0], [0], [1], [0, 0, 1, 1], [], []>} : vector<64x128xbf16>, vector<128x128xbf16>, vector<64x128xf32> -> vector<64x128xf32>
    %54 = arith.addf %48, %53 : vector<64x128xf32>
    %c2_46 = arith.constant 2 : index
    %c9_47 = arith.constant 9 : index
    %c0_48 = arith.constant 0 : index
    %55 = vector.load %arg13[%c2_46, %c9_47, %c0_48] : memref<10x24x128xf32, #tpu.memory_space<vmem>>, vector<8x8x128xf32>
    %56 = vector.shape_cast %55 : vector<8x8x128xf32> to vector<64x128xf32>
    %57 = arith.truncf %56 : vector<64x128xf32> to vector<64x128xbf16>
    %c1024 = arith.constant 1024 : index
    %c0_49 = arith.constant 0 : index
    %58 = vector.load %arg2[%c1024, %c0_49] : memref<1152x128xbf16, #tpu.memory_space<vmem>>, vector<128x128xbf16>
    %cst_50 = arith.constant dense<0.000000e+00> : vector<64x128xf32>
    %59 = tpu.matmul %57, %58, %cst_50 {dimension_numbers = #tpu.dot_dimension_numbers<[1], [0], [0], [1], [0, 0, 1, 1], [], []>} : vector<64x128xbf16>, vector<128x128xbf16>, vector<64x128xf32> -> vector<64x128xf32>
    %60 = arith.addf %54, %59 : vector<64x128xf32>
    %c0_51 = arith.constant 0 : index
    %c0_52 = arith.constant 0 : index
    %61 = vector.load %arg3[%c0_51, %c0_52] : memref<1x128xf32, #tpu.memory_space<vmem>>, vector<1x128xf32>
    %62 = vector.broadcast %61 : vector<1x128xf32> to vector<64x128xf32>
    %63 = arith.addf %60, %62 : vector<64x128xf32>
    %cst_53 = arith.constant 0.000000e+00 : f32
    %64 = vector.broadcast %cst_53 : f32 to vector<64x128xf32>
    %65 = arith.maximumf %63, %64 : vector<64x128xf32>
    %66 = vector.shape_cast %65 : vector<64x128xf32> to vector<8x8x128xf32>
    %c1_54 = arith.constant 1 : index
    %c8_55 = arith.constant 8 : index
    %c0_56 = arith.constant 0 : index
    %67 = vector.load %arg13[%c1_54, %c8_55, %c0_56] : memref<10x24x128xf32, #tpu.memory_space<vmem>>, vector<8x8x128xf32>
    tpu.vector_store %arg13[%c1_54, %c8_55, %c0_56], %66 {strides = array<i32>} : memref<10x24x128xf32, #tpu.memory_space<vmem>>, vector<8x8x128xf32>,
    %cst_57 = arith.constant 0.000000e+00 : f32
    %68 = vector.broadcast %cst_57 : f32 to vector<64x32xf32>
    %c0_58 = arith.constant 0 : index
    %c7_59 = arith.constant 7 : index
    %c0_60 = arith.constant 0 : index
    %69 = vector.load %arg13[%c0_58, %c7_59, %c0_60] : memref<10x24x128xf32, #tpu.memory_space<vmem>>, vector<8x8x128xf32>
    %70 = vector.shape_cast %69 : vector<8x8x128xf32> to vector<64x128xf32>
    %71 = arith.truncf %70 : vector<64x128xf32> to vector<64x128xbf16>
    %c0_61 = arith.constant 0 : index
    %c0_62 = arith.constant 0 : index
    %72 = vector.load %arg4[%c0_61, %c0_62] : memref<1152x32xbf16, #tpu.memory_space<vmem>>, vector<128x32xbf16>
    %cst_63 = arith.constant dense<0.000000e+00> : vector<64x32xf32>
    %73 = tpu.matmul %71, %72, %cst_63 {dimension_numbers = #tpu.dot_dimension_numbers<[1], [0], [0], [1], [0, 0, 1, 1], [], []>} : vector<64x128xbf16>, vector<128x32xbf16>, vector<64x32xf32> -> vector<64x32xf32>
    %74 = arith.addf %68, %73 : vector<64x32xf32>
    %c0_64 = arith.constant 0 : index
    %c8_65 = arith.constant 8 : index
    %c0_66 = arith.constant 0 : index
    %75 = vector.load %arg13[%c0_64, %c8_65, %c0_66] : memref<10x24x128xf32, #tpu.memory_space<vmem>>, vector<8x8x128xf32>
    %76 = vector.shape_cast %75 : vector<8x8x128xf32> to vector<64x128xf32>
    %77 = arith.truncf %76 : vector<64x128xf32> to vector<64x128xbf16>
    %c128_67 = arith.constant 128 : index
    %c0_68 = arith.constant 0 : index
    %78 = vector.load %arg4[%c128_67, %c0_68] : memref<1152x32xbf16, #tpu.memory_space<vmem>>, vector<128x32xbf16>
    %cst_69 = arith.constant dense<0.000000e+00> : vector<64x32xf32>
    %79 = tpu.matmul %77, %78, %cst_69 {dimension_numbers = #tpu.dot_dimension_numbers<[1], [0], [0], [1], [0, 0, 1, 1], [], []>} : vector<64x128xbf16>, vector<128x32xbf16>, vector<64x32xf32> -> vector<64x32xf32>
    %80 = arith.addf %74, %79 : vector<64x32xf32>
    %c0_70 = arith.constant 0 : index
    %c9_71 = arith.constant 9 : index
    %c0_72 = arith.constant 0 : index
    %81 = vector.load %arg13[%c0_70, %c9_71, %c0_72] : memref<10x24x128xf32, #tpu.memory_space<vmem>>, vector<8x8x128xf32>
    %82 = vector.shape_cast %81 : vector<8x8x128xf32> to vector<64x128xf32>
    %83 = arith.truncf %82 : vector<64x128xf32> to vector<64x128xbf16>
    %c256_73 = arith.constant 256 : index
    %c0_74 = arith.constant 0 : index
    %84 = vector.load %arg4[%c256_73, %c0_74] : memref<1152x32xbf16, #tpu.memory_space<vmem>>, vector<128x32xbf16>
    %cst_75 = arith.constant dense<0.000000e+00> : vector<64x32xf32>
    %85 = tpu.matmul %83, %84, %cst_75 {dimension_numbers = #tpu.dot_dimension_numbers<[1], [0], [0], [1], [0, 0, 1, 1], [], []>} : vector<64x128xbf16>, vector<128x32xbf16>, vector<64x32xf32> -> vector<64x32xf32>
    %86 = arith.addf %80, %85 : vector<64x32xf32>
    %c1_76 = arith.constant 1 : index
    %c7_77 = arith.constant 7 : index
    %c0_78 = arith.constant 0 : index
    %87 = vector.load %arg13[%c1_76, %c7_77, %c0_78] : memref<10x24x128xf32, #tpu.memory_space<vmem>>, vector<8x8x128xf32>
    %88 = vector.shape_cast %87 : vector<8x8x128xf32> to vector<64x128xf32>
    %89 = arith.truncf %88 : vector<64x128xf32> to vector<64x128xbf16>
    %c384_79 = arith.constant 384 : index
    %c0_80 = arith.constant 0 : index
    %90 = vector.load %arg4[%c384_79, %c0_80] : memref<1152x32xbf16, #tpu.memory_space<vmem>>, vector<128x32xbf16>
    %cst_81 = arith.constant dense<0.000000e+00> : vector<64x32xf32>
    %91 = tpu.matmul %89, %90, %cst_81 {dimension_numbers = #tpu.dot_dimension_numbers<[1], [0], [0], [1], [0, 0, 1, 1], [], []>} : vector<64x128xbf16>, vector<128x32xbf16>, vector<64x32xf32> -> vector<64x32xf32>
    %92 = arith.addf %86, %91 : vector<64x32xf32>
    %c1_82 = arith.constant 1 : index
    %c8_83 = arith.constant 8 : index
    %c0_84 = arith.constant 0 : index
    %93 = vector.load %arg13[%c1_82, %c8_83, %c0_84] : memref<10x24x128xf32, #tpu.memory_space<vmem>>, vector<8x8x128xf32>
    %94 = vector.shape_cast %93 : vector<8x8x128xf32> to vector<64x128xf32>
    %95 = arith.truncf %94 : vector<64x128xf32> to vector<64x128xbf16>
    %c512_85 = arith.constant 512 : index
    %c0_86 = arith.constant 0 : index
    %96 = vector.load %arg4[%c512_85, %c0_86] : memref<1152x32xbf16, #tpu.memory_space<vmem>>, vector<128x32xbf16>
    %cst_87 = arith.constant dense<0.000000e+00> : vector<64x32xf32>
    %97 = tpu.matmul %95, %96, %cst_87 {dimension_numbers = #tpu.dot_dimension_numbers<[1], [0], [0], [1], [0, 0, 1, 1], [], []>} : vector<64x128xbf16>, vector<128x32xbf16>, vector<64x32xf32> -> vector<64x32xf32>
    %98 = arith.addf %92, %97 : vector<64x32xf32>
    %c1_88 = arith.constant 1 : index
    %c9_89 = arith.constant 9 : index
    %c0_90 = arith.constant 0 : index
    %99 = vector.load %arg13[%c1_88, %c9_89, %c0_90] : memref<10x24x128xf32, #tpu.memory_space<vmem>>, vector<8x8x128xf32>
    %100 = vector.shape_cast %99 : vector<8x8x128xf32> to vector<64x128xf32>
    %101 = arith.truncf %100 : vector<64x128xf32> to vector<64x128xbf16>
    %c640_91 = arith.constant 640 : index
    %c0_92 = arith.constant 0 : index
    %102 = vector.load %arg4[%c640_91, %c0_92] : memref<1152x32xbf16, #tpu.memory_space<vmem>>, vector<128x32xbf16>
    %cst_93 = arith.constant dense<0.000000e+00> : vector<64x32xf32>
    %103 = tpu.matmul %101, %102, %cst_93 {dimension_numbers = #tpu.dot_dimension_numbers<[1], [0], [0], [1], [0, 0, 1, 1], [], []>} : vector<64x128xbf16>, vector<128x32xbf16>, vector<64x32xf32> -> vector<64x32xf32>
    %104 = arith.addf %98, %103 : vector<64x32xf32>
    %c2_94 = arith.constant 2 : index
    %c7_95 = arith.constant 7 : index
    %c0_96 = arith.constant 0 : index
    %105 = vector.load %arg13[%c2_94, %c7_95, %c0_96] : memref<10x24x128xf32, #tpu.memory_space<vmem>>, vector<8x8x128xf32>
    %106 = vector.shape_cast %105 : vector<8x8x128xf32> to vector<64x128xf32>
    %107 = arith.truncf %106 : vector<64x128xf32> to vector<64x128xbf16>
    %c768_97 = arith.constant 768 : index
    %c0_98 = arith.constant 0 : index
    %108 = vector.load %arg4[%c768_97, %c0_98] : memref<1152x32xbf16, #tpu.memory_space<vmem>>, vector<128x32xbf16>
    %cst_99 = arith.constant dense<0.000000e+00> : vector<64x32xf32>
    %109 = tpu.matmul %107, %108, %cst_99 {dimension_numbers = #tpu.dot_dimension_numbers<[1], [0], [0], [1], [0, 0, 1, 1], [], []>} : vector<64x128xbf16>, vector<128x32xbf16>, vector<64x32xf32> -> vector<64x32xf32>
    %110 = arith.addf %104, %109 : vector<64x32xf32>
    %c2_100 = arith.constant 2 : index
    %c8_101 = arith.constant 8 : index
    %c0_102 = arith.constant 0 : index
    %111 = vector.load %arg13[%c2_100, %c8_101, %c0_102] : memref<10x24x128xf32, #tpu.memory_space<vmem>>, vector<8x8x128xf32>
    %112 = vector.shape_cast %111 : vector<8x8x128xf32> to vector<64x128xf32>
    %113 = arith.truncf %112 : vector<64x128xf32> to vector<64x128xbf16>
    %c896_103 = arith.constant 896 : index
    %c0_104 = arith.constant 0 : index
    %114 = vector.load %arg4[%c896_103, %c0_104] : memref<1152x32xbf16, #tpu.memory_space<vmem>>, vector<128x32xbf16>
    %cst_105 = arith.constant dense<0.000000e+00> : vector<64x32xf32>
    %115 = tpu.matmul %113, %114, %cst_105 {dimension_numbers = #tpu.dot_dimension_numbers<[1], [0], [0], [1], [0, 0, 1, 1], [], []>} : vector<64x128xbf16>, vector<128x32xbf16>, vector<64x32xf32> -> vector<64x32xf32>
    %116 = arith.addf %110, %115 : vector<64x32xf32>
    %c2_106 = arith.constant 2 : index
    %c9_107 = arith.constant 9 : index
    %c0_108 = arith.constant 0 : index
    %117 = vector.load %arg13[%c2_106, %c9_107, %c0_108] : memref<10x24x128xf32, #tpu.memory_space<vmem>>, vector<8x8x128xf32>
    %118 = vector.shape_cast %117 : vector<8x8x128xf32> to vector<64x128xf32>
    %119 = arith.truncf %118 : vector<64x128xf32> to vector<64x128xbf16>
    %c1024_109 = arith.constant 1024 : index
    %c0_110 = arith.constant 0 : index
    %120 = vector.load %arg4[%c1024_109, %c0_110] : memref<1152x32xbf16, #tpu.memory_space<vmem>>, vector<128x32xbf16>
    %cst_111 = arith.constant dense<0.000000e+00> : vector<64x32xf32>
    %121 = tpu.matmul %119, %120, %cst_111 {dimension_numbers = #tpu.dot_dimension_numbers<[1], [0], [0], [1], [0, 0, 1, 1], [], []>} : vector<64x128xbf16>, vector<128x32xbf16>, vector<64x32xf32> -> vector<64x32xf32>
    %122 = arith.addf %116, %121 : vector<64x32xf32>
    %c0_112 = arith.constant 0 : index
    %c0_113 = arith.constant 0 : index
    %123 = vector.load %arg5[%c0_112, %c0_113] : memref<1x32xf32, #tpu.memory_space<vmem>>, vector<1x32xf32>
    %124 = vector.broadcast %123 : vector<1x32xf32> to vector<64x32xf32>
    %125 = arith.addf %122, %124 : vector<64x32xf32>
    %cst_114 = arith.constant 0.000000e+00 : f32
    %126 = vector.broadcast %cst_114 : f32 to vector<64x32xf32>
    %127 = arith.maximumf %125, %126 : vector<64x32xf32>
    %128 = arith.truncf %127 : vector<64x32xf32> to vector<64x32xbf16>
    %c0_115 = arith.constant 0 : index
    %c0_116 = arith.constant 0 : index
    %129 = vector.load %arg6[%c0_115, %c0_116] : memref<32x128xbf16, #tpu.memory_space<vmem>>, vector<32x128xbf16>
    %cst_117 = arith.constant dense<0.000000e+00> : vector<64x128xf32>
    %130 = tpu.matmul %128, %129, %cst_117 {dimension_numbers = #tpu.dot_dimension_numbers<[1], [0], [0], [1], [0, 0, 1, 1], [], []>} : vector<64x32xbf16>, vector<32x128xbf16>, vector<64x128xf32> -> vector<64x128xf32>
    %c0_118 = arith.constant 0 : index
    %c0_119 = arith.constant 0 : index
    %131 = vector.load %arg7[%c0_118, %c0_119] : memref<1x128xf32, #tpu.memory_space<vmem>>, vector<1x128xf32>
    %132 = vector.broadcast %131 : vector<1x128xf32> to vector<64x128xf32>
    %133 = arith.addf %130, %132 : vector<64x128xf32>
    %134 = arith.addf %133, %65 : vector<64x128xf32>
    %cst_120 = arith.constant 0.000000e+00 : f32
    %135 = vector.broadcast %cst_120 : f32 to vector<64x128xf32>
    %136 = arith.maximumf %134, %135 : vector<64x128xf32>
    %137 = vector.shape_cast %136 : vector<64x128xf32> to vector<8x8x128xf32>
    %c1_121 = arith.constant 1 : index
    %c8_122 = arith.constant 8 : index
    %c0_123 = arith.constant 0 : index
    %138 = vector.load %arg13[%c1_121, %c8_122, %c0_123] : memref<10x24x128xf32, #tpu.memory_space<vmem>>, vector<8x8x128xf32>
    tpu.vector_store %arg13[%c1_121, %c8_122, %c0_123], %137 {strides = array<i32>} : memref<10x24x128xf32, #tpu.memory_space<vmem>>, vector<8x8x128xf32>,
    %cst_124 = arith.constant 0.000000e+00 : f32
    %139 = vector.broadcast %cst_124 : f32 to vector<64x32xf32>
    %c0_125 = arith.constant 0 : index
    %c7_126 = arith.constant 7 : index
    %c0_127 = arith.constant 0 : index
    %140 = vector.load %arg13[%c0_125, %c7_126, %c0_127] : memref<10x24x128xf32, #tpu.memory_space<vmem>>, vector<8x8x128xf32>
    %141 = vector.shape_cast %140 : vector<8x8x128xf32> to vector<64x128xf32>
    %142 = arith.truncf %141 : vector<64x128xf32> to vector<64x128xbf16>
    %c0_128 = arith.constant 0 : index
    %c0_129 = arith.constant 0 : index
    %143 = vector.load %arg8[%c0_128, %c0_129] : memref<1152x32xbf16, #tpu.memory_space<vmem>>, vector<128x32xbf16>
    %cst_130 = arith.constant dense<0.000000e+00> : vector<64x32xf32>
    %144 = tpu.matmul %142, %143, %cst_130 {dimension_numbers = #tpu.dot_dimension_numbers<[1], [0], [0], [1], [0, 0, 1, 1], [], []>} : vector<64x128xbf16>, vector<128x32xbf16>, vector<64x32xf32> -> vector<64x32xf32>
    %145 = arith.addf %139, %144 : vector<64x32xf32>
    %c0_131 = arith.constant 0 : index
    %c8_132 = arith.constant 8 : index
    %c0_133 = arith.constant 0 : index
    %146 = vector.load %arg13[%c0_131, %c8_132, %c0_133] : memref<10x24x128xf32, #tpu.memory_space<vmem>>, vector<8x8x128xf32>
    %147 = vector.shape_cast %146 : vector<8x8x128xf32> to vector<64x128xf32>
    %148 = arith.truncf %147 : vector<64x128xf32> to vector<64x128xbf16>
    %c128_134 = arith.constant 128 : index
    %c0_135 = arith.constant 0 : index
    %149 = vector.load %arg8[%c128_134, %c0_135] : memref<1152x32xbf16, #tpu.memory_space<vmem>>, vector<128x32xbf16>
    %cst_136 = arith.constant dense<0.000000e+00> : vector<64x32xf32>
    %150 = tpu.matmul %148, %149, %cst_136 {dimension_numbers = #tpu.dot_dimension_numbers<[1], [0], [0], [1], [0, 0, 1, 1], [], []>} : vector<64x128xbf16>, vector<128x32xbf16>, vector<64x32xf32> -> vector<64x32xf32>
    %151 = arith.addf %145, %150 : vector<64x32xf32>
    %c0_137 = arith.constant 0 : index
    %c9_138 = arith.constant 9 : index
    %c0_139 = arith.constant 0 : index
    %152 = vector.load %arg13[%c0_137, %c9_138, %c0_139] : memref<10x24x128xf32, #tpu.memory_space<vmem>>, vector<8x8x128xf32>
    %153 = vector.shape_cast %152 : vector<8x8x128xf32> to vector<64x128xf32>
    %154 = arith.truncf %153 : vector<64x128xf32> to vector<64x128xbf16>
    %c256_140 = arith.constant 256 : index
    %c0_141 = arith.constant 0 : index
    %155 = vector.load %arg8[%c256_140, %c0_141] : memref<1152x32xbf16, #tpu.memory_space<vmem>>, vector<128x32xbf16>
    %cst_142 = arith.constant dense<0.000000e+00> : vector<64x32xf32>
    %156 = tpu.matmul %154, %155, %cst_142 {dimension_numbers = #tpu.dot_dimension_numbers<[1], [0], [0], [1], [0, 0, 1, 1], [], []>} : vector<64x128xbf16>, vector<128x32xbf16>, vector<64x32xf32> -> vector<64x32xf32>
    %157 = arith.addf %151, %156 : vector<64x32xf32>
    %c1_143 = arith.constant 1 : index
    %c7_144 = arith.constant 7 : index
    %c0_145 = arith.constant 0 : index
    %158 = vector.load %arg13[%c1_143, %c7_144, %c0_145] : memref<10x24x128xf32, #tpu.memory_space<vmem>>, vector<8x8x128xf32>
    %159 = vector.shape_cast %158 : vector<8x8x128xf32> to vector<64x128xf32>
    %160 = arith.truncf %159 : vector<64x128xf32> to vector<64x128xbf16>
    %c384_146 = arith.constant 384 : index
    %c0_147 = arith.constant 0 : index
    %161 = vector.load %arg8[%c384_146, %c0_147] : memref<1152x32xbf16, #tpu.memory_space<vmem>>, vector<128x32xbf16>
    %cst_148 = arith.constant dense<0.000000e+00> : vector<64x32xf32>
    %162 = tpu.matmul %160, %161, %cst_148 {dimension_numbers = #tpu.dot_dimension_numbers<[1], [0], [0], [1], [0, 0, 1, 1], [], []>} : vector<64x128xbf16>, vector<128x32xbf16>, vector<64x32xf32> -> vector<64x32xf32>
    %163 = arith.addf %157, %162 : vector<64x32xf32>
    %c1_149 = arith.constant 1 : index
    %c8_150 = arith.constant 8 : index
    %c0_151 = arith.constant 0 : index
    %164 = vector.load %arg13[%c1_149, %c8_150, %c0_151] : memref<10x24x128xf32, #tpu.memory_space<vmem>>, vector<8x8x128xf32>
    %165 = vector.shape_cast %164 : vector<8x8x128xf32> to vector<64x128xf32>
    %166 = arith.truncf %165 : vector<64x128xf32> to vector<64x128xbf16>
    %c512_152 = arith.constant 512 : index
    %c0_153 = arith.constant 0 : index
    %167 = vector.load %arg8[%c512_152, %c0_153] : memref<1152x32xbf16, #tpu.memory_space<vmem>>, vector<128x32xbf16>
    %cst_154 = arith.constant dense<0.000000e+00> : vector<64x32xf32>
    %168 = tpu.matmul %166, %167, %cst_154 {dimension_numbers = #tpu.dot_dimension_numbers<[1], [0], [0], [1], [0, 0, 1, 1], [], []>} : vector<64x128xbf16>, vector<128x32xbf16>, vector<64x32xf32> -> vector<64x32xf32>
    %169 = arith.addf %163, %168 : vector<64x32xf32>
    %c1_155 = arith.constant 1 : index
    %c9_156 = arith.constant 9 : index
    %c0_157 = arith.constant 0 : index
    %170 = vector.load %arg13[%c1_155, %c9_156, %c0_157] : memref<10x24x128xf32, #tpu.memory_space<vmem>>, vector<8x8x128xf32>
    %171 = vector.shape_cast %170 : vector<8x8x128xf32> to vector<64x128xf32>
    %172 = arith.truncf %171 : vector<64x128xf32> to vector<64x128xbf16>
    %c640_158 = arith.constant 640 : index
    %c0_159 = arith.constant 0 : index
    %173 = vector.load %arg8[%c640_158, %c0_159] : memref<1152x32xbf16, #tpu.memory_space<vmem>>, vector<128x32xbf16>
    %cst_160 = arith.constant dense<0.000000e+00> : vector<64x32xf32>
    %174 = tpu.matmul %172, %173, %cst_160 {dimension_numbers = #tpu.dot_dimension_numbers<[1], [0], [0], [1], [0, 0, 1, 1], [], []>} : vector<64x128xbf16>, vector<128x32xbf16>, vector<64x32xf32> -> vector<64x32xf32>
    %175 = arith.addf %169, %174 : vector<64x32xf32>
    %c2_161 = arith.constant 2 : index
    %c7_162 = arith.constant 7 : index
    %c0_163 = arith.constant 0 : index
    %176 = vector.load %arg13[%c2_161, %c7_162, %c0_163] : memref<10x24x128xf32, #tpu.memory_space<vmem>>, vector<8x8x128xf32>
    %177 = vector.shape_cast %176 : vector<8x8x128xf32> to vector<64x128xf32>
    %178 = arith.truncf %177 : vector<64x128xf32> to vector<64x128xbf16>
    %c768_164 = arith.constant 768 : index
    %c0_165 = arith.constant 0 : index
    %179 = vector.load %arg8[%c768_164, %c0_165] : memref<1152x32xbf16, #tpu.memory_space<vmem>>, vector<128x32xbf16>
    %cst_166 = arith.constant dense<0.000000e+00> : vector<64x32xf32>
    %180 = tpu.matmul %178, %179, %cst_166 {dimension_numbers = #tpu.dot_dimension_numbers<[1], [0], [0], [1], [0, 0, 1, 1], [], []>} : vector<64x128xbf16>, vector<128x32xbf16>, vector<64x32xf32> -> vector<64x32xf32>
    %181 = arith.addf %175, %180 : vector<64x32xf32>
    %c2_167 = arith.constant 2 : index
    %c8_168 = arith.constant 8 : index
    %c0_169 = arith.constant 0 : index
    %182 = vector.load %arg13[%c2_167, %c8_168, %c0_169] : memref<10x24x128xf32, #tpu.memory_space<vmem>>, vector<8x8x128xf32>
    %183 = vector.shape_cast %182 : vector<8x8x128xf32> to vector<64x128xf32>
    %184 = arith.truncf %183 : vector<64x128xf32> to vector<64x128xbf16>
    %c896_170 = arith.constant 896 : index
    %c0_171 = arith.constant 0 : index
    %185 = vector.load %arg8[%c896_170, %c0_171] : memref<1152x32xbf16, #tpu.memory_space<vmem>>, vector<128x32xbf16>
    %cst_172 = arith.constant dense<0.000000e+00> : vector<64x32xf32>
    %186 = tpu.matmul %184, %185, %cst_172 {dimension_numbers = #tpu.dot_dimension_numbers<[1], [0], [0], [1], [0, 0, 1, 1], [], []>} : vector<64x128xbf16>, vector<128x32xbf16>, vector<64x32xf32> -> vector<64x32xf32>
    %187 = arith.addf %181, %186 : vector<64x32xf32>
    %c2_173 = arith.constant 2 : index
    %c9_174 = arith.constant 9 : index
    %c0_175 = arith.constant 0 : index
    %188 = vector.load %arg13[%c2_173, %c9_174, %c0_175] : memref<10x24x128xf32, #tpu.memory_space<vmem>>, vector<8x8x128xf32>
    %189 = vector.shape_cast %188 : vector<8x8x128xf32> to vector<64x128xf32>
    %190 = arith.truncf %189 : vector<64x128xf32> to vector<64x128xbf16>
    %c1024_176 = arith.constant 1024 : index
    %c0_177 = arith.constant 0 : index
    %191 = vector.load %arg8[%c1024_176, %c0_177] : memref<1152x32xbf16, #tpu.memory_space<vmem>>, vector<128x32xbf16>
    %cst_178 = arith.constant dense<0.000000e+00> : vector<64x32xf32>
    %192 = tpu.matmul %190, %191, %cst_178 {dimension_numbers = #tpu.dot_dimension_numbers<[1], [0], [0], [1], [0, 0, 1, 1], [], []>} : vector<64x128xbf16>, vector<128x32xbf16>, vector<64x32xf32> -> vector<64x32xf32>
    %193 = arith.addf %187, %192 : vector<64x32xf32>
    %c0_179 = arith.constant 0 : index
    %c0_180 = arith.constant 0 : index
    %194 = vector.load %arg9[%c0_179, %c0_180] : memref<1x32xf32, #tpu.memory_space<vmem>>, vector<1x32xf32>
    %195 = vector.broadcast %194 : vector<1x32xf32> to vector<64x32xf32>
    %196 = arith.addf %193, %195 : vector<64x32xf32>
    %cst_181 = arith.constant 0.000000e+00 : f32
    %197 = vector.broadcast %cst_181 : f32 to vector<64x32xf32>
    %198 = arith.maximumf %196, %197 : vector<64x32xf32>
    %199 = arith.truncf %198 : vector<64x32xf32> to vector<64x32xbf16>
    %c0_182 = arith.constant 0 : index
    %c0_183 = arith.constant 0 : index
    %200 = vector.load %arg10[%c0_182, %c0_183] : memref<32x128xbf16, #tpu.memory_space<vmem>>, vector<32x128xbf16>
    %cst_184 = arith.constant dense<0.000000e+00> : vector<64x128xf32>
    %201 = tpu.matmul %199, %200, %cst_184 {dimension_numbers = #tpu.dot_dimension_numbers<[1], [0], [0], [1], [0, 0, 1, 1], [], []>} : vector<64x32xbf16>, vector<32x128xbf16>, vector<64x128xf32> -> vector<64x128xf32>
    %c0_185 = arith.constant 0 : index
    %c0_186 = arith.constant 0 : index
    %202 = vector.load %arg11[%c0_185, %c0_186] : memref<1x128xf32, #tpu.memory_space<vmem>>, vector<1x128xf32>
    %203 = vector.broadcast %202 : vector<1x128xf32> to vector<64x128xf32>
    %204 = arith.addf %201, %203 : vector<64x128xf32>
    %205 = arith.addf %204, %136 : vector<64x128xf32>
    %cst_187 = arith.constant 0.000000e+00 : f32
    %206 = vector.broadcast %cst_187 : f32 to vector<64x128xf32>
    %207 = arith.maximumf %205, %206 : vector<64x128xf32>
    %208 = vector.shape_cast %207 : vector<64x128xf32> to vector<1x8x8x128xf32>
    %c0_188 = arith.constant 0 : index
    %c0_189 = arith.constant 0 : index
    %c0_190 = arith.constant 0 : index
    %c0_191 = arith.constant 0 : index
    %209 = vector.load %arg12[%c0_188, %c0_189, %c0_190, %c0_191] : memref<1x8x8x128xf32, #tpu.memory_space<vmem>>, vector<1x8x8x128xf32>
    tpu.vector_store %arg12[%c0_188, %c0_189, %c0_190, %c0_191], %208 {strides = array<i32>} : memref<1x8x8x128xf32, #tpu.memory_space<vmem>>, vector<1x8x8x128xf32>,
    return
  }
  func.func @transform_0(%arg0: i32) -> (i32, i32, i32, i32) {
    %c0_i32 = arith.constant 0 : i32
    %c0_i32_0 = arith.constant 0 : i32
    %c0_i32_1 = arith.constant 0 : i32
    %c0_i32_2 = arith.constant 0 : i32
    return %arg0, %c0_i32, %c0_i32_0, %c0_i32_1 : i32, i32, i32, i32
  }
  func.func @transform_1(%arg0: i32) -> (i32, i32) {
    %c0_i32 = arith.constant 0 : i32
    %c0_i32_0 = arith.constant 0 : i32
    %c0_i32_1 = arith.constant 0 : i32
    return %c0_i32, %c0_i32_0 : i32, i32
  }
  func.func @transform_2(%arg0: i32) -> (i32, i32) {
    %c0_i32 = arith.constant 0 : i32
    %c0_i32_0 = arith.constant 0 : i32
    %c0_i32_1 = arith.constant 0 : i32
    return %c0_i32, %c0_i32_0 : i32, i32
  }
  func.func @transform_3(%arg0: i32) -> (i32, i32) {
    %c0_i32 = arith.constant 0 : i32
    %c0_i32_0 = arith.constant 0 : i32
    %c0_i32_1 = arith.constant 0 : i32
    return %c0_i32, %c0_i32_0 : i32, i32
  }
  func.func @transform_4(%arg0: i32) -> (i32, i32) {
    %c0_i32 = arith.constant 0 : i32
    %c0_i32_0 = arith.constant 0 : i32
    %c0_i32_1 = arith.constant 0 : i32
    return %c0_i32, %c0_i32_0 : i32, i32
  }
  func.func @transform_5(%arg0: i32) -> (i32, i32) {
    %c0_i32 = arith.constant 0 : i32
    %c0_i32_0 = arith.constant 0 : i32
    %c0_i32_1 = arith.constant 0 : i32
    return %c0_i32, %c0_i32_0 : i32, i32
  }
  func.func @transform_6(%arg0: i32) -> (i32, i32) {
    %c0_i32 = arith.constant 0 : i32
    %c0_i32_0 = arith.constant 0 : i32
    %c0_i32_1 = arith.constant 0 : i32
    return %c0_i32, %c0_i32_0 : i32, i32
  }
  func.func @transform_7(%arg0: i32) -> (i32, i32) {
    %c0_i32 = arith.constant 0 : i32
    %c0_i32_0 = arith.constant 0 : i32
    %c0_i32_1 = arith.constant 0 : i32
    return %c0_i32, %c0_i32_0 : i32, i32
  }
  func.func @transform_8(%arg0: i32) -> (i32, i32) {
    %c0_i32 = arith.constant 0 : i32
    %c0_i32_0 = arith.constant 0 : i32
    %c0_i32_1 = arith.constant 0 : i32
    return %c0_i32, %c0_i32_0 : i32, i32
  }
  func.func @transform_9(%arg0: i32) -> (i32, i32) {
    %c0_i32 = arith.constant 0 : i32
    %c0_i32_0 = arith.constant 0 : i32
    %c0_i32_1 = arith.constant 0 : i32
    return %c0_i32, %c0_i32_0 : i32, i32
  }
  func.func @transform_10(%arg0: i32) -> (i32, i32) {
    %c0_i32 = arith.constant 0 : i32
    %c0_i32_0 = arith.constant 0 : i32
    %c0_i32_1 = arith.constant 0 : i32
    return %c0_i32, %c0_i32_0 : i32, i32
  }
  func.func @transform_11(%arg0: i32) -> (i32, i32, i32, i32) {
    %c0_i32 = arith.constant 0 : i32
    %c0_i32_0 = arith.constant 0 : i32
    %c0_i32_1 = arith.constant 0 : i32
    %c0_i32_2 = arith.constant 0 : i32
    return %arg0, %c0_i32, %c0_i32_0, %c0_i32_1 : i32, i32, i32, i32
  }
}

</mosaic_0001>

<llo_original>
// kernel: deepmind_encoder_forward.3
$region0: #{deepmind_encoder_forward.3}
  #allocation0 [shape = 'u32[]', space=smem, size = 0x4, offset = 0x4, fixed_abs, tag = 'smem constant byte address 0x4 - core index']
  #allocation1 [shape = 'u32[144,128]{1,0:T(1,128)}', space=vmem, size = 0x12000, scoped, tag = 'internal scratch']
  %s0 = inlined_call_operand.vmem [shape: bf16[512,48], index: 0, kind: input, shape index: {}]
  %s1 = inlined_call_operand.vmem [shape: bf16[48,64], index: 1, kind: input, shape index: {}]
  %s2 = inlined_call_operand.vmem [shape: f32[1,64], index: 2, kind: input, shape index: {}]
  %s3 = inlined_call_operand.vmem [shape: bf16[512,64], index: 3, kind: output, shape index: {}]
  %s4 = sld [smem:[#allocation0]]
  $region45: #{deepmind_encoder_forward.3} parent=0
    _
  %s6 = ssub.s32 1, %s4
  %s7 = scalar_select 0, %s6, %s4
  loop: start=0, step=1, limit=4
  $region2: #{deepmind_encoder_forward.3} parent=0 // loop_pre_header
    _
  $region3: #{deepmind_encoder_forward.3} parent=0 // loop_header
    %s9 = sphi 0, %s13
    %p10 = scmp.ge.s32.totalorder %s9, 4
    %s19 = sphi 0, %s21
    %s22 = sphi 0, %s19
    %s23 = sphi 0, %s22
    %s39 = sphi 0, %s23
    %s43 = sphi 0, %s43
    %s45 = sphi 0, %s43
    %s46 = sphi 0, %s45
    %s60 = sphi 0, %s46
    %s64 = sphi 0, %s64
    %s66 = sphi 0, %s64
    %s67 = sphi 0, %s66
    %s81 = sphi 0, %s67
    %s87 = sphi 0, %s89
    %s90 = sphi 0, %s87
    %s91 = sphi 0, %s90
    %s107 = sphi 0, %s91
  $region4: #{deepmind_encoder_forward.3} parent=0 // loop_header_branch
    %12 = sbr.rel (%p10) target = $region8
  $region5: #{deepmind_encoder_forward.3} parent=0 // loop_body
    %s14 = ssub.s32 %s9, 1
    %s15 = ssub.s32 %s9, 2
    %s16 = sadd.s32 %s9, 1
    %s17 = ssub.s32 %s9, %s16
    %p18 = scmp.eq.s32.totalorder %s17, 0
    %s20 = sadd.s32 %s19, 1
    %s21 = scalar_select %p18, %s19, %s20
    %p24 = pneg %p18
    %p25 = scmp.eq.s32.totalorder %s9, 1
    %p26 = por %p24, %p25
    %p27 = scmp.ne.s32.totalorder %s19, %s22
    %p28 = scmp.eq.s32.totalorder %s9, 0
    %p29 = por %p27, %p28
    %p30 = scmp.ne.s32.totalorder %s19, %s22
    %p31 = scmp.eq.s32.totalorder %s14, 1
    %p32 = por %p30, %p31
    %p33 = scmp.ne.s32.totalorder %s22, %s23
    %p34 = scmp.eq.s32.totalorder %s14, 0
    %p35 = por %p33, %p34
    %p36 = scmp.ne.s32.totalorder %s22, %s23
    %p37 = scmp.eq.s32.totalorder %s15, 1
    %p38 = por %p36, %p37
    %p40 = scmp.ne.s32.totalorder %s23, %s39
    %p41 = scmp.eq.s32.totalorder %s15, 0
    %p42 = por %p40, %p41
    %s44 = sadd.s32 %s43, 1
    %p47 = scmp.eq.s32.totalorder %s9, 1
    %p48 = scmp.ne.s32.totalorder %s43, %s45
    %p49 = scmp.eq.s32.totalorder %s9, 0
    %p50 = por %p48, %p49
    %p51 = scmp.ne.s32.totalorder %s43, %s45
    %p52 = scmp.eq.s32.totalorder %s14, 1
    %p53 = por %p51, %p52
    %p54 = scmp.ne.s32.totalorder %s45, %s46
    %p55 = scmp.eq.s32.totalorder %s14, 0
    %p56 = por %p54, %p55
    %p57 = scmp.ne.s32.totalorder %s45, %s46
    %p58 = scmp.eq.s32.totalorder %s15, 1
    %p59 = por %p57, %p58
    %p61 = scmp.ne.s32.totalorder %s46, %s60
    %p62 = scmp.eq.s32.totalorder %s15, 0
    %p63 = por %p61, %p62
    %s65 = sadd.s32 %s64, 1
    %p68 = scmp.eq.s32.totalorder %s9, 1
    %p69 = scmp.ne.s32.totalorder %s64, %s66
    %p70 = scmp.eq.s32.totalorder %s9, 0
    %p71 = por %p69, %p70
    %p72 = scmp.ne.s32.totalorder %s64, %s66
    %p73 = scmp.eq.s32.totalorder %s14, 1
    %p74 = por %p72, %p73
    %p75 = scmp.ne.s32.totalorder %s66, %s67
    %p76 = scmp.eq.s32.totalorder %s14, 0
    %p77 = por %p75, %p76
    %p78 = scmp.ne.s32.totalorder %s66, %s67
    %p79 = scmp.eq.s32.totalorder %s15, 1
    %p80 = por %p78, %p79
    %p82 = scmp.ne.s32.totalorder %s67, %s81
    %p83 = scmp.eq.s32.totalorder %s15, 0
    %p84 = por %p82, %p83
    %s85 = ssub.s32 %s9, %s16
    %p86 = scmp.eq.s32.totalorder %s85, 0
    %s88 = sadd.s32 %s87, 1
    %s89 = scalar_select %p86, %s87, %s88
    %p92 = pneg %p86
    %p93 = scmp.eq.s32.totalorder %s9, 1
    %p94 = por %p92, %p93
    %p95 = scmp.ne.s32.totalorder %s87, %s90
    %p96 = scmp.eq.s32.totalorder %s9, 0
    %p97 = por %p95, %p96
    %p98 = scmp.ne.s32.totalorder %s87, %s90
    %p99 = scmp.eq.s32.totalorder %s14, 1
    %p100 = por %p98, %p99
    %p101 = scmp.ne.s32.totalorder %s90, %s91
    %p102 = scmp.eq.s32.totalorder %s14, 0
    %p103 = por %p101, %p102
    %p104 = scmp.ne.s32.totalorder %s90, %s91
    %p105 = scmp.eq.s32.totalorder %s15, 1
    %p106 = por %p104, %p105
    %p108 = scmp.ne.s32.totalorder %s91, %s107
    %p109 = scmp.eq.s32.totalorder %s15, 0
    %p110 = por %p108, %p109
    %p111 = scmp.le.s32.totalorder 1, %s9
    %p112 = scmp.lt.s32.totalorder %s9, 3
    %p113 = pnand %p111, %p112
    %p114 = pneg %p113
    // Predicated region
    $region9: #{deepmind_encoder_forward.3} parent=5 // pred_check
      _
    $region10: #{deepmind_encoder_forward.3} parent=5 // pred_check_branch
      %116 = sbr.rel (%p113) target = $region12
    $region11: #{deepmind_encoder_forward.3} parent=5 // pred_region
      %s117 = ssub.s32 %s9, 1
      // Predicated region
      $region13: #{deepmind_encoder_forward.3} parent=11 // pred_check
        %p118 = pneg %p56
      $region14: #{deepmind_encoder_forward.3} parent=11 // pred_check_branch
        %120 = sbr.rel (%p118) target = $region16
      $region15: #{deepmind_encoder_forward.3} parent=11 // pred_region
        _
      $region16: #{deepmind_encoder_forward.3} parent=11 // pred_fallthru
        _
      // Predicated region
      $region17: #{deepmind_encoder_forward.3} parent=11 // pred_check
        %p121 = pneg %p77
      $region18: #{deepmind_encoder_forward.3} parent=11 // pred_check_branch
        %123 = sbr.rel (%p121) target = $region20
      $region19: #{deepmind_encoder_forward.3} parent=11 // pred_region
        _
      $region20: #{deepmind_encoder_forward.3} parent=11 // pred_fallthru
        _
    $region12: #{deepmind_encoder_forward.3} parent=5 // pred_fallthru
      _
    %p124 = scmp.lt.s32.totalorder %s9, 2
    // Predicated region
    $region21: #{deepmind_encoder_forward.3} parent=5 // pred_check
      %p125 = pneg %p124
    $region22: #{deepmind_encoder_forward.3} parent=5 // pred_check_branch
      %127 = sbr.rel (%p125) target = $region24
    $region23: #{deepmind_encoder_forward.3} parent=5 // pred_region
      // Predicated region
      $region25: #{deepmind_encoder_forward.3} parent=23 // pred_check
        %p128 = pneg %p29
      $region26: #{deepmind_encoder_forward.3} parent=23 // pred_check_branch
        %130 = sbr.rel (%p128) target = $region28
      $region27: #{deepmind_encoder_forward.3} parent=23 // pred_region
        %s131 = smul.u32 32, %s9
        %p132 = scmp.lt.s32.totalorder %s131, 63
        %s133 = scalar_select %p132, %s131, 63
        %s134 = smul.addr %s133, 4
        %s135 = scalar_lea.vmem %s0, %s134
        %s136 = smul.u32 32, %s9
      $region28: #{deepmind_encoder_forward.3} parent=23 // pred_fallthru
        _
    $region24: #{deepmind_encoder_forward.3} parent=5 // pred_fallthru
      _
    %p137 = scmp.le.s32.totalorder 1, %s9
    %p138 = scmp.lt.s32.totalorder %s9, 3
    %p139 = pnand %p137, %p138
    %p140 = pneg %p139
    // Predicated region
    $region29: #{deepmind_encoder_forward.3} parent=5 // pred_check
      _
    $region30: #{deepmind_encoder_forward.3} parent=5 // pred_check_branch
      %142 = sbr.rel (%p139) target = $region32
    $region31: #{deepmind_encoder_forward.3} parent=5 // pred_region
      %s143 = ssub.s32 %s9, 1
      %s144 = smul.u32 32, %s14
      %p145 = scmp.lt.s32.totalorder %s144, 63
      %s146 = scalar_select %p145, %s144, 63
      %s147 = smul.addr %s146, 4
      %s148 = scalar_lea.vmem %s0, %s147
      %p149 = pneg %p35
      %p150 = pneg %p32
      %p151 = pneg %p56
      %p152 = pneg %p53
      %p153 = pneg %p77
      %p154 = pneg %p74
      %p155 = pneg %p103
      %p156 = pneg %p100
      %s157 = smul.u32 32, %s14
      %p158 = scmp.lt.s32.totalorder %s157, 63
      %s159 = scalar_select %p158, %s157, 63
      %s160 = smul.addr %s159, 4
      %s161 = scalar_lea.vmem %s3, %s160
      %s162 = smul.u32 32, %s14
      %p163 = scmp.lt.s32.totalorder %s162, 63
      %s164 = scalar_select %p163, %s162, 63
      %s165 = smul.addr %s164, 4
      %s166 = scalar_lea.vmem %s0, %s165
      %s167 = smul.u32 32, %s14
      %s168 = smul.u32 32, %s14
      %p169 = scmp.lt.s32.totalorder %s168, 63
      %s170 = scalar_select %p169, %s168, 63
      %s171 = smul.addr %s170, 4
      %s172 = scalar_lea.vmem %s3, %s171
      %s173 = smul.u32 32, %s14
      %v175 = vld [vmem:[%s166] sm:$0xf]
      %v176 = vld [vmem:[%s166 + $0x4] sm:$0xf]
      %v177 = vld [vmem:[%s166 + $0x8] sm:$0xf]
      %v178 = vld [vmem:[%s166 + $0xc] sm:$0xf]
      %v179 = vld [vmem:[%s166 + $0x10] sm:$0xf]
      %v180 = vld [vmem:[%s166 + $0x14] sm:$0xf]
      %v181 = vld [vmem:[%s166 + $0x18] sm:$0xf]
      %v182 = vld [vmem:[%s166 + $0x1c] sm:$0xf]
      %v183 = vld [vmem:[%s166 + $0x20] sm:$0xf]
      %v184 = vld [vmem:[%s166 + $0x24] sm:$0xf]
      %v185 = vld [vmem:[%s166 + $0x28] sm:$0xf]
      %v186 = vld [vmem:[%s166 + $0x2c] sm:$0xf]
      %v187 = vld [vmem:[%s166 + $0x30] sm:$0xf]
      %v188 = vld [vmem:[%s166 + $0x34] sm:$0xf]
      %v189 = vld [vmem:[%s166 + $0x38] sm:$0xf]
      %v190 = vld [vmem:[%s166 + $0x3c] sm:$0xf]
      %v191 = vld [vmem:[%s166 + $0x40] sm:$0xf]
      %v192 = vld [vmem:[%s166 + $0x44] sm:$0xf]
      %v193 = vld [vmem:[%s166 + $0x48] sm:$0xf]
      %v194 = vld [vmem:[%s166 + $0x4c] sm:$0xf]
      %v195 = vld [vmem:[%s166 + $0x50] sm:$0xf]
      %v196 = vld [vmem:[%s166 + $0x54] sm:$0xf]
      %v197 = vld [vmem:[%s166 + $0x58] sm:$0xf]
      %v198 = vld [vmem:[%s166 + $0x5c] sm:$0xf]
      %v199 = vld [vmem:[%s166 + $0x60] sm:$0xf]
      %v200 = vld [vmem:[%s166 + $0x64] sm:$0xf]
      %v201 = vld [vmem:[%s166 + $0x68] sm:$0xf]
      %v202 = vld [vmem:[%s166 + $0x6c] sm:$0xf]
      %v203 = vld [vmem:[%s166 + $0x70] sm:$0xf]
      %v204 = vld [vmem:[%s166 + $0x74] sm:$0xf]
      %v205 = vld [vmem:[%s166 + $0x78] sm:$0xf]
      %v206 = vld [vmem:[%s166 + $0x7c] sm:$0xf]
      %v207 = vld [vmem:[%s1] sm:$0xf]
      %v208 = vld [vmem:[%s1 + $0x4] sm:$0xf]
      %v209 = vld [vmem:[%s1 + $0x8] sm:$0xf]
      %v210 = vld [vmem:[%s1 + $0xc] sm:$0xf]
      %v211 = vld [vmem:[%s1 + $0x10] sm:$0xf]
      %v212 = vld [vmem:[%s1 + $0x14] sm:$0xf]
      %v213 = vld [vmem:[%s2] sm:$0x1]
      %v215 = vlaneseq
      %v216 = vshrl.u32 %v215, 7
      %v217 = vsub.s32 0, %v216
      %v218 = vrot.slane %v213, %v217
      %v252 = vunpack.c.l.b16 %v175
      %v253 = vunpack.c.l.b16 %v176
      %v254 = vunpack.c.l.b16 %v177
      %v255 = vunpack.c.l.b16 %v178
      %v256 = vunpack.c.l.b16 %v179
      %v257 = vunpack.c.l.b16 %v180
      %v258 = vunpack.c.l.b16 %v181
      %v259 = vunpack.c.l.b16 %v182
      %v260 = vunpack.c.l.b16 %v183
      %v261 = vunpack.c.l.b16 %v184
      %v262 = vunpack.c.l.b16 %v185
      %v263 = vunpack.c.l.b16 %v186
      %v264 = vunpack.c.l.b16 %v187
      %v265 = vunpack.c.l.b16 %v188
      %v266 = vunpack.c.l.b16 %v189
      %v267 = vunpack.c.l.b16 %v190
      %v268 = vunpack.c.l.b16 %v191
      %v269 = vunpack.c.l.b16 %v192
      %v270 = vunpack.c.l.b16 %v193
      %v271 = vunpack.c.l.b16 %v194
      %v272 = vunpack.c.l.b16 %v195
      %v273 = vunpack.c.l.b16 %v196
      %v274 = vunpack.c.l.b16 %v197
      %v275 = vunpack.c.l.b16 %v198
      %v276 = vunpack.c.l.b16 %v199
      %v277 = vunpack.c.l.b16 %v200
      %v278 = vunpack.c.l.b16 %v201
      %v279 = vunpack.c.l.b16 %v202
      %v280 = vunpack.c.l.b16 %v203
      %v281 = vunpack.c.l.b16 %v204
      %v282 = vunpack.c.l.b16 %v205
      %v283 = vunpack.c.l.b16 %v206
      %v284 = vpack.c.b16 %v253, %v252
      %v285 = vpack.c.b16 %v255, %v254
      %v286 = vpack.c.b16 %v257, %v256
      %v287 = vpack.c.b16 %v259, %v258
      %v288 = vpack.c.b16 %v261, %v260
      %v289 = vpack.c.b16 %v263, %v262
      %v290 = vpack.c.b16 %v265, %v264
      %v291 = vpack.c.b16 %v267, %v266
      %v292 = vpack.c.b16 %v269, %v268
      %v293 = vpack.c.b16 %v271, %v270
      %v294 = vpack.c.b16 %v273, %v272
      %v295 = vpack.c.b16 %v275, %v274
      %v296 = vpack.c.b16 %v277, %v276
      %v297 = vpack.c.b16 %v279, %v278
      %v298 = vpack.c.b16 %v281, %v280
      %v299 = vpack.c.b16 %v283, %v282
      %v306 = vunpack.c.l.b16 %v207
      %v307 = vunpack.c.l.b16 %v208
      %v308 = vunpack.c.l.b16 %v209
      %v309 = vunpack.c.l.b16 %v210
      %v310 = vunpack.c.l.b16 %v211
      %v311 = vunpack.c.l.b16 %v212
      %v312 = vpack.c.b16 %v307, %v306
      %v313 = vpack.c.b16 %v309, %v308
      %v314 = vpack.c.b16 %v311, %v310
      %vm318 = vcmask 392192
      %v320 = vsel %vm318, %v284, 0
      %v323 = vsel %vm318, %v285, 0
      %v326 = vsel %vm318, %v286, 0
      %v329 = vsel %vm318, %v287, 0
      %v332 = vsel %vm318, %v288, 0
      %v335 = vsel %vm318, %v289, 0
      %v338 = vsel %vm318, %v290, 0
      %v341 = vsel %vm318, %v291, 0
      %v344 = vsel %vm318, %v292, 0
      %v347 = vsel %vm318, %v293, 0
      %v350 = vsel %vm318, %v294, 0
      %v353 = vsel %vm318, %v295, 0
      %v356 = vsel %vm318, %v296, 0
      %v359 = vsel %vm318, %v297, 0
      %v362 = vsel %vm318, %v298, 0
      %v365 = vsel %vm318, %v299, 0
      %367 = vmatprep.subr.bf16.mxu0 0
      %368 = vmatpush1.bf16.msra.mxu0 %v312
      %369 = vmatprep.subr.bf16.mxu0 0
      %370 = vmatpush1.bf16.msra.mxu0 %v313
      %371 = vmatprep.subr.bf16.mxu0 0
      %372 = vmatpush1.bf16.msra.mxu0 %v314
      %373 = vmatprep.subr.bf16.mxu0 0
      %374 = vmatpush1.bf16.msra.mxu0 0
      %375 = vmatprep.subr.bf16.mxu0 0
      %376 = vmatpush1.bf16.msra.mxu0 0
      %377 = vmatprep.subr.bf16.mxu0 0
      %378 = vmatpush1.bf16.msra.mxu0 0
      %379 = vmatprep.subr.bf16.mxu0 0
      %380 = vmatpush1.bf16.msra.mxu0 0
      %381 = vmatprep.subr.bf16.mxu0 0
      %382 = vmatpush1.bf16.msra.mxu0 0
      %383 = vmatprep.subr.bf16.mxu0 0
      %384 = vmatpush1.bf16.msra.mxu0 0
      %385 = vmatprep.subr.bf16.mxu0 0
      %386 = vmatpush1.bf16.msra.mxu0 0
      %387 = vmatprep.subr.bf16.mxu0 0
      %388 = vmatpush1.bf16.msra.mxu0 0
      %389 = vmatprep.subr.bf16.mxu0 0
      %390 = vmatpush1.bf16.msra.mxu0 0
      %391 = vmatprep.subr.bf16.mxu0 0
      %392 = vmatpush1.bf16.msra.mxu0 0
      %393 = vmatprep.subr.bf16.mxu0 0
      %394 = vmatpush1.bf16.msra.mxu0 0
      %395 = vmatprep.subr.bf16.mxu0 0
      %396 = vmatpush1.bf16.msra.mxu0 0
      %397 = vmatprep.subr.bf16.mxu0 0
      %398 = vmatpush1.bf16.msra.mxu0 0
      %399 = vmatprep.mubr.bf16.mxu0 0
      %400 = vmatmul.mubr.bf16.gmra.mrb[0].mxu0 %v320
      %v401 = vpop.f32.mrb[0].mxu0
      %v402 = vadd.f32 %v218, %v401
      %v403 = vpop.f32.mrb[0].mxu0
      %v404 = vpop.f32.mrb[0].mxu0
      %v405 = vadd.f32 %v218, %v404
      %v406 = vpop.f32.mrb[0].mxu0
      %407 = vmatprep.mubr.bf16.mxu0 0
      %408 = vmatmul.mubr.bf16.gmra.mrb[0].mxu0 %v323
      %v409 = vpop.f32.mrb[0].mxu0
      %v410 = vadd.f32 %v218, %v409
      %v411 = vpop.f32.mrb[0].mxu0
      %v412 = vpop.f32.mrb[0].mxu0
      %v413 = vadd.f32 %v218, %v412
      %v414 = vpop.f32.mrb[0].mxu0
      %415 = vmatprep.mubr.bf16.mxu0 0
      %416 = vmatmul.mubr.bf16.gmra.mrb[0].mxu0 %v326
      %v417 = vpop.f32.mrb[0].mxu0
      %v418 = vadd.f32 %v218, %v417
      %v419 = vpop.f32.mrb[0].mxu0
      %v420 = vpop.f32.mrb[0].mxu0
      %v421 = vadd.f32 %v218, %v420
      %v422 = vpop.f32.mrb[0].mxu0
      %423 = vmatprep.mubr.bf16.mxu0 0
      %424 = vmatmul.mubr.bf16.gmra.mrb[0].mxu0 %v329
      %v425 = vpop.f32.mrb[0].mxu0
      %v426 = vadd.f32 %v218, %v425
      %v427 = vpop.f32.mrb[0].mxu0
      %v428 = vpop.f32.mrb[0].mxu0
      %v429 = vadd.f32 %v218, %v428
      %v430 = vpop.f32.mrb[0].mxu0
      %431 = vmatprep.mubr.bf16.mxu0 0
      %432 = vmatmul.mubr.bf16.gmra.mrb[0].mxu0 %v332
      %v433 = vpop.f32.mrb[0].mxu0
      %v434 = vadd.f32 %v218, %v433
      %v435 = vpop.f32.mrb[0].mxu0
      %v436 = vpop.f32.mrb[0].mxu0
      %v437 = vadd.f32 %v218, %v436
      %v438 = vpop.f32.mrb[0].mxu0
      %439 = vmatprep.mubr.bf16.mxu0 0
      %440 = vmatmul.mubr.bf16.gmra.mrb[0].mxu0 %v335
      %v441 = vpop.f32.mrb[0].mxu0
      %v442 = vadd.f32 %v218, %v441
      %v443 = vpop.f32.mrb[0].mxu0
      %v444 = vpop.f32.mrb[0].mxu0
      %v445 = vadd.f32 %v218, %v444
      %v446 = vpop.f32.mrb[0].mxu0
      %447 = vmatprep.mubr.bf16.mxu0 0
      %448 = vmatmul.mubr.bf16.gmra.mrb[0].mxu0 %v338
      %v449 = vpop.f32.mrb[0].mxu0
      %v450 = vadd.f32 %v218, %v449
      %v451 = vpop.f32.mrb[0].mxu0
      %v452 = vpop.f32.mrb[0].mxu0
      %v453 = vadd.f32 %v218, %v452
      %v454 = vpop.f32.mrb[0].mxu0
      %455 = vmatprep.mubr.bf16.mxu0 0
      %456 = vmatmul.mubr.bf16.gmra.mrb[0].mxu0 %v341
      %v457 = vpop.f32.mrb[0].mxu0
      %v458 = vadd.f32 %v218, %v457
      %v459 = vpop.f32.mrb[0].mxu0
      %v460 = vpop.f32.mrb[0].mxu0
      %v461 = vadd.f32 %v218, %v460
      %v462 = vpop.f32.mrb[0].mxu0
      %463 = vmatprep.mubr.bf16.mxu0 0
      %464 = vmatmul.mubr.bf16.gmra.mrb[0].mxu0 %v344
      %v465 = vpop.f32.mrb[0].mxu0
      %v466 = vadd.f32 %v218, %v465
      %v467 = vpop.f32.mrb[0].mxu0
      %v468 = vpop.f32.mrb[0].mxu0
      %v469 = vadd.f32 %v218, %v468
      %v470 = vpop.f32.mrb[0].mxu0
      %471 = vmatprep.mubr.bf16.mxu0 0
      %472 = vmatmul.mubr.bf16.gmra.mrb[0].mxu0 %v347
      %v473 = vpop.f32.mrb[0].mxu0
      %v474 = vadd.f32 %v218, %v473
      %v475 = vpop.f32.mrb[0].mxu0
      %v476 = vpop.f32.mrb[0].mxu0
      %v477 = vadd.f32 %v218, %v476
      %v478 = vpop.f32.mrb[0].mxu0
      %479 = vmatprep.mubr.bf16.mxu0 0
      %480 = vmatmul.mubr.bf16.gmra.mrb[0].mxu0 %v350
      %v481 = vpop.f32.mrb[0].mxu0
      %v482 = vadd.f32 %v218, %v481
      %v483 = vpop.f32.mrb[0].mxu0
      %v484 = vpop.f32.mrb[0].mxu0
      %v485 = vadd.f32 %v218, %v484
      %v486 = vpop.f32.mrb[0].mxu0
      %487 = vmatprep.mubr.bf16.mxu0 0
      %488 = vmatmul.mubr.bf16.gmra.mrb[0].mxu0 %v353
      %v489 = vpop.f32.mrb[0].mxu0
      %v490 = vadd.f32 %v218, %v489
      %v491 = vpop.f32.mrb[0].mxu0
      %v492 = vpop.f32.mrb[0].mxu0
      %v493 = vadd.f32 %v218, %v492
      %v494 = vpop.f32.mrb[0].mxu0
      %495 = vmatprep.mubr.bf16.mxu0 0
      %496 = vmatmul.mubr.bf16.gmra.mrb[0].mxu0 %v356
      %v497 = vpop.f32.mrb[0].mxu0
      %v498 = vadd.f32 %v218, %v497
      %v499 = vpop.f32.mrb[0].mxu0
      %v500 = vpop.f32.mrb[0].mxu0
      %v501 = vadd.f32 %v218, %v500
      %v502 = vpop.f32.mrb[0].mxu0
      %503 = vmatprep.mubr.bf16.mxu0 0
      %504 = vmatmul.mubr.bf16.gmra.mrb[0].mxu0 %v359
      %v505 = vpop.f32.mrb[0].mxu0
      %v506 = vadd.f32 %v218, %v505
      %v507 = vpop.f32.mrb[0].mxu0
      %v508 = vpop.f32.mrb[0].mxu0
      %v509 = vadd.f32 %v218, %v508
      %v510 = vpop.f32.mrb[0].mxu0
      %511 = vmatprep.mubr.bf16.mxu0 0
      %512 = vmatmul.mubr.bf16.gmra.mrb[0].mxu0 %v362
      %v513 = vpop.f32.mrb[0].mxu0
      %v514 = vadd.f32 %v218, %v513
      %v515 = vpop.f32.mrb[0].mxu0
      %v516 = vpop.f32.mrb[0].mxu0
      %v517 = vadd.f32 %v218, %v516
      %v518 = vpop.f32.mrb[0].mxu0
      %519 = vmatprep.mubr.bf16.mxu0 0
      %520 = vmatmul.mubr.bf16.gmra.mrb[0].mxu0 %v365
      %v521 = vpop.f32.mrb[0].mxu0
      %v522 = vadd.f32 %v218, %v521
      %v523 = vpop.f32.mrb[0].mxu0
      %v524 = vpop.f32.mrb[0].mxu0
      %v525 = vadd.f32 %v218, %v524
      %v526 = vpop.f32.mrb[0].mxu0
      %527 = vdwg.mxu0
      %v528 = vmax.f32 %v402, 0.0
      %v529 = vmax.f32 %v405, 0.0
      %v530 = vmax.f32 %v410, 0.0
      %v531 = vmax.f32 %v413, 0.0
      %v532 = vmax.f32 %v418, 0.0
      %v533 = vmax.f32 %v421, 0.0
      %v534 = vmax.f32 %v426, 0.0
      %v535 = vmax.f32 %v429, 0.0
      %v536 = vmax.f32 %v434, 0.0
      %v537 = vmax.f32 %v437, 0.0
      %v538 = vmax.f32 %v442, 0.0
      %v539 = vmax.f32 %v445, 0.0
      %v540 = vmax.f32 %v450, 0.0
      %v541 = vmax.f32 %v453, 0.0
      %v542 = vmax.f32 %v458, 0.0
      %v543 = vmax.f32 %v461, 0.0
      %v544 = vmax.f32 %v466, 0.0
      %v545 = vmax.f32 %v469, 0.0
      %v546 = vmax.f32 %v474, 0.0
      %v547 = vmax.f32 %v477, 0.0
      %v548 = vmax.f32 %v482, 0.0
      %v549 = vmax.f32 %v485, 0.0
      %v550 = vmax.f32 %v490, 0.0
      %v551 = vmax.f32 %v493, 0.0
      %v552 = vmax.f32 %v498, 0.0
      %v553 = vmax.f32 %v501, 0.0
      %v554 = vmax.f32 %v506, 0.0
      %v555 = vmax.f32 %v509, 0.0
      %v556 = vmax.f32 %v514, 0.0
      %v557 = vmax.f32 %v517, 0.0
      %v558 = vmax.f32 %v522, 0.0
      %v559 = vmax.f32 %v525, 0.0
      %v560 = vpack.c.bf16 %v529, %v528
      %v561 = vpack.c.bf16 %v531, %v530
      %v562 = vpack.c.bf16 %v533, %v532
      %v563 = vpack.c.bf16 %v535, %v534
      %v564 = vpack.c.bf16 %v537, %v536
      %v565 = vpack.c.bf16 %v539, %v538
      %v566 = vpack.c.bf16 %v541, %v540
      %v567 = vpack.c.bf16 %v543, %v542
      %v568 = vpack.c.bf16 %v545, %v544
      %v569 = vpack.c.bf16 %v547, %v546
      %v570 = vpack.c.bf16 %v549, %v548
      %v571 = vpack.c.bf16 %v551, %v550
      %v572 = vpack.c.bf16 %v553, %v552
      %v573 = vpack.c.bf16 %v555, %v554
      %v574 = vpack.c.bf16 %v557, %v556
      %v575 = vpack.c.bf16 %v559, %v558
      %v592 = vunpack.c.l.b16 %v560
      %v593 = vunpack.c.h.b16 %v560
      %v594 = vunpack.c.l.b16 %v561
      %v595 = vunpack.c.h.b16 %v561
      %v596 = vunpack.c.l.b16 %v562
      %v597 = vunpack.c.h.b16 %v562
      %v598 = vunpack.c.l.b16 %v563
      %v599 = vunpack.c.h.b16 %v563
      %v600 = vunpack.c.l.b16 %v564
      %v601 = vunpack.c.h.b16 %v564
      %v602 = vunpack.c.l.b16 %v565
      %v603 = vunpack.c.h.b16 %v565
      %v604 = vunpack.c.l.b16 %v566
      %v605 = vunpack.c.h.b16 %v566
      %v606 = vunpack.c.l.b16 %v567
      %v607 = vunpack.c.h.b16 %v567
      %v608 = vunpack.c.l.b16 %v568
      %v609 = vunpack.c.h.b16 %v568
      %v610 = vunpack.c.l.b16 %v569
      %v611 = vunpack.c.h.b16 %v569
      %v612 = vunpack.c.l.b16 %v570
      %v613 = vunpack.c.h.b16 %v570
      %v614 = vunpack.c.l.b16 %v571
      %v615 = vunpack.c.h.b16 %v571
      %v616 = vunpack.c.l.b16 %v572
      %v617 = vunpack.c.h.b16 %v572
      %v618 = vunpack.c.l.b16 %v573
      %v619 = vunpack.c.h.b16 %v573
      %v620 = vunpack.c.l.b16 %v574
      %v621 = vunpack.c.h.b16 %v574
      %v622 = vunpack.c.l.b16 %v575
      %v623 = vunpack.c.h.b16 %v575
      %v624 = vpack.c.b16 %v592, %v592
      %v625 = vpack.c.b16 %v593, %v593
      %v626 = vpack.c.b16 %v594, %v594
      %v627 = vpack.c.b16 %v595, %v595
      %v628 = vpack.c.b16 %v596, %v596
      %v629 = vpack.c.b16 %v597, %v597
      %v630 = vpack.c.b16 %v598, %v598
      %v631 = vpack.c.b16 %v599, %v599
      %v632 = vpack.c.b16 %v600, %v600
      %v633 = vpack.c.b16 %v601, %v601
      %v634 = vpack.c.b16 %v602, %v602
      %v635 = vpack.c.b16 %v603, %v603
      %v636 = vpack.c.b16 %v604, %v604
      %v637 = vpack.c.b16 %v605, %v605
      %v638 = vpack.c.b16 %v606, %v606
      %v639 = vpack.c.b16 %v607, %v607
      %v640 = vpack.c.b16 %v608, %v608
      %v641 = vpack.c.b16 %v609, %v609
      %v642 = vpack.c.b16 %v610, %v610
      %v643 = vpack.c.b16 %v611, %v611
      %v644 = vpack.c.b16 %v612, %v612
      %v645 = vpack.c.b16 %v613, %v613
      %v646 = vpack.c.b16 %v614, %v614
      %v647 = vpack.c.b16 %v615, %v615
      %v648 = vpack.c.b16 %v616, %v616
      %v649 = vpack.c.b16 %v617, %v617
      %v650 = vpack.c.b16 %v618, %v618
      %v651 = vpack.c.b16 %v619, %v619
      %v652 = vpack.c.b16 %v620, %v620
      %v653 = vpack.c.b16 %v621, %v621
      %v654 = vpack.c.b16 %v622, %v622
      %v655 = vpack.c.b16 %v623, %v623
      %vm688 = vcmask 519168
      %689 = vst.msk [vmem:[%s172] sm:$0xf] %vm688, %v624
      %690 = vst.msk [vmem:[%s172 + $0x4] sm:$0xf] %vm688, %v625
      %691 = vst.msk [vmem:[%s172 + $0x8] sm:$0xf] %vm688, %v626
      %692 = vst.msk [vmem:[%s172 + $0xc] sm:$0xf] %vm688, %v627
      %693 = vst.msk [vmem:[%s172 + $0x10] sm:$0xf] %vm688, %v628
      %694 = vst.msk [vmem:[%s172 + $0x14] sm:$0xf] %vm688, %v629
      %695 = vst.msk [vmem:[%s172 + $0x18] sm:$0xf] %vm688, %v630
      %696 = vst.msk [vmem:[%s172 + $0x1c] sm:$0xf] %vm688, %v631
      %697 = vst.msk [vmem:[%s172 + $0x20] sm:$0xf] %vm688, %v632
      %698 = vst.msk [vmem:[%s172 + $0x24] sm:$0xf] %vm688, %v633
      %699 = vst.msk [vmem:[%s172 + $0x28] sm:$0xf] %vm688, %v634
      %700 = vst.msk [vmem:[%s172 + $0x2c] sm:$0xf] %vm688, %v635
      %701 = vst.msk [vmem:[%s172 + $0x30] sm:$0xf] %vm688, %v636
      %702 = vst.msk [vmem:[%s172 + $0x34] sm:$0xf] %vm688, %v637
      %703 = vst.msk [vmem:[%s172 + $0x38] sm:$0xf] %vm688, %v638
      %704 = vst.msk [vmem:[%s172 + $0x3c] sm:$0xf] %vm688, %v639
      %705 = vst.msk [vmem:[%s172 + $0x40] sm:$0xf] %vm688, %v640
      %706 = vst.msk [vmem:[%s172 + $0x44] sm:$0xf] %vm688, %v641
      %707 = vst.msk [vmem:[%s172 + $0x48] sm:$0xf] %vm688, %v642
      %708 = vst.msk [vmem:[%s172 + $0x4c] sm:$0xf] %vm688, %v643
      %709 = vst.msk [vmem:[%s172 + $0x50] sm:$0xf] %vm688, %v644
      %710 = vst.msk [vmem:[%s172 + $0x54] sm:$0xf] %vm688, %v645
      %711 = vst.msk [vmem:[%s172 + $0x58] sm:$0xf] %vm688, %v646
      %712 = vst.msk [vmem:[%s172 + $0x5c] sm:$0xf] %vm688, %v647
      %713 = vst.msk [vmem:[%s172 + $0x60] sm:$0xf] %vm688, %v648
      %714 = vst.msk [vmem:[%s172 + $0x64] sm:$0xf] %vm688, %v649
      %715 = vst.msk [vmem:[%s172 + $0x68] sm:$0xf] %vm688, %v650
      %716 = vst.msk [vmem:[%s172 + $0x6c] sm:$0xf] %vm688, %v651
      %717 = vst.msk [vmem:[%s172 + $0x70] sm:$0xf] %vm688, %v652
      %718 = vst.msk [vmem:[%s172 + $0x74] sm:$0xf] %vm688, %v653
      %719 = vst.msk [vmem:[%s172 + $0x78] sm:$0xf] %vm688, %v654
      %720 = vst.msk [vmem:[%s172 + $0x7c] sm:$0xf] %vm688, %v655
      %s721 = smul.u32 32, %s14
      %p722 = scmp.lt.s32.totalorder %s721, 63
      %s723 = scalar_select %p722, %s721, 63
      %s724 = smul.addr %s723, 4
      %s725 = scalar_lea.vmem %s3, %s724
      // Predicated region
      $region33: #{deepmind_encoder_forward.3} parent=31 // pred_check
        %p726 = pneg %p100
      $region34: #{deepmind_encoder_forward.3} parent=31 // pred_check_branch
        %728 = sbr.rel (%p726) target = $region36
      $region35: #{deepmind_encoder_forward.3} parent=31 // pred_region
        %s729 = smul.u32 32, %s14
      $region36: #{deepmind_encoder_forward.3} parent=31 // pred_fallthru
        _
    $region32: #{deepmind_encoder_forward.3} parent=5 // pred_fallthru
      _
    %p730 = scmp.le.s32.totalorder 2, %s9
    // Predicated region
    $region37: #{deepmind_encoder_forward.3} parent=5 // pred_check
      %p731 = pneg %p730
    $region38: #{deepmind_encoder_forward.3} parent=5 // pred_check_branch
      %733 = sbr.rel (%p731) target = $region40
    $region39: #{deepmind_encoder_forward.3} parent=5 // pred_region
      %s734 = ssub.s32 %s9, 2
      // Predicated region
      $region41: #{deepmind_encoder_forward.3} parent=39 // pred_check
        %p735 = pneg %p106
      $region42: #{deepmind_encoder_forward.3} parent=39 // pred_check_branch
        %737 = sbr.rel (%p735) target = $region44
      $region43: #{deepmind_encoder_forward.3} parent=39 // pred_region
        %s738 = smul.u32 32, %s15
        %p739 = scmp.lt.s32.totalorder %s738, 63
        %s740 = scalar_select %p739, %s738, 63
        %s741 = smul.addr %s740, 4
        %s742 = scalar_lea.vmem %s3, %s741
      $region44: #{deepmind_encoder_forward.3} parent=39 // pred_fallthru
        _
    $region40: #{deepmind_encoder_forward.3} parent=5 // pred_fallthru
      _
  $region6: #{deepmind_encoder_forward.3} parent=0 // loop_footer
    %s13 = sadd.s32 1, %s9
  $region7: #{deepmind_encoder_forward.3} parent=0 // loop_footer_branch
    %8 = sbr.rel target = $region3
  $region8: #{deepmind_encoder_forward.3} parent=0 // loop_exit
    _

// kernel: deepmind_encoder_forward.4
$region0: #{deepmind_encoder_forward.4}
  #allocation0 [shape = 'u32[]', space=smem, size = 0x4, offset = 0x4, fixed_abs, tag = 'smem constant byte address 0x4 - core index']
  #allocation1 [shape = 'u32[144,128]{1,0:T(1,128)}', space=vmem, size = 0x12000, scoped, tag = 'internal scratch']
  %s0 = inlined_call_operand.vmem [shape: bf16[128,1024], index: 0, kind: input, shape index: {}]
  %s1 = inlined_call_operand.vmem [shape: bf16[1024,128], index: 1, kind: input, shape index: {}]
  %s2 = inlined_call_operand.vmem [shape: f32[1,128], index: 2, kind: input, shape index: {}]
  %s3 = inlined_call_operand.vmem [shape: bf16[128,128], index: 3, kind: output, shape index: {}]
  %s4 = sld [smem:[#allocation0]]
  $region45: #{deepmind_encoder_forward.4} parent=0
    _
  %s6 = ssub.s32 1, %s4
  %s7 = scalar_select 0, %s6, %s4
  loop: start=0, step=1, limit=4
  $region2: #{deepmind_encoder_forward.4} parent=0 // loop_pre_header
    _
  $region3: #{deepmind_encoder_forward.4} parent=0 // loop_header
    %s9 = sphi 0, %s13
    %p10 = scmp.ge.s32.totalorder %s9, 4
    %s19 = sphi 0, %s21
    %s22 = sphi 0, %s19
    %s23 = sphi 0, %s22
    %s39 = sphi 0, %s23
    %s43 = sphi 0, %s43
    %s45 = sphi 0, %s43
    %s46 = sphi 0, %s45
    %s60 = sphi 0, %s46
    %s64 = sphi 0, %s64
    %s66 = sphi 0, %s64
    %s67 = sphi 0, %s66
    %s81 = sphi 0, %s67
    %s87 = sphi 0, %s89
    %s90 = sphi 0, %s87
    %s91 = sphi 0, %s90
    %s107 = sphi 0, %s91
  $region4: #{deepmind_encoder_forward.4} parent=0 // loop_header_branch
    %12 = sbr.rel (%p10) target = $region8
  $region5: #{deepmind_encoder_forward.4} parent=0 // loop_body
    %s14 = ssub.s32 %s9, 1
    %s15 = ssub.s32 %s9, 2
    %s16 = sadd.s32 %s9, 1
    %s17 = ssub.s32 %s9, %s16
    %p18 = scmp.eq.s32.totalorder %s17, 0
    %s20 = sadd.s32 %s19, 1
    %s21 = scalar_select %p18, %s19, %s20
    %p24 = pneg %p18
    %p25 = scmp.eq.s32.totalorder %s9, 1
    %p26 = por %p24, %p25
    %p27 = scmp.ne.s32.totalorder %s19, %s22
    %p28 = scmp.eq.s32.totalorder %s9, 0
    %p29 = por %p27, %p28
    %p30 = scmp.ne.s32.totalorder %s19, %s22
    %p31 = scmp.eq.s32.totalorder %s14, 1
    %p32 = por %p30, %p31
    %p33 = scmp.ne.s32.totalorder %s22, %s23
    %p34 = scmp.eq.s32.totalorder %s14, 0
    %p35 = por %p33, %p34
    %p36 = scmp.ne.s32.totalorder %s22, %s23
    %p37 = scmp.eq.s32.totalorder %s15, 1
    %p38 = por %p36, %p37
    %p40 = scmp.ne.s32.totalorder %s23, %s39
    %p41 = scmp.eq.s32.totalorder %s15, 0
    %p42 = por %p40, %p41
    %s44 = sadd.s32 %s43, 1
    %p47 = scmp.eq.s32.totalorder %s9, 1
    %p48 = scmp.ne.s32.totalorder %s43, %s45
    %p49 = scmp.eq.s32.totalorder %s9, 0
    %p50 = por %p48, %p49
    %p51 = scmp.ne.s32.totalorder %s43, %s45
    %p52 = scmp.eq.s32.totalorder %s14, 1
    %p53 = por %p51, %p52
    %p54 = scmp.ne.s32.totalorder %s45, %s46
    %p55 = scmp.eq.s32.totalorder %s14, 0
    %p56 = por %p54, %p55
    %p57 = scmp.ne.s32.totalorder %s45, %s46
    %p58 = scmp.eq.s32.totalorder %s15, 1
    %p59 = por %p57, %p58
    %p61 = scmp.ne.s32.totalorder %s46, %s60
    %p62 = scmp.eq.s32.totalorder %s15, 0
    %p63 = por %p61, %p62
    %s65 = sadd.s32 %s64, 1
    %p68 = scmp.eq.s32.totalorder %s9, 1
    %p69 = scmp.ne.s32.totalorder %s64, %s66
    %p70 = scmp.eq.s32.totalorder %s9, 0
    %p71 = por %p69, %p70
    %p72 = scmp.ne.s32.totalorder %s64, %s66
    %p73 = scmp.eq.s32.totalorder %s14, 1
    %p74 = por %p72, %p73
    %p75 = scmp.ne.s32.totalorder %s66, %s67
    %p76 = scmp.eq.s32.totalorder %s14, 0
    %p77 = por %p75, %p76
    %p78 = scmp.ne.s32.totalorder %s66, %s67
    %p79 = scmp.eq.s32.totalorder %s15, 1
    %p80 = por %p78, %p79
    %p82 = scmp.ne.s32.totalorder %s67, %s81
    %p83 = scmp.eq.s32.totalorder %s15, 0
    %p84 = por %p82, %p83
    %s85 = ssub.s32 %s9, %s16
    %p86 = scmp.eq.s32.totalorder %s85, 0
    %s88 = sadd.s32 %s87, 1
    %s89 = scalar_select %p86, %s87, %s88
    %p92 = pneg %p86
    %p93 = scmp.eq.s32.totalorder %s9, 1
    %p94 = por %p92, %p93
    %p95 = scmp.ne.s32.totalorder %s87, %s90
    %p96 = scmp.eq.s32.totalorder %s9, 0
    %p97 = por %p95, %p96
    %p98 = scmp.ne.s32.totalorder %s87, %s90
    %p99 = scmp.eq.s32.totalorder %s14, 1
    %p100 = por %p98, %p99
    %p101 = scmp.ne.s32.totalorder %s90, %s91
    %p102 = scmp.eq.s32.totalorder %s14, 0
    %p103 = por %p101, %p102
    %p104 = scmp.ne.s32.totalorder %s90, %s91
    %p105 = scmp.eq.s32.totalorder %s15, 1
    %p106 = por %p104, %p105
    %p108 = scmp.ne.s32.totalorder %s91, %s107
    %p109 = scmp.eq.s32.totalorder %s15, 0
    %p110 = por %p108, %p109
    %p111 = scmp.le.s32.totalorder 1, %s9
    %p112 = scmp.lt.s32.totalorder %s9, 3
    %p113 = pnand %p111, %p112
    %p114 = pneg %p113
    // Predicated region
    $region9: #{deepmind_encoder_forward.4} parent=5 // pred_check
      _
    $region10: #{deepmind_encoder_forward.4} parent=5 // pred_check_branch
      %116 = sbr.rel (%p113) target = $region12
    $region11: #{deepmind_encoder_forward.4} parent=5 // pred_region
      %s117 = ssub.s32 %s9, 1
      // Predicated region
      $region13: #{deepmind_encoder_forward.4} parent=11 // pred_check
        %p118 = pneg %p56
      $region14: #{deepmind_encoder_forward.4} parent=11 // pred_check_branch
        %120 = sbr.rel (%p118) target = $region16
      $region15: #{deepmind_encoder_forward.4} parent=11 // pred_region
        _
      $region16: #{deepmind_encoder_forward.4} parent=11 // pred_fallthru
        _
      // Predicated region
      $region17: #{deepmind_encoder_forward.4} parent=11 // pred_check
        %p121 = pneg %p77
      $region18: #{deepmind_encoder_forward.4} parent=11 // pred_check_branch
        %123 = sbr.rel (%p121) target = $region20
      $region19: #{deepmind_encoder_forward.4} parent=11 // pred_region
        _
      $region20: #{deepmind_encoder_forward.4} parent=11 // pred_fallthru
        _
    $region12: #{deepmind_encoder_forward.4} parent=5 // pred_fallthru
      _
    %p124 = scmp.lt.s32.totalorder %s9, 2
    // Predicated region
    $region21: #{deepmind_encoder_forward.4} parent=5 // pred_check
      %p125 = pneg %p124
    $region22: #{deepmind_encoder_forward.4} parent=5 // pred_check_branch
      %127 = sbr.rel (%p125) target = $region24
    $region23: #{deepmind_encoder_forward.4} parent=5 // pred_region
      // Predicated region
      $region25: #{deepmind_encoder_forward.4} parent=23 // pred_check
        %p128 = pneg %p29
      $region26: #{deepmind_encoder_forward.4} parent=23 // pred_check_branch
        %130 = sbr.rel (%p128) target = $region28
      $region27: #{deepmind_encoder_forward.4} parent=23 // pred_region
        %s131 = smul.u32 8, %s9
        %p132 = scmp.lt.s32.totalorder %s131, 15
        %s133 = scalar_select %p132, %s131, 15
        %s134 = smul.addr %s133, 8
        %s135 = smul.addr %s134, 4
        %s136 = scalar_lea.vmem %s0, %s135
        %s137 = smul.u32 8, %s9
      $region28: #{deepmind_encoder_forward.4} parent=23 // pred_fallthru
        _
    $region24: #{deepmind_encoder_forward.4} parent=5 // pred_fallthru
      _
    %p138 = scmp.le.s32.totalorder 1, %s9
    %p139 = scmp.lt.s32.totalorder %s9, 3
    %p140 = pnand %p138, %p139
    %p141 = pneg %p140
    // Predicated region
    $region29: #{deepmind_encoder_forward.4} parent=5 // pred_check
      _
    $region30: #{deepmind_encoder_forward.4} parent=5 // pred_check_branch
      %143 = sbr.rel (%p140) target = $region32
    $region31: #{deepmind_encoder_forward.4} parent=5 // pred_region
      %s144 = ssub.s32 %s9, 1
      %s145 = smul.u32 8, %s14
      %p146 = scmp.lt.s32.totalorder %s145, 15
      %s147 = scalar_select %p146, %s145, 15
      %s148 = smul.addr %s147, 8
      %s149 = smul.addr %s148, 4
      %s150 = scalar_lea.vmem %s0, %s149
      %p151 = pneg %p35
      %p152 = pneg %p32
      %p153 = pneg %p56
      %p154 = pneg %p53
      %p155 = pneg %p77
      %p156 = pneg %p74
      %p157 = pneg %p103
      %p158 = pneg %p100
      %s159 = smul.u32 8, %s14
      %p160 = scmp.lt.s32.totalorder %s159, 15
      %s161 = scalar_select %p160, %s159, 15
      %s162 = smul.addr %s161, 4
      %s163 = scalar_lea.vmem %s3, %s162
      %s164 = smul.u32 8, %s14
      %p165 = scmp.lt.s32.totalorder %s164, 15
      %s166 = scalar_select %p165, %s164, 15
      %s167 = smul.addr %s166, 8
      %s168 = smul.addr %s167, 4
      %s169 = scalar_lea.vmem %s0, %s168
      %s170 = smul.u32 8, %s14
      %s171 = smul.u32 8, %s14
      %p172 = scmp.lt.s32.totalorder %s171, 15
      %s173 = scalar_select %p172, %s171, 15
      %s174 = smul.addr %s173, 4
      %s175 = scalar_lea.vmem %s3, %s174
      %s176 = smul.u32 8, %s14
      %v178 = vld [vmem:[%s169] sm:$0xff]
      %v179 = vld [vmem:[%s169 + $0x8] sm:$0xff]
      %v180 = vld [vmem:[%s169 + $0x10] sm:$0xff]
      %v181 = vld [vmem:[%s169 + $0x18] sm:$0xff]
      %v182 = vld [vmem:[%s169 + $0x20] sm:$0xff]
      %v183 = vld [vmem:[%s169 + $0x28] sm:$0xff]
      %v184 = vld [vmem:[%s169 + $0x30] sm:$0xff]
      %v185 = vld [vmem:[%s169 + $0x38] sm:$0xff]
      %v186 = vld [vmem:[%s169 + $0x40] sm:$0xff]
      %v187 = vld [vmem:[%s169 + $0x48] sm:$0xff]
      %v188 = vld [vmem:[%s169 + $0x50] sm:$0xff]
      %v189 = vld [vmem:[%s169 + $0x58] sm:$0xff]
      %v190 = vld [vmem:[%s169 + $0x60] sm:$0xff]
      %v191 = vld [vmem:[%s169 + $0x68] sm:$0xff]
      %v192 = vld [vmem:[%s169 + $0x70] sm:$0xff]
      %v193 = vld [vmem:[%s169 + $0x78] sm:$0xff]
      %v194 = vld [vmem:[%s169 + $0x80] sm:$0xff]
      %v195 = vld [vmem:[%s169 + $0x88] sm:$0xff]
      %v196 = vld [vmem:[%s169 + $0x90] sm:$0xff]
      %v197 = vld [vmem:[%s169 + $0x98] sm:$0xff]
      %v198 = vld [vmem:[%s169 + $0xa0] sm:$0xff]
      %v199 = vld [vmem:[%s169 + $0xa8] sm:$0xff]
      %v200 = vld [vmem:[%s169 + $0xb0] sm:$0xff]
      %v201 = vld [vmem:[%s169 + $0xb8] sm:$0xff]
      %v202 = vld [vmem:[%s169 + $0xc0] sm:$0xff]
      %v203 = vld [vmem:[%s169 + $0xc8] sm:$0xff]
      %v204 = vld [vmem:[%s169 + $0xd0] sm:$0xff]
      %v205 = vld [vmem:[%s169 + $0xd8] sm:$0xff]
      %v206 = vld [vmem:[%s169 + $0xe0] sm:$0xff]
      %v207 = vld [vmem:[%s169 + $0xe8] sm:$0xff]
      %v208 = vld [vmem:[%s169 + $0xf0] sm:$0xff]
      %v209 = vld [vmem:[%s169 + $0xf8] sm:$0xff]
      %v210 = vld [vmem:[%s1] sm:$0xf]
      %v211 = vld [vmem:[%s1 + $0x4] sm:$0xf]
      %v212 = vld [vmem:[%s1 + $0x8] sm:$0xf]
      %v213 = vld [vmem:[%s1 + $0xc] sm:$0xf]
      %v214 = vld [vmem:[%s1 + $0x10] sm:$0xf]
      %v215 = vld [vmem:[%s1 + $0x14] sm:$0xf]
      %v216 = vld [vmem:[%s1 + $0x18] sm:$0xf]
      %v217 = vld [vmem:[%s1 + $0x1c] sm:$0xf]
      %v218 = vld [vmem:[%s1 + $0x20] sm:$0xf]
      %v219 = vld [vmem:[%s1 + $0x24] sm:$0xf]
      %v220 = vld [vmem:[%s1 + $0x28] sm:$0xf]
      %v221 = vld [vmem:[%s1 + $0x2c] sm:$0xf]
      %v222 = vld [vmem:[%s1 + $0x30] sm:$0xf]
      %v223 = vld [vmem:[%s1 + $0x34] sm:$0xf]
      %v224 = vld [vmem:[%s1 + $0x38] sm:$0xf]
      %v225 = vld [vmem:[%s1 + $0x3c] sm:$0xf]
      %v226 = vld [vmem:[%s1 + $0x40] sm:$0xf]
      %v227 = vld [vmem:[%s1 + $0x44] sm:$0xf]
      %v228 = vld [vmem:[%s1 + $0x48] sm:$0xf]
      %v229 = vld [vmem:[%s1 + $0x4c] sm:$0xf]
      %v230 = vld [vmem:[%s1 + $0x50] sm:$0xf]
      %v231 = vld [vmem:[%s1 + $0x54] sm:$0xf]
      %v232 = vld [vmem:[%s1 + $0x58] sm:$0xf]
      %v233 = vld [vmem:[%s1 + $0x5c] sm:$0xf]
      %v234 = vld [vmem:[%s1 + $0x60] sm:$0xf]
      %v235 = vld [vmem:[%s1 + $0x64] sm:$0xf]
      %v236 = vld [vmem:[%s1 + $0x68] sm:$0xf]
      %v237 = vld [vmem:[%s1 + $0x6c] sm:$0xf]
      %v238 = vld [vmem:[%s1 + $0x70] sm:$0xf]
      %v239 = vld [vmem:[%s1 + $0x74] sm:$0xf]
      %v240 = vld [vmem:[%s1 + $0x78] sm:$0xf]
      %v241 = vld [vmem:[%s1 + $0x7c] sm:$0xf]
      %v242 = vld [vmem:[%s1 + $0x80] sm:$0xf]
      %v243 = vld [vmem:[%s1 + $0x84] sm:$0xf]
      %v244 = vld [vmem:[%s1 + $0x88] sm:$0xf]
      %v245 = vld [vmem:[%s1 + $0x8c] sm:$0xf]
      %v246 = vld [vmem:[%s1 + $0x90] sm:$0xf]
      %v247 = vld [vmem:[%s1 + $0x94] sm:$0xf]
      %v248 = vld [vmem:[%s1 + $0x98] sm:$0xf]
      %v249 = vld [vmem:[%s1 + $0x9c] sm:$0xf]
      %v250 = vld [vmem:[%s1 + $0xa0] sm:$0xf]
      %v251 = vld [vmem:[%s1 + $0xa4] sm:$0xf]
      %v252 = vld [vmem:[%s1 + $0xa8] sm:$0xf]
      %v253 = vld [vmem:[%s1 + $0xac] sm:$0xf]
      %v254 = vld [vmem:[%s1 + $0xb0] sm:$0xf]
      %v255 = vld [vmem:[%s1 + $0xb4] sm:$0xf]
      %v256 = vld [vmem:[%s1 + $0xb8] sm:$0xf]
      %v257 = vld [vmem:[%s1 + $0xbc] sm:$0xf]
      %v258 = vld [vmem:[%s1 + $0xc0] sm:$0xf]
      %v259 = vld [vmem:[%s1 + $0xc4] sm:$0xf]
      %v260 = vld [vmem:[%s1 + $0xc8] sm:$0xf]
      %v261 = vld [vmem:[%s1 + $0xcc] sm:$0xf]
      %v262 = vld [vmem:[%s1 + $0xd0] sm:$0xf]
      %v263 = vld [vmem:[%s1 + $0xd4] sm:$0xf]
      %v264 = vld [vmem:[%s1 + $0xd8] sm:$0xf]
      %v265 = vld [vmem:[%s1 + $0xdc] sm:$0xf]
      %v266 = vld [vmem:[%s1 + $0xe0] sm:$0xf]
      %v267 = vld [vmem:[%s1 + $0xe4] sm:$0xf]
      %v268 = vld [vmem:[%s1 + $0xe8] sm:$0xf]
      %v269 = vld [vmem:[%s1 + $0xec] sm:$0xf]
      %v270 = vld [vmem:[%s1 + $0xf0] sm:$0xf]
      %v271 = vld [vmem:[%s1 + $0xf4] sm:$0xf]
      %v272 = vld [vmem:[%s1 + $0xf8] sm:$0xf]
      %v273 = vld [vmem:[%s1 + $0xfc] sm:$0xf]
      %v274 = vld [vmem:[%s1 + $0x100] sm:$0xf]
      %v275 = vld [vmem:[%s1 + $0x104] sm:$0xf]
      %v276 = vld [vmem:[%s1 + $0x108] sm:$0xf]
      %v277 = vld [vmem:[%s1 + $0x10c] sm:$0xf]
      %v278 = vld [vmem:[%s1 + $0x110] sm:$0xf]
      %v279 = vld [vmem:[%s1 + $0x114] sm:$0xf]
      %v280 = vld [vmem:[%s1 + $0x118] sm:$0xf]
      %v281 = vld [vmem:[%s1 + $0x11c] sm:$0xf]
      %v282 = vld [vmem:[%s1 + $0x120] sm:$0xf]
      %v283 = vld [vmem:[%s1 + $0x124] sm:$0xf]
      %v284 = vld [vmem:[%s1 + $0x128] sm:$0xf]
      %v285 = vld [vmem:[%s1 + $0x12c] sm:$0xf]
      %v286 = vld [vmem:[%s1 + $0x130] sm:$0xf]
      %v287 = vld [vmem:[%s1 + $0x134] sm:$0xf]
      %v288 = vld [vmem:[%s1 + $0x138] sm:$0xf]
      %v289 = vld [vmem:[%s1 + $0x13c] sm:$0xf]
      %v290 = vld [vmem:[%s1 + $0x140] sm:$0xf]
      %v291 = vld [vmem:[%s1 + $0x144] sm:$0xf]
      %v292 = vld [vmem:[%s1 + $0x148] sm:$0xf]
      %v293 = vld [vmem:[%s1 + $0x14c] sm:$0xf]
      %v294 = vld [vmem:[%s1 + $0x150] sm:$0xf]
      %v295 = vld [vmem:[%s1 + $0x154] sm:$0xf]
      %v296 = vld [vmem:[%s1 + $0x158] sm:$0xf]
      %v297 = vld [vmem:[%s1 + $0x15c] sm:$0xf]
      %v298 = vld [vmem:[%s1 + $0x160] sm:$0xf]
      %v299 = vld [vmem:[%s1 + $0x164] sm:$0xf]
      %v300 = vld [vmem:[%s1 + $0x168] sm:$0xf]
      %v301 = vld [vmem:[%s1 + $0x16c] sm:$0xf]
      %v302 = vld [vmem:[%s1 + $0x170] sm:$0xf]
      %v303 = vld [vmem:[%s1 + $0x174] sm:$0xf]
      %v304 = vld [vmem:[%s1 + $0x178] sm:$0xf]
      %v305 = vld [vmem:[%s1 + $0x17c] sm:$0xf]
      %v306 = vld [vmem:[%s1 + $0x180] sm:$0xf]
      %v307 = vld [vmem:[%s1 + $0x184] sm:$0xf]
      %v308 = vld [vmem:[%s1 + $0x188] sm:$0xf]
      %v309 = vld [vmem:[%s1 + $0x18c] sm:$0xf]
      %v310 = vld [vmem:[%s1 + $0x190] sm:$0xf]
      %v311 = vld [vmem:[%s1 + $0x194] sm:$0xf]
      %v312 = vld [vmem:[%s1 + $0x198] sm:$0xf]
      %v313 = vld [vmem:[%s1 + $0x19c] sm:$0xf]
      %v314 = vld [vmem:[%s1 + $0x1a0] sm:$0xf]
      %v315 = vld [vmem:[%s1 + $0x1a4] sm:$0xf]
      %v316 = vld [vmem:[%s1 + $0x1a8] sm:$0xf]
      %v317 = vld [vmem:[%s1 + $0x1ac] sm:$0xf]
      %v318 = vld [vmem:[%s1 + $0x1b0] sm:$0xf]
      %v319 = vld [vmem:[%s1 + $0x1b4] sm:$0xf]
      %v320 = vld [vmem:[%s1 + $0x1b8] sm:$0xf]
      %v321 = vld [vmem:[%s1 + $0x1bc] sm:$0xf]
      %v322 = vld [vmem:[%s1 + $0x1c0] sm:$0xf]
      %v323 = vld [vmem:[%s1 + $0x1c4] sm:$0xf]
      %v324 = vld [vmem:[%s1 + $0x1c8] sm:$0xf]
      %v325 = vld [vmem:[%s1 + $0x1cc] sm:$0xf]
      %v326 = vld [vmem:[%s1 + $0x1d0] sm:$0xf]
      %v327 = vld [vmem:[%s1 + $0x1d4] sm:$0xf]
      %v328 = vld [vmem:[%s1 + $0x1d8] sm:$0xf]
      %v329 = vld [vmem:[%s1 + $0x1dc] sm:$0xf]
      %v330 = vld [vmem:[%s1 + $0x1e0] sm:$0xf]
      %v331 = vld [vmem:[%s1 + $0x1e4] sm:$0xf]
      %v332 = vld [vmem:[%s1 + $0x1e8] sm:$0xf]
      %v333 = vld [vmem:[%s1 + $0x1ec] sm:$0xf]
      %v334 = vld [vmem:[%s1 + $0x1f0] sm:$0xf]
      %v335 = vld [vmem:[%s1 + $0x1f4] sm:$0xf]
      %v336 = vld [vmem:[%s1 + $0x1f8] sm:$0xf]
      %v337 = vld [vmem:[%s1 + $0x1fc] sm:$0xf]
      %v338 = vld [vmem:[%s2] sm:$0x1]
      %v340 = vlaneseq
      %v341 = vshrl.u32 %v340, 7
      %v342 = vsub.s32 0, %v341
      %v343 = vrot.slane %v338, %v342
      %v377 = vunpack.c.l.b16 %v178
      %v378 = vunpack.c.h.b16 %v178
      %v379 = vunpack.c.l.b16 %v179
      %v380 = vunpack.c.h.b16 %v179
      %v381 = vunpack.c.l.b16 %v180
      %v382 = vunpack.c.h.b16 %v180
      %v383 = vunpack.c.l.b16 %v181
      %v384 = vunpack.c.h.b16 %v181
      %v385 = vunpack.c.l.b16 %v182
      %v386 = vunpack.c.h.b16 %v182
      %v387 = vunpack.c.l.b16 %v183
      %v388 = vunpack.c.h.b16 %v183
      %v389 = vunpack.c.l.b16 %v184
      %v390 = vunpack.c.h.b16 %v184
      %v391 = vunpack.c.l.b16 %v185
      %v392 = vunpack.c.h.b16 %v185
      %v393 = vunpack.c.l.b16 %v186
      %v394 = vunpack.c.h.b16 %v186
      %v395 = vunpack.c.l.b16 %v187
      %v396 = vunpack.c.h.b16 %v187
      %v397 = vunpack.c.l.b16 %v188
      %v398 = vunpack.c.h.b16 %v188
      %v399 = vunpack.c.l.b16 %v189
      %v400 = vunpack.c.h.b16 %v189
      %v401 = vunpack.c.l.b16 %v190
      %v402 = vunpack.c.h.b16 %v190
      %v403 = vunpack.c.l.b16 %v191
      %v404 = vunpack.c.h.b16 %v191
      %v405 = vunpack.c.l.b16 %v192
      %v406 = vunpack.c.h.b16 %v192
      %v407 = vunpack.c.l.b16 %v193
      %v408 = vunpack.c.h.b16 %v193
      %v409 = vunpack.c.l.b16 %v194
      %v410 = vunpack.c.h.b16 %v194
      %v411 = vunpack.c.l.b16 %v195
      %v412 = vunpack.c.h.b16 %v195
      %v413 = vunpack.c.l.b16 %v196
      %v414 = vunpack.c.h.b16 %v196
      %v415 = vunpack.c.l.b16 %v197
      %v416 = vunpack.c.h.b16 %v197
      %v417 = vunpack.c.l.b16 %v198
      %v418 = vunpack.c.h.b16 %v198
      %v419 = vunpack.c.l.b16 %v199
      %v420 = vunpack.c.h.b16 %v199
      %v421 = vunpack.c.l.b16 %v200
      %v422 = vunpack.c.h.b16 %v200
      %v423 = vunpack.c.l.b16 %v201
      %v424 = vunpack.c.h.b16 %v201
      %v425 = vunpack.c.l.b16 %v202
      %v426 = vunpack.c.h.b16 %v202
      %v427 = vunpack.c.l.b16 %v203
      %v428 = vunpack.c.h.b16 %v203
      %v429 = vunpack.c.l.b16 %v204
      %v430 = vunpack.c.h.b16 %v204
      %v431 = vunpack.c.l.b16 %v205
      %v432 = vunpack.c.h.b16 %v205
      %v433 = vunpack.c.l.b16 %v206
      %v434 = vunpack.c.h.b16 %v206
      %v435 = vunpack.c.l.b16 %v207
      %v436 = vunpack.c.h.b16 %v207
      %v437 = vunpack.c.l.b16 %v208
      %v438 = vunpack.c.h.b16 %v208
      %v439 = vunpack.c.l.b16 %v209
      %v440 = vunpack.c.h.b16 %v209
      %v441 = vpack.c.b16 %v385, %v377
      %v442 = vpack.c.b16 %v386, %v378
      %v443 = vpack.c.b16 %v387, %v379
      %v444 = vpack.c.b16 %v388, %v380
      %v445 = vpack.c.b16 %v389, %v381
      %v446 = vpack.c.b16 %v390, %v382
      %v447 = vpack.c.b16 %v391, %v383
      %v448 = vpack.c.b16 %v392, %v384
      %v449 = vpack.c.b16 %v401, %v393
      %v450 = vpack.c.b16 %v402, %v394
      %v451 = vpack.c.b16 %v403, %v395
      %v452 = vpack.c.b16 %v404, %v396
      %v453 = vpack.c.b16 %v405, %v397
      %v454 = vpack.c.b16 %v406, %v398
      %v455 = vpack.c.b16 %v407, %v399
      %v456 = vpack.c.b16 %v408, %v400
      %v457 = vpack.c.b16 %v417, %v409
      %v458 = vpack.c.b16 %v418, %v410
      %v459 = vpack.c.b16 %v419, %v411
      %v460 = vpack.c.b16 %v420, %v412
      %v461 = vpack.c.b16 %v421, %v413
      %v462 = vpack.c.b16 %v422, %v414
      %v463 = vpack.c.b16 %v423, %v415
      %v464 = vpack.c.b16 %v424, %v416
      %v465 = vpack.c.b16 %v433, %v425
      %v466 = vpack.c.b16 %v434, %v426
      %v467 = vpack.c.b16 %v435, %v427
      %v468 = vpack.c.b16 %v436, %v428
      %v469 = vpack.c.b16 %v437, %v429
      %v470 = vpack.c.b16 %v438, %v430
      %v471 = vpack.c.b16 %v439, %v431
      %v472 = vpack.c.b16 %v440, %v432
      %v633 = vunpack.c.l.b16 %v210
      %v634 = vunpack.c.l.b16 %v211
      %v635 = vunpack.c.l.b16 %v212
      %v636 = vunpack.c.l.b16 %v213
      %v637 = vunpack.c.l.b16 %v214
      %v638 = vunpack.c.l.b16 %v215
      %v639 = vunpack.c.l.b16 %v216
      %v640 = vunpack.c.l.b16 %v217
      %v641 = vunpack.c.l.b16 %v218
      %v642 = vunpack.c.l.b16 %v219
      %v643 = vunpack.c.l.b16 %v220
      %v644 = vunpack.c.l.b16 %v221
      %v645 = vunpack.c.l.b16 %v222
      %v646 = vunpack.c.l.b16 %v223
      %v647 = vunpack.c.l.b16 %v224
      %v648 = vunpack.c.l.b16 %v225
      %v649 = vunpack.c.l.b16 %v226
      %v650 = vunpack.c.l.b16 %v227
      %v651 = vunpack.c.l.b16 %v228
      %v652 = vunpack.c.l.b16 %v229
      %v653 = vunpack.c.l.b16 %v230
      %v654 = vunpack.c.l.b16 %v231
      %v655 = vunpack.c.l.b16 %v232
      %v656 = vunpack.c.l.b16 %v233
      %v657 = vunpack.c.l.b16 %v234
      %v658 = vunpack.c.l.b16 %v235
      %v659 = vunpack.c.l.b16 %v236
      %v660 = vunpack.c.l.b16 %v237
      %v661 = vunpack.c.l.b16 %v238
      %v662 = vunpack.c.l.b16 %v239
      %v663 = vunpack.c.l.b16 %v240
      %v664 = vunpack.c.l.b16 %v241
      %v665 = vunpack.c.l.b16 %v242
      %v666 = vunpack.c.l.b16 %v243
      %v667 = vunpack.c.l.b16 %v244
      %v668 = vunpack.c.l.b16 %v245
      %v669 = vunpack.c.l.b16 %v246
      %v670 = vunpack.c.l.b16 %v247
      %v671 = vunpack.c.l.b16 %v248
      %v672 = vunpack.c.l.b16 %v249
      %v673 = vunpack.c.l.b16 %v250
      %v674 = vunpack.c.l.b16 %v251
      %v675 = vunpack.c.l.b16 %v252
      %v676 = vunpack.c.l.b16 %v253
      %v677 = vunpack.c.l.b16 %v254
      %v678 = vunpack.c.l.b16 %v255
      %v679 = vunpack.c.l.b16 %v256
      %v680 = vunpack.c.l.b16 %v257
      %v681 = vunpack.c.l.b16 %v258
      %v682 = vunpack.c.l.b16 %v259
      %v683 = vunpack.c.l.b16 %v260
      %v684 = vunpack.c.l.b16 %v261
      %v685 = vunpack.c.l.b16 %v262
      %v686 = vunpack.c.l.b16 %v263
      %v687 = vunpack.c.l.b16 %v264
      %v688 = vunpack.c.l.b16 %v265
      %v689 = vunpack.c.l.b16 %v266
      %v690 = vunpack.c.l.b16 %v267
      %v691 = vunpack.c.l.b16 %v268
      %v692 = vunpack.c.l.b16 %v269
      %v693 = vunpack.c.l.b16 %v270
      %v694 = vunpack.c.l.b16 %v271
      %v695 = vunpack.c.l.b16 %v272
      %v696 = vunpack.c.l.b16 %v273
      %v697 = vunpack.c.l.b16 %v274
      %v698 = vunpack.c.l.b16 %v275
      %v699 = vunpack.c.l.b16 %v276
      %v700 = vunpack.c.l.b16 %v277
      %v701 = vunpack.c.l.b16 %v278
      %v702 = vunpack.c.l.b16 %v279
      %v703 = vunpack.c.l.b16 %v280
      %v704 = vunpack.c.l.b16 %v281
      %v705 = vunpack.c.l.b16 %v282
      %v706 = vunpack.c.l.b16 %v283
      %v707 = vunpack.c.l.b16 %v284
      %v708 = vunpack.c.l.b16 %v285
      %v709 = vunpack.c.l.b16 %v286
      %v710 = vunpack.c.l.b16 %v287
      %v711 = vunpack.c.l.b16 %v288
      %v712 = vunpack.c.l.b16 %v289
      %v713 = vunpack.c.l.b16 %v290
      %v714 = vunpack.c.l.b16 %v291
      %v715 = vunpack.c.l.b16 %v292
      %v716 = vunpack.c.l.b16 %v293
      %v717 = vunpack.c.l.b16 %v294
      %v718 = vunpack.c.l.b16 %v295
      %v719 = vunpack.c.l.b16 %v296
      %v720 = vunpack.c.l.b16 %v297
      %v721 = vunpack.c.l.b16 %v298
      %v722 = vunpack.c.l.b16 %v299
      %v723 = vunpack.c.l.b16 %v300
      %v724 = vunpack.c.l.b16 %v301
      %v725 = vunpack.c.l.b16 %v302
      %v726 = vunpack.c.l.b16 %v303
      %v727 = vunpack.c.l.b16 %v304
      %v728 = vunpack.c.l.b16 %v305
      %v729 = vunpack.c.l.b16 %v306
      %v730 = vunpack.c.l.b16 %v307
      %v731 = vunpack.c.l.b16 %v308
      %v732 = vunpack.c.l.b16 %v309
      %v733 = vunpack.c.l.b16 %v310
      %v734 = vunpack.c.l.b16 %v311
      %v735 = vunpack.c.l.b16 %v312
      %v736 = vunpack.c.l.b16 %v313
      %v737 = vunpack.c.l.b16 %v314
      %v738 = vunpack.c.l.b16 %v315
      %v739 = vunpack.c.l.b16 %v316
      %v740 = vunpack.c.l.b16 %v317
      %v741 = vunpack.c.l.b16 %v318
      %v742 = vunpack.c.l.b16 %v319
      %v743 = vunpack.c.l.b16 %v320
      %v744 = vunpack.c.l.b16 %v321
      %v745 = vunpack.c.l.b16 %v322
      %v746 = vunpack.c.l.b16 %v323
      %v747 = vunpack.c.l.b16 %v324
      %v748 = vunpack.c.l.b16 %v325
      %v749 = vunpack.c.l.b16 %v326
      %v750 = vunpack.c.l.b16 %v327
      %v751 = vunpack.c.l.b16 %v328
      %v752 = vunpack.c.l.b16 %v329
      %v753 = vunpack.c.l.b16 %v330
      %v754 = vunpack.c.l.b16 %v331
      %v755 = vunpack.c.l.b16 %v332
      %v756 = vunpack.c.l.b16 %v333
      %v757 = vunpack.c.l.b16 %v334
      %v758 = vunpack.c.l.b16 %v335
      %v759 = vunpack.c.l.b16 %v336
      %v760 = vunpack.c.l.b16 %v337
      %v761 = vpack.c.b16 %v634, %v633
      %v762 = vpack.c.b16 %v636, %v635
      %v763 = vpack.c.b16 %v638, %v637
      %v764 = vpack.c.b16 %v640, %v639
      %v765 = vpack.c.b16 %v642, %v641
      %v766 = vpack.c.b16 %v644, %v643
      %v767 = vpack.c.b16 %v646, %v645
      %v768 = vpack.c.b16 %v648, %v647
      %v769 = vpack.c.b16 %v650, %v649
      %v770 = vpack.c.b16 %v652, %v651
      %v771 = vpack.c.b16 %v654, %v653
      %v772 = vpack.c.b16 %v656, %v655
      %v773 = vpack.c.b16 %v658, %v657
      %v774 = vpack.c.b16 %v660, %v659
      %v775 = vpack.c.b16 %v662, %v661
      %v776 = vpack.c.b16 %v664, %v663
      %v777 = vpack.c.b16 %v666, %v665
      %v778 = vpack.c.b16 %v668, %v667
      %v779 = vpack.c.b16 %v670, %v669
      %v780 = vpack.c.b16 %v672, %v671
      %v781 = vpack.c.b16 %v674, %v673
      %v782 = vpack.c.b16 %v676, %v675
      %v783 = vpack.c.b16 %v678, %v677
      %v784 = vpack.c.b16 %v680, %v679
      %v785 = vpack.c.b16 %v682, %v681
      %v786 = vpack.c.b16 %v684, %v683
      %v787 = vpack.c.b16 %v686, %v685
      %v788 = vpack.c.b16 %v688, %v687
      %v789 = vpack.c.b16 %v690, %v689
      %v790 = vpack.c.b16 %v692, %v691
      %v791 = vpack.c.b16 %v694, %v693
      %v792 = vpack.c.b16 %v696, %v695
      %v793 = vpack.c.b16 %v698, %v697
      %v794 = vpack.c.b16 %v700, %v699
      %v795 = vpack.c.b16 %v702, %v701
      %v796 = vpack.c.b16 %v704, %v703
      %v797 = vpack.c.b16 %v706, %v705
      %v798 = vpack.c.b16 %v708, %v707
      %v799 = vpack.c.b16 %v710, %v709
      %v800 = vpack.c.b16 %v712, %v711
      %v801 = vpack.c.b16 %v714, %v713
      %v802 = vpack.c.b16 %v716, %v715
      %v803 = vpack.c.b16 %v718, %v717
      %v804 = vpack.c.b16 %v720, %v719
      %v805 = vpack.c.b16 %v722, %v721
      %v806 = vpack.c.b16 %v724, %v723
      %v807 = vpack.c.b16 %v726, %v725
      %v808 = vpack.c.b16 %v728, %v727
      %v809 = vpack.c.b16 %v730, %v729
      %v810 = vpack.c.b16 %v732, %v731
      %v811 = vpack.c.b16 %v734, %v733
      %v812 = vpack.c.b16 %v736, %v735
      %v813 = vpack.c.b16 %v738, %v737
      %v814 = vpack.c.b16 %v740, %v739
      %v815 = vpack.c.b16 %v742, %v741
      %v816 = vpack.c.b16 %v744, %v743
      %v817 = vpack.c.b16 %v746, %v745
      %v818 = vpack.c.b16 %v748, %v747
      %v819 = vpack.c.b16 %v750, %v749
      %v820 = vpack.c.b16 %v752, %v751
      %v821 = vpack.c.b16 %v754, %v753
      %v822 = vpack.c.b16 %v756, %v755
      %v823 = vpack.c.b16 %v758, %v757
      %v824 = vpack.c.b16 %v760, %v759
      %889 = vmatprep.subr.bf16.mxu0 0
      %890 = vmatpush1.bf16.msra.mxu0 %v761
      %891 = vmatprep.subr.bf16.mxu0 0
      %892 = vmatpush1.bf16.msra.mxu0 %v762
      %893 = vmatprep.subr.bf16.mxu0 0
      %894 = vmatpush1.bf16.msra.mxu0 %v763
      %895 = vmatprep.subr.bf16.mxu0 0
      %896 = vmatpush1.bf16.msra.mxu0 %v764
      %897 = vmatprep.subr.bf16.mxu0 0
      %898 = vmatpush1.bf16.msra.mxu0 %v765
      %899 = vmatprep.subr.bf16.mxu0 0
      %900 = vmatpush1.bf16.msra.mxu0 %v766
      %901 = vmatprep.subr.bf16.mxu0 0
      %902 = vmatpush1.bf16.msra.mxu0 %v767
      %903 = vmatprep.subr.bf16.mxu0 0
      %904 = vmatpush1.bf16.msra.mxu0 %v768
      %905 = vmatprep.subr.bf16.mxu0 0
      %906 = vmatpush1.bf16.msra.mxu0 %v769
      %907 = vmatprep.subr.bf16.mxu0 0
      %908 = vmatpush1.bf16.msra.mxu0 %v770
      %909 = vmatprep.subr.bf16.mxu0 0
      %910 = vmatpush1.bf16.msra.mxu0 %v771
      %911 = vmatprep.subr.bf16.mxu0 0
      %912 = vmatpush1.bf16.msra.mxu0 %v772
      %913 = vmatprep.subr.bf16.mxu0 0
      %914 = vmatpush1.bf16.msra.mxu0 %v773
      %915 = vmatprep.subr.bf16.mxu0 0
      %916 = vmatpush1.bf16.msra.mxu0 %v774
      %917 = vmatprep.subr.bf16.mxu0 0
      %918 = vmatpush1.bf16.msra.mxu0 %v775
      %919 = vmatprep.subr.bf16.mxu0 0
      %920 = vmatpush1.bf16.msra.mxu0 %v776
      %921 = vmatprep.mubr.bf16.mxu0 %v442
      %922 = vmatmul.mubr.bf16.gmra.mrb[0].mxu0 %v441
      %v923 = vpop.f32.mrb[0].mxu0
      %v924 = vadd.f32 %v343, %v923
      %v925 = vpop.f32.mrb[0].mxu0
      %v926 = vpop.f32.mrb[0].mxu0
      %v927 = vadd.f32 %v343, %v926
      %v928 = vpop.f32.mrb[0].mxu0
      %929 = vmatprep.mubr.bf16.mxu0 %v450
      %930 = vmatmul.mubr.bf16.gmra.mrb[0].mxu0 %v449
      %v931 = vpop.f32.mrb[0].mxu0
      %v932 = vadd.f32 %v343, %v931
      %v933 = vpop.f32.mrb[0].mxu0
      %v934 = vpop.f32.mrb[0].mxu0
      %v935 = vadd.f32 %v343, %v934
      %v936 = vpop.f32.mrb[0].mxu0
      %937 = vmatprep.mubr.bf16.mxu0 %v458
      %938 = vmatmul.mubr.bf16.gmra.mrb[0].mxu0 %v457
      %v939 = vpop.f32.mrb[0].mxu0
      %v940 = vadd.f32 %v343, %v939
      %v941 = vpop.f32.mrb[0].mxu0
      %v942 = vpop.f32.mrb[0].mxu0
      %v943 = vadd.f32 %v343, %v942
      %v944 = vpop.f32.mrb[0].mxu0
      %945 = vmatprep.mubr.bf16.mxu0 %v466
      %946 = vmatmul.mubr.bf16.gmra.mrb[0].mxu0 %v465
      %v947 = vpop.f32.mrb[0].mxu0
      %v948 = vadd.f32 %v343, %v947
      %v949 = vpop.f32.mrb[0].mxu0
      %v950 = vpop.f32.mrb[0].mxu0
      %v951 = vadd.f32 %v343, %v950
      %v952 = vpop.f32.mrb[0].mxu0
      %953 = vdwg.mxu0
      %954 = vmatprep.subr.bf16.mxu0 0
      %955 = vmatpush1.bf16.msra.mxu0 %v777
      %956 = vmatprep.subr.bf16.mxu0 0
      %957 = vmatpush1.bf16.msra.mxu0 %v778
      %958 = vmatprep.subr.bf16.mxu0 0
      %959 = vmatpush1.bf16.msra.mxu0 %v779
      %960 = vmatprep.subr.bf16.mxu0 0
      %961 = vmatpush1.bf16.msra.mxu0 %v780
      %962 = vmatprep.subr.bf16.mxu0 0
      %963 = vmatpush1.bf16.msra.mxu0 %v781
      %964 = vmatprep.subr.bf16.mxu0 0
      %965 = vmatpush1.bf16.msra.mxu0 %v782
      %966 = vmatprep.subr.bf16.mxu0 0
      %967 = vmatpush1.bf16.msra.mxu0 %v783
      %968 = vmatprep.subr.bf16.mxu0 0
      %969 = vmatpush1.bf16.msra.mxu0 %v784
      %970 = vmatprep.subr.bf16.mxu0 0
      %971 = vmatpush1.bf16.msra.mxu0 %v785
      %972 = vmatprep.subr.bf16.mxu0 0
      %973 = vmatpush1.bf16.msra.mxu0 %v786
      %974 = vmatprep.subr.bf16.mxu0 0
      %975 = vmatpush1.bf16.msra.mxu0 %v787
      %976 = vmatprep.subr.bf16.mxu0 0
      %977 = vmatpush1.bf16.msra.mxu0 %v788
      %978 = vmatprep.subr.bf16.mxu0 0
      %979 = vmatpush1.bf16.msra.mxu0 %v789
      %980 = vmatprep.subr.bf16.mxu0 0
      %981 = vmatpush1.bf16.msra.mxu0 %v790
      %982 = vmatprep.subr.bf16.mxu0 0
      %983 = vmatpush1.bf16.msra.mxu0 %v791
      %984 = vmatprep.subr.bf16.mxu0 0
      %985 = vmatpush1.bf16.msra.mxu0 %v792
      %986 = vmatprep.mubr.bf16.mxu0 %v444
      %987 = vmatmul.mubr.bf16.gmra.mrb[0].mxu0 %v443
      %v988 = vpop.f32.mrb[0].mxu0
      %v989 = vadd.f32 %v924, %v988
      %v990 = vpop.f32.mrb[0].mxu0
      %v991 = vpop.f32.mrb[0].mxu0
      %v992 = vadd.f32 %v927, %v991
      %v993 = vpop.f32.mrb[0].mxu0
      %994 = vmatprep.mubr.bf16.mxu0 %v452
      %995 = vmatmul.mubr.bf16.gmra.mrb[0].mxu0 %v451
      %v996 = vpop.f32.mrb[0].mxu0
      %v997 = vadd.f32 %v932, %v996
      %v998 = vpop.f32.mrb[0].mxu0
      %v999 = vpop.f32.mrb[0].mxu0
      %v1000 = vadd.f32 %v935, %v999
      %v1001 = vpop.f32.mrb[0].mxu0
      %1002 = vmatprep.mubr.bf16.mxu0 %v460
      %1003 = vmatmul.mubr.bf16.gmra.mrb[0].mxu0 %v459
      %v1004 = vpop.f32.mrb[0].mxu0
      %v1005 = vadd.f32 %v940, %v1004
      %v1006 = vpop.f32.mrb[0].mxu0
      %v1007 = vpop.f32.mrb[0].mxu0
      %v1008 = vadd.f32 %v943, %v1007
      %v1009 = vpop.f32.mrb[0].mxu0
      %1010 = vmatprep.mubr.bf16.mxu0 %v468
      %1011 = vmatmul.mubr.bf16.gmra.mrb[0].mxu0 %v467
      %v1012 = vpop.f32.mrb[0].mxu0
      %v1013 = vadd.f32 %v948, %v1012
      %v1014 = vpop.f32.mrb[0].mxu0
      %v1015 = vpop.f32.mrb[0].mxu0
      %v1016 = vadd.f32 %v951, %v1015
      %v1017 = vpop.f32.mrb[0].mxu0
      %1018 = vdwg.mxu0
      %1019 = vmatprep.subr.bf16.mxu0 0
      %1020 = vmatpush1.bf16.msra.mxu0 %v793
      %1021 = vmatprep.subr.bf16.mxu0 0
      %1022 = vmatpush1.bf16.msra.mxu0 %v794
      %1023 = vmatprep.subr.bf16.mxu0 0
      %1024 = vmatpush1.bf16.msra.mxu0 %v795
      %1025 = vmatprep.subr.bf16.mxu0 0
      %1026 = vmatpush1.bf16.msra.mxu0 %v796
      %1027 = vmatprep.subr.bf16.mxu0 0
      %1028 = vmatpush1.bf16.msra.mxu0 %v797
      %1029 = vmatprep.subr.bf16.mxu0 0
      %1030 = vmatpush1.bf16.msra.mxu0 %v798
      %1031 = vmatprep.subr.bf16.mxu0 0
      %1032 = vmatpush1.bf16.msra.mxu0 %v799
      %1033 = vmatprep.subr.bf16.mxu0 0
      %1034 = vmatpush1.bf16.msra.mxu0 %v800
      %1035 = vmatprep.subr.bf16.mxu0 0
      %1036 = vmatpush1.bf16.msra.mxu0 %v801
      %1037 = vmatprep.subr.bf16.mxu0 0
      %1038 = vmatpush1.bf16.msra.mxu0 %v802
      %1039 = vmatprep.subr.bf16.mxu0 0
      %1040 = vmatpush1.bf16.msra.mxu0 %v803
      %1041 = vmatprep.subr.bf16.mxu0 0
      %1042 = vmatpush1.bf16.msra.mxu0 %v804
      %1043 = vmatprep.subr.bf16.mxu0 0
      %1044 = vmatpush1.bf16.msra.mxu0 %v805
      %1045 = vmatprep.subr.bf16.mxu0 0
      %1046 = vmatpush1.bf16.msra.mxu0 %v806
      %1047 = vmatprep.subr.bf16.mxu0 0
      %1048 = vmatpush1.bf16.msra.mxu0 %v807
      %1049 = vmatprep.subr.bf16.mxu0 0
      %1050 = vmatpush1.bf16.msra.mxu0 %v808
      %1051 = vmatprep.mubr.bf16.mxu0 %v446
      %1052 = vmatmul.mubr.bf16.gmra.mrb[0].mxu0 %v445
      %v1053 = vpop.f32.mrb[0].mxu0
      %v1054 = vadd.f32 %v989, %v1053
      %v1055 = vpop.f32.mrb[0].mxu0
      %v1056 = vpop.f32.mrb[0].mxu0
      %v1057 = vadd.f32 %v992, %v1056
      %v1058 = vpop.f32.mrb[0].mxu0
      %1059 = vmatprep.mubr.bf16.mxu0 %v454
      %1060 = vmatmul.mubr.bf16.gmra.mrb[0].mxu0 %v453
      %v1061 = vpop.f32.mrb[0].mxu0
      %v1062 = vadd.f32 %v997, %v1061
      %v1063 = vpop.f32.mrb[0].mxu0
      %v1064 = vpop.f32.mrb[0].mxu0
      %v1065 = vadd.f32 %v1000, %v1064
      %v1066 = vpop.f32.mrb[0].mxu0
      %1067 = vmatprep.mubr.bf16.mxu0 %v462
      %1068 = vmatmul.mubr.bf16.gmra.mrb[0].mxu0 %v461
      %v1069 = vpop.f32.mrb[0].mxu0
      %v1070 = vadd.f32 %v1005, %v1069
      %v1071 = vpop.f32.mrb[0].mxu0
      %v1072 = vpop.f32.mrb[0].mxu0
      %v1073 = vadd.f32 %v1008, %v1072
      %v1074 = vpop.f32.mrb[0].mxu0
      %1075 = vmatprep.mubr.bf16.mxu0 %v470
      %1076 = vmatmul.mubr.bf16.gmra.mrb[0].mxu0 %v469
      %v1077 = vpop.f32.mrb[0].mxu0
      %v1078 = vadd.f32 %v1013, %v1077
      %v1079 = vpop.f32.mrb[0].mxu0
      %v1080 = vpop.f32.mrb[0].mxu0
      %v1081 = vadd.f32 %v1016, %v1080
      %v1082 = vpop.f32.mrb[0].mxu0
      %1083 = vdwg.mxu0
      %1084 = vmatprep.subr.bf16.mxu0 0
      %1085 = vmatpush1.bf16.msra.mxu0 %v809
      %1086 = vmatprep.subr.bf16.mxu0 0
      %1087 = vmatpush1.bf16.msra.mxu0 %v810
      %1088 = vmatprep.subr.bf16.mxu0 0
      %1089 = vmatpush1.bf16.msra.mxu0 %v811
      %1090 = vmatprep.subr.bf16.mxu0 0
      %1091 = vmatpush1.bf16.msra.mxu0 %v812
      %1092 = vmatprep.subr.bf16.mxu0 0
      %1093 = vmatpush1.bf16.msra.mxu0 %v813
      %1094 = vmatprep.subr.bf16.mxu0 0
      %1095 = vmatpush1.bf16.msra.mxu0 %v814
      %1096 = vmatprep.subr.bf16.mxu0 0
      %1097 = vmatpush1.bf16.msra.mxu0 %v815
      %1098 = vmatprep.subr.bf16.mxu0 0
      %1099 = vmatpush1.bf16.msra.mxu0 %v816
      %1100 = vmatprep.subr.bf16.mxu0 0
      %1101 = vmatpush1.bf16.msra.mxu0 %v817
      %1102 = vmatprep.subr.bf16.mxu0 0
      %1103 = vmatpush1.bf16.msra.mxu0 %v818
      %1104 = vmatprep.subr.bf16.mxu0 0
      %1105 = vmatpush1.bf16.msra.mxu0 %v819
      %1106 = vmatprep.subr.bf16.mxu0 0
      %1107 = vmatpush1.bf16.msra.mxu0 %v820
      %1108 = vmatprep.subr.bf16.mxu0 0
      %1109 = vmatpush1.bf16.msra.mxu0 %v821
      %1110 = vmatprep.subr.bf16.mxu0 0
      %1111 = vmatpush1.bf16.msra.mxu0 %v822
      %1112 = vmatprep.subr.bf16.mxu0 0
      %1113 = vmatpush1.bf16.msra.mxu0 %v823
      %1114 = vmatprep.subr.bf16.mxu0 0
      %1115 = vmatpush1.bf16.msra.mxu0 %v824
      %1116 = vmatprep.mubr.bf16.mxu0 %v448
      %1117 = vmatmul.mubr.bf16.gmra.mrb[0].mxu0 %v447
      %v1118 = vpop.f32.mrb[0].mxu0
      %v1119 = vadd.f32 %v1054, %v1118
      %v1120 = vpop.f32.mrb[0].mxu0
      %v1121 = vpop.f32.mrb[0].mxu0
      %v1122 = vadd.f32 %v1057, %v1121
      %v1123 = vpop.f32.mrb[0].mxu0
      %1124 = vmatprep.mubr.bf16.mxu0 %v456
      %1125 = vmatmul.mubr.bf16.gmra.mrb[0].mxu0 %v455
      %v1126 = vpop.f32.mrb[0].mxu0
      %v1127 = vadd.f32 %v1062, %v1126
      %v1128 = vpop.f32.mrb[0].mxu0
      %v1129 = vpop.f32.mrb[0].mxu0
      %v1130 = vadd.f32 %v1065, %v1129
      %v1131 = vpop.f32.mrb[0].mxu0
      %1132 = vmatprep.mubr.bf16.mxu0 %v464
      %1133 = vmatmul.mubr.bf16.gmra.mrb[0].mxu0 %v463
      %v1134 = vpop.f32.mrb[0].mxu0
      %v1135 = vadd.f32 %v1070, %v1134
      %v1136 = vpop.f32.mrb[0].mxu0
      %v1137 = vpop.f32.mrb[0].mxu0
      %v1138 = vadd.f32 %v1073, %v1137
      %v1139 = vpop.f32.mrb[0].mxu0
      %1140 = vmatprep.mubr.bf16.mxu0 %v472
      %1141 = vmatmul.mubr.bf16.gmra.mrb[0].mxu0 %v471
      %v1142 = vpop.f32.mrb[0].mxu0
      %v1143 = vadd.f32 %v1078, %v1142
      %v1144 = vpop.f32.mrb[0].mxu0
      %v1145 = vpop.f32.mrb[0].mxu0
      %v1146 = vadd.f32 %v1081, %v1145
      %v1147 = vpop.f32.mrb[0].mxu0
      %1148 = vdwg.mxu0
      %v1149 = vmax.f32 %v1119, 0.0
      %v1150 = vmax.f32 %v1122, 0.0
      %v1151 = vmax.f32 %v1127, 0.0
      %v1152 = vmax.f32 %v1130, 0.0
      %v1153 = vmax.f32 %v1135, 0.0
      %v1154 = vmax.f32 %v1138, 0.0
      %v1155 = vmax.f32 %v1143, 0.0
      %v1156 = vmax.f32 %v1146, 0.0
      %v1157 = vpack.c.bf16 %v1150, %v1149
      %v1158 = vpack.c.bf16 %v1152, %v1151
      %v1159 = vpack.c.bf16 %v1154, %v1153
      %v1160 = vpack.c.bf16 %v1156, %v1155
      %v1165 = vunpack.c.l.b16 %v1157
      %v1166 = vunpack.c.h.b16 %v1157
      %v1167 = vunpack.c.l.b16 %v1158
      %v1168 = vunpack.c.h.b16 %v1158
      %v1169 = vunpack.c.l.b16 %v1159
      %v1170 = vunpack.c.h.b16 %v1159
      %v1171 = vunpack.c.l.b16 %v1160
      %v1172 = vunpack.c.h.b16 %v1160
      %v1173 = vpack.c.b16 %v1165, %v1165
      %v1174 = vpack.c.b16 %v1166, %v1166
      %v1175 = vpack.c.b16 %v1167, %v1167
      %v1176 = vpack.c.b16 %v1168, %v1168
      %v1177 = vpack.c.b16 %v1169, %v1169
      %v1178 = vpack.c.b16 %v1170, %v1170
      %v1179 = vpack.c.b16 %v1171, %v1171
      %v1180 = vpack.c.b16 %v1172, %v1172
      %1189 = vst [vmem:[%s175] sm:$0xf] %v1173
      %1190 = vst [vmem:[%s175 + $0x4] sm:$0xf] %v1174
      %1191 = vst [vmem:[%s175 + $0x8] sm:$0xf] %v1175
      %1192 = vst [vmem:[%s175 + $0xc] sm:$0xf] %v1176
      %1193 = vst [vmem:[%s175 + $0x10] sm:$0xf] %v1177
      %1194 = vst [vmem:[%s175 + $0x14] sm:$0xf] %v1178
      %1195 = vst [vmem:[%s175 + $0x18] sm:$0xf] %v1179
      %1196 = vst [vmem:[%s175 + $0x1c] sm:$0xf] %v1180
      %s1197 = smul.u32 8, %s14
      %p1198 = scmp.lt.s32.totalorder %s1197, 15
      %s1199 = scalar_select %p1198, %s1197, 15
      %s1200 = smul.addr %s1199, 4
      %s1201 = scalar_lea.vmem %s3, %s1200
      // Predicated region
      $region33: #{deepmind_encoder_forward.4} parent=31 // pred_check
        %p1202 = pneg %p100
      $region34: #{deepmind_encoder_forward.4} parent=31 // pred_check_branch
        %1204 = sbr.rel (%p1202) target = $region36
      $region35: #{deepmind_encoder_forward.4} parent=31 // pred_region
        %s1205 = smul.u32 8, %s14
      $region36: #{deepmind_encoder_forward.4} parent=31 // pred_fallthru
        _
    $region32: #{deepmind_encoder_forward.4} parent=5 // pred_fallthru
      _
    %p1206 = scmp.le.s32.totalorder 2, %s9
    // Predicated region
    $region37: #{deepmind_encoder_forward.4} parent=5 // pred_check
      %p1207 = pneg %p1206
    $region38: #{deepmind_encoder_forward.4} parent=5 // pred_check_branch
      %1209 = sbr.rel (%p1207) target = $region40
    $region39: #{deepmind_encoder_forward.4} parent=5 // pred_region
      %s1210 = ssub.s32 %s9, 2
      // Predicated region
      $region41: #{deepmind_encoder_forward.4} parent=39 // pred_check
        %p1211 = pneg %p106
      $region42: #{deepmind_encoder_forward.4} parent=39 // pred_check_branch
        %1213 = sbr.rel (%p1211) target = $region44
      $region43: #{deepmind_encoder_forward.4} parent=39 // pred_region
        %s1214 = smul.u32 8, %s15
        %p1215 = scmp.lt.s32.totalorder %s1214, 15
        %s1216 = scalar_select %p1215, %s1214, 15
        %s1217 = smul.addr %s1216, 4
        %s1218 = scalar_lea.vmem %s3, %s1217
      $region44: #{deepmind_encoder_forward.4} parent=39 // pred_fallthru
        _
    $region40: #{deepmind_encoder_forward.4} parent=5 // pred_fallthru
      _
  $region6: #{deepmind_encoder_forward.4} parent=0 // loop_footer
    %s13 = sadd.s32 1, %s9
  $region7: #{deepmind_encoder_forward.4} parent=0 // loop_footer_branch
    %8 = sbr.rel target = $region3
  $region8: #{deepmind_encoder_forward.4} parent=0 // loop_exit
    _

// kernel: deepmind_encoder_forward.5
$region0: #{deepmind_encoder_forward.5}
  #allocation0 [shape = 'u32[]', space=smem, size = 0x4, offset = 0x4, fixed_abs, tag = 'smem constant byte address 0x4 - core index']
  #allocation1 [shape = 'u32[144,128]{1,0:T(1,128)}', space=vmem, size = 0x12000, scoped, tag = 'internal scratch']
  #allocation2 [shape = 'f32[10,24,128]{2,1,0:T(8,128)}', space=vmem, size = 0x1e000, scoped, tag = 'scratch operand']
  %s0 = inlined_call_operand.vmem [shape: bf16[2,8,8,128], index: 0, kind: input, shape index: {}]
  %s1 = inlined_call_operand.vmem [shape: bf16[1152,128], index: 1, kind: input, shape index: {}]
  %s2 = inlined_call_operand.vmem [shape: f32[1,128], index: 2, kind: input, shape index: {}]
  %s3 = inlined_call_operand.vmem [shape: bf16[1152,32], index: 3, kind: input, shape index: {}]
  %s4 = inlined_call_operand.vmem [shape: f32[1,32], index: 4, kind: input, shape index: {}]
  %s5 = inlined_call_operand.vmem [shape: bf16[32,128], index: 5, kind: input, shape index: {}]
  %s6 = inlined_call_operand.vmem [shape: f32[1,128], index: 6, kind: input, shape index: {}]
  %s7 = inlined_call_operand.vmem [shape: bf16[1152,32], index: 7, kind: input, shape index: {}]
  %s8 = inlined_call_operand.vmem [shape: f32[1,32], index: 8, kind: input, shape index: {}]
  %s9 = inlined_call_operand.vmem [shape: bf16[32,128], index: 9, kind: input, shape index: {}]
  %s10 = inlined_call_operand.vmem [shape: f32[1,128], index: 10, kind: input, shape index: {}]
  %s11 = inlined_call_operand.hbm [shape: f32[2,8,8,128], index: 11, kind: output, shape index: {}]
  %s12 = sld [smem:[#allocation0]]
  $region77: #{deepmind_encoder_forward.5} parent=0
    _
  %s14 = ssub.s32 1, %s12
  %s15 = scalar_select 0, %s14, %s12
  $region1: #{deepmind_encoder_forward.5} parent=0
    #allocation3 [shape = 'u8[65536]{0}', space=vmem, size = 0x10000, scoped, tag = 'output window, operand 0']
    #allocation4 [shape = 's32[2]{0}', space=sflag, size = 0x8, scoped, tag = 'scoped memory for deepmind_encoder_forward.5']
    %16 = vsyncpa [#allocation4], 0
    %s17 = scalar_lea.sflag [#allocation4], 1
    %18 = vsyncpa %s17, 0
    loop: start=0, step=1, limit=4
    $region2: #{deepmind_encoder_forward.5} parent=1 // loop_pre_header
      _
    $region3: #{deepmind_encoder_forward.5} parent=1 // loop_header
      %s20 = sphi 0, %s24
      %p21 = scmp.ge.s32.totalorder %s20, 4
      %s30 = sphi 0, %s32
      %s33 = sphi 0, %s30
      %s34 = sphi 0, %s33
      %s50 = sphi 0, %s34
      %s54 = sphi 0, %s54
      %s56 = sphi 0, %s54
      %s57 = sphi 0, %s56
      %s71 = sphi 0, %s57
      %s75 = sphi 0, %s75
      %s77 = sphi 0, %s75
      %s78 = sphi 0, %s77
      %s92 = sphi 0, %s78
      %s96 = sphi 0, %s96
      %s98 = sphi 0, %s96
      %s99 = sphi 0, %s98
      %s113 = sphi 0, %s99
      %s117 = sphi 0, %s117
      %s119 = sphi 0, %s117
      %s120 = sphi 0, %s119
      %s134 = sphi 0, %s120
      %s138 = sphi 0, %s138
      %s140 = sphi 0, %s138
      %s141 = sphi 0, %s140
      %s155 = sphi 0, %s141
      %s159 = sphi 0, %s159
      %s161 = sphi 0, %s159
      %s162 = sphi 0, %s161
      %s176 = sphi 0, %s162
      %s180 = sphi 0, %s180
      %s182 = sphi 0, %s180
      %s183 = sphi 0, %s182
      %s197 = sphi 0, %s183
      %s201 = sphi 0, %s201
      %s203 = sphi 0, %s201
      %s204 = sphi 0, %s203
      %s218 = sphi 0, %s204
      %s222 = sphi 0, %s222
      %s224 = sphi 0, %s222
      %s225 = sphi 0, %s224
      %s239 = sphi 0, %s225
      %s243 = sphi 0, %s243
      %s245 = sphi 0, %s243
      %s246 = sphi 0, %s245
      %s260 = sphi 0, %s246
      %s266 = sphi 0, %s268
      %s269 = sphi 0, %s266
      %s270 = sphi 0, %s269
      %s286 = sphi 0, %s270
    $region4: #{deepmind_encoder_forward.5} parent=1 // loop_header_branch
      %23 = sbr.rel (%p21) target = $region8
    $region5: #{deepmind_encoder_forward.5} parent=1 // loop_body
      %s25 = ssub.s32 %s20, 1
      %s26 = ssub.s32 %s20, 2
      %s27 = sadd.s32 %s20, 1
      %s28 = ssub.s32 %s20, %s27
      %p29 = scmp.eq.s32.totalorder %s28, 0
      %s31 = sadd.s32 %s30, 1
      %s32 = scalar_select %p29, %s30, %s31
      %p35 = pneg %p29
      %p36 = scmp.eq.s32.totalorder %s20, 1
      %p37 = por %p35, %p36
      %p38 = scmp.ne.s32.totalorder %s30, %s33
      %p39 = scmp.eq.s32.totalorder %s20, 0
      %p40 = por %p38, %p39
      %p41 = scmp.ne.s32.totalorder %s30, %s33
      %p42 = scmp.eq.s32.totalorder %s25, 1
      %p43 = por %p41, %p42
      %p44 = scmp.ne.s32.totalorder %s33, %s34
      %p45 = scmp.eq.s32.totalorder %s25, 0
      %p46 = por %p44, %p45
      %p47 = scmp.ne.s32.totalorder %s33, %s34
      %p48 = scmp.eq.s32.totalorder %s26, 1
      %p49 = por %p47, %p48
      %p51 = scmp.ne.s32.totalorder %s34, %s50
      %p52 = scmp.eq.s32.totalorder %s26, 0
      %p53 = por %p51, %p52
      %s55 = sadd.s32 %s54, 1
      %p58 = scmp.eq.s32.totalorder %s20, 1
      %p59 = scmp.ne.s32.totalorder %s54, %s56
      %p60 = scmp.eq.s32.totalorder %s20, 0
      %p61 = por %p59, %p60
      %p62 = scmp.ne.s32.totalorder %s54, %s56
      %p63 = scmp.eq.s32.totalorder %s25, 1
      %p64 = por %p62, %p63
      %p65 = scmp.ne.s32.totalorder %s56, %s57
      %p66 = scmp.eq.s32.totalorder %s25, 0
      %p67 = por %p65, %p66
      %p68 = scmp.ne.s32.totalorder %s56, %s57
      %p69 = scmp.eq.s32.totalorder %s26, 1
      %p70 = por %p68, %p69
      %p72 = scmp.ne.s32.totalorder %s57, %s71
      %p73 = scmp.eq.s32.totalorder %s26, 0
      %p74 = por %p72, %p73
      %s76 = sadd.s32 %s75, 1
      %p79 = scmp.eq.s32.totalorder %s20, 1
      %p80 = scmp.ne.s32.totalorder %s75, %s77
      %p81 = scmp.eq.s32.totalorder %s20, 0
      %p82 = por %p80, %p81
      %p83 = scmp.ne.s32.totalorder %s75, %s77
      %p84 = scmp.eq.s32.totalorder %s25, 1
      %p85 = por %p83, %p84
      %p86 = scmp.ne.s32.totalorder %s77, %s78
      %p87 = scmp.eq.s32.totalorder %s25, 0
      %p88 = por %p86, %p87
      %p89 = scmp.ne.s32.totalorder %s77, %s78
      %p90 = scmp.eq.s32.totalorder %s26, 1
      %p91 = por %p89, %p90
      %p93 = scmp.ne.s32.totalorder %s78, %s92
      %p94 = scmp.eq.s32.totalorder %s26, 0
      %p95 = por %p93, %p94
      %s97 = sadd.s32 %s96, 1
      %p100 = scmp.eq.s32.totalorder %s20, 1
      %p101 = scmp.ne.s32.totalorder %s96, %s98
      %p102 = scmp.eq.s32.totalorder %s20, 0
      %p103 = por %p101, %p102
      %p104 = scmp.ne.s32.totalorder %s96, %s98
      %p105 = scmp.eq.s32.totalorder %s25, 1
      %p106 = por %p104, %p105
      %p107 = scmp.ne.s32.totalorder %s98, %s99
      %p108 = scmp.eq.s32.totalorder %s25, 0
      %p109 = por %p107, %p108
      %p110 = scmp.ne.s32.totalorder %s98, %s99
      %p111 = scmp.eq.s32.totalorder %s26, 1
      %p112 = por %p110, %p111
      %p114 = scmp.ne.s32.totalorder %s99, %s113
      %p115 = scmp.eq.s32.totalorder %s26, 0
      %p116 = por %p114, %p115
      %s118 = sadd.s32 %s117, 1
      %p121 = scmp.eq.s32.totalorder %s20, 1
      %p122 = scmp.ne.s32.totalorder %s117, %s119
      %p123 = scmp.eq.s32.totalorder %s20, 0
      %p124 = por %p122, %p123
      %p125 = scmp.ne.s32.totalorder %s117, %s119
      %p126 = scmp.eq.s32.totalorder %s25, 1
      %p127 = por %p125, %p126
      %p128 = scmp.ne.s32.totalorder %s119, %s120
      %p129 = scmp.eq.s32.totalorder %s25, 0
      %p130 = por %p128, %p129
      %p131 = scmp.ne.s32.totalorder %s119, %s120
      %p132 = scmp.eq.s32.totalorder %s26, 1
      %p133 = por %p131, %p132
      %p135 = scmp.ne.s32.totalorder %s120, %s134
      %p136 = scmp.eq.s32.totalorder %s26, 0
      %p137 = por %p135, %p136
      %s139 = sadd.s32 %s138, 1
      %p142 = scmp.eq.s32.totalorder %s20, 1
      %p143 = scmp.ne.s32.totalorder %s138, %s140
      %p144 = scmp.eq.s32.totalorder %s20, 0
      %p145 = por %p143, %p144
      %p146 = scmp.ne.s32.totalorder %s138, %s140
      %p147 = scmp.eq.s32.totalorder %s25, 1
      %p148 = por %p146, %p147
      %p149 = scmp.ne.s32.totalorder %s140, %s141
      %p150 = scmp.eq.s32.totalorder %s25, 0
      %p151 = por %p149, %p150
      %p152 = scmp.ne.s32.totalorder %s140, %s141
      %p153 = scmp.eq.s32.totalorder %s26, 1
      %p154 = por %p152, %p153
      %p156 = scmp.ne.s32.totalorder %s141, %s155
      %p157 = scmp.eq.s32.totalorder %s26, 0
      %p158 = por %p156, %p157
      %s160 = sadd.s32 %s159, 1
      %p163 = scmp.eq.s32.totalorder %s20, 1
      %p164 = scmp.ne.s32.totalorder %s159, %s161
      %p165 = scmp.eq.s32.totalorder %s20, 0
      %p166 = por %p164, %p165
      %p167 = scmp.ne.s32.totalorder %s159, %s161
      %p168 = scmp.eq.s32.totalorder %s25, 1
      %p169 = por %p167, %p168
      %p170 = scmp.ne.s32.totalorder %s161, %s162
      %p171 = scmp.eq.s32.totalorder %s25, 0
      %p172 = por %p170, %p171
      %p173 = scmp.ne.s32.totalorder %s161, %s162
      %p174 = scmp.eq.s32.totalorder %s26, 1
      %p175 = por %p173, %p174
      %p177 = scmp.ne.s32.totalorder %s162, %s176
      %p178 = scmp.eq.s32.totalorder %s26, 0
      %p179 = por %p177, %p178
      %s181 = sadd.s32 %s180, 1
      %p184 = scmp.eq.s32.totalorder %s20, 1
      %p185 = scmp.ne.s32.totalorder %s180, %s182
      %p186 = scmp.eq.s32.totalorder %s20, 0
      %p187 = por %p185, %p186
      %p188 = scmp.ne.s32.totalorder %s180, %s182
      %p189 = scmp.eq.s32.totalorder %s25, 1
      %p190 = por %p188, %p189
      %p191 = scmp.ne.s32.totalorder %s182, %s183
      %p192 = scmp.eq.s32.totalorder %s25, 0
      %p193 = por %p191, %p192
      %p194 = scmp.ne.s32.totalorder %s182, %s183
      %p195 = scmp.eq.s32.totalorder %s26, 1
      %p196 = por %p194, %p195
      %p198 = scmp.ne.s32.totalorder %s183, %s197
      %p199 = scmp.eq.s32.totalorder %s26, 0
      %p200 = por %p198, %p199
      %s202 = sadd.s32 %s201, 1
      %p205 = scmp.eq.s32.totalorder %s20, 1
      %p206 = scmp.ne.s32.totalorder %s201, %s203
      %p207 = scmp.eq.s32.totalorder %s20, 0
      %p208 = por %p206, %p207
      %p209 = scmp.ne.s32.totalorder %s201, %s203
      %p210 = scmp.eq.s32.totalorder %s25, 1
      %p211 = por %p209, %p210
      %p212 = scmp.ne.s32.totalorder %s203, %s204
      %p213 = scmp.eq.s32.totalorder %s25, 0
      %p214 = por %p212, %p213
      %p215 = scmp.ne.s32.totalorder %s203, %s204
      %p216 = scmp.eq.s32.totalorder %s26, 1
      %p217 = por %p215, %p216
      %p219 = scmp.ne.s32.totalorder %s204, %s218
      %p220 = scmp.eq.s32.totalorder %s26, 0
      %p221 = por %p219, %p220
      %s223 = sadd.s32 %s222, 1
      %p226 = scmp.eq.s32.totalorder %s20, 1
      %p227 = scmp.ne.s32.totalorder %s222, %s224
      %p228 = scmp.eq.s32.totalorder %s20, 0
      %p229 = por %p227, %p228
      %p230 = scmp.ne.s32.totalorder %s222, %s224
      %p231 = scmp.eq.s32.totalorder %s25, 1
      %p232 = por %p230, %p231
      %p233 = scmp.ne.s32.totalorder %s224, %s225
      %p234 = scmp.eq.s32.totalorder %s25, 0
      %p235 = por %p233, %p234
      %p236 = scmp.ne.s32.totalorder %s224, %s225
      %p237 = scmp.eq.s32.totalorder %s26, 1
      %p238 = por %p236, %p237
      %p240 = scmp.ne.s32.totalorder %s225, %s239
      %p241 = scmp.eq.s32.totalorder %s26, 0
      %p242 = por %p240, %p241
      %s244 = sadd.s32 %s243, 1
      %p247 = scmp.eq.s32.totalorder %s20, 1
      %p248 = scmp.ne.s32.totalorder %s243, %s245
      %p249 = scmp.eq.s32.totalorder %s20, 0
      %p250 = por %p248, %p249
      %p251 = scmp.ne.s32.totalorder %s243, %s245
      %p252 = scmp.eq.s32.totalorder %s25, 1
      %p253 = por %p251, %p252
      %p254 = scmp.ne.s32.totalorder %s245, %s246
      %p255 = scmp.eq.s32.totalorder %s25, 0
      %p256 = por %p254, %p255
      %p257 = scmp.ne.s32.totalorder %s245, %s246
      %p258 = scmp.eq.s32.totalorder %s26, 1
      %p259 = por %p257, %p258
      %p261 = scmp.ne.s32.totalorder %s246, %s260
      %p262 = scmp.eq.s32.totalorder %s26, 0
      %p263 = por %p261, %p262
      %s264 = ssub.s32 %s20, %s27
      %p265 = scmp.eq.s32.totalorder %s264, 0
      %s267 = sadd.s32 %s266, 1
      %s268 = scalar_select %p265, %s266, %s267
      %p271 = pneg %p265
      %p272 = scmp.eq.s32.totalorder %s20, 1
      %p273 = por %p271, %p272
      %p274 = scmp.ne.s32.totalorder %s266, %s269
      %p275 = scmp.eq.s32.totalorder %s20, 0
      %p276 = por %p274, %p275
      %p277 = scmp.ne.s32.totalorder %s266, %s269
      %p278 = scmp.eq.s32.totalorder %s25, 1
      %p279 = por %p277, %p278
      %p280 = scmp.ne.s32.totalorder %s269, %s270
      %p281 = scmp.eq.s32.totalorder %s25, 0
      %p282 = por %p280, %p281
      %p283 = scmp.ne.s32.totalorder %s269, %s270
      %p284 = scmp.eq.s32.totalorder %s26, 1
      %p285 = por %p283, %p284
      %p287 = scmp.ne.s32.totalorder %s270, %s286
      %p288 = scmp.eq.s32.totalorder %s26, 0
      %p289 = por %p287, %p288
      %p290 = scmp.le.s32.totalorder 1, %s20
      %p291 = scmp.lt.s32.totalorder %s20, 3
      %p292 = pnand %p290, %p291
      %p293 = pneg %p292
      // Predicated region
      $region9: #{deepmind_encoder_forward.5} parent=5 // pred_check
        _
      $region10: #{deepmind_encoder_forward.5} parent=5 // pred_check_branch
        %295 = sbr.rel (%p292) target = $region12
      $region11: #{deepmind_encoder_forward.5} parent=5 // pred_region
        %s296 = ssub.s32 %s20, 1
        // Predicated region
        $region13: #{deepmind_encoder_forward.5} parent=11 // pred_check
          %p297 = pneg %p67
        $region14: #{deepmind_encoder_forward.5} parent=11 // pred_check_branch
          %299 = sbr.rel (%p297) target = $region16
        $region15: #{deepmind_encoder_forward.5} parent=11 // pred_region
          _
        $region16: #{deepmind_encoder_forward.5} parent=11 // pred_fallthru
          _
        // Predicated region
        $region17: #{deepmind_encoder_forward.5} parent=11 // pred_check
          %p300 = pneg %p88
        $region18: #{deepmind_encoder_forward.5} parent=11 // pred_check_branch
          %302 = sbr.rel (%p300) target = $region20
        $region19: #{deepmind_encoder_forward.5} parent=11 // pred_region
          _
        $region20: #{deepmind_encoder_forward.5} parent=11 // pred_fallthru
          _
        // Predicated region
        $region21: #{deepmind_encoder_forward.5} parent=11 // pred_check
          %p303 = pneg %p109
        $region22: #{deepmind_encoder_forward.5} parent=11 // pred_check_branch
          %305 = sbr.rel (%p303) target = $region24
        $region23: #{deepmind_encoder_forward.5} parent=11 // pred_region
          _
        $region24: #{deepmind_encoder_forward.5} parent=11 // pred_fallthru
          _
        // Predicated region
        $region25: #{deepmind_encoder_forward.5} parent=11 // pred_check
          %p306 = pneg %p130
        $region26: #{deepmind_encoder_forward.5} parent=11 // pred_check_branch
          %308 = sbr.rel (%p306) target = $region28
        $region27: #{deepmind_encoder_forward.5} parent=11 // pred_region
          _
        $region28: #{deepmind_encoder_forward.5} parent=11 // pred_fallthru
          _
        // Predicated region
        $region29: #{deepmind_encoder_forward.5} parent=11 // pred_check
          %p309 = pneg %p151
        $region30: #{deepmind_encoder_forward.5} parent=11 // pred_check_branch
          %311 = sbr.rel (%p309) target = $region32
        $region31: #{deepmind_encoder_forward.5} parent=11 // pred_region
          _
        $region32: #{deepmind_encoder_forward.5} parent=11 // pred_fallthru
          _
        // Predicated region
        $region33: #{deepmind_encoder_forward.5} parent=11 // pred_check
          %p312 = pneg %p172
        $region34: #{deepmind_encoder_forward.5} parent=11 // pred_check_branch
          %314 = sbr.rel (%p312) target = $region36
        $region35: #{deepmind_encoder_forward.5} parent=11 // pred_region
          _
        $region36: #{deepmind_encoder_forward.5} parent=11 // pred_fallthru
          _
        // Predicated region
        $region37: #{deepmind_encoder_forward.5} parent=11 // pred_check
          %p315 = pneg %p193
        $region38: #{deepmind_encoder_forward.5} parent=11 // pred_check_branch
          %317 = sbr.rel (%p315) target = $region40
        $region39: #{deepmind_encoder_forward.5} parent=11 // pred_region
          _
        $region40: #{deepmind_encoder_forward.5} parent=11 // pred_fallthru
          _
        // Predicated region
        $region41: #{deepmind_encoder_forward.5} parent=11 // pred_check
          %p318 = pneg %p214
        $region42: #{deepmind_encoder_forward.5} parent=11 // pred_check_branch
          %320 = sbr.rel (%p318) target = $region44
        $region43: #{deepmind_encoder_forward.5} parent=11 // pred_region
          _
        $region44: #{deepmind_encoder_forward.5} parent=11 // pred_fallthru
          _
        // Predicated region
        $region45: #{deepmind_encoder_forward.5} parent=11 // pred_check
          %p321 = pneg %p235
        $region46: #{deepmind_encoder_forward.5} parent=11 // pred_check_branch
          %323 = sbr.rel (%p321) target = $region48
        $region47: #{deepmind_encoder_forward.5} parent=11 // pred_region
          _
        $region48: #{deepmind_encoder_forward.5} parent=11 // pred_fallthru
          _
        // Predicated region
        $region49: #{deepmind_encoder_forward.5} parent=11 // pred_check
          %p324 = pneg %p256
        $region50: #{deepmind_encoder_forward.5} parent=11 // pred_check_branch
          %326 = sbr.rel (%p324) target = $region52
        $region51: #{deepmind_encoder_forward.5} parent=11 // pred_region
          _
        $region52: #{deepmind_encoder_forward.5} parent=11 // pred_fallthru
          _
      $region12: #{deepmind_encoder_forward.5} parent=5 // pred_fallthru
        _
      %p327 = scmp.lt.s32.totalorder %s20, 2
      // Predicated region
      $region53: #{deepmind_encoder_forward.5} parent=5 // pred_check
        %p328 = pneg %p327
      $region54: #{deepmind_encoder_forward.5} parent=5 // pred_check_branch
        %330 = sbr.rel (%p328) target = $region56
      $region55: #{deepmind_encoder_forward.5} parent=5 // pred_region
        // Predicated region
        $region57: #{deepmind_encoder_forward.5} parent=55 // pred_check
          %p331 = pneg %p40
        $region58: #{deepmind_encoder_forward.5} parent=55 // pred_check_branch
          %333 = sbr.rel (%p331) target = $region60
        $region59: #{deepmind_encoder_forward.5} parent=55 // pred_region
          %p334 = scmp.lt.s32.totalorder %s20, 1
          %s335 = scalar_select %p334, %s20, 1
          %s336 = smul.addr %s335, 8
          %s337 = smul.addr %s336, 4
          %s338 = scalar_lea.vmem %s0, %s337
        $region60: #{deepmind_encoder_forward.5} parent=55 // pred_fallthru
          _
      $region56: #{deepmind_encoder_forward.5} parent=5 // pred_fallthru
        _
      %p339 = scmp.le.s32.totalorder 1, %s20
      %p340 = scmp.lt.s32.totalorder %s20, 3
      %p341 = pnand %p339, %p340
      %p342 = pneg %p341
      // Predicated region
      $region61: #{deepmind_encoder_forward.5} parent=5 // pred_check
        _
      $region62: #{deepmind_encoder_forward.5} parent=5 // pred_check_branch
        %344 = sbr.rel (%p341) target = $region64
      $region63: #{deepmind_encoder_forward.5} parent=5 // pred_region
        %s345 = ssub.s32 %s20, 1
        %p346 = scmp.lt.s32.totalorder %s25, 1
        %s347 = scalar_select %p346, %s25, 1
        %s348 = smul.addr %s347, 8
        %s349 = smul.addr %s348, 4
        %s350 = scalar_lea.vmem %s0, %s349
        %p351 = pneg %p46
        %p352 = pneg %p43
        %p353 = pneg %p67
        %p354 = pneg %p64
        %p355 = pneg %p88
        %p356 = pneg %p85
        %p357 = pneg %p109
        %p358 = pneg %p106
        %p359 = pneg %p130
        %p360 = pneg %p127
        %p361 = pneg %p151
        %p362 = pneg %p148
        %p363 = pneg %p172
        %p364 = pneg %p169
        %p365 = pneg %p193
        %p366 = pneg %p190
        %p367 = pneg %p214
        %p368 = pneg %p211
        %p369 = pneg %p235
        %p370 = pneg %p232
        %p371 = pneg %p256
        %p372 = pneg %p253
        %p373 = pneg %p282
        %p374 = pneg %p279
        %s375 = sand.u32 %s269, 1
        %s376 = scalar_lea.sflag [#allocation4], %s375
        %s377 = sand.u32 %s269, 1
        %s378 = smul.addr %s377, 64
        %s379 = scalar_lea.vmem [#allocation3], %s378
        %p380 = scmp.lt.s32.totalorder %s25, 1
        %s381 = scalar_select %p380, %s25, 1
        %s382 = smul.addr %s381, 8
        %s383 = smul.addr %s382, 4
        %s384 = scalar_lea.vmem %s0, %s383
        %386 = vst [vmem:[#allocation2] sm:$0xff] 0.0
        %387 = vst [vmem:[#allocation2 + $0x8] sm:$0xff] 0.0
        %388 = vst [vmem:[#allocation2 + $0x10] sm:$0xff] 0.0
        %389 = vst [vmem:[#allocation2 + $0x18] sm:$0xff] 0.0
        %390 = vst [vmem:[#allocation2 + $0x20] sm:$0xff] 0.0
        %391 = vst [vmem:[#allocation2 + $0x28] sm:$0xff] 0.0
        %392 = vst [vmem:[#allocation2 + $0x30] sm:$0xff] 0.0
        %393 = vst [vmem:[#allocation2 + $0x38] sm:$0xff] 0.0
        %394 = vst [vmem:[#allocation2 + $0x40] sm:$0xff] 0.0
        %395 = vst [vmem:[#allocation2 + $0x48] sm:$0xff] 0.0
        %396 = vst [vmem:[#allocation2 + $0x50] sm:$0xff] 0.0
        %397 = vst [vmem:[#allocation2 + $0x58] sm:$0xff] 0.0
        %398 = vst [vmem:[#allocation2 + $0x60] sm:$0xff] 0.0
        %399 = vst [vmem:[#allocation2 + $0x68] sm:$0xff] 0.0
        %400 = vst [vmem:[#allocation2 + $0x70] sm:$0xff] 0.0
        %401 = vst [vmem:[#allocation2 + $0x78] sm:$0xff] 0.0
        %402 = vst [vmem:[#allocation2 + $0x80] sm:$0xff] 0.0
        %403 = vst [vmem:[#allocation2 + $0x88] sm:$0xff] 0.0
        %404 = vst [vmem:[#allocation2 + $0x90] sm:$0xff] 0.0
        %405 = vst [vmem:[#allocation2 + $0x98] sm:$0xff] 0.0
        %406 = vst [vmem:[#allocation2 + $0xa0] sm:$0xff] 0.0
        %407 = vst [vmem:[#allocation2 + $0xa8] sm:$0xff] 0.0
        %408 = vst [vmem:[#allocation2 + $0xb0] sm:$0xff] 0.0
        %409 = vst [vmem:[#allocation2 + $0xb8] sm:$0xff] 0.0
        %410 = vst [vmem:[#allocation2 + $0xc0] sm:$0xff] 0.0
        %411 = vst [vmem:[#allocation2 + $0xc8] sm:$0xff] 0.0
        %412 = vst [vmem:[#allocation2 + $0xd0] sm:$0xff] 0.0
        %413 = vst [vmem:[#allocation2 + $0xd8] sm:$0xff] 0.0
        %414 = vst [vmem:[#allocation2 + $0xe0] sm:$0xff] 0.0
        %415 = vst [vmem:[#allocation2 + $0xe8] sm:$0xff] 0.0
        %v416 = vld [vmem:[%s384] sm:$0xf]
        %v417 = vld [vmem:[%s384 + $0x4] sm:$0xf]
        %v418 = vld [vmem:[%s384 + $0x8] sm:$0xf]
        %v419 = vld [vmem:[%s384 + $0xc] sm:$0xf]
        %v420 = vld [vmem:[%s384 + $0x10] sm:$0xf]
        %v421 = vld [vmem:[%s384 + $0x14] sm:$0xf]
        %v422 = vld [vmem:[%s384 + $0x18] sm:$0xf]
        %v423 = vld [vmem:[%s384 + $0x1c] sm:$0xf]
        %v424 = vunpack.c.l.bf16 %v416
        %v425 = vunpack.c.l.bf16 %v417
        %v426 = vunpack.c.l.bf16 %v418
        %v427 = vunpack.c.l.bf16 %v419
        %v428 = vunpack.c.l.bf16 %v420
        %v429 = vunpack.c.l.bf16 %v421
        %v430 = vunpack.c.l.bf16 %v422
        %v431 = vunpack.c.l.bf16 %v423
        %s432 = scalar_lea.vmem [#allocation2], 24
        %433 = vst [vmem:[%s432 + $0x8] sm:$0xff] %v424
        %434 = vst [vmem:[%s432 + $0x20] sm:$0xff] %v425
        %435 = vst [vmem:[%s432 + $0x38] sm:$0xff] %v426
        %436 = vst [vmem:[%s432 + $0x50] sm:$0xff] %v427
        %437 = vst [vmem:[%s432 + $0x68] sm:$0xff] %v428
        %438 = vst [vmem:[%s432 + $0x80] sm:$0xff] %v429
        %439 = vst [vmem:[%s432 + $0x98] sm:$0xff] %v430
        %440 = vst [vmem:[%s432 + $0xb0] sm:$0xff] %v431
        %v441 = vld [vmem:[#allocation2 + $0x7] sm:$0xff]
        %v442 = vld [vmem:[#allocation2 + $0x1f] sm:$0xff]
        %v443 = vld [vmem:[#allocation2 + $0x37] sm:$0xff]
        %v444 = vld [vmem:[#allocation2 + $0x4f] sm:$0xff]
        %v445 = vld [vmem:[#allocation2 + $0x67] sm:$0xff]
        %v446 = vld [vmem:[#allocation2 + $0x7f] sm:$0xff]
        %v447 = vld [vmem:[#allocation2 + $0x97] sm:$0xff]
        %v448 = vld [vmem:[#allocation2 + $0xaf] sm:$0xff]
        %v449 = vpack.c.bf16 %v442, %v441
        %v450 = vpack.c.bf16 %v444, %v443
        %v451 = vpack.c.bf16 %v446, %v445
        %v452 = vpack.c.bf16 %v448, %v447
        %v453 = vld [vmem:[%s1] sm:$0xf]
        %v454 = vld [vmem:[%s1 + $0x4] sm:$0xf]
        %v455 = vld [vmem:[%s1 + $0x8] sm:$0xf]
        %v456 = vld [vmem:[%s1 + $0xc] sm:$0xf]
        %v457 = vld [vmem:[%s1 + $0x10] sm:$0xf]
        %v458 = vld [vmem:[%s1 + $0x14] sm:$0xf]
        %v459 = vld [vmem:[%s1 + $0x18] sm:$0xf]
        %v460 = vld [vmem:[%s1 + $0x1c] sm:$0xf]
        %v461 = vld [vmem:[%s1 + $0x20] sm:$0xf]
        %v462 = vld [vmem:[%s1 + $0x24] sm:$0xf]
        %v463 = vld [vmem:[%s1 + $0x28] sm:$0xf]
        %v464 = vld [vmem:[%s1 + $0x2c] sm:$0xf]
        %v465 = vld [vmem:[%s1 + $0x30] sm:$0xf]
        %v466 = vld [vmem:[%s1 + $0x34] sm:$0xf]
        %v467 = vld [vmem:[%s1 + $0x38] sm:$0xf]
        %v468 = vld [vmem:[%s1 + $0x3c] sm:$0xf]
        %v469 = vld [vmem:[#allocation2 + $0x8] sm:$0xff]
        %v470 = vld [vmem:[#allocation2 + $0x20] sm:$0xff]
        %v471 = vld [vmem:[#allocation2 + $0x38] sm:$0xff]
        %v472 = vld [vmem:[#allocation2 + $0x50] sm:$0xff]
        %v473 = vld [vmem:[#allocation2 + $0x68] sm:$0xff]
        %v474 = vld [vmem:[#allocation2 + $0x80] sm:$0xff]
        %v475 = vld [vmem:[#allocation2 + $0x98] sm:$0xff]
        %v476 = vld [vmem:[#allocation2 + $0xb0] sm:$0xff]
        %v477 = vpack.c.bf16 %v470, %v469
        %v478 = vpack.c.bf16 %v472, %v471
        %v479 = vpack.c.bf16 %v474, %v473
        %v480 = vpack.c.bf16 %v476, %v475
        %v481 = vld [vmem:[%s1 + $0x40] sm:$0xf]
        %v482 = vld [vmem:[%s1 + $0x44] sm:$0xf]
        %v483 = vld [vmem:[%s1 + $0x48] sm:$0xf]
        %v484 = vld [vmem:[%s1 + $0x4c] sm:$0xf]
        %v485 = vld [vmem:[%s1 + $0x50] sm:$0xf]
        %v486 = vld [vmem:[%s1 + $0x54] sm:$0xf]
        %v487 = vld [vmem:[%s1 + $0x58] sm:$0xf]
        %v488 = vld [vmem:[%s1 + $0x5c] sm:$0xf]
        %v489 = vld [vmem:[%s1 + $0x60] sm:$0xf]
        %v490 = vld [vmem:[%s1 + $0x64] sm:$0xf]
        %v491 = vld [vmem:[%s1 + $0x68] sm:$0xf]
        %v492 = vld [vmem:[%s1 + $0x6c] sm:$0xf]
        %v493 = vld [vmem:[%s1 + $0x70] sm:$0xf]
        %v494 = vld [vmem:[%s1 + $0x74] sm:$0xf]
        %v495 = vld [vmem:[%s1 + $0x78] sm:$0xf]
        %v496 = vld [vmem:[%s1 + $0x7c] sm:$0xf]
        %v513 = vunpack.c.l.b16 %v481
        %v514 = vunpack.c.l.b16 %v482
        %v515 = vunpack.c.l.b16 %v483
        %v516 = vunpack.c.l.b16 %v484
        %v517 = vunpack.c.l.b16 %v485
        %v518 = vunpack.c.l.b16 %v486
        %v519 = vunpack.c.l.b16 %v487
        %v520 = vunpack.c.l.b16 %v488
        %v521 = vunpack.c.l.b16 %v489
        %v522 = vunpack.c.l.b16 %v490
        %v523 = vunpack.c.l.b16 %v491
        %v524 = vunpack.c.l.b16 %v492
        %v525 = vunpack.c.l.b16 %v493
        %v526 = vunpack.c.l.b16 %v494
        %v527 = vunpack.c.l.b16 %v495
        %v528 = vunpack.c.l.b16 %v496
        %v529 = vpack.c.b16 %v514, %v513
        %v530 = vpack.c.b16 %v516, %v515
        %v531 = vpack.c.b16 %v518, %v517
        %v532 = vpack.c.b16 %v520, %v519
        %v533 = vpack.c.b16 %v522, %v521
        %v534 = vpack.c.b16 %v524, %v523
        %v535 = vpack.c.b16 %v526, %v525
        %v536 = vpack.c.b16 %v528, %v527
        %545 = vmatprep.subr.bf16.mxu0 0
        %546 = vmatpush1.bf16.msra.mxu0 %v529
        %547 = vmatprep.subr.bf16.mxu0 0
        %548 = vmatpush1.bf16.msra.mxu0 %v530
        %549 = vmatprep.subr.bf16.mxu0 0
        %550 = vmatpush1.bf16.msra.mxu0 %v531
        %551 = vmatprep.subr.bf16.mxu0 0
        %552 = vmatpush1.bf16.msra.mxu0 %v532
        %553 = vmatprep.subr.bf16.mxu0 0
        %554 = vmatpush1.bf16.msra.mxu0 %v533
        %555 = vmatprep.subr.bf16.mxu0 0
        %556 = vmatpush1.bf16.msra.mxu0 %v534
        %557 = vmatprep.subr.bf16.mxu0 0
        %558 = vmatpush1.bf16.msra.mxu0 %v535
        %559 = vmatprep.subr.bf16.mxu0 0
        %560 = vmatpush1.bf16.msra.mxu0 %v536
        %561 = vmatprep.subr.bf16.mxu0 0
        %562 = vmatpush1.bf16.msra.mxu0 0
        %563 = vmatprep.subr.bf16.mxu0 0
        %564 = vmatpush1.bf16.msra.mxu0 0
        %565 = vmatprep.subr.bf16.mxu0 0
        %566 = vmatpush1.bf16.msra.mxu0 0
        %567 = vmatprep.subr.bf16.mxu0 0
        %568 = vmatpush1.bf16.msra.mxu0 0
        %569 = vmatprep.subr.bf16.mxu0 0
        %570 = vmatpush1.bf16.msra.mxu0 0
        %571 = vmatprep.subr.bf16.mxu0 0
        %572 = vmatpush1.bf16.msra.mxu0 0
        %573 = vmatprep.subr.bf16.mxu0 0
        %574 = vmatpush1.bf16.msra.mxu0 0
        %575 = vmatprep.subr.bf16.mxu0 0
        %576 = vmatpush1.bf16.msra.mxu0 0
        %577 = vmatprep.mubr.bf16.mxu0 0
        %578 = vmatmul.mubr.bf16.gmra.mrb[0].mxu0 %v477
        %v579 = vpop.f32.mrb[0].mxu0
        %v580 = vadd.f32 0.0, %v579
        %v581 = vpop.f32.mrb[0].mxu0
        %v582 = vpop.f32.mrb[0].mxu0
        %v583 = vadd.f32 0.0, %v582
        %v584 = vpop.f32.mrb[0].mxu0
        %585 = vmatprep.mubr.bf16.mxu0 0
        %586 = vmatmul.mubr.bf16.gmra.mrb[0].mxu0 %v478
        %v587 = vpop.f32.mrb[0].mxu0
        %v588 = vadd.f32 0.0, %v587
        %v589 = vpop.f32.mrb[0].mxu0
        %v590 = vpop.f32.mrb[0].mxu0
        %v591 = vadd.f32 0.0, %v590
        %v592 = vpop.f32.mrb[0].mxu0
        %593 = vmatprep.mubr.bf16.mxu0 0
        %594 = vmatmul.mubr.bf16.gmra.mrb[0].mxu0 %v479
        %v595 = vpop.f32.mrb[0].mxu0
        %v596 = vadd.f32 0.0, %v595
        %v597 = vpop.f32.mrb[0].mxu0
        %v598 = vpop.f32.mrb[0].mxu0
        %v599 = vadd.f32 0.0, %v598
        %v600 = vpop.f32.mrb[0].mxu0
        %601 = vmatprep.mubr.bf16.mxu0 0
        %602 = vmatmul.mubr.bf16.gmra.mrb[0].mxu0 %v480
        %v603 = vpop.f32.mrb[0].mxu0
        %v604 = vadd.f32 0.0, %v603
        %v605 = vpop.f32.mrb[0].mxu0
        %v606 = vpop.f32.mrb[0].mxu0
        %v607 = vadd.f32 0.0, %v606
        %v608 = vpop.f32.mrb[0].mxu0
        %609 = vdwg.mxu0
        %v626 = vunpack.c.l.b16 %v453
        %v627 = vunpack.c.l.b16 %v454
        %v628 = vunpack.c.l.b16 %v455
        %v629 = vunpack.c.l.b16 %v456
        %v630 = vunpack.c.l.b16 %v457
        %v631 = vunpack.c.l.b16 %v458
        %v632 = vunpack.c.l.b16 %v459
        %v633 = vunpack.c.l.b16 %v460
        %v634 = vunpack.c.l.b16 %v461
        %v635 = vunpack.c.l.b16 %v462
        %v636 = vunpack.c.l.b16 %v463
        %v637 = vunpack.c.l.b16 %v464
        %v638 = vunpack.c.l.b16 %v465
        %v639 = vunpack.c.l.b16 %v466
        %v640 = vunpack.c.l.b16 %v467
        %v641 = vunpack.c.l.b16 %v468
        %v642 = vpack.c.b16 %v627, %v626
        %v643 = vpack.c.b16 %v629, %v628
        %v644 = vpack.c.b16 %v631, %v630
        %v645 = vpack.c.b16 %v633, %v632
        %v646 = vpack.c.b16 %v635, %v634
        %v647 = vpack.c.b16 %v637, %v636
        %v648 = vpack.c.b16 %v639, %v638
        %v649 = vpack.c.b16 %v641, %v640
        %658 = vmatprep.subr.bf16.mxu0 0
        %659 = vmatpush1.bf16.msra.mxu0 %v642
        %660 = vmatprep.subr.bf16.mxu0 0
        %661 = vmatpush1.bf16.msra.mxu0 %v643
        %662 = vmatprep.subr.bf16.mxu0 0
        %663 = vmatpush1.bf16.msra.mxu0 %v644
        %664 = vmatprep.subr.bf16.mxu0 0
        %665 = vmatpush1.bf16.msra.mxu0 %v645
        %666 = vmatprep.subr.bf16.mxu0 0
        %667 = vmatpush1.bf16.msra.mxu0 %v646
        %668 = vmatprep.subr.bf16.mxu0 0
        %669 = vmatpush1.bf16.msra.mxu0 %v647
        %670 = vmatprep.subr.bf16.mxu0 0
        %671 = vmatpush1.bf16.msra.mxu0 %v648
        %672 = vmatprep.subr.bf16.mxu0 0
        %673 = vmatpush1.bf16.msra.mxu0 %v649
        %674 = vmatprep.subr.bf16.mxu0 0
        %675 = vmatpush1.bf16.msra.mxu0 0
        %676 = vmatprep.subr.bf16.mxu0 0
        %677 = vmatpush1.bf16.msra.mxu0 0
        %678 = vmatprep.subr.bf16.mxu0 0
        %679 = vmatpush1.bf16.msra.mxu0 0
        %680 = vmatprep.subr.bf16.mxu0 0
        %681 = vmatpush1.bf16.msra.mxu0 0
        %682 = vmatprep.subr.bf16.mxu0 0
        %683 = vmatpush1.bf16.msra.mxu0 0
        %684 = vmatprep.subr.bf16.mxu0 0
        %685 = vmatpush1.bf16.msra.mxu0 0
        %686 = vmatprep.subr.bf16.mxu0 0
        %687 = vmatpush1.bf16.msra.mxu0 0
        %688 = vmatprep.subr.bf16.mxu0 0
        %689 = vmatpush1.bf16.msra.mxu0 0
        %690 = vmatprep.mubr.bf16.mxu0 0
        %691 = vmatmul.mubr.bf16.gmra.mrb[0].mxu0 %v449
        %v692 = vpop.f32.mrb[0].mxu0
        %v693 = vadd.f32 %v580, %v692
        %v694 = vpop.f32.mrb[0].mxu0
        %v695 = vpop.f32.mrb[0].mxu0
        %v696 = vadd.f32 %v583, %v695
        %v697 = vpop.f32.mrb[0].mxu0
        %698 = vmatprep.mubr.bf16.mxu0 0
        %699 = vmatmul.mubr.bf16.gmra.mrb[0].mxu0 %v450
        %v700 = vpop.f32.mrb[0].mxu0
        %v701 = vadd.f32 %v588, %v700
        %v702 = vpop.f32.mrb[0].mxu0
        %v703 = vpop.f32.mrb[0].mxu0
        %v704 = vadd.f32 %v591, %v703
        %v705 = vpop.f32.mrb[0].mxu0
        %706 = vmatprep.mubr.bf16.mxu0 0
        %707 = vmatmul.mubr.bf16.gmra.mrb[0].mxu0 %v451
        %v708 = vpop.f32.mrb[0].mxu0
        %v709 = vadd.f32 %v596, %v708
        %v710 = vpop.f32.mrb[0].mxu0
        %v711 = vpop.f32.mrb[0].mxu0
        %v712 = vadd.f32 %v599, %v711
        %v713 = vpop.f32.mrb[0].mxu0
        %714 = vmatprep.mubr.bf16.mxu0 0
        %715 = vmatmul.mubr.bf16.gmra.mrb[0].mxu0 %v452
        %v716 = vpop.f32.mrb[0].mxu0
        %v717 = vadd.f32 %v604, %v716
        %v718 = vpop.f32.mrb[0].mxu0
        %v719 = vpop.f32.mrb[0].mxu0
        %v720 = vadd.f32 %v607, %v719
        %v721 = vpop.f32.mrb[0].mxu0
        %722 = vdwg.mxu0
        %v723 = vld [vmem:[#allocation2 + $0x9] sm:$0xff]
        %v724 = vld [vmem:[#allocation2 + $0x21] sm:$0xff]
        %v725 = vld [vmem:[#allocation2 + $0x39] sm:$0xff]
        %v726 = vld [vmem:[#allocation2 + $0x51] sm:$0xff]
        %v727 = vld [vmem:[#allocation2 + $0x69] sm:$0xff]
        %v728 = vld [vmem:[#allocation2 + $0x81] sm:$0xff]
        %v729 = vld [vmem:[#allocation2 + $0x99] sm:$0xff]
        %v730 = vld [vmem:[#allocation2 + $0xb1] sm:$0xff]
        %v731 = vpack.c.bf16 %v724, %v723
        %v732 = vpack.c.bf16 %v726, %v725
        %v733 = vpack.c.bf16 %v728, %v727
        %v734 = vpack.c.bf16 %v730, %v729
        %v735 = vld [vmem:[%s1 + $0x80] sm:$0xf]
        %v736 = vld [vmem:[%s1 + $0x84] sm:$0xf]
        %v737 = vld [vmem:[%s1 + $0x88] sm:$0xf]
        %v738 = vld [vmem:[%s1 + $0x8c] sm:$0xf]
        %v739 = vld [vmem:[%s1 + $0x90] sm:$0xf]
        %v740 = vld [vmem:[%s1 + $0x94] sm:$0xf]
        %v741 = vld [vmem:[%s1 + $0x98] sm:$0xf]
        %v742 = vld [vmem:[%s1 + $0x9c] sm:$0xf]
        %v743 = vld [vmem:[%s1 + $0xa0] sm:$0xf]
        %v744 = vld [vmem:[%s1 + $0xa4] sm:$0xf]
        %v745 = vld [vmem:[%s1 + $0xa8] sm:$0xf]
        %v746 = vld [vmem:[%s1 + $0xac] sm:$0xf]
        %v747 = vld [vmem:[%s1 + $0xb0] sm:$0xf]
        %v748 = vld [vmem:[%s1 + $0xb4] sm:$0xf]
        %v749 = vld [vmem:[%s1 + $0xb8] sm:$0xf]
        %v750 = vld [vmem:[%s1 + $0xbc] sm:$0xf]
        %v767 = vunpack.c.l.b16 %v735
        %v768 = vunpack.c.l.b16 %v736
        %v769 = vunpack.c.l.b16 %v737
        %v770 = vunpack.c.l.b16 %v738
        %v771 = vunpack.c.l.b16 %v739
        %v772 = vunpack.c.l.b16 %v740
        %v773 = vunpack.c.l.b16 %v741
        %v774 = vunpack.c.l.b16 %v742
        %v775 = vunpack.c.l.b16 %v743
        %v776 = vunpack.c.l.b16 %v744
        %v777 = vunpack.c.l.b16 %v745
        %v778 = vunpack.c.l.b16 %v746
        %v779 = vunpack.c.l.b16 %v747
        %v780 = vunpack.c.l.b16 %v748
        %v781 = vunpack.c.l.b16 %v749
        %v782 = vunpack.c.l.b16 %v750
        %v783 = vpack.c.b16 %v768, %v767
        %v784 = vpack.c.b16 %v770, %v769
        %v785 = vpack.c.b16 %v772, %v771
        %v786 = vpack.c.b16 %v774, %v773
        %v787 = vpack.c.b16 %v776, %v775
        %v788 = vpack.c.b16 %v778, %v777
        %v789 = vpack.c.b16 %v780, %v779
        %v790 = vpack.c.b16 %v782, %v781
        %799 = vmatprep.subr.bf16.mxu0 0
        %800 = vmatpush1.bf16.msra.mxu0 %v783
        %801 = vmatprep.subr.bf16.mxu0 0
        %802 = vmatpush1.bf16.msra.mxu0 %v784
        %803 = vmatprep.subr.bf16.mxu0 0
        %804 = vmatpush1.bf16.msra.mxu0 %v785
        %805 = vmatprep.subr.bf16.mxu0 0
        %806 = vmatpush1.bf16.msra.mxu0 %v786
        %807 = vmatprep.subr.bf16.mxu0 0
        %808 = vmatpush1.bf16.msra.mxu0 %v787
        %809 = vmatprep.subr.bf16.mxu0 0
        %810 = vmatpush1.bf16.msra.mxu0 %v788
        %811 = vmatprep.subr.bf16.mxu0 0
        %812 = vmatpush1.bf16.msra.mxu0 %v789
        %813 = vmatprep.subr.bf16.mxu0 0
        %814 = vmatpush1.bf16.msra.mxu0 %v790
        %815 = vmatprep.subr.bf16.mxu0 0
        %816 = vmatpush1.bf16.msra.mxu0 0
        %817 = vmatprep.subr.bf16.mxu0 0
        %818 = vmatpush1.bf16.msra.mxu0 0
        %819 = vmatprep.subr.bf16.mxu0 0
        %820 = vmatpush1.bf16.msra.mxu0 0
        %821 = vmatprep.subr.bf16.mxu0 0
        %822 = vmatpush1.bf16.msra.mxu0 0
        %823 = vmatprep.subr.bf16.mxu0 0
        %824 = vmatpush1.bf16.msra.mxu0 0
        %825 = vmatprep.subr.bf16.mxu0 0
        %826 = vmatpush1.bf16.msra.mxu0 0
        %827 = vmatprep.subr.bf16.mxu0 0
        %828 = vmatpush1.bf16.msra.mxu0 0
        %829 = vmatprep.subr.bf16.mxu0 0
        %830 = vmatpush1.bf16.msra.mxu0 0
        %831 = vmatprep.mubr.bf16.mxu0 0
        %832 = vmatmul.mubr.bf16.gmra.mrb[0].mxu0 %v731
        %v833 = vpop.f32.mrb[0].mxu0
        %v834 = vadd.f32 0.0, %v833
        %v835 = vpop.f32.mrb[0].mxu0
        %v836 = vpop.f32.mrb[0].mxu0
        %v837 = vadd.f32 0.0, %v836
        %v838 = vpop.f32.mrb[0].mxu0
        %839 = vmatprep.mubr.bf16.mxu0 0
        %840 = vmatmul.mubr.bf16.gmra.mrb[0].mxu0 %v732
        %v841 = vpop.f32.mrb[0].mxu0
        %v842 = vadd.f32 0.0, %v841
        %v843 = vpop.f32.mrb[0].mxu0
        %v844 = vpop.f32.mrb[0].mxu0
        %v845 = vadd.f32 0.0, %v844
        %v846 = vpop.f32.mrb[0].mxu0
        %847 = vmatprep.mubr.bf16.mxu0 0
        %848 = vmatmul.mubr.bf16.gmra.mrb[0].mxu0 %v733
        %v849 = vpop.f32.mrb[0].mxu0
        %v850 = vadd.f32 0.0, %v849
        %v851 = vpop.f32.mrb[0].mxu0
        %v852 = vpop.f32.mrb[0].mxu0
        %v853 = vadd.f32 0.0, %v852
        %v854 = vpop.f32.mrb[0].mxu0
        %855 = vmatprep.mubr.bf16.mxu0 0
        %856 = vmatmul.mubr.bf16.gmra.mrb[0].mxu0 %v734
        %v857 = vpop.f32.mrb[0].mxu0
        %v858 = vadd.f32 0.0, %v857
        %v859 = vpop.f32.mrb[0].mxu0
        %v860 = vpop.f32.mrb[0].mxu0
        %v861 = vadd.f32 0.0, %v860
        %v862 = vpop.f32.mrb[0].mxu0
        %863 = vdwg.mxu0
        %v864 = vadd.f32 %v693, %v834
        %v865 = vadd.f32 %v696, %v837
        %v866 = vadd.f32 %v701, %v842
        %v867 = vadd.f32 %v704, %v845
        %v868 = vadd.f32 %v709, %v850
        %v869 = vadd.f32 %v712, %v853
        %v870 = vadd.f32 %v717, %v858
        %v871 = vadd.f32 %v720, %v861
        %v872 = vld [vmem:[%s432 + $0x7] sm:$0xff]
        %v873 = vld [vmem:[%s432 + $0x1f] sm:$0xff]
        %v874 = vld [vmem:[%s432 + $0x37] sm:$0xff]
        %v875 = vld [vmem:[%s432 + $0x4f] sm:$0xff]
        %v876 = vld [vmem:[%s432 + $0x67] sm:$0xff]
        %v877 = vld [vmem:[%s432 + $0x7f] sm:$0xff]
        %v878 = vld [vmem:[%s432 + $0x97] sm:$0xff]
        %v879 = vld [vmem:[%s432 + $0xaf] sm:$0xff]
        %v880 = vpack.c.bf16 %v873, %v872
        %v881 = vpack.c.bf16 %v875, %v874
        %v882 = vpack.c.bf16 %v877, %v876
        %v883 = vpack.c.bf16 %v879, %v878
        %v884 = vld [vmem:[%s1 + $0xc0] sm:$0xf]
        %v885 = vld [vmem:[%s1 + $0xc4] sm:$0xf]
        %v886 = vld [vmem:[%s1 + $0xc8] sm:$0xf]
        %v887 = vld [vmem:[%s1 + $0xcc] sm:$0xf]
        %v888 = vld [vmem:[%s1 + $0xd0] sm:$0xf]
        %v889 = vld [vmem:[%s1 + $0xd4] sm:$0xf]
        %v890 = vld [vmem:[%s1 + $0xd8] sm:$0xf]
        %v891 = vld [vmem:[%s1 + $0xdc] sm:$0xf]
        %v892 = vld [vmem:[%s1 + $0xe0] sm:$0xf]
        %v893 = vld [vmem:[%s1 + $0xe4] sm:$0xf]
        %v894 = vld [vmem:[%s1 + $0xe8] sm:$0xf]
        %v895 = vld [vmem:[%s1 + $0xec] sm:$0xf]
        %v896 = vld [vmem:[%s1 + $0xf0] sm:$0xf]
        %v897 = vld [vmem:[%s1 + $0xf4] sm:$0xf]
        %v898 = vld [vmem:[%s1 + $0xf8] sm:$0xf]
        %v899 = vld [vmem:[%s1 + $0xfc] sm:$0xf]
        %v916 = vunpack.c.l.b16 %v884
        %v917 = vunpack.c.l.b16 %v885
        %v918 = vunpack.c.l.b16 %v886
        %v919 = vunpack.c.l.b16 %v887
        %v920 = vunpack.c.l.b16 %v888
        %v921 = vunpack.c.l.b16 %v889
        %v922 = vunpack.c.l.b16 %v890
        %v923 = vunpack.c.l.b16 %v891
        %v924 = vunpack.c.l.b16 %v892
        %v925 = vunpack.c.l.b16 %v893
        %v926 = vunpack.c.l.b16 %v894
        %v927 = vunpack.c.l.b16 %v895
        %v928 = vunpack.c.l.b16 %v896
        %v929 = vunpack.c.l.b16 %v897
        %v930 = vunpack.c.l.b16 %v898
        %v931 = vunpack.c.l.b16 %v899
        %v932 = vpack.c.b16 %v917, %v916
        %v933 = vpack.c.b16 %v919, %v918
        %v934 = vpack.c.b16 %v921, %v920
        %v935 = vpack.c.b16 %v923, %v922
        %v936 = vpack.c.b16 %v925, %v924
        %v937 = vpack.c.b16 %v927, %v926
        %v938 = vpack.c.b16 %v929, %v928
        %v939 = vpack.c.b16 %v931, %v930
        %948 = vmatprep.subr.bf16.mxu0 0
        %949 = vmatpush1.bf16.msra.mxu0 %v932
        %950 = vmatprep.subr.bf16.mxu0 0
        %951 = vmatpush1.bf16.msra.mxu0 %v933
        %952 = vmatprep.subr.bf16.mxu0 0
        %953 = vmatpush1.bf16.msra.mxu0 %v934
        %954 = vmatprep.subr.bf16.mxu0 0
        %955 = vmatpush1.bf16.msra.mxu0 %v935
        %956 = vmatprep.subr.bf16.mxu0 0
        %957 = vmatpush1.bf16.msra.mxu0 %v936
        %958 = vmatprep.subr.bf16.mxu0 0
        %959 = vmatpush1.bf16.msra.mxu0 %v937
        %960 = vmatprep.subr.bf16.mxu0 0
        %961 = vmatpush1.bf16.msra.mxu0 %v938
        %962 = vmatprep.subr.bf16.mxu0 0
        %963 = vmatpush1.bf16.msra.mxu0 %v939
        %964 = vmatprep.subr.bf16.mxu0 0
        %965 = vmatpush1.bf16.msra.mxu0 0
        %966 = vmatprep.subr.bf16.mxu0 0
        %967 = vmatpush1.bf16.msra.mxu0 0
        %968 = vmatprep.subr.bf16.mxu0 0
        %969 = vmatpush1.bf16.msra.mxu0 0
        %970 = vmatprep.subr.bf16.mxu0 0
        %971 = vmatpush1.bf16.msra.mxu0 0
        %972 = vmatprep.subr.bf16.mxu0 0
        %973 = vmatpush1.bf16.msra.mxu0 0
        %974 = vmatprep.subr.bf16.mxu0 0
        %975 = vmatpush1.bf16.msra.mxu0 0
        %976 = vmatprep.subr.bf16.mxu0 0
        %977 = vmatpush1.bf16.msra.mxu0 0
        %978 = vmatprep.subr.bf16.mxu0 0
        %979 = vmatpush1.bf16.msra.mxu0 0
        %980 = vmatprep.mubr.bf16.mxu0 0
        %981 = vmatmul.mubr.bf16.gmra.mrb[0].mxu0 %v880
        %v982 = vpop.f32.mrb[0].mxu0
        %v983 = vadd.f32 0.0, %v982
        %v984 = vpop.f32.mrb[0].mxu0
        %v985 = vpop.f32.mrb[0].mxu0
        %v986 = vadd.f32 0.0, %v985
        %v987 = vpop.f32.mrb[0].mxu0
        %988 = vmatprep.mubr.bf16.mxu0 0
        %989 = vmatmul.mubr.bf16.gmra.mrb[0].mxu0 %v881
        %v990 = vpop.f32.mrb[0].mxu0
        %v991 = vadd.f32 0.0, %v990
        %v992 = vpop.f32.mrb[0].mxu0
        %v993 = vpop.f32.mrb[0].mxu0
        %v994 = vadd.f32 0.0, %v993
        %v995 = vpop.f32.mrb[0].mxu0
        %996 = vmatprep.mubr.bf16.mxu0 0
        %997 = vmatmul.mubr.bf16.gmra.mrb[0].mxu0 %v882
        %v998 = vpop.f32.mrb[0].mxu0
        %v999 = vadd.f32 0.0, %v998
        %v1000 = vpop.f32.mrb[0].mxu0
        %v1001 = vpop.f32.mrb[0].mxu0
        %v1002 = vadd.f32 0.0, %v1001
        %v1003 = vpop.f32.mrb[0].mxu0
        %1004 = vmatprep.mubr.bf16.mxu0 0
        %1005 = vmatmul.mubr.bf16.gmra.mrb[0].mxu0 %v883
        %v1006 = vpop.f32.mrb[0].mxu0
        %v1007 = vadd.f32 0.0, %v1006
        %v1008 = vpop.f32.mrb[0].mxu0
        %v1009 = vpop.f32.mrb[0].mxu0
        %v1010 = vadd.f32 0.0, %v1009
        %v1011 = vpop.f32.mrb[0].mxu0
        %1012 = vdwg.mxu0
        %v1013 = vadd.f32 %v864, %v983
        %v1014 = vadd.f32 %v865, %v986
        %v1015 = vadd.f32 %v866, %v991
        %v1016 = vadd.f32 %v867, %v994
        %v1017 = vadd.f32 %v868, %v999
        %v1018 = vadd.f32 %v869, %v1002
        %v1019 = vadd.f32 %v870, %v1007
        %v1020 = vadd.f32 %v871, %v1010
        %v1021 = vld [vmem:[%s432 + $0x8] sm:$0xff]
        %v1022 = vld [vmem:[%s432 + $0x20] sm:$0xff]
        %v1023 = vld [vmem:[%s432 + $0x38] sm:$0xff]
        %v1024 = vld [vmem:[%s432 + $0x50] sm:$0xff]
        %v1025 = vld [vmem:[%s432 + $0x68] sm:$0xff]
        %v1026 = vld [vmem:[%s432 + $0x80] sm:$0xff]
        %v1027 = vld [vmem:[%s432 + $0x98] sm:$0xff]
        %v1028 = vld [vmem:[%s432 + $0xb0] sm:$0xff]
        %v1029 = vpack.c.bf16 %v1022, %v1021
        %v1030 = vpack.c.bf16 %v1024, %v1023
        %v1031 = vpack.c.bf16 %v1026, %v1025
        %v1032 = vpack.c.bf16 %v1028, %v1027
        %v1033 = vld [vmem:[%s1 + $0x100] sm:$0xf]
        %v1034 = vld [vmem:[%s1 + $0x104] sm:$0xf]
        %v1035 = vld [vmem:[%s1 + $0x108] sm:$0xf]
        %v1036 = vld [vmem:[%s1 + $0x10c] sm:$0xf]
        %v1037 = vld [vmem:[%s1 + $0x110] sm:$0xf]
        %v1038 = vld [vmem:[%s1 + $0x114] sm:$0xf]
        %v1039 = vld [vmem:[%s1 + $0x118] sm:$0xf]
        %v1040 = vld [vmem:[%s1 + $0x11c] sm:$0xf]
        %v1041 = vld [vmem:[%s1 + $0x120] sm:$0xf]
        %v1042 = vld [vmem:[%s1 + $0x124] sm:$0xf]
        %v1043 = vld [vmem:[%s1 + $0x128] sm:$0xf]
        %v1044 = vld [vmem:[%s1 + $0x12c] sm:$0xf]
        %v1045 = vld [vmem:[%s1 + $0x130] sm:$0xf]
        %v1046 = vld [vmem:[%s1 + $0x134] sm:$0xf]
        %v1047 = vld [vmem:[%s1 + $0x138] sm:$0xf]
        %v1048 = vld [vmem:[%s1 + $0x13c] sm:$0xf]
        %v1065 = vunpack.c.l.b16 %v1033
        %v1066 = vunpack.c.l.b16 %v1034
        %v1067 = vunpack.c.l.b16 %v1035
        %v1068 = vunpack.c.l.b16 %v1036
        %v1069 = vunpack.c.l.b16 %v1037
        %v1070 = vunpack.c.l.b16 %v1038
        %v1071 = vunpack.c.l.b16 %v1039
        %v1072 = vunpack.c.l.b16 %v1040
        %v1073 = vunpack.c.l.b16 %v1041
        %v1074 = vunpack.c.l.b16 %v1042
        %v1075 = vunpack.c.l.b16 %v1043
        %v1076 = vunpack.c.l.b16 %v1044
        %v1077 = vunpack.c.l.b16 %v1045
        %v1078 = vunpack.c.l.b16 %v1046
        %v1079 = vunpack.c.l.b16 %v1047
        %v1080 = vunpack.c.l.b16 %v1048
        %v1081 = vpack.c.b16 %v1066, %v1065
        %v1082 = vpack.c.b16 %v1068, %v1067
        %v1083 = vpack.c.b16 %v1070, %v1069
        %v1084 = vpack.c.b16 %v1072, %v1071
        %v1085 = vpack.c.b16 %v1074, %v1073
        %v1086 = vpack.c.b16 %v1076, %v1075
        %v1087 = vpack.c.b16 %v1078, %v1077
        %v1088 = vpack.c.b16 %v1080, %v1079
        %1097 = vmatprep.subr.bf16.mxu0 0
        %1098 = vmatpush1.bf16.msra.mxu0 %v1081
        %1099 = vmatprep.subr.bf16.mxu0 0
        %1100 = vmatpush1.bf16.msra.mxu0 %v1082
        %1101 = vmatprep.subr.bf16.mxu0 0
        %1102 = vmatpush1.bf16.msra.mxu0 %v1083
        %1103 = vmatprep.subr.bf16.mxu0 0
        %1104 = vmatpush1.bf16.msra.mxu0 %v1084
        %1105 = vmatprep.subr.bf16.mxu0 0
        %1106 = vmatpush1.bf16.msra.mxu0 %v1085
        %1107 = vmatprep.subr.bf16.mxu0 0
        %1108 = vmatpush1.bf16.msra.mxu0 %v1086
        %1109 = vmatprep.subr.bf16.mxu0 0
        %1110 = vmatpush1.bf16.msra.mxu0 %v1087
        %1111 = vmatprep.subr.bf16.mxu0 0
        %1112 = vmatpush1.bf16.msra.mxu0 %v1088
        %1113 = vmatprep.subr.bf16.mxu0 0
        %1114 = vmatpush1.bf16.msra.mxu0 0
        %1115 = vmatprep.subr.bf16.mxu0 0
        %1116 = vmatpush1.bf16.msra.mxu0 0
        %1117 = vmatprep.subr.bf16.mxu0 0
        %1118 = vmatpush1.bf16.msra.mxu0 0
        %1119 = vmatprep.subr.bf16.mxu0 0
        %1120 = vmatpush1.bf16.msra.mxu0 0
        %1121 = vmatprep.subr.bf16.mxu0 0
        %1122 = vmatpush1.bf16.msra.mxu0 0
        %1123 = vmatprep.subr.bf16.mxu0 0
        %1124 = vmatpush1.bf16.msra.mxu0 0
        %1125 = vmatprep.subr.bf16.mxu0 0
        %1126 = vmatpush1.bf16.msra.mxu0 0
        %1127 = vmatprep.subr.bf16.mxu0 0
        %1128 = vmatpush1.bf16.msra.mxu0 0
        %1129 = vmatprep.mubr.bf16.mxu0 0
        %1130 = vmatmul.mubr.bf16.gmra.mrb[0].mxu0 %v1029
        %v1131 = vpop.f32.mrb[0].mxu0
        %v1132 = vadd.f32 0.0, %v1131
        %v1133 = vpop.f32.mrb[0].mxu0
        %v1134 = vpop.f32.mrb[0].mxu0
        %v1135 = vadd.f32 0.0, %v1134
        %v1136 = vpop.f32.mrb[0].mxu0
        %1137 = vmatprep.mubr.bf16.mxu0 0
        %1138 = vmatmul.mubr.bf16.gmra.mrb[0].mxu0 %v1030
        %v1139 = vpop.f32.mrb[0].mxu0
        %v1140 = vadd.f32 0.0, %v1139
        %v1141 = vpop.f32.mrb[0].mxu0
        %v1142 = vpop.f32.mrb[0].mxu0
        %v1143 = vadd.f32 0.0, %v1142
        %v1144 = vpop.f32.mrb[0].mxu0
        %1145 = vmatprep.mubr.bf16.mxu0 0
        %1146 = vmatmul.mubr.bf16.gmra.mrb[0].mxu0 %v1031
        %v1147 = vpop.f32.mrb[0].mxu0
        %v1148 = vadd.f32 0.0, %v1147
        %v1149 = vpop.f32.mrb[0].mxu0
        %v1150 = vpop.f32.mrb[0].mxu0
        %v1151 = vadd.f32 0.0, %v1150
        %v1152 = vpop.f32.mrb[0].mxu0
        %1153 = vmatprep.mubr.bf16.mxu0 0
        %1154 = vmatmul.mubr.bf16.gmra.mrb[0].mxu0 %v1032
        %v1155 = vpop.f32.mrb[0].mxu0
        %v1156 = vadd.f32 0.0, %v1155
        %v1157 = vpop.f32.mrb[0].mxu0
        %v1158 = vpop.f32.mrb[0].mxu0
        %v1159 = vadd.f32 0.0, %v1158
        %v1160 = vpop.f32.mrb[0].mxu0
        %1161 = vdwg.mxu0
        %v1162 = vadd.f32 %v1013, %v1132
        %v1163 = vadd.f32 %v1014, %v1135
        %v1164 = vadd.f32 %v1015, %v1140
        %v1165 = vadd.f32 %v1016, %v1143
        %v1166 = vadd.f32 %v1017, %v1148
        %v1167 = vadd.f32 %v1018, %v1151
        %v1168 = vadd.f32 %v1019, %v1156
        %v1169 = vadd.f32 %v1020, %v1159
        %v1170 = vld [vmem:[%s432 + $0x9] sm:$0xff]
        %v1171 = vld [vmem:[%s432 + $0x21] sm:$0xff]
        %v1172 = vld [vmem:[%s432 + $0x39] sm:$0xff]
        %v1173 = vld [vmem:[%s432 + $0x51] sm:$0xff]
        %v1174 = vld [vmem:[%s432 + $0x69] sm:$0xff]
        %v1175 = vld [vmem:[%s432 + $0x81] sm:$0xff]
        %v1176 = vld [vmem:[%s432 + $0x99] sm:$0xff]
        %v1177 = vld [vmem:[%s432 + $0xb1] sm:$0xff]
        %v1178 = vpack.c.bf16 %v1171, %v1170
        %v1179 = vpack.c.bf16 %v1173, %v1172
        %v1180 = vpack.c.bf16 %v1175, %v1174
        %v1181 = vpack.c.bf16 %v1177, %v1176
        %v1182 = vld [vmem:[%s1 + $0x140] sm:$0xf]
        %v1183 = vld [vmem:[%s1 + $0x144] sm:$0xf]
        %v1184 = vld [vmem:[%s1 + $0x148] sm:$0xf]
        %v1185 = vld [vmem:[%s1 + $0x14c] sm:$0xf]
        %v1186 = vld [vmem:[%s1 + $0x150] sm:$0xf]
        %v1187 = vld [vmem:[%s1 + $0x154] sm:$0xf]
        %v1188 = vld [vmem:[%s1 + $0x158] sm:$0xf]
        %v1189 = vld [vmem:[%s1 + $0x15c] sm:$0xf]
        %v1190 = vld [vmem:[%s1 + $0x160] sm:$0xf]
        %v1191 = vld [vmem:[%s1 + $0x164] sm:$0xf]
        %v1192 = vld [vmem:[%s1 + $0x168] sm:$0xf]
        %v1193 = vld [vmem:[%s1 + $0x16c] sm:$0xf]
        %v1194 = vld [vmem:[%s1 + $0x170] sm:$0xf]
        %v1195 = vld [vmem:[%s1 + $0x174] sm:$0xf]
        %v1196 = vld [vmem:[%s1 + $0x178] sm:$0xf]
        %v1197 = vld [vmem:[%s1 + $0x17c] sm:$0xf]
        %v1214 = vunpack.c.l.b16 %v1182
        %v1215 = vunpack.c.l.b16 %v1183
        %v1216 = vunpack.c.l.b16 %v1184
        %v1217 = vunpack.c.l.b16 %v1185
        %v1218 = vunpack.c.l.b16 %v1186
        %v1219 = vunpack.c.l.b16 %v1187
        %v1220 = vunpack.c.l.b16 %v1188
        %v1221 = vunpack.c.l.b16 %v1189
        %v1222 = vunpack.c.l.b16 %v1190
        %v1223 = vunpack.c.l.b16 %v1191
        %v1224 = vunpack.c.l.b16 %v1192
        %v1225 = vunpack.c.l.b16 %v1193
        %v1226 = vunpack.c.l.b16 %v1194
        %v1227 = vunpack.c.l.b16 %v1195
        %v1228 = vunpack.c.l.b16 %v1196
        %v1229 = vunpack.c.l.b16 %v1197
        %v1230 = vpack.c.b16 %v1215, %v1214
        %v1231 = vpack.c.b16 %v1217, %v1216
        %v1232 = vpack.c.b16 %v1219, %v1218
        %v1233 = vpack.c.b16 %v1221, %v1220
        %v1234 = vpack.c.b16 %v1223, %v1222
        %v1235 = vpack.c.b16 %v1225, %v1224
        %v1236 = vpack.c.b16 %v1227, %v1226
        %v1237 = vpack.c.b16 %v1229, %v1228
        %1246 = vmatprep.subr.bf16.mxu0 0
        %1247 = vmatpush1.bf16.msra.mxu0 %v1230
        %1248 = vmatprep.subr.bf16.mxu0 0
        %1249 = vmatpush1.bf16.msra.mxu0 %v1231
        %1250 = vmatprep.subr.bf16.mxu0 0
        %1251 = vmatpush1.bf16.msra.mxu0 %v1232
        %1252 = vmatprep.subr.bf16.mxu0 0
        %1253 = vmatpush1.bf16.msra.mxu0 %v1233
        %1254 = vmatprep.subr.bf16.mxu0 0
        %1255 = vmatpush1.bf16.msra.mxu0 %v1234
        %1256 = vmatprep.subr.bf16.mxu0 0
        %1257 = vmatpush1.bf16.msra.mxu0 %v1235
        %1258 = vmatprep.subr.bf16.mxu0 0
        %1259 = vmatpush1.bf16.msra.mxu0 %v1236
        %1260 = vmatprep.subr.bf16.mxu0 0
        %1261 = vmatpush1.bf16.msra.mxu0 %v1237
        %1262 = vmatprep.subr.bf16.mxu0 0
        %1263 = vmatpush1.bf16.msra.mxu0 0
        %1264 = vmatprep.subr.bf16.mxu0 0
        %1265 = vmatpush1.bf16.msra.mxu0 0
        %1266 = vmatprep.subr.bf16.mxu0 0
        %1267 = vmatpush1.bf16.msra.mxu0 0
        %1268 = vmatprep.subr.bf16.mxu0 0
        %1269 = vmatpush1.bf16.msra.mxu0 0
        %1270 = vmatprep.subr.bf16.mxu0 0
        %1271 = vmatpush1.bf16.msra.mxu0 0
        %1272 = vmatprep.subr.bf16.mxu0 0
        %1273 = vmatpush1.bf16.msra.mxu0 0
        %1274 = vmatprep.subr.bf16.mxu0 0
        %1275 = vmatpush1.bf16.msra.mxu0 0
        %1276 = vmatprep.subr.bf16.mxu0 0
        %1277 = vmatpush1.bf16.msra.mxu0 0
        %1278 = vmatprep.mubr.bf16.mxu0 0
        %1279 = vmatmul.mubr.bf16.gmra.mrb[0].mxu0 %v1178
        %v1280 = vpop.f32.mrb[0].mxu0
        %v1281 = vadd.f32 0.0, %v1280
        %v1282 = vpop.f32.mrb[0].mxu0
        %v1283 = vpop.f32.mrb[0].mxu0
        %v1284 = vadd.f32 0.0, %v1283
        %v1285 = vpop.f32.mrb[0].mxu0
        %1286 = vmatprep.mubr.bf16.mxu0 0
        %1287 = vmatmul.mubr.bf16.gmra.mrb[0].mxu0 %v1179
        %v1288 = vpop.f32.mrb[0].mxu0
        %v1289 = vadd.f32 0.0, %v1288
        %v1290 = vpop.f32.mrb[0].mxu0
        %v1291 = vpop.f32.mrb[0].mxu0
        %v1292 = vadd.f32 0.0, %v1291
        %v1293 = vpop.f32.mrb[0].mxu0
        %1294 = vmatprep.mubr.bf16.mxu0 0
        %1295 = vmatmul.mubr.bf16.gmra.mrb[0].mxu0 %v1180
        %v1296 = vpop.f32.mrb[0].mxu0
        %v1297 = vadd.f32 0.0, %v1296
        %v1298 = vpop.f32.mrb[0].mxu0
        %v1299 = vpop.f32.mrb[0].mxu0
        %v1300 = vadd.f32 0.0, %v1299
        %v1301 = vpop.f32.mrb[0].mxu0
        %1302 = vmatprep.mubr.bf16.mxu0 0
        %1303 = vmatmul.mubr.bf16.gmra.mrb[0].mxu0 %v1181
        %v1304 = vpop.f32.mrb[0].mxu0
        %v1305 = vadd.f32 0.0, %v1304
        %v1306 = vpop.f32.mrb[0].mxu0
        %v1307 = vpop.f32.mrb[0].mxu0
        %v1308 = vadd.f32 0.0, %v1307
        %v1309 = vpop.f32.mrb[0].mxu0
        %1310 = vdwg.mxu0
        %v1311 = vadd.f32 %v1162, %v1281
        %v1312 = vadd.f32 %v1163, %v1284
        %v1313 = vadd.f32 %v1164, %v1289
        %v1314 = vadd.f32 %v1165, %v1292
        %v1315 = vadd.f32 %v1166, %v1297
        %v1316 = vadd.f32 %v1167, %v1300
        %v1317 = vadd.f32 %v1168, %v1305
        %v1318 = vadd.f32 %v1169, %v1308
        %s1319 = scalar_lea.vmem [#allocation2], 48
        %v1320 = vld [vmem:[%s1319 + $0x7] sm:$0xff]
        %v1321 = vld [vmem:[%s1319 + $0x1f] sm:$0xff]
        %v1322 = vld [vmem:[%s1319 + $0x37] sm:$0xff]
        %v1323 = vld [vmem:[%s1319 + $0x4f] sm:$0xff]
        %v1324 = vld [vmem:[%s1319 + $0x67] sm:$0xff]
        %v1325 = vld [vmem:[%s1319 + $0x7f] sm:$0xff]
        %v1326 = vld [vmem:[%s1319 + $0x97] sm:$0xff]
        %v1327 = vld [vmem:[%s1319 + $0xaf] sm:$0xff]
        %v1328 = vpack.c.bf16 %v1321, %v1320
        %v1329 = vpack.c.bf16 %v1323, %v1322
        %v1330 = vpack.c.bf16 %v1325, %v1324
        %v1331 = vpack.c.bf16 %v1327, %v1326
        %v1332 = vld [vmem:[%s1 + $0x180] sm:$0xf]
        %v1333 = vld [vmem:[%s1 + $0x184] sm:$0xf]
        %v1334 = vld [vmem:[%s1 + $0x188] sm:$0xf]
        %v1335 = vld [vmem:[%s1 + $0x18c] sm:$0xf]
        %v1336 = vld [vmem:[%s1 + $0x190] sm:$0xf]
        %v1337 = vld [vmem:[%s1 + $0x194] sm:$0xf]
        %v1338 = vld [vmem:[%s1 + $0x198] sm:$0xf]
        %v1339 = vld [vmem:[%s1 + $0x19c] sm:$0xf]
        %v1340 = vld [vmem:[%s1 + $0x1a0] sm:$0xf]
        %v1341 = vld [vmem:[%s1 + $0x1a4] sm:$0xf]
        %v1342 = vld [vmem:[%s1 + $0x1a8] sm:$0xf]
        %v1343 = vld [vmem:[%s1 + $0x1ac] sm:$0xf]
        %v1344 = vld [vmem:[%s1 + $0x1b0] sm:$0xf]
        %v1345 = vld [vmem:[%s1 + $0x1b4] sm:$0xf]
        %v1346 = vld [vmem:[%s1 + $0x1b8] sm:$0xf]
        %v1347 = vld [vmem:[%s1 + $0x1bc] sm:$0xf]
        %v1364 = vunpack.c.l.b16 %v1332
        %v1365 = vunpack.c.l.b16 %v1333
        %v1366 = vunpack.c.l.b16 %v1334
        %v1367 = vunpack.c.l.b16 %v1335
        %v1368 = vunpack.c.l.b16 %v1336
        %v1369 = vunpack.c.l.b16 %v1337
        %v1370 = vunpack.c.l.b16 %v1338
        %v1371 = vunpack.c.l.b16 %v1339
        %v1372 = vunpack.c.l.b16 %v1340
        %v1373 = vunpack.c.l.b16 %v1341
        %v1374 = vunpack.c.l.b16 %v1342
        %v1375 = vunpack.c.l.b16 %v1343
        %v1376 = vunpack.c.l.b16 %v1344
        %v1377 = vunpack.c.l.b16 %v1345
        %v1378 = vunpack.c.l.b16 %v1346
        %v1379 = vunpack.c.l.b16 %v1347
        %v1380 = vpack.c.b16 %v1365, %v1364
        %v1381 = vpack.c.b16 %v1367, %v1366
        %v1382 = vpack.c.b16 %v1369, %v1368
        %v1383 = vpack.c.b16 %v1371, %v1370
        %v1384 = vpack.c.b16 %v1373, %v1372
        %v1385 = vpack.c.b16 %v1375, %v1374
        %v1386 = vpack.c.b16 %v1377, %v1376
        %v1387 = vpack.c.b16 %v1379, %v1378
        %1396 = vmatprep.subr.bf16.mxu0 0
        %1397 = vmatpush1.bf16.msra.mxu0 %v1380
        %1398 = vmatprep.subr.bf16.mxu0 0
        %1399 = vmatpush1.bf16.msra.mxu0 %v1381
        %1400 = vmatprep.subr.bf16.mxu0 0
        %1401 = vmatpush1.bf16.msra.mxu0 %v1382
        %1402 = vmatprep.subr.bf16.mxu0 0
        %1403 = vmatpush1.bf16.msra.mxu0 %v1383
        %1404 = vmatprep.subr.bf16.mxu0 0
        %1405 = vmatpush1.bf16.msra.mxu0 %v1384
        %1406 = vmatprep.subr.bf16.mxu0 0
        %1407 = vmatpush1.bf16.msra.mxu0 %v1385
        %1408 = vmatprep.subr.bf16.mxu0 0
        %1409 = vmatpush1.bf16.msra.mxu0 %v1386
        %1410 = vmatprep.subr.bf16.mxu0 0
        %1411 = vmatpush1.bf16.msra.mxu0 %v1387
        %1412 = vmatprep.subr.bf16.mxu0 0
        %1413 = vmatpush1.bf16.msra.mxu0 0
        %1414 = vmatprep.subr.bf16.mxu0 0
        %1415 = vmatpush1.bf16.msra.mxu0 0
        %1416 = vmatprep.subr.bf16.mxu0 0
        %1417 = vmatpush1.bf16.msra.mxu0 0
        %1418 = vmatprep.subr.bf16.mxu0 0
        %1419 = vmatpush1.bf16.msra.mxu0 0
        %1420 = vmatprep.subr.bf16.mxu0 0
        %1421 = vmatpush1.bf16.msra.mxu0 0
        %1422 = vmatprep.subr.bf16.mxu0 0
        %1423 = vmatpush1.bf16.msra.mxu0 0
        %1424 = vmatprep.subr.bf16.mxu0 0
        %1425 = vmatpush1.bf16.msra.mxu0 0
        %1426 = vmatprep.subr.bf16.mxu0 0
        %1427 = vmatpush1.bf16.msra.mxu0 0
        %1428 = vmatprep.mubr.bf16.mxu0 0
        %1429 = vmatmul.mubr.bf16.gmra.mrb[0].mxu0 %v1328
        %v1430 = vpop.f32.mrb[0].mxu0
        %v1431 = vadd.f32 0.0, %v1430
        %v1432 = vpop.f32.mrb[0].mxu0
        %v1433 = vpop.f32.mrb[0].mxu0
        %v1434 = vadd.f32 0.0, %v1433
        %v1435 = vpop.f32.mrb[0].mxu0
        %1436 = vmatprep.mubr.bf16.mxu0 0
        %1437 = vmatmul.mubr.bf16.gmra.mrb[0].mxu0 %v1329
        %v1438 = vpop.f32.mrb[0].mxu0
        %v1439 = vadd.f32 0.0, %v1438
        %v1440 = vpop.f32.mrb[0].mxu0
        %v1441 = vpop.f32.mrb[0].mxu0
        %v1442 = vadd.f32 0.0, %v1441
        %v1443 = vpop.f32.mrb[0].mxu0
        %1444 = vmatprep.mubr.bf16.mxu0 0
        %1445 = vmatmul.mubr.bf16.gmra.mrb[0].mxu0 %v1330
        %v1446 = vpop.f32.mrb[0].mxu0
        %v1447 = vadd.f32 0.0, %v1446
        %v1448 = vpop.f32.mrb[0].mxu0
        %v1449 = vpop.f32.mrb[0].mxu0
        %v1450 = vadd.f32 0.0, %v1449
        %v1451 = vpop.f32.mrb[0].mxu0
        %1452 = vmatprep.mubr.bf16.mxu0 0
        %1453 = vmatmul.mubr.bf16.gmra.mrb[0].mxu0 %v1331
        %v1454 = vpop.f32.mrb[0].mxu0
        %v1455 = vadd.f32 0.0, %v1454
        %v1456 = vpop.f32.mrb[0].mxu0
        %v1457 = vpop.f32.mrb[0].mxu0
        %v1458 = vadd.f32 0.0, %v1457
        %v1459 = vpop.f32.mrb[0].mxu0
        %1460 = vdwg.mxu0
        %v1461 = vadd.f32 %v1311, %v1431
        %v1462 = vadd.f32 %v1312, %v1434
        %v1463 = vadd.f32 %v1313, %v1439
        %v1464 = vadd.f32 %v1314, %v1442
        %v1465 = vadd.f32 %v1315, %v1447
        %v1466 = vadd.f32 %v1316, %v1450
        %v1467 = vadd.f32 %v1317, %v1455
        %v1468 = vadd.f32 %v1318, %v1458
        %v1469 = vld [vmem:[%s1319 + $0x8] sm:$0xff]
        %v1470 = vld [vmem:[%s1319 + $0x20] sm:$0xff]
        %v1471 = vld [vmem:[%s1319 + $0x38] sm:$0xff]
        %v1472 = vld [vmem:[%s1319 + $0x50] sm:$0xff]
        %v1473 = vld [vmem:[%s1319 + $0x68] sm:$0xff]
        %v1474 = vld [vmem:[%s1319 + $0x80] sm:$0xff]
        %v1475 = vld [vmem:[%s1319 + $0x98] sm:$0xff]
        %v1476 = vld [vmem:[%s1319 + $0xb0] sm:$0xff]
        %v1477 = vpack.c.bf16 %v1470, %v1469
        %v1478 = vpack.c.bf16 %v1472, %v1471
        %v1479 = vpack.c.bf16 %v1474, %v1473
        %v1480 = vpack.c.bf16 %v1476, %v1475
        %v1481 = vld [vmem:[%s1 + $0x1c0] sm:$0xf]
        %v1482 = vld [vmem:[%s1 + $0x1c4] sm:$0xf]
        %v1483 = vld [vmem:[%s1 + $0x1c8] sm:$0xf]
        %v1484 = vld [vmem:[%s1 + $0x1cc] sm:$0xf]
        %v1485 = vld [vmem:[%s1 + $0x1d0] sm:$0xf]
        %v1486 = vld [vmem:[%s1 + $0x1d4] sm:$0xf]
        %v1487 = vld [vmem:[%s1 + $0x1d8] sm:$0xf]
        %v1488 = vld [vmem:[%s1 + $0x1dc] sm:$0xf]
        %v1489 = vld [vmem:[%s1 + $0x1e0] sm:$0xf]
        %v1490 = vld [vmem:[%s1 + $0x1e4] sm:$0xf]
        %v1491 = vld [vmem:[%s1 + $0x1e8] sm:$0xf]
        %v1492 = vld [vmem:[%s1 + $0x1ec] sm:$0xf]
        %v1493 = vld [vmem:[%s1 + $0x1f0] sm:$0xf]
        %v1494 = vld [vmem:[%s1 + $0x1f4] sm:$0xf]
        %v1495 = vld [vmem:[%s1 + $0x1f8] sm:$0xf]
        %v1496 = vld [vmem:[%s1 + $0x1fc] sm:$0xf]
        %v1513 = vunpack.c.l.b16 %v1481
        %v1514 = vunpack.c.l.b16 %v1482
        %v1515 = vunpack.c.l.b16 %v1483
        %v1516 = vunpack.c.l.b16 %v1484
        %v1517 = vunpack.c.l.b16 %v1485
        %v1518 = vunpack.c.l.b16 %v1486
        %v1519 = vunpack.c.l.b16 %v1487
        %v1520 = vunpack.c.l.b16 %v1488
        %v1521 = vunpack.c.l.b16 %v1489
        %v1522 = vunpack.c.l.b16 %v1490
        %v1523 = vunpack.c.l.b16 %v1491
        %v1524 = vunpack.c.l.b16 %v1492
        %v1525 = vunpack.c.l.b16 %v1493
        %v1526 = vunpack.c.l.b16 %v1494
        %v1527 = vunpack.c.l.b16 %v1495
        %v1528 = vunpack.c.l.b16 %v1496
        %v1529 = vpack.c.b16 %v1514, %v1513
        %v1530 = vpack.c.b16 %v1516, %v1515
        %v1531 = vpack.c.b16 %v1518, %v1517
        %v1532 = vpack.c.b16 %v1520, %v1519
        %v1533 = vpack.c.b16 %v1522, %v1521
        %v1534 = vpack.c.b16 %v1524, %v1523
        %v1535 = vpack.c.b16 %v1526, %v1525
        %v1536 = vpack.c.b16 %v1528, %v1527
        %1545 = vmatprep.subr.bf16.mxu0 0
        %1546 = vmatpush1.bf16.msra.mxu0 %v1529
        %1547 = vmatprep.subr.bf16.mxu0 0
        %1548 = vmatpush1.bf16.msra.mxu0 %v1530
        %1549 = vmatprep.subr.bf16.mxu0 0
        %1550 = vmatpush1.bf16.msra.mxu0 %v1531
        %1551 = vmatprep.subr.bf16.mxu0 0
        %1552 = vmatpush1.bf16.msra.mxu0 %v1532
        %1553 = vmatprep.subr.bf16.mxu0 0
        %1554 = vmatpush1.bf16.msra.mxu0 %v1533
        %1555 = vmatprep.subr.bf16.mxu0 0
        %1556 = vmatpush1.bf16.msra.mxu0 %v1534
        %1557 = vmatprep.subr.bf16.mxu0 0
        %1558 = vmatpush1.bf16.msra.mxu0 %v1535
        %1559 = vmatprep.subr.bf16.mxu0 0
        %1560 = vmatpush1.bf16.msra.mxu0 %v1536
        %1561 = vmatprep.subr.bf16.mxu0 0
        %1562 = vmatpush1.bf16.msra.mxu0 0
        %1563 = vmatprep.subr.bf16.mxu0 0
        %1564 = vmatpush1.bf16.msra.mxu0 0
        %1565 = vmatprep.subr.bf16.mxu0 0
        %1566 = vmatpush1.bf16.msra.mxu0 0
        %1567 = vmatprep.subr.bf16.mxu0 0
        %1568 = vmatpush1.bf16.msra.mxu0 0
        %1569 = vmatprep.subr.bf16.mxu0 0
        %1570 = vmatpush1.bf16.msra.mxu0 0
        %1571 = vmatprep.subr.bf16.mxu0 0
        %1572 = vmatpush1.bf16.msra.mxu0 0
        %1573 = vmatprep.subr.bf16.mxu0 0
        %1574 = vmatpush1.bf16.msra.mxu0 0
        %1575 = vmatprep.subr.bf16.mxu0 0
        %1576 = vmatpush1.bf16.msra.mxu0 0
        %1577 = vmatprep.mubr.bf16.mxu0 0
        %1578 = vmatmul.mubr.bf16.gmra.mrb[0].mxu0 %v1477
        %v1579 = vpop.f32.mrb[0].mxu0
        %v1580 = vadd.f32 0.0, %v1579
        %v1581 = vpop.f32.mrb[0].mxu0
        %v1582 = vpop.f32.mrb[0].mxu0
        %v1583 = vadd.f32 0.0, %v1582
        %v1584 = vpop.f32.mrb[0].mxu0
        %1585 = vmatprep.mubr.bf16.mxu0 0
        %1586 = vmatmul.mubr.bf16.gmra.mrb[0].mxu0 %v1478
        %v1587 = vpop.f32.mrb[0].mxu0
        %v1588 = vadd.f32 0.0, %v1587
        %v1589 = vpop.f32.mrb[0].mxu0
        %v1590 = vpop.f32.mrb[0].mxu0
        %v1591 = vadd.f32 0.0, %v1590
        %v1592 = vpop.f32.mrb[0].mxu0
        %1593 = vmatprep.mubr.bf16.mxu0 0
        %1594 = vmatmul.mubr.bf16.gmra.mrb[0].mxu0 %v1479
        %v1595 = vpop.f32.mrb[0].mxu0
        %v1596 = vadd.f32 0.0, %v1595
        %v1597 = vpop.f32.mrb[0].mxu0
        %v1598 = vpop.f32.mrb[0].mxu0
        %v1599 = vadd.f32 0.0, %v1598
        %v1600 = vpop.f32.mrb[0].mxu0
        %1601 = vmatprep.mubr.bf16.mxu0 0
        %1602 = vmatmul.mubr.bf16.gmra.mrb[0].mxu0 %v1480
        %v1603 = vpop.f32.mrb[0].mxu0
        %v1604 = vadd.f32 0.0, %v1603
        %v1605 = vpop.f32.mrb[0].mxu0
        %v1606 = vpop.f32.mrb[0].mxu0
        %v1607 = vadd.f32 0.0, %v1606
        %v1608 = vpop.f32.mrb[0].mxu0
        %1609 = vdwg.mxu0
        %v1610 = vadd.f32 %v1461, %v1580
        %v1611 = vadd.f32 %v1462, %v1583
        %v1612 = vadd.f32 %v1463, %v1588
        %v1613 = vadd.f32 %v1464, %v1591
        %v1614 = vadd.f32 %v1465, %v1596
        %v1615 = vadd.f32 %v1466, %v1599
        %v1616 = vadd.f32 %v1467, %v1604
        %v1617 = vadd.f32 %v1468, %v1607
        %v1618 = vld [vmem:[%s1319 + $0x9] sm:$0xff]
        %v1619 = vld [vmem:[%s1319 + $0x21] sm:$0xff]
        %v1620 = vld [vmem:[%s1319 + $0x39] sm:$0xff]
        %v1621 = vld [vmem:[%s1319 + $0x51] sm:$0xff]
        %v1622 = vld [vmem:[%s1319 + $0x69] sm:$0xff]
        %v1623 = vld [vmem:[%s1319 + $0x81] sm:$0xff]
        %v1624 = vld [vmem:[%s1319 + $0x99] sm:$0xff]
        %v1625 = vld [vmem:[%s1319 + $0xb1] sm:$0xff]
        %v1626 = vpack.c.bf16 %v1619, %v1618
        %v1627 = vpack.c.bf16 %v1621, %v1620
        %v1628 = vpack.c.bf16 %v1623, %v1622
        %v1629 = vpack.c.bf16 %v1625, %v1624
        %v1630 = vld [vmem:[%s1 + $0x200] sm:$0xf]
        %v1631 = vld [vmem:[%s1 + $0x204] sm:$0xf]
        %v1632 = vld [vmem:[%s1 + $0x208] sm:$0xf]
        %v1633 = vld [vmem:[%s1 + $0x20c] sm:$0xf]
        %v1634 = vld [vmem:[%s1 + $0x210] sm:$0xf]
        %v1635 = vld [vmem:[%s1 + $0x214] sm:$0xf]
        %v1636 = vld [vmem:[%s1 + $0x218] sm:$0xf]
        %v1637 = vld [vmem:[%s1 + $0x21c] sm:$0xf]
        %v1638 = vld [vmem:[%s1 + $0x220] sm:$0xf]
        %v1639 = vld [vmem:[%s1 + $0x224] sm:$0xf]
        %v1640 = vld [vmem:[%s1 + $0x228] sm:$0xf]
        %v1641 = vld [vmem:[%s1 + $0x22c] sm:$0xf]
        %v1642 = vld [vmem:[%s1 + $0x230] sm:$0xf]
        %v1643 = vld [vmem:[%s1 + $0x234] sm:$0xf]
        %v1644 = vld [vmem:[%s1 + $0x238] sm:$0xf]
        %v1645 = vld [vmem:[%s1 + $0x23c] sm:$0xf]
        %v1662 = vunpack.c.l.b16 %v1630
        %v1663 = vunpack.c.l.b16 %v1631
        %v1664 = vunpack.c.l.b16 %v1632
        %v1665 = vunpack.c.l.b16 %v1633
        %v1666 = vunpack.c.l.b16 %v1634
        %v1667 = vunpack.c.l.b16 %v1635
        %v1668 = vunpack.c.l.b16 %v1636
        %v1669 = vunpack.c.l.b16 %v1637
        %v1670 = vunpack.c.l.b16 %v1638
        %v1671 = vunpack.c.l.b16 %v1639
        %v1672 = vunpack.c.l.b16 %v1640
        %v1673 = vunpack.c.l.b16 %v1641
        %v1674 = vunpack.c.l.b16 %v1642
        %v1675 = vunpack.c.l.b16 %v1643
        %v1676 = vunpack.c.l.b16 %v1644
        %v1677 = vunpack.c.l.b16 %v1645
        %v1678 = vpack.c.b16 %v1663, %v1662
        %v1679 = vpack.c.b16 %v1665, %v1664
        %v1680 = vpack.c.b16 %v1667, %v1666
        %v1681 = vpack.c.b16 %v1669, %v1668
        %v1682 = vpack.c.b16 %v1671, %v1670
        %v1683 = vpack.c.b16 %v1673, %v1672
        %v1684 = vpack.c.b16 %v1675, %v1674
        %v1685 = vpack.c.b16 %v1677, %v1676
        %1694 = vmatprep.subr.bf16.mxu0 0
        %1695 = vmatpush1.bf16.msra.mxu0 %v1678
        %1696 = vmatprep.subr.bf16.mxu0 0
        %1697 = vmatpush1.bf16.msra.mxu0 %v1679
        %1698 = vmatprep.subr.bf16.mxu0 0
        %1699 = vmatpush1.bf16.msra.mxu0 %v1680
        %1700 = vmatprep.subr.bf16.mxu0 0
        %1701 = vmatpush1.bf16.msra.mxu0 %v1681
        %1702 = vmatprep.subr.bf16.mxu0 0
        %1703 = vmatpush1.bf16.msra.mxu0 %v1682
        %1704 = vmatprep.subr.bf16.mxu0 0
        %1705 = vmatpush1.bf16.msra.mxu0 %v1683
        %1706 = vmatprep.subr.bf16.mxu0 0
        %1707 = vmatpush1.bf16.msra.mxu0 %v1684
        %1708 = vmatprep.subr.bf16.mxu0 0
        %1709 = vmatpush1.bf16.msra.mxu0 %v1685
        %1710 = vmatprep.subr.bf16.mxu0 0
        %1711 = vmatpush1.bf16.msra.mxu0 0
        %1712 = vmatprep.subr.bf16.mxu0 0
        %1713 = vmatpush1.bf16.msra.mxu0 0
        %1714 = vmatprep.subr.bf16.mxu0 0
        %1715 = vmatpush1.bf16.msra.mxu0 0
        %1716 = vmatprep.subr.bf16.mxu0 0
        %1717 = vmatpush1.bf16.msra.mxu0 0
        %1718 = vmatprep.subr.bf16.mxu0 0
        %1719 = vmatpush1.bf16.msra.mxu0 0
        %1720 = vmatprep.subr.bf16.mxu0 0
        %1721 = vmatpush1.bf16.msra.mxu0 0
        %1722 = vmatprep.subr.bf16.mxu0 0
        %1723 = vmatpush1.bf16.msra.mxu0 0
        %1724 = vmatprep.subr.bf16.mxu0 0
        %1725 = vmatpush1.bf16.msra.mxu0 0
        %1726 = vmatprep.mubr.bf16.mxu0 0
        %1727 = vmatmul.mubr.bf16.gmra.mrb[0].mxu0 %v1626
        %v1728 = vpop.f32.mrb[0].mxu0
        %v1729 = vadd.f32 0.0, %v1728
        %v1730 = vpop.f32.mrb[0].mxu0
        %v1731 = vpop.f32.mrb[0].mxu0
        %v1732 = vadd.f32 0.0, %v1731
        %v1733 = vpop.f32.mrb[0].mxu0
        %1734 = vmatprep.mubr.bf16.mxu0 0
        %1735 = vmatmul.mubr.bf16.gmra.mrb[0].mxu0 %v1627
        %v1736 = vpop.f32.mrb[0].mxu0
        %v1737 = vadd.f32 0.0, %v1736
        %v1738 = vpop.f32.mrb[0].mxu0
        %v1739 = vpop.f32.mrb[0].mxu0
        %v1740 = vadd.f32 0.0, %v1739
        %v1741 = vpop.f32.mrb[0].mxu0
        %1742 = vmatprep.mubr.bf16.mxu0 0
        %1743 = vmatmul.mubr.bf16.gmra.mrb[0].mxu0 %v1628
        %v1744 = vpop.f32.mrb[0].mxu0
        %v1745 = vadd.f32 0.0, %v1744
        %v1746 = vpop.f32.mrb[0].mxu0
        %v1747 = vpop.f32.mrb[0].mxu0
        %v1748 = vadd.f32 0.0, %v1747
        %v1749 = vpop.f32.mrb[0].mxu0
        %1750 = vmatprep.mubr.bf16.mxu0 0
        %1751 = vmatmul.mubr.bf16.gmra.mrb[0].mxu0 %v1629
        %v1752 = vpop.f32.mrb[0].mxu0
        %v1753 = vadd.f32 0.0, %v1752
        %v1754 = vpop.f32.mrb[0].mxu0
        %v1755 = vpop.f32.mrb[0].mxu0
        %v1756 = vadd.f32 0.0, %v1755
        %v1757 = vpop.f32.mrb[0].mxu0
        %1758 = vdwg.mxu0
        %v1759 = vadd.f32 %v1610, %v1729
        %v1760 = vadd.f32 %v1611, %v1732
        %v1761 = vadd.f32 %v1612, %v1737
        %v1762 = vadd.f32 %v1613, %v1740
        %v1763 = vadd.f32 %v1614, %v1745
        %v1764 = vadd.f32 %v1615, %v1748
        %v1765 = vadd.f32 %v1616, %v1753
        %v1766 = vadd.f32 %v1617, %v1756
        %v1767 = vld [vmem:[%s2] sm:$0x1]
        %v1769 = vlaneseq
        %v1770 = vshrl.u32 %v1769, 7
        %v1771 = vsub.s32 0, %v1770
        %v1772 = vrot.slane %v1767, %v1771
        %v1774 = vadd.f32 %v1759, %v1772
        %v1775 = vadd.f32 %v1760, %v1772
        %v1776 = vadd.f32 %v1761, %v1772
        %v1777 = vadd.f32 %v1762, %v1772
        %v1778 = vadd.f32 %v1763, %v1772
        %v1779 = vadd.f32 %v1764, %v1772
        %v1780 = vadd.f32 %v1765, %v1772
        %v1781 = vadd.f32 %v1766, %v1772
        %v1782 = vmax.f32 %v1774, 0.0
        %v1783 = vmax.f32 %v1775, 0.0
        %v1784 = vmax.f32 %v1776, 0.0
        %v1785 = vmax.f32 %v1777, 0.0
        %v1786 = vmax.f32 %v1778, 0.0
        %v1787 = vmax.f32 %v1779, 0.0
        %v1788 = vmax.f32 %v1780, 0.0
        %v1789 = vmax.f32 %v1781, 0.0
        %1790 = vst [vmem:[%s432 + $0x8] sm:$0xff] %v1782
        %1791 = vst [vmem:[%s432 + $0x20] sm:$0xff] %v1783
        %1792 = vst [vmem:[%s432 + $0x38] sm:$0xff] %v1784
        %1793 = vst [vmem:[%s432 + $0x50] sm:$0xff] %v1785
        %1794 = vst [vmem:[%s432 + $0x68] sm:$0xff] %v1786
        %1795 = vst [vmem:[%s432 + $0x80] sm:$0xff] %v1787
        %1796 = vst [vmem:[%s432 + $0x98] sm:$0xff] %v1788
        %1797 = vst [vmem:[%s432 + $0xb0] sm:$0xff] %v1789
        %v1798 = vld [vmem:[#allocation2 + $0x7] sm:$0xff]
        %v1799 = vld [vmem:[#allocation2 + $0x1f] sm:$0xff]
        %v1800 = vld [vmem:[#allocation2 + $0x37] sm:$0xff]
        %v1801 = vld [vmem:[#allocation2 + $0x4f] sm:$0xff]
        %v1802 = vld [vmem:[#allocation2 + $0x67] sm:$0xff]
        %v1803 = vld [vmem:[#allocation2 + $0x7f] sm:$0xff]
        %v1804 = vld [vmem:[#allocation2 + $0x97] sm:$0xff]
        %v1805 = vld [vmem:[#allocation2 + $0xaf] sm:$0xff]
        %v1806 = vpack.c.bf16 %v1799, %v1798
        %v1807 = vpack.c.bf16 %v1801, %v1800
        %v1808 = vpack.c.bf16 %v1803, %v1802
        %v1809 = vpack.c.bf16 %v1805, %v1804
        %v1810 = vld [vmem:[%s3] sm:$0xf]
        %v1811 = vld [vmem:[%s3 + $0x4] sm:$0xf]
        %v1812 = vld [vmem:[%s3 + $0x8] sm:$0xf]
        %v1813 = vld [vmem:[%s3 + $0xc] sm:$0xf]
        %v1814 = vld [vmem:[%s3 + $0x10] sm:$0xf]
        %v1815 = vld [vmem:[%s3 + $0x14] sm:$0xf]
        %v1816 = vld [vmem:[%s3 + $0x18] sm:$0xf]
        %v1817 = vld [vmem:[%s3 + $0x1c] sm:$0xf]
        %v1818 = vld [vmem:[%s3 + $0x20] sm:$0xf]
        %v1819 = vld [vmem:[%s3 + $0x24] sm:$0xf]
        %v1820 = vld [vmem:[%s3 + $0x28] sm:$0xf]
        %v1821 = vld [vmem:[%s3 + $0x2c] sm:$0xf]
        %v1822 = vld [vmem:[%s3 + $0x30] sm:$0xf]
        %v1823 = vld [vmem:[%s3 + $0x34] sm:$0xf]
        %v1824 = vld [vmem:[%s3 + $0x38] sm:$0xf]
        %v1825 = vld [vmem:[%s3 + $0x3c] sm:$0xf]
        %v1826 = vld [vmem:[#allocation2 + $0x8] sm:$0xff]
        %v1827 = vld [vmem:[#allocation2 + $0x20] sm:$0xff]
        %v1828 = vld [vmem:[#allocation2 + $0x38] sm:$0xff]
        %v1829 = vld [vmem:[#allocation2 + $0x50] sm:$0xff]
        %v1830 = vld [vmem:[#allocation2 + $0x68] sm:$0xff]
        %v1831 = vld [vmem:[#allocation2 + $0x80] sm:$0xff]
        %v1832 = vld [vmem:[#allocation2 + $0x98] sm:$0xff]
        %v1833 = vld [vmem:[#allocation2 + $0xb0] sm:$0xff]
        %v1834 = vpack.c.bf16 %v1827, %v1826
        %v1835 = vpack.c.bf16 %v1829, %v1828
        %v1836 = vpack.c.bf16 %v1831, %v1830
        %v1837 = vpack.c.bf16 %v1833, %v1832
        %v1838 = vld [vmem:[%s3 + $0x40] sm:$0xf]
        %v1839 = vld [vmem:[%s3 + $0x44] sm:$0xf]
        %v1840 = vld [vmem:[%s3 + $0x48] sm:$0xf]
        %v1841 = vld [vmem:[%s3 + $0x4c] sm:$0xf]
        %v1842 = vld [vmem:[%s3 + $0x50] sm:$0xf]
        %v1843 = vld [vmem:[%s3 + $0x54] sm:$0xf]
        %v1844 = vld [vmem:[%s3 + $0x58] sm:$0xf]
        %v1845 = vld [vmem:[%s3 + $0x5c] sm:$0xf]
        %v1846 = vld [vmem:[%s3 + $0x60] sm:$0xf]
        %v1847 = vld [vmem:[%s3 + $0x64] sm:$0xf]
        %v1848 = vld [vmem:[%s3 + $0x68] sm:$0xf]
        %v1849 = vld [vmem:[%s3 + $0x6c] sm:$0xf]
        %v1850 = vld [vmem:[%s3 + $0x70] sm:$0xf]
        %v1851 = vld [vmem:[%s3 + $0x74] sm:$0xf]
        %v1852 = vld [vmem:[%s3 + $0x78] sm:$0xf]
        %v1853 = vld [vmem:[%s3 + $0x7c] sm:$0xf]
        %v1870 = vunpack.c.l.b16 %v1838
        %v1871 = vunpack.c.l.b16 %v1839
        %v1872 = vunpack.c.l.b16 %v1840
        %v1873 = vunpack.c.l.b16 %v1841
        %v1874 = vunpack.c.l.b16 %v1842
        %v1875 = vunpack.c.l.b16 %v1843
        %v1876 = vunpack.c.l.b16 %v1844
        %v1877 = vunpack.c.l.b16 %v1845
        %v1878 = vunpack.c.l.b16 %v1846
        %v1879 = vunpack.c.l.b16 %v1847
        %v1880 = vunpack.c.l.b16 %v1848
        %v1881 = vunpack.c.l.b16 %v1849
        %v1882 = vunpack.c.l.b16 %v1850
        %v1883 = vunpack.c.l.b16 %v1851
        %v1884 = vunpack.c.l.b16 %v1852
        %v1885 = vunpack.c.l.b16 %v1853
        %v1886 = vpack.c.b16 %v1871, %v1870
        %v1887 = vpack.c.b16 %v1873, %v1872
        %v1888 = vpack.c.b16 %v1875, %v1874
        %v1889 = vpack.c.b16 %v1877, %v1876
        %v1890 = vpack.c.b16 %v1879, %v1878
        %v1891 = vpack.c.b16 %v1881, %v1880
        %v1892 = vpack.c.b16 %v1883, %v1882
        %v1893 = vpack.c.b16 %v1885, %v1884
        %1902 = vmatprep.subr.bf16.mxu0 0
        %1903 = vmatpush1.bf16.msra.mxu0 %v1886
        %1904 = vmatprep.subr.bf16.mxu0 0
        %1905 = vmatpush1.bf16.msra.mxu0 %v1887
        %1906 = vmatprep.subr.bf16.mxu0 0
        %1907 = vmatpush1.bf16.msra.mxu0 %v1888
        %1908 = vmatprep.subr.bf16.mxu0 0
        %1909 = vmatpush1.bf16.msra.mxu0 %v1889
        %1910 = vmatprep.subr.bf16.mxu0 0
        %1911 = vmatpush1.bf16.msra.mxu0 %v1890
        %1912 = vmatprep.subr.bf16.mxu0 0
        %1913 = vmatpush1.bf16.msra.mxu0 %v1891
        %1914 = vmatprep.subr.bf16.mxu0 0
        %1915 = vmatpush1.bf16.msra.mxu0 %v1892
        %1916 = vmatprep.subr.bf16.mxu0 0
        %1917 = vmatpush1.bf16.msra.mxu0 %v1893
        %1918 = vmatprep.subr.bf16.mxu0 0
        %1919 = vmatpush1.bf16.msra.mxu0 0
        %1920 = vmatprep.subr.bf16.mxu0 0
        %1921 = vmatpush1.bf16.msra.mxu0 0
        %1922 = vmatprep.subr.bf16.mxu0 0
        %1923 = vmatpush1.bf16.msra.mxu0 0
        %1924 = vmatprep.subr.bf16.mxu0 0
        %1925 = vmatpush1.bf16.msra.mxu0 0
        %1926 = vmatprep.subr.bf16.mxu0 0
        %1927 = vmatpush1.bf16.msra.mxu0 0
        %1928 = vmatprep.subr.bf16.mxu0 0
        %1929 = vmatpush1.bf16.msra.mxu0 0
        %1930 = vmatprep.subr.bf16.mxu0 0
        %1931 = vmatpush1.bf16.msra.mxu0 0
        %1932 = vmatprep.subr.bf16.mxu0 0
        %1933 = vmatpush1.bf16.msra.mxu0 0
        %1934 = vmatprep.mubr.bf16.mxu0 0
        %1935 = vmatmul.mubr.bf16.gmra.mrb[0].mxu0 %v1834
        %v1936 = vpop.f32.mrb[0].mxu0
        %v1937 = vadd.f32 0.0, %v1936
        %v1938 = vpop.f32.mrb[0].mxu0
        %v1939 = vpop.f32.mrb[0].mxu0
        %v1940 = vadd.f32 0.0, %v1939
        %v1941 = vpop.f32.mrb[0].mxu0
        %1942 = vmatprep.mubr.bf16.mxu0 0
        %1943 = vmatmul.mubr.bf16.gmra.mrb[0].mxu0 %v1835
        %v1944 = vpop.f32.mrb[0].mxu0
        %v1945 = vadd.f32 0.0, %v1944
        %v1946 = vpop.f32.mrb[0].mxu0
        %v1947 = vpop.f32.mrb[0].mxu0
        %v1948 = vadd.f32 0.0, %v1947
        %v1949 = vpop.f32.mrb[0].mxu0
        %1950 = vmatprep.mubr.bf16.mxu0 0
        %1951 = vmatmul.mubr.bf16.gmra.mrb[0].mxu0 %v1836
        %v1952 = vpop.f32.mrb[0].mxu0
        %v1953 = vadd.f32 0.0, %v1952
        %v1954 = vpop.f32.mrb[0].mxu0
        %v1955 = vpop.f32.mrb[0].mxu0
        %v1956 = vadd.f32 0.0, %v1955
        %v1957 = vpop.f32.mrb[0].mxu0
        %1958 = vmatprep.mubr.bf16.mxu0 0
        %1959 = vmatmul.mubr.bf16.gmra.mrb[0].mxu0 %v1837
        %v1960 = vpop.f32.mrb[0].mxu0
        %v1961 = vadd.f32 0.0, %v1960
        %v1962 = vpop.f32.mrb[0].mxu0
        %v1963 = vpop.f32.mrb[0].mxu0
        %v1964 = vadd.f32 0.0, %v1963
        %v1965 = vpop.f32.mrb[0].mxu0
        %1966 = vdwg.mxu0
        %v1983 = vunpack.c.l.b16 %v1810
        %v1984 = vunpack.c.l.b16 %v1811
        %v1985 = vunpack.c.l.b16 %v1812
        %v1986 = vunpack.c.l.b16 %v1813
        %v1987 = vunpack.c.l.b16 %v1814
        %v1988 = vunpack.c.l.b16 %v1815
        %v1989 = vunpack.c.l.b16 %v1816
        %v1990 = vunpack.c.l.b16 %v1817
        %v1991 = vunpack.c.l.b16 %v1818
        %v1992 = vunpack.c.l.b16 %v1819
        %v1993 = vunpack.c.l.b16 %v1820
        %v1994 = vunpack.c.l.b16 %v1821
        %v1995 = vunpack.c.l.b16 %v1822
        %v1996 = vunpack.c.l.b16 %v1823
        %v1997 = vunpack.c.l.b16 %v1824
        %v1998 = vunpack.c.l.b16 %v1825
        %v1999 = vpack.c.b16 %v1984, %v1983
        %v2000 = vpack.c.b16 %v1986, %v1985
        %v2001 = vpack.c.b16 %v1988, %v1987
        %v2002 = vpack.c.b16 %v1990, %v1989
        %v2003 = vpack.c.b16 %v1992, %v1991
        %v2004 = vpack.c.b16 %v1994, %v1993
        %v2005 = vpack.c.b16 %v1996, %v1995
        %v2006 = vpack.c.b16 %v1998, %v1997
        %2015 = vmatprep.subr.bf16.mxu0 0
        %2016 = vmatpush1.bf16.msra.mxu0 %v1999
        %2017 = vmatprep.subr.bf16.mxu0 0
        %2018 = vmatpush1.bf16.msra.mxu0 %v2000
        %2019 = vmatprep.subr.bf16.mxu0 0
        %2020 = vmatpush1.bf16.msra.mxu0 %v2001
        %2021 = vmatprep.subr.bf16.mxu0 0
        %2022 = vmatpush1.bf16.msra.mxu0 %v2002
        %2023 = vmatprep.subr.bf16.mxu0 0
        %2024 = vmatpush1.bf16.msra.mxu0 %v2003
        %2025 = vmatprep.subr.bf16.mxu0 0
        %2026 = vmatpush1.bf16.msra.mxu0 %v2004
        %2027 = vmatprep.subr.bf16.mxu0 0
        %2028 = vmatpush1.bf16.msra.mxu0 %v2005
        %2029 = vmatprep.subr.bf16.mxu0 0
        %2030 = vmatpush1.bf16.msra.mxu0 %v2006
        %2031 = vmatprep.subr.bf16.mxu0 0
        %2032 = vmatpush1.bf16.msra.mxu0 0
        %2033 = vmatprep.subr.bf16.mxu0 0
        %2034 = vmatpush1.bf16.msra.mxu0 0
        %2035 = vmatprep.subr.bf16.mxu0 0
        %2036 = vmatpush1.bf16.msra.mxu0 0
        %2037 = vmatprep.subr.bf16.mxu0 0
        %2038 = vmatpush1.bf16.msra.mxu0 0
        %2039 = vmatprep.subr.bf16.mxu0 0
        %2040 = vmatpush1.bf16.msra.mxu0 0
        %2041 = vmatprep.subr.bf16.mxu0 0
        %2042 = vmatpush1.bf16.msra.mxu0 0
        %2043 = vmatprep.subr.bf16.mxu0 0
        %2044 = vmatpush1.bf16.msra.mxu0 0
        %2045 = vmatprep.subr.bf16.mxu0 0
        %2046 = vmatpush1.bf16.msra.mxu0 0
        %2047 = vmatprep.mubr.bf16.mxu0 0
        %2048 = vmatmul.mubr.bf16.gmra.mrb[0].mxu0 %v1806
        %v2049 = vpop.f32.mrb[0].mxu0
        %v2050 = vadd.f32 %v1937, %v2049
        %v2051 = vpop.f32.mrb[0].mxu0
        %v2052 = vpop.f32.mrb[0].mxu0
        %v2053 = vadd.f32 %v1940, %v2052
        %v2054 = vpop.f32.mrb[0].mxu0
        %2055 = vmatprep.mubr.bf16.mxu0 0
        %2056 = vmatmul.mubr.bf16.gmra.mrb[0].mxu0 %v1807
        %v2057 = vpop.f32.mrb[0].mxu0
        %v2058 = vadd.f32 %v1945, %v2057
        %v2059 = vpop.f32.mrb[0].mxu0
        %v2060 = vpop.f32.mrb[0].mxu0
        %v2061 = vadd.f32 %v1948, %v2060
        %v2062 = vpop.f32.mrb[0].mxu0
        %2063 = vmatprep.mubr.bf16.mxu0 0
        %2064 = vmatmul.mubr.bf16.gmra.mrb[0].mxu0 %v1808
        %v2065 = vpop.f32.mrb[0].mxu0
        %v2066 = vadd.f32 %v1953, %v2065
        %v2067 = vpop.f32.mrb[0].mxu0
        %v2068 = vpop.f32.mrb[0].mxu0
        %v2069 = vadd.f32 %v1956, %v2068
        %v2070 = vpop.f32.mrb[0].mxu0
        %2071 = vmatprep.mubr.bf16.mxu0 0
        %2072 = vmatmul.mubr.bf16.gmra.mrb[0].mxu0 %v1809
        %v2073 = vpop.f32.mrb[0].mxu0
        %v2074 = vadd.f32 %v1961, %v2073
        %v2075 = vpop.f32.mrb[0].mxu0
        %v2076 = vpop.f32.mrb[0].mxu0
        %v2077 = vadd.f32 %v1964, %v2076
        %v2078 = vpop.f32.mrb[0].mxu0
        %2079 = vdwg.mxu0
        %v2080 = vld [vmem:[#allocation2 + $0x9] sm:$0xff]
        %v2081 = vld [vmem:[#allocation2 + $0x21] sm:$0xff]
        %v2082 = vld [vmem:[#allocation2 + $0x39] sm:$0xff]
        %v2083 = vld [vmem:[#allocation2 + $0x51] sm:$0xff]
        %v2084 = vld [vmem:[#allocation2 + $0x69] sm:$0xff]
        %v2085 = vld [vmem:[#allocation2 + $0x81] sm:$0xff]
        %v2086 = vld [vmem:[#allocation2 + $0x99] sm:$0xff]
        %v2087 = vld [vmem:[#allocation2 + $0xb1] sm:$0xff]
        %v2088 = vpack.c.bf16 %v2081, %v2080
        %v2089 = vpack.c.bf16 %v2083, %v2082
        %v2090 = vpack.c.bf16 %v2085, %v2084
        %v2091 = vpack.c.bf16 %v2087, %v2086
        %v2092 = vld [vmem:[%s3 + $0x80] sm:$0xf]
        %v2093 = vld [vmem:[%s3 + $0x84] sm:$0xf]
        %v2094 = vld [vmem:[%s3 + $0x88] sm:$0xf]
        %v2095 = vld [vmem:[%s3 + $0x8c] sm:$0xf]
        %v2096 = vld [vmem:[%s3 + $0x90] sm:$0xf]
        %v2097 = vld [vmem:[%s3 + $0x94] sm:$0xf]
        %v2098 = vld [vmem:[%s3 + $0x98] sm:$0xf]
        %v2099 = vld [vmem:[%s3 + $0x9c] sm:$0xf]
        %v2100 = vld [vmem:[%s3 + $0xa0] sm:$0xf]
        %v2101 = vld [vmem:[%s3 + $0xa4] sm:$0xf]
        %v2102 = vld [vmem:[%s3 + $0xa8] sm:$0xf]
        %v2103 = vld [vmem:[%s3 + $0xac] sm:$0xf]
        %v2104 = vld [vmem:[%s3 + $0xb0] sm:$0xf]
        %v2105 = vld [vmem:[%s3 + $0xb4] sm:$0xf]
        %v2106 = vld [vmem:[%s3 + $0xb8] sm:$0xf]
        %v2107 = vld [vmem:[%s3 + $0xbc] sm:$0xf]
        %v2124 = vunpack.c.l.b16 %v2092
        %v2125 = vunpack.c.l.b16 %v2093
        %v2126 = vunpack.c.l.b16 %v2094
        %v2127 = vunpack.c.l.b16 %v2095
        %v2128 = vunpack.c.l.b16 %v2096
        %v2129 = vunpack.c.l.b16 %v2097
        %v2130 = vunpack.c.l.b16 %v2098
        %v2131 = vunpack.c.l.b16 %v2099
        %v2132 = vunpack.c.l.b16 %v2100
        %v2133 = vunpack.c.l.b16 %v2101
        %v2134 = vunpack.c.l.b16 %v2102
        %v2135 = vunpack.c.l.b16 %v2103
        %v2136 = vunpack.c.l.b16 %v2104
        %v2137 = vunpack.c.l.b16 %v2105
        %v2138 = vunpack.c.l.b16 %v2106
        %v2139 = vunpack.c.l.b16 %v2107
        %v2140 = vpack.c.b16 %v2125, %v2124
        %v2141 = vpack.c.b16 %v2127, %v2126
        %v2142 = vpack.c.b16 %v2129, %v2128
        %v2143 = vpack.c.b16 %v2131, %v2130
        %v2144 = vpack.c.b16 %v2133, %v2132
        %v2145 = vpack.c.b16 %v2135, %v2134
        %v2146 = vpack.c.b16 %v2137, %v2136
        %v2147 = vpack.c.b16 %v2139, %v2138
        %2156 = vmatprep.subr.bf16.mxu0 0
        %2157 = vmatpush1.bf16.msra.mxu0 %v2140
        %2158 = vmatprep.subr.bf16.mxu0 0
        %2159 = vmatpush1.bf16.msra.mxu0 %v2141
        %2160 = vmatprep.subr.bf16.mxu0 0
        %2161 = vmatpush1.bf16.msra.mxu0 %v2142
        %2162 = vmatprep.subr.bf16.mxu0 0
        %2163 = vmatpush1.bf16.msra.mxu0 %v2143
        %2164 = vmatprep.subr.bf16.mxu0 0
        %2165 = vmatpush1.bf16.msra.mxu0 %v2144
        %2166 = vmatprep.subr.bf16.mxu0 0
        %2167 = vmatpush1.bf16.msra.mxu0 %v2145
        %2168 = vmatprep.subr.bf16.mxu0 0
        %2169 = vmatpush1.bf16.msra.mxu0 %v2146
        %2170 = vmatprep.subr.bf16.mxu0 0
        %2171 = vmatpush1.bf16.msra.mxu0 %v2147
        %2172 = vmatprep.subr.bf16.mxu0 0
        %2173 = vmatpush1.bf16.msra.mxu0 0
        %2174 = vmatprep.subr.bf16.mxu0 0
        %2175 = vmatpush1.bf16.msra.mxu0 0
        %2176 = vmatprep.subr.bf16.mxu0 0
        %2177 = vmatpush1.bf16.msra.mxu0 0
        %2178 = vmatprep.subr.bf16.mxu0 0
        %2179 = vmatpush1.bf16.msra.mxu0 0
        %2180 = vmatprep.subr.bf16.mxu0 0
        %2181 = vmatpush1.bf16.msra.mxu0 0
        %2182 = vmatprep.subr.bf16.mxu0 0
        %2183 = vmatpush1.bf16.msra.mxu0 0
        %2184 = vmatprep.subr.bf16.mxu0 0
        %2185 = vmatpush1.bf16.msra.mxu0 0
        %2186 = vmatprep.subr.bf16.mxu0 0
        %2187 = vmatpush1.bf16.msra.mxu0 0
        %2188 = vmatprep.mubr.bf16.mxu0 0
        %2189 = vmatmul.mubr.bf16.gmra.mrb[0].mxu0 %v2088
        %v2190 = vpop.f32.mrb[0].mxu0
        %v2191 = vadd.f32 0.0, %v2190
        %v2192 = vpop.f32.mrb[0].mxu0
        %v2193 = vpop.f32.mrb[0].mxu0
        %v2194 = vadd.f32 0.0, %v2193
        %v2195 = vpop.f32.mrb[0].mxu0
        %2196 = vmatprep.mubr.bf16.mxu0 0
        %2197 = vmatmul.mubr.bf16.gmra.mrb[0].mxu0 %v2089
        %v2198 = vpop.f32.mrb[0].mxu0
        %v2199 = vadd.f32 0.0, %v2198
        %v2200 = vpop.f32.mrb[0].mxu0
        %v2201 = vpop.f32.mrb[0].mxu0
        %v2202 = vadd.f32 0.0, %v2201
        %v2203 = vpop.f32.mrb[0].mxu0
        %2204 = vmatprep.mubr.bf16.mxu0 0
        %2205 = vmatmul.mubr.bf16.gmra.mrb[0].mxu0 %v2090
        %v2206 = vpop.f32.mrb[0].mxu0
        %v2207 = vadd.f32 0.0, %v2206
        %v2208 = vpop.f32.mrb[0].mxu0
        %v2209 = vpop.f32.mrb[0].mxu0
        %v2210 = vadd.f32 0.0, %v2209
        %v2211 = vpop.f32.mrb[0].mxu0
        %2212 = vmatprep.mubr.bf16.mxu0 0
        %2213 = vmatmul.mubr.bf16.gmra.mrb[0].mxu0 %v2091
        %v2214 = vpop.f32.mrb[0].mxu0
        %v2215 = vadd.f32 0.0, %v2214
        %v2216 = vpop.f32.mrb[0].mxu0
        %v2217 = vpop.f32.mrb[0].mxu0
        %v2218 = vadd.f32 0.0, %v2217
        %v2219 = vpop.f32.mrb[0].mxu0
        %2220 = vdwg.mxu0
        %v2221 = vadd.f32 %v2050, %v2191
        %v2222 = vadd.f32 %v2053, %v2194
        %v2223 = vadd.f32 %v2058, %v2199
        %v2224 = vadd.f32 %v2061, %v2202
        %v2225 = vadd.f32 %v2066, %v2207
        %v2226 = vadd.f32 %v2069, %v2210
        %v2227 = vadd.f32 %v2074, %v2215
        %v2228 = vadd.f32 %v2077, %v2218
        %v2229 = vld [vmem:[%s432 + $0x7] sm:$0xff]
        %v2230 = vld [vmem:[%s432 + $0x1f] sm:$0xff]
        %v2231 = vld [vmem:[%s432 + $0x37] sm:$0xff]
        %v2232 = vld [vmem:[%s432 + $0x4f] sm:$0xff]
        %v2233 = vld [vmem:[%s432 + $0x67] sm:$0xff]
        %v2234 = vld [vmem:[%s432 + $0x7f] sm:$0xff]
        %v2235 = vld [vmem:[%s432 + $0x97] sm:$0xff]
        %v2236 = vld [vmem:[%s432 + $0xaf] sm:$0xff]
        %v2237 = vpack.c.bf16 %v2230, %v2229
        %v2238 = vpack.c.bf16 %v2232, %v2231
        %v2239 = vpack.c.bf16 %v2234, %v2233
        %v2240 = vpack.c.bf16 %v2236, %v2235
        %v2241 = vld [vmem:[%s3 + $0xc0] sm:$0xf]
        %v2242 = vld [vmem:[%s3 + $0xc4] sm:$0xf]
        %v2243 = vld [vmem:[%s3 + $0xc8] sm:$0xf]
        %v2244 = vld [vmem:[%s3 + $0xcc] sm:$0xf]
        %v2245 = vld [vmem:[%s3 + $0xd0] sm:$0xf]
        %v2246 = vld [vmem:[%s3 + $0xd4] sm:$0xf]
        %v2247 = vld [vmem:[%s3 + $0xd8] sm:$0xf]
        %v2248 = vld [vmem:[%s3 + $0xdc] sm:$0xf]
        %v2249 = vld [vmem:[%s3 + $0xe0] sm:$0xf]
        %v2250 = vld [vmem:[%s3 + $0xe4] sm:$0xf]
        %v2251 = vld [vmem:[%s3 + $0xe8] sm:$0xf]
        %v2252 = vld [vmem:[%s3 + $0xec] sm:$0xf]
        %v2253 = vld [vmem:[%s3 + $0xf0] sm:$0xf]
        %v2254 = vld [vmem:[%s3 + $0xf4] sm:$0xf]
        %v2255 = vld [vmem:[%s3 + $0xf8] sm:$0xf]
        %v2256 = vld [vmem:[%s3 + $0xfc] sm:$0xf]
        %v2273 = vunpack.c.l.b16 %v2241
        %v2274 = vunpack.c.l.b16 %v2242
        %v2275 = vunpack.c.l.b16 %v2243
        %v2276 = vunpack.c.l.b16 %v2244
        %v2277 = vunpack.c.l.b16 %v2245
        %v2278 = vunpack.c.l.b16 %v2246
        %v2279 = vunpack.c.l.b16 %v2247
        %v2280 = vunpack.c.l.b16 %v2248
        %v2281 = vunpack.c.l.b16 %v2249
        %v2282 = vunpack.c.l.b16 %v2250
        %v2283 = vunpack.c.l.b16 %v2251
        %v2284 = vunpack.c.l.b16 %v2252
        %v2285 = vunpack.c.l.b16 %v2253
        %v2286 = vunpack.c.l.b16 %v2254
        %v2287 = vunpack.c.l.b16 %v2255
        %v2288 = vunpack.c.l.b16 %v2256
        %v2289 = vpack.c.b16 %v2274, %v2273
        %v2290 = vpack.c.b16 %v2276, %v2275
        %v2291 = vpack.c.b16 %v2278, %v2277
        %v2292 = vpack.c.b16 %v2280, %v2279
        %v2293 = vpack.c.b16 %v2282, %v2281
        %v2294 = vpack.c.b16 %v2284, %v2283
        %v2295 = vpack.c.b16 %v2286, %v2285
        %v2296 = vpack.c.b16 %v2288, %v2287
        %2305 = vmatprep.subr.bf16.mxu0 0
        %2306 = vmatpush1.bf16.msra.mxu0 %v2289
        %2307 = vmatprep.subr.bf16.mxu0 0
        %2308 = vmatpush1.bf16.msra.mxu0 %v2290
        %2309 = vmatprep.subr.bf16.mxu0 0
        %2310 = vmatpush1.bf16.msra.mxu0 %v2291
        %2311 = vmatprep.subr.bf16.mxu0 0
        %2312 = vmatpush1.bf16.msra.mxu0 %v2292
        %2313 = vmatprep.subr.bf16.mxu0 0
        %2314 = vmatpush1.bf16.msra.mxu0 %v2293
        %2315 = vmatprep.subr.bf16.mxu0 0
        %2316 = vmatpush1.bf16.msra.mxu0 %v2294
        %2317 = vmatprep.subr.bf16.mxu0 0
        %2318 = vmatpush1.bf16.msra.mxu0 %v2295
        %2319 = vmatprep.subr.bf16.mxu0 0
        %2320 = vmatpush1.bf16.msra.mxu0 %v2296
        %2321 = vmatprep.subr.bf16.mxu0 0
        %2322 = vmatpush1.bf16.msra.mxu0 0
        %2323 = vmatprep.subr.bf16.mxu0 0
        %2324 = vmatpush1.bf16.msra.mxu0 0
        %2325 = vmatprep.subr.bf16.mxu0 0
        %2326 = vmatpush1.bf16.msra.mxu0 0
        %2327 = vmatprep.subr.bf16.mxu0 0
        %2328 = vmatpush1.bf16.msra.mxu0 0
        %2329 = vmatprep.subr.bf16.mxu0 0
        %2330 = vmatpush1.bf16.msra.mxu0 0
        %2331 = vmatprep.subr.bf16.mxu0 0
        %2332 = vmatpush1.bf16.msra.mxu0 0
        %2333 = vmatprep.subr.bf16.mxu0 0
        %2334 = vmatpush1.bf16.msra.mxu0 0
        %2335 = vmatprep.subr.bf16.mxu0 0
        %2336 = vmatpush1.bf16.msra.mxu0 0
        %2337 = vmatprep.mubr.bf16.mxu0 0
        %2338 = vmatmul.mubr.bf16.gmra.mrb[0].mxu0 %v2237
        %v2339 = vpop.f32.mrb[0].mxu0
        %v2340 = vadd.f32 0.0, %v2339
        %v2341 = vpop.f32.mrb[0].mxu0
        %v2342 = vpop.f32.mrb[0].mxu0
        %v2343 = vadd.f32 0.0, %v2342
        %v2344 = vpop.f32.mrb[0].mxu0
        %2345 = vmatprep.mubr.bf16.mxu0 0
        %2346 = vmatmul.mubr.bf16.gmra.mrb[0].mxu0 %v2238
        %v2347 = vpop.f32.mrb[0].mxu0
        %v2348 = vadd.f32 0.0, %v2347
        %v2349 = vpop.f32.mrb[0].mxu0
        %v2350 = vpop.f32.mrb[0].mxu0
        %v2351 = vadd.f32 0.0, %v2350
        %v2352 = vpop.f32.mrb[0].mxu0
        %2353 = vmatprep.mubr.bf16.mxu0 0
        %2354 = vmatmul.mubr.bf16.gmra.mrb[0].mxu0 %v2239
        %v2355 = vpop.f32.mrb[0].mxu0
        %v2356 = vadd.f32 0.0, %v2355
        %v2357 = vpop.f32.mrb[0].mxu0
        %v2358 = vpop.f32.mrb[0].mxu0
        %v2359 = vadd.f32 0.0, %v2358
        %v2360 = vpop.f32.mrb[0].mxu0
        %2361 = vmatprep.mubr.bf16.mxu0 0
        %2362 = vmatmul.mubr.bf16.gmra.mrb[0].mxu0 %v2240
        %v2363 = vpop.f32.mrb[0].mxu0
        %v2364 = vadd.f32 0.0, %v2363
        %v2365 = vpop.f32.mrb[0].mxu0
        %v2366 = vpop.f32.mrb[0].mxu0
        %v2367 = vadd.f32 0.0, %v2366
        %v2368 = vpop.f32.mrb[0].mxu0
        %2369 = vdwg.mxu0
        %v2370 = vadd.f32 %v2221, %v2340
        %v2371 = vadd.f32 %v2222, %v2343
        %v2372 = vadd.f32 %v2223, %v2348
        %v2373 = vadd.f32 %v2224, %v2351
        %v2374 = vadd.f32 %v2225, %v2356
        %v2375 = vadd.f32 %v2226, %v2359
        %v2376 = vadd.f32 %v2227, %v2364
        %v2377 = vadd.f32 %v2228, %v2367
        %v2378 = vld [vmem:[%s432 + $0x8] sm:$0xff]
        %v2379 = vld [vmem:[%s432 + $0x20] sm:$0xff]
        %v2380 = vld [vmem:[%s432 + $0x38] sm:$0xff]
        %v2381 = vld [vmem:[%s432 + $0x50] sm:$0xff]
        %v2382 = vld [vmem:[%s432 + $0x68] sm:$0xff]
        %v2383 = vld [vmem:[%s432 + $0x80] sm:$0xff]
        %v2384 = vld [vmem:[%s432 + $0x98] sm:$0xff]
        %v2385 = vld [vmem:[%s432 + $0xb0] sm:$0xff]
        %v2386 = vpack.c.bf16 %v2379, %v2378
        %v2387 = vpack.c.bf16 %v2381, %v2380
        %v2388 = vpack.c.bf16 %v2383, %v2382
        %v2389 = vpack.c.bf16 %v2385, %v2384
        %v2390 = vld [vmem:[%s3 + $0x100] sm:$0xf]
        %v2391 = vld [vmem:[%s3 + $0x104] sm:$0xf]
        %v2392 = vld [vmem:[%s3 + $0x108] sm:$0xf]
        %v2393 = vld [vmem:[%s3 + $0x10c] sm:$0xf]
        %v2394 = vld [vmem:[%s3 + $0x110] sm:$0xf]
        %v2395 = vld [vmem:[%s3 + $0x114] sm:$0xf]
        %v2396 = vld [vmem:[%s3 + $0x118] sm:$0xf]
        %v2397 = vld [vmem:[%s3 + $0x11c] sm:$0xf]
        %v2398 = vld [vmem:[%s3 + $0x120] sm:$0xf]
        %v2399 = vld [vmem:[%s3 + $0x124] sm:$0xf]
        %v2400 = vld [vmem:[%s3 + $0x128] sm:$0xf]
        %v2401 = vld [vmem:[%s3 + $0x12c] sm:$0xf]
        %v2402 = vld [vmem:[%s3 + $0x130] sm:$0xf]
        %v2403 = vld [vmem:[%s3 + $0x134] sm:$0xf]
        %v2404 = vld [vmem:[%s3 + $0x138] sm:$0xf]
        %v2405 = vld [vmem:[%s3 + $0x13c] sm:$0xf]
        %v2422 = vunpack.c.l.b16 %v2390
        %v2423 = vunpack.c.l.b16 %v2391
        %v2424 = vunpack.c.l.b16 %v2392
        %v2425 = vunpack.c.l.b16 %v2393
        %v2426 = vunpack.c.l.b16 %v2394
        %v2427 = vunpack.c.l.b16 %v2395
        %v2428 = vunpack.c.l.b16 %v2396
        %v2429 = vunpack.c.l.b16 %v2397
        %v2430 = vunpack.c.l.b16 %v2398
        %v2431 = vunpack.c.l.b16 %v2399
        %v2432 = vunpack.c.l.b16 %v2400
        %v2433 = vunpack.c.l.b16 %v2401
        %v2434 = vunpack.c.l.b16 %v2402
        %v2435 = vunpack.c.l.b16 %v2403
        %v2436 = vunpack.c.l.b16 %v2404
        %v2437 = vunpack.c.l.b16 %v2405
        %v2438 = vpack.c.b16 %v2423, %v2422
        %v2439 = vpack.c.b16 %v2425, %v2424
        %v2440 = vpack.c.b16 %v2427, %v2426
        %v2441 = vpack.c.b16 %v2429, %v2428
        %v2442 = vpack.c.b16 %v2431, %v2430
        %v2443 = vpack.c.b16 %v2433, %v2432
        %v2444 = vpack.c.b16 %v2435, %v2434
        %v2445 = vpack.c.b16 %v2437, %v2436
        %2454 = vmatprep.subr.bf16.mxu0 0
        %2455 = vmatpush1.bf16.msra.mxu0 %v2438
        %2456 = vmatprep.subr.bf16.mxu0 0
        %2457 = vmatpush1.bf16.msra.mxu0 %v2439
        %2458 = vmatprep.subr.bf16.mxu0 0
        %2459 = vmatpush1.bf16.msra.mxu0 %v2440
        %2460 = vmatprep.subr.bf16.mxu0 0
        %2461 = vmatpush1.bf16.msra.mxu0 %v2441
        %2462 = vmatprep.subr.bf16.mxu0 0
        %2463 = vmatpush1.bf16.msra.mxu0 %v2442
        %2464 = vmatprep.subr.bf16.mxu0 0
        %2465 = vmatpush1.bf16.msra.mxu0 %v2443
        %2466 = vmatprep.subr.bf16.mxu0 0
        %2467 = vmatpush1.bf16.msra.mxu0 %v2444
        %2468 = vmatprep.subr.bf16.mxu0 0
        %2469 = vmatpush1.bf16.msra.mxu0 %v2445
        %2470 = vmatprep.subr.bf16.mxu0 0
        %2471 = vmatpush1.bf16.msra.mxu0 0
        %2472 = vmatprep.subr.bf16.mxu0 0
        %2473 = vmatpush1.bf16.msra.mxu0 0
        %2474 = vmatprep.subr.bf16.mxu0 0
        %2475 = vmatpush1.bf16.msra.mxu0 0
        %2476 = vmatprep.subr.bf16.mxu0 0
        %2477 = vmatpush1.bf16.msra.mxu0 0
        %2478 = vmatprep.subr.bf16.mxu0 0
        %2479 = vmatpush1.bf16.msra.mxu0 0
        %2480 = vmatprep.subr.bf16.mxu0 0
        %2481 = vmatpush1.bf16.msra.mxu0 0
        %2482 = vmatprep.subr.bf16.mxu0 0
        %2483 = vmatpush1.bf16.msra.mxu0 0
        %2484 = vmatprep.subr.bf16.mxu0 0
        %2485 = vmatpush1.bf16.msra.mxu0 0
        %2486 = vmatprep.mubr.bf16.mxu0 0
        %2487 = vmatmul.mubr.bf16.gmra.mrb[0].mxu0 %v2386
        %v2488 = vpop.f32.mrb[0].mxu0
        %v2489 = vadd.f32 0.0, %v2488
        %v2490 = vpop.f32.mrb[0].mxu0
        %v2491 = vpop.f32.mrb[0].mxu0
        %v2492 = vadd.f32 0.0, %v2491
        %v2493 = vpop.f32.mrb[0].mxu0
        %2494 = vmatprep.mubr.bf16.mxu0 0
        %2495 = vmatmul.mubr.bf16.gmra.mrb[0].mxu0 %v2387
        %v2496 = vpop.f32.mrb[0].mxu0
        %v2497 = vadd.f32 0.0, %v2496
        %v2498 = vpop.f32.mrb[0].mxu0
        %v2499 = vpop.f32.mrb[0].mxu0
        %v2500 = vadd.f32 0.0, %v2499
        %v2501 = vpop.f32.mrb[0].mxu0
        %2502 = vmatprep.mubr.bf16.mxu0 0
        %2503 = vmatmul.mubr.bf16.gmra.mrb[0].mxu0 %v2388
        %v2504 = vpop.f32.mrb[0].mxu0
        %v2505 = vadd.f32 0.0, %v2504
        %v2506 = vpop.f32.mrb[0].mxu0
        %v2507 = vpop.f32.mrb[0].mxu0
        %v2508 = vadd.f32 0.0, %v2507
        %v2509 = vpop.f32.mrb[0].mxu0
        %2510 = vmatprep.mubr.bf16.mxu0 0
        %2511 = vmatmul.mubr.bf16.gmra.mrb[0].mxu0 %v2389
        %v2512 = vpop.f32.mrb[0].mxu0
        %v2513 = vadd.f32 0.0, %v2512
        %v2514 = vpop.f32.mrb[0].mxu0
        %v2515 = vpop.f32.mrb[0].mxu0
        %v2516 = vadd.f32 0.0, %v2515
        %v2517 = vpop.f32.mrb[0].mxu0
        %2518 = vdwg.mxu0
        %v2519 = vadd.f32 %v2370, %v2489
        %v2520 = vadd.f32 %v2371, %v2492
        %v2521 = vadd.f32 %v2372, %v2497
        %v2522 = vadd.f32 %v2373, %v2500
        %v2523 = vadd.f32 %v2374, %v2505
        %v2524 = vadd.f32 %v2375, %v2508
        %v2525 = vadd.f32 %v2376, %v2513
        %v2526 = vadd.f32 %v2377, %v2516
        %v2527 = vld [vmem:[%s432 + $0x9] sm:$0xff]
        %v2528 = vld [vmem:[%s432 + $0x21] sm:$0xff]
        %v2529 = vld [vmem:[%s432 + $0x39] sm:$0xff]
        %v2530 = vld [vmem:[%s432 + $0x51] sm:$0xff]
        %v2531 = vld [vmem:[%s432 + $0x69] sm:$0xff]
        %v2532 = vld [vmem:[%s432 + $0x81] sm:$0xff]
        %v2533 = vld [vmem:[%s432 + $0x99] sm:$0xff]
        %v2534 = vld [vmem:[%s432 + $0xb1] sm:$0xff]
        %v2535 = vpack.c.bf16 %v2528, %v2527
        %v2536 = vpack.c.bf16 %v2530, %v2529
        %v2537 = vpack.c.bf16 %v2532, %v2531
        %v2538 = vpack.c.bf16 %v2534, %v2533
        %v2539 = vld [vmem:[%s3 + $0x140] sm:$0xf]
        %v2540 = vld [vmem:[%s3 + $0x144] sm:$0xf]
        %v2541 = vld [vmem:[%s3 + $0x148] sm:$0xf]
        %v2542 = vld [vmem:[%s3 + $0x14c] sm:$0xf]
        %v2543 = vld [vmem:[%s3 + $0x150] sm:$0xf]
        %v2544 = vld [vmem:[%s3 + $0x154] sm:$0xf]
        %v2545 = vld [vmem:[%s3 + $0x158] sm:$0xf]
        %v2546 = vld [vmem:[%s3 + $0x15c] sm:$0xf]
        %v2547 = vld [vmem:[%s3 + $0x160] sm:$0xf]
        %v2548 = vld [vmem:[%s3 + $0x164] sm:$0xf]
        %v2549 = vld [vmem:[%s3 + $0x168] sm:$0xf]
        %v2550 = vld [vmem:[%s3 + $0x16c] sm:$0xf]
        %v2551 = vld [vmem:[%s3 + $0x170] sm:$0xf]
        %v2552 = vld [vmem:[%s3 + $0x174] sm:$0xf]
        %v2553 = vld [vmem:[%s3 + $0x178] sm:$0xf]
        %v2554 = vld [vmem:[%s3 + $0x17c] sm:$0xf]
        %v2571 = vunpack.c.l.b16 %v2539
        %v2572 = vunpack.c.l.b16 %v2540
        %v2573 = vunpack.c.l.b16 %v2541
        %v2574 = vunpack.c.l.b16 %v2542
        %v2575 = vunpack.c.l.b16 %v2543
        %v2576 = vunpack.c.l.b16 %v2544
        %v2577 = vunpack.c.l.b16 %v2545
        %v2578 = vunpack.c.l.b16 %v2546
        %v2579 = vunpack.c.l.b16 %v2547
        %v2580 = vunpack.c.l.b16 %v2548
        %v2581 = vunpack.c.l.b16 %v2549
        %v2582 = vunpack.c.l.b16 %v2550
        %v2583 = vunpack.c.l.b16 %v2551
        %v2584 = vunpack.c.l.b16 %v2552
        %v2585 = vunpack.c.l.b16 %v2553
        %v2586 = vunpack.c.l.b16 %v2554
        %v2587 = vpack.c.b16 %v2572, %v2571
        %v2588 = vpack.c.b16 %v2574, %v2573
        %v2589 = vpack.c.b16 %v2576, %v2575
        %v2590 = vpack.c.b16 %v2578, %v2577
        %v2591 = vpack.c.b16 %v2580, %v2579
        %v2592 = vpack.c.b16 %v2582, %v2581
        %v2593 = vpack.c.b16 %v2584, %v2583
        %v2594 = vpack.c.b16 %v2586, %v2585
        %2603 = vmatprep.subr.bf16.mxu0 0
        %2604 = vmatpush1.bf16.msra.mxu0 %v2587
        %2605 = vmatprep.subr.bf16.mxu0 0
        %2606 = vmatpush1.bf16.msra.mxu0 %v2588
        %2607 = vmatprep.subr.bf16.mxu0 0
        %2608 = vmatpush1.bf16.msra.mxu0 %v2589
        %2609 = vmatprep.subr.bf16.mxu0 0
        %2610 = vmatpush1.bf16.msra.mxu0 %v2590
        %2611 = vmatprep.subr.bf16.mxu0 0
        %2612 = vmatpush1.bf16.msra.mxu0 %v2591
        %2613 = vmatprep.subr.bf16.mxu0 0
        %2614 = vmatpush1.bf16.msra.mxu0 %v2592
        %2615 = vmatprep.subr.bf16.mxu0 0
        %2616 = vmatpush1.bf16.msra.mxu0 %v2593
        %2617 = vmatprep.subr.bf16.mxu0 0
        %2618 = vmatpush1.bf16.msra.mxu0 %v2594
        %2619 = vmatprep.subr.bf16.mxu0 0
        %2620 = vmatpush1.bf16.msra.mxu0 0
        %2621 = vmatprep.subr.bf16.mxu0 0
        %2622 = vmatpush1.bf16.msra.mxu0 0
        %2623 = vmatprep.subr.bf16.mxu0 0
        %2624 = vmatpush1.bf16.msra.mxu0 0
        %2625 = vmatprep.subr.bf16.mxu0 0
        %2626 = vmatpush1.bf16.msra.mxu0 0
        %2627 = vmatprep.subr.bf16.mxu0 0
        %2628 = vmatpush1.bf16.msra.mxu0 0
        %2629 = vmatprep.subr.bf16.mxu0 0
        %2630 = vmatpush1.bf16.msra.mxu0 0
        %2631 = vmatprep.subr.bf16.mxu0 0
        %2632 = vmatpush1.bf16.msra.mxu0 0
        %2633 = vmatprep.subr.bf16.mxu0 0
        %2634 = vmatpush1.bf16.msra.mxu0 0
        %2635 = vmatprep.mubr.bf16.mxu0 0
        %2636 = vmatmul.mubr.bf16.gmra.mrb[0].mxu0 %v2535
        %v2637 = vpop.f32.mrb[0].mxu0
        %v2638 = vadd.f32 0.0, %v2637
        %v2639 = vpop.f32.mrb[0].mxu0
        %v2640 = vpop.f32.mrb[0].mxu0
        %v2641 = vadd.f32 0.0, %v2640
        %v2642 = vpop.f32.mrb[0].mxu0
        %2643 = vmatprep.mubr.bf16.mxu0 0
        %2644 = vmatmul.mubr.bf16.gmra.mrb[0].mxu0 %v2536
        %v2645 = vpop.f32.mrb[0].mxu0
        %v2646 = vadd.f32 0.0, %v2645
        %v2647 = vpop.f32.mrb[0].mxu0
        %v2648 = vpop.f32.mrb[0].mxu0
        %v2649 = vadd.f32 0.0, %v2648
        %v2650 = vpop.f32.mrb[0].mxu0
        %2651 = vmatprep.mubr.bf16.mxu0 0
        %2652 = vmatmul.mubr.bf16.gmra.mrb[0].mxu0 %v2537
        %v2653 = vpop.f32.mrb[0].mxu0
        %v2654 = vadd.f32 0.0, %v2653
        %v2655 = vpop.f32.mrb[0].mxu0
        %v2656 = vpop.f32.mrb[0].mxu0
        %v2657 = vadd.f32 0.0, %v2656
        %v2658 = vpop.f32.mrb[0].mxu0
        %2659 = vmatprep.mubr.bf16.mxu0 0
        %2660 = vmatmul.mubr.bf16.gmra.mrb[0].mxu0 %v2538
        %v2661 = vpop.f32.mrb[0].mxu0
        %v2662 = vadd.f32 0.0, %v2661
        %v2663 = vpop.f32.mrb[0].mxu0
        %v2664 = vpop.f32.mrb[0].mxu0
        %v2665 = vadd.f32 0.0, %v2664
        %v2666 = vpop.f32.mrb[0].mxu0
        %2667 = vdwg.mxu0
        %v2668 = vadd.f32 %v2519, %v2638
        %v2669 = vadd.f32 %v2520, %v2641
        %v2670 = vadd.f32 %v2521, %v2646
        %v2671 = vadd.f32 %v2522, %v2649
        %v2672 = vadd.f32 %v2523, %v2654
        %v2673 = vadd.f32 %v2524, %v2657
        %v2674 = vadd.f32 %v2525, %v2662
        %v2675 = vadd.f32 %v2526, %v2665
        %v2676 = vld [vmem:[%s1319 + $0x7] sm:$0xff]
        %v2677 = vld [vmem:[%s1319 + $0x1f] sm:$0xff]
        %v2678 = vld [vmem:[%s1319 + $0x37] sm:$0xff]
        %v2679 = vld [vmem:[%s1319 + $0x4f] sm:$0xff]
        %v2680 = vld [vmem:[%s1319 + $0x67] sm:$0xff]
        %v2681 = vld [vmem:[%s1319 + $0x7f] sm:$0xff]
        %v2682 = vld [vmem:[%s1319 + $0x97] sm:$0xff]
        %v2683 = vld [vmem:[%s1319 + $0xaf] sm:$0xff]
        %v2684 = vpack.c.bf16 %v2677, %v2676
        %v2685 = vpack.c.bf16 %v2679, %v2678
        %v2686 = vpack.c.bf16 %v2681, %v2680
        %v2687 = vpack.c.bf16 %v2683, %v2682
        %v2688 = vld [vmem:[%s3 + $0x180] sm:$0xf]
        %v2689 = vld [vmem:[%s3 + $0x184] sm:$0xf]
        %v2690 = vld [vmem:[%s3 + $0x188] sm:$0xf]
        %v2691 = vld [vmem:[%s3 + $0x18c] sm:$0xf]
        %v2692 = vld [vmem:[%s3 + $0x190] sm:$0xf]
        %v2693 = vld [vmem:[%s3 + $0x194] sm:$0xf]
        %v2694 = vld [vmem:[%s3 + $0x198] sm:$0xf]
        %v2695 = vld [vmem:[%s3 + $0x19c] sm:$0xf]
        %v2696 = vld [vmem:[%s3 + $0x1a0] sm:$0xf]
        %v2697 = vld [vmem:[%s3 + $0x1a4] sm:$0xf]
        %v2698 = vld [vmem:[%s3 + $0x1a8] sm:$0xf]
        %v2699 = vld [vmem:[%s3 + $0x1ac] sm:$0xf]
        %v2700 = vld [vmem:[%s3 + $0x1b0] sm:$0xf]
        %v2701 = vld [vmem:[%s3 + $0x1b4] sm:$0xf]
        %v2702 = vld [vmem:[%s3 + $0x1b8] sm:$0xf]
        %v2703 = vld [vmem:[%s3 + $0x1bc] sm:$0xf]
        %v2720 = vunpack.c.l.b16 %v2688
        %v2721 = vunpack.c.l.b16 %v2689
        %v2722 = vunpack.c.l.b16 %v2690
        %v2723 = vunpack.c.l.b16 %v2691
        %v2724 = vunpack.c.l.b16 %v2692
        %v2725 = vunpack.c.l.b16 %v2693
        %v2726 = vunpack.c.l.b16 %v2694
        %v2727 = vunpack.c.l.b16 %v2695
        %v2728 = vunpack.c.l.b16 %v2696
        %v2729 = vunpack.c.l.b16 %v2697
        %v2730 = vunpack.c.l.b16 %v2698
        %v2731 = vunpack.c.l.b16 %v2699
        %v2732 = vunpack.c.l.b16 %v2700
        %v2733 = vunpack.c.l.b16 %v2701
        %v2734 = vunpack.c.l.b16 %v2702
        %v2735 = vunpack.c.l.b16 %v2703
        %v2736 = vpack.c.b16 %v2721, %v2720
        %v2737 = vpack.c.b16 %v2723, %v2722
        %v2738 = vpack.c.b16 %v2725, %v2724
        %v2739 = vpack.c.b16 %v2727, %v2726
        %v2740 = vpack.c.b16 %v2729, %v2728
        %v2741 = vpack.c.b16 %v2731, %v2730
        %v2742 = vpack.c.b16 %v2733, %v2732
        %v2743 = vpack.c.b16 %v2735, %v2734
        %2752 = vmatprep.subr.bf16.mxu0 0
        %2753 = vmatpush1.bf16.msra.mxu0 %v2736
        %2754 = vmatprep.subr.bf16.mxu0 0
        %2755 = vmatpush1.bf16.msra.mxu0 %v2737
        %2756 = vmatprep.subr.bf16.mxu0 0
        %2757 = vmatpush1.bf16.msra.mxu0 %v2738
        %2758 = vmatprep.subr.bf16.mxu0 0
        %2759 = vmatpush1.bf16.msra.mxu0 %v2739
        %2760 = vmatprep.subr.bf16.mxu0 0
        %2761 = vmatpush1.bf16.msra.mxu0 %v2740
        %2762 = vmatprep.subr.bf16.mxu0 0
        %2763 = vmatpush1.bf16.msra.mxu0 %v2741
        %2764 = vmatprep.subr.bf16.mxu0 0
        %2765 = vmatpush1.bf16.msra.mxu0 %v2742
        %2766 = vmatprep.subr.bf16.mxu0 0
        %2767 = vmatpush1.bf16.msra.mxu0 %v2743
        %2768 = vmatprep.subr.bf16.mxu0 0
        %2769 = vmatpush1.bf16.msra.mxu0 0
        %2770 = vmatprep.subr.bf16.mxu0 0
        %2771 = vmatpush1.bf16.msra.mxu0 0
        %2772 = vmatprep.subr.bf16.mxu0 0
        %2773 = vmatpush1.bf16.msra.mxu0 0
        %2774 = vmatprep.subr.bf16.mxu0 0
        %2775 = vmatpush1.bf16.msra.mxu0 0
        %2776 = vmatprep.subr.bf16.mxu0 0
        %2777 = vmatpush1.bf16.msra.mxu0 0
        %2778 = vmatprep.subr.bf16.mxu0 0
        %2779 = vmatpush1.bf16.msra.mxu0 0
        %2780 = vmatprep.subr.bf16.mxu0 0
        %2781 = vmatpush1.bf16.msra.mxu0 0
        %2782 = vmatprep.subr.bf16.mxu0 0
        %2783 = vmatpush1.bf16.msra.mxu0 0
        %2784 = vmatprep.mubr.bf16.mxu0 0
        %2785 = vmatmul.mubr.bf16.gmra.mrb[0].mxu0 %v2684
        %v2786 = vpop.f32.mrb[0].mxu0
        %v2787 = vadd.f32 0.0, %v2786
        %v2788 = vpop.f32.mrb[0].mxu0
        %v2789 = vpop.f32.mrb[0].mxu0
        %v2790 = vadd.f32 0.0, %v2789
        %v2791 = vpop.f32.mrb[0].mxu0
        %2792 = vmatprep.mubr.bf16.mxu0 0
        %2793 = vmatmul.mubr.bf16.gmra.mrb[0].mxu0 %v2685
        %v2794 = vpop.f32.mrb[0].mxu0
        %v2795 = vadd.f32 0.0, %v2794
        %v2796 = vpop.f32.mrb[0].mxu0
        %v2797 = vpop.f32.mrb[0].mxu0
        %v2798 = vadd.f32 0.0, %v2797
        %v2799 = vpop.f32.mrb[0].mxu0
        %2800 = vmatprep.mubr.bf16.mxu0 0
        %2801 = vmatmul.mubr.bf16.gmra.mrb[0].mxu0 %v2686
        %v2802 = vpop.f32.mrb[0].mxu0
        %v2803 = vadd.f32 0.0, %v2802
        %v2804 = vpop.f32.mrb[0].mxu0
        %v2805 = vpop.f32.mrb[0].mxu0
        %v2806 = vadd.f32 0.0, %v2805
        %v2807 = vpop.f32.mrb[0].mxu0
        %2808 = vmatprep.mubr.bf16.mxu0 0
        %2809 = vmatmul.mubr.bf16.gmra.mrb[0].mxu0 %v2687
        %v2810 = vpop.f32.mrb[0].mxu0
        %v2811 = vadd.f32 0.0, %v2810
        %v2812 = vpop.f32.mrb[0].mxu0
        %v2813 = vpop.f32.mrb[0].mxu0
        %v2814 = vadd.f32 0.0, %v2813
        %v2815 = vpop.f32.mrb[0].mxu0
        %2816 = vdwg.mxu0
        %v2817 = vadd.f32 %v2668, %v2787
        %v2818 = vadd.f32 %v2669, %v2790
        %v2819 = vadd.f32 %v2670, %v2795
        %v2820 = vadd.f32 %v2671, %v2798
        %v2821 = vadd.f32 %v2672, %v2803
        %v2822 = vadd.f32 %v2673, %v2806
        %v2823 = vadd.f32 %v2674, %v2811
        %v2824 = vadd.f32 %v2675, %v2814
        %v2825 = vld [vmem:[%s1319 + $0x8] sm:$0xff]
        %v2826 = vld [vmem:[%s1319 + $0x20] sm:$0xff]
        %v2827 = vld [vmem:[%s1319 + $0x38] sm:$0xff]
        %v2828 = vld [vmem:[%s1319 + $0x50] sm:$0xff]
        %v2829 = vld [vmem:[%s1319 + $0x68] sm:$0xff]
        %v2830 = vld [vmem:[%s1319 + $0x80] sm:$0xff]
        %v2831 = vld [vmem:[%s1319 + $0x98] sm:$0xff]
        %v2832 = vld [vmem:[%s1319 + $0xb0] sm:$0xff]
        %v2833 = vpack.c.bf16 %v2826, %v2825
        %v2834 = vpack.c.bf16 %v2828, %v2827
        %v2835 = vpack.c.bf16 %v2830, %v2829
        %v2836 = vpack.c.bf16 %v2832, %v2831
        %v2837 = vld [vmem:[%s3 + $0x1c0] sm:$0xf]
        %v2838 = vld [vmem:[%s3 + $0x1c4] sm:$0xf]
        %v2839 = vld [vmem:[%s3 + $0x1c8] sm:$0xf]
        %v2840 = vld [vmem:[%s3 + $0x1cc] sm:$0xf]
        %v2841 = vld [vmem:[%s3 + $0x1d0] sm:$0xf]
        %v2842 = vld [vmem:[%s3 + $0x1d4] sm:$0xf]
        %v2843 = vld [vmem:[%s3 + $0x1d8] sm:$0xf]
        %v2844 = vld [vmem:[%s3 + $0x1dc] sm:$0xf]
        %v2845 = vld [vmem:[%s3 + $0x1e0] sm:$0xf]
        %v2846 = vld [vmem:[%s3 + $0x1e4] sm:$0xf]
        %v2847 = vld [vmem:[%s3 + $0x1e8] sm:$0xf]
        %v2848 = vld [vmem:[%s3 + $0x1ec] sm:$0xf]
        %v2849 = vld [vmem:[%s3 + $0x1f0] sm:$0xf]
        %v2850 = vld [vmem:[%s3 + $0x1f4] sm:$0xf]
        %v2851 = vld [vmem:[%s3 + $0x1f8] sm:$0xf]
        %v2852 = vld [vmem:[%s3 + $0x1fc] sm:$0xf]
        %v2869 = vunpack.c.l.b16 %v2837
        %v2870 = vunpack.c.l.b16 %v2838
        %v2871 = vunpack.c.l.b16 %v2839
        %v2872 = vunpack.c.l.b16 %v2840
        %v2873 = vunpack.c.l.b16 %v2841
        %v2874 = vunpack.c.l.b16 %v2842
        %v2875 = vunpack.c.l.b16 %v2843
        %v2876 = vunpack.c.l.b16 %v2844
        %v2877 = vunpack.c.l.b16 %v2845
        %v2878 = vunpack.c.l.b16 %v2846
        %v2879 = vunpack.c.l.b16 %v2847
        %v2880 = vunpack.c.l.b16 %v2848
        %v2881 = vunpack.c.l.b16 %v2849
        %v2882 = vunpack.c.l.b16 %v2850
        %v2883 = vunpack.c.l.b16 %v2851
        %v2884 = vunpack.c.l.b16 %v2852
        %v2885 = vpack.c.b16 %v2870, %v2869
        %v2886 = vpack.c.b16 %v2872, %v2871
        %v2887 = vpack.c.b16 %v2874, %v2873
        %v2888 = vpack.c.b16 %v2876, %v2875
        %v2889 = vpack.c.b16 %v2878, %v2877
        %v2890 = vpack.c.b16 %v2880, %v2879
        %v2891 = vpack.c.b16 %v2882, %v2881
        %v2892 = vpack.c.b16 %v2884, %v2883
        %2901 = vmatprep.subr.bf16.mxu0 0
        %2902 = vmatpush1.bf16.msra.mxu0 %v2885
        %2903 = vmatprep.subr.bf16.mxu0 0
        %2904 = vmatpush1.bf16.msra.mxu0 %v2886
        %2905 = vmatprep.subr.bf16.mxu0 0
        %2906 = vmatpush1.bf16.msra.mxu0 %v2887
        %2907 = vmatprep.subr.bf16.mxu0 0
        %2908 = vmatpush1.bf16.msra.mxu0 %v2888
        %2909 = vmatprep.subr.bf16.mxu0 0
        %2910 = vmatpush1.bf16.msra.mxu0 %v2889
        %2911 = vmatprep.subr.bf16.mxu0 0
        %2912 = vmatpush1.bf16.msra.mxu0 %v2890
        %2913 = vmatprep.subr.bf16.mxu0 0
        %2914 = vmatpush1.bf16.msra.mxu0 %v2891
        %2915 = vmatprep.subr.bf16.mxu0 0
        %2916 = vmatpush1.bf16.msra.mxu0 %v2892
        %2917 = vmatprep.subr.bf16.mxu0 0
        %2918 = vmatpush1.bf16.msra.mxu0 0
        %2919 = vmatprep.subr.bf16.mxu0 0
        %2920 = vmatpush1.bf16.msra.mxu0 0
        %2921 = vmatprep.subr.bf16.mxu0 0
        %2922 = vmatpush1.bf16.msra.mxu0 0
        %2923 = vmatprep.subr.bf16.mxu0 0
        %2924 = vmatpush1.bf16.msra.mxu0 0
        %2925 = vmatprep.subr.bf16.mxu0 0
        %2926 = vmatpush1.bf16.msra.mxu0 0
        %2927 = vmatprep.subr.bf16.mxu0 0
        %2928 = vmatpush1.bf16.msra.mxu0 0
        %2929 = vmatprep.subr.bf16.mxu0 0
        %2930 = vmatpush1.bf16.msra.mxu0 0
        %2931 = vmatprep.subr.bf16.mxu0 0
        %2932 = vmatpush1.bf16.msra.mxu0 0
        %2933 = vmatprep.mubr.bf16.mxu0 0
        %2934 = vmatmul.mubr.bf16.gmra.mrb[0].mxu0 %v2833
        %v2935 = vpop.f32.mrb[0].mxu0
        %v2936 = vadd.f32 0.0, %v2935
        %v2937 = vpop.f32.mrb[0].mxu0
        %v2938 = vpop.f32.mrb[0].mxu0
        %v2939 = vadd.f32 0.0, %v2938
        %v2940 = vpop.f32.mrb[0].mxu0
        %2941 = vmatprep.mubr.bf16.mxu0 0
        %2942 = vmatmul.mubr.bf16.gmra.mrb[0].mxu0 %v2834
        %v2943 = vpop.f32.mrb[0].mxu0
        %v2944 = vadd.f32 0.0, %v2943
        %v2945 = vpop.f32.mrb[0].mxu0
        %v2946 = vpop.f32.mrb[0].mxu0
        %v2947 = vadd.f32 0.0, %v2946
        %v2948 = vpop.f32.mrb[0].mxu0
        %2949 = vmatprep.mubr.bf16.mxu0 0
        %2950 = vmatmul.mubr.bf16.gmra.mrb[0].mxu0 %v2835
        %v2951 = vpop.f32.mrb[0].mxu0
        %v2952 = vadd.f32 0.0, %v2951
        %v2953 = vpop.f32.mrb[0].mxu0
        %v2954 = vpop.f32.mrb[0].mxu0
        %v2955 = vadd.f32 0.0, %v2954
        %v2956 = vpop.f32.mrb[0].mxu0
        %2957 = vmatprep.mubr.bf16.mxu0 0
        %2958 = vmatmul.mubr.bf16.gmra.mrb[0].mxu0 %v2836
        %v2959 = vpop.f32.mrb[0].mxu0
        %v2960 = vadd.f32 0.0, %v2959
        %v2961 = vpop.f32.mrb[0].mxu0
        %v2962 = vpop.f32.mrb[0].mxu0
        %v2963 = vadd.f32 0.0, %v2962
        %v2964 = vpop.f32.mrb[0].mxu0
        %2965 = vdwg.mxu0
        %v2966 = vadd.f32 %v2817, %v2936
        %v2967 = vadd.f32 %v2818, %v2939
        %v2968 = vadd.f32 %v2819, %v2944
        %v2969 = vadd.f32 %v2820, %v2947
        %v2970 = vadd.f32 %v2821, %v2952
        %v2971 = vadd.f32 %v2822, %v2955
        %v2972 = vadd.f32 %v2823, %v2960
        %v2973 = vadd.f32 %v2824, %v2963
        %v2974 = vld [vmem:[%s1319 + $0x9] sm:$0xff]
        %v2975 = vld [vmem:[%s1319 + $0x21] sm:$0xff]
        %v2976 = vld [vmem:[%s1319 + $0x39] sm:$0xff]
        %v2977 = vld [vmem:[%s1319 + $0x51] sm:$0xff]
        %v2978 = vld [vmem:[%s1319 + $0x69] sm:$0xff]
        %v2979 = vld [vmem:[%s1319 + $0x81] sm:$0xff]
        %v2980 = vld [vmem:[%s1319 + $0x99] sm:$0xff]
        %v2981 = vld [vmem:[%s1319 + $0xb1] sm:$0xff]
        %v2982 = vpack.c.bf16 %v2975, %v2974
        %v2983 = vpack.c.bf16 %v2977, %v2976
        %v2984 = vpack.c.bf16 %v2979, %v2978
        %v2985 = vpack.c.bf16 %v2981, %v2980
        %v2986 = vld [vmem:[%s3 + $0x200] sm:$0xf]
        %v2987 = vld [vmem:[%s3 + $0x204] sm:$0xf]
        %v2988 = vld [vmem:[%s3 + $0x208] sm:$0xf]
        %v2989 = vld [vmem:[%s3 + $0x20c] sm:$0xf]
        %v2990 = vld [vmem:[%s3 + $0x210] sm:$0xf]
        %v2991 = vld [vmem:[%s3 + $0x214] sm:$0xf]
        %v2992 = vld [vmem:[%s3 + $0x218] sm:$0xf]
        %v2993 = vld [vmem:[%s3 + $0x21c] sm:$0xf]
        %v2994 = vld [vmem:[%s3 + $0x220] sm:$0xf]
        %v2995 = vld [vmem:[%s3 + $0x224] sm:$0xf]
        %v2996 = vld [vmem:[%s3 + $0x228] sm:$0xf]
        %v2997 = vld [vmem:[%s3 + $0x22c] sm:$0xf]
        %v2998 = vld [vmem:[%s3 + $0x230] sm:$0xf]
        %v2999 = vld [vmem:[%s3 + $0x234] sm:$0xf]
        %v3000 = vld [vmem:[%s3 + $0x238] sm:$0xf]
        %v3001 = vld [vmem:[%s3 + $0x23c] sm:$0xf]
        %v3018 = vunpack.c.l.b16 %v2986
        %v3019 = vunpack.c.l.b16 %v2987
        %v3020 = vunpack.c.l.b16 %v2988
        %v3021 = vunpack.c.l.b16 %v2989
        %v3022 = vunpack.c.l.b16 %v2990
        %v3023 = vunpack.c.l.b16 %v2991
        %v3024 = vunpack.c.l.b16 %v2992
        %v3025 = vunpack.c.l.b16 %v2993
        %v3026 = vunpack.c.l.b16 %v2994
        %v3027 = vunpack.c.l.b16 %v2995
        %v3028 = vunpack.c.l.b16 %v2996
        %v3029 = vunpack.c.l.b16 %v2997
        %v3030 = vunpack.c.l.b16 %v2998
        %v3031 = vunpack.c.l.b16 %v2999
        %v3032 = vunpack.c.l.b16 %v3000
        %v3033 = vunpack.c.l.b16 %v3001
        %v3034 = vpack.c.b16 %v3019, %v3018
        %v3035 = vpack.c.b16 %v3021, %v3020
        %v3036 = vpack.c.b16 %v3023, %v3022
        %v3037 = vpack.c.b16 %v3025, %v3024
        %v3038 = vpack.c.b16 %v3027, %v3026
        %v3039 = vpack.c.b16 %v3029, %v3028
        %v3040 = vpack.c.b16 %v3031, %v3030
        %v3041 = vpack.c.b16 %v3033, %v3032
        %3050 = vmatprep.subr.bf16.mxu0 0
        %3051 = vmatpush1.bf16.msra.mxu0 %v3034
        %3052 = vmatprep.subr.bf16.mxu0 0
        %3053 = vmatpush1.bf16.msra.mxu0 %v3035
        %3054 = vmatprep.subr.bf16.mxu0 0
        %3055 = vmatpush1.bf16.msra.mxu0 %v3036
        %3056 = vmatprep.subr.bf16.mxu0 0
        %3057 = vmatpush1.bf16.msra.mxu0 %v3037
        %3058 = vmatprep.subr.bf16.mxu0 0
        %3059 = vmatpush1.bf16.msra.mxu0 %v3038
        %3060 = vmatprep.subr.bf16.mxu0 0
        %3061 = vmatpush1.bf16.msra.mxu0 %v3039
        %3062 = vmatprep.subr.bf16.mxu0 0
        %3063 = vmatpush1.bf16.msra.mxu0 %v3040
        %3064 = vmatprep.subr.bf16.mxu0 0
        %3065 = vmatpush1.bf16.msra.mxu0 %v3041
        %3066 = vmatprep.subr.bf16.mxu0 0
        %3067 = vmatpush1.bf16.msra.mxu0 0
        %3068 = vmatprep.subr.bf16.mxu0 0
        %3069 = vmatpush1.bf16.msra.mxu0 0
        %3070 = vmatprep.subr.bf16.mxu0 0
        %3071 = vmatpush1.bf16.msra.mxu0 0
        %3072 = vmatprep.subr.bf16.mxu0 0
        %3073 = vmatpush1.bf16.msra.mxu0 0
        %3074 = vmatprep.subr.bf16.mxu0 0
        %3075 = vmatpush1.bf16.msra.mxu0 0
        %3076 = vmatprep.subr.bf16.mxu0 0
        %3077 = vmatpush1.bf16.msra.mxu0 0
        %3078 = vmatprep.subr.bf16.mxu0 0
        %3079 = vmatpush1.bf16.msra.mxu0 0
        %3080 = vmatprep.subr.bf16.mxu0 0
        %3081 = vmatpush1.bf16.msra.mxu0 0
        %3082 = vmatprep.mubr.bf16.mxu0 0
        %3083 = vmatmul.mubr.bf16.gmra.mrb[0].mxu0 %v2982
        %v3084 = vpop.f32.mrb[0].mxu0
        %v3085 = vadd.f32 0.0, %v3084
        %v3086 = vpop.f32.mrb[0].mxu0
        %v3087 = vpop.f32.mrb[0].mxu0
        %v3088 = vadd.f32 0.0, %v3087
        %v3089 = vpop.f32.mrb[0].mxu0
        %3090 = vmatprep.mubr.bf16.mxu0 0
        %3091 = vmatmul.mubr.bf16.gmra.mrb[0].mxu0 %v2983
        %v3092 = vpop.f32.mrb[0].mxu0
        %v3093 = vadd.f32 0.0, %v3092
        %v3094 = vpop.f32.mrb[0].mxu0
        %v3095 = vpop.f32.mrb[0].mxu0
        %v3096 = vadd.f32 0.0, %v3095
        %v3097 = vpop.f32.mrb[0].mxu0
        %3098 = vmatprep.mubr.bf16.mxu0 0
        %3099 = vmatmul.mubr.bf16.gmra.mrb[0].mxu0 %v2984
        %v3100 = vpop.f32.mrb[0].mxu0
        %v3101 = vadd.f32 0.0, %v3100
        %v3102 = vpop.f32.mrb[0].mxu0
        %v3103 = vpop.f32.mrb[0].mxu0
        %v3104 = vadd.f32 0.0, %v3103
        %v3105 = vpop.f32.mrb[0].mxu0
        %3106 = vmatprep.mubr.bf16.mxu0 0
        %3107 = vmatmul.mubr.bf16.gmra.mrb[0].mxu0 %v2985
        %v3108 = vpop.f32.mrb[0].mxu0
        %v3109 = vadd.f32 0.0, %v3108
        %v3110 = vpop.f32.mrb[0].mxu0
        %v3111 = vpop.f32.mrb[0].mxu0
        %v3112 = vadd.f32 0.0, %v3111
        %v3113 = vpop.f32.mrb[0].mxu0
        %3114 = vdwg.mxu0
        %v3115 = vadd.f32 %v2966, %v3085
        %v3116 = vadd.f32 %v2967, %v3088
        %v3117 = vadd.f32 %v2968, %v3093
        %v3118 = vadd.f32 %v2969, %v3096
        %v3119 = vadd.f32 %v2970, %v3101
        %v3120 = vadd.f32 %v2971, %v3104
        %v3121 = vadd.f32 %v2972, %v3109
        %v3122 = vadd.f32 %v2973, %v3112
        %v3123 = vld [vmem:[%s4] sm:$0x1]
        %v3125 = vlaneseq
        %v3126 = vshrl.u32 %v3125, 7
        %v3127 = vsub.s32 0, %v3126
        %v3128 = vrot.slane %v3123, %v3127
        %v3130 = vadd.f32 %v3115, %v3128
        %v3131 = vadd.f32 %v3116, %v3128
        %v3132 = vadd.f32 %v3117, %v3128
        %v3133 = vadd.f32 %v3118, %v3128
        %v3134 = vadd.f32 %v3119, %v3128
        %v3135 = vadd.f32 %v3120, %v3128
        %v3136 = vadd.f32 %v3121, %v3128
        %v3137 = vadd.f32 %v3122, %v3128
        %v3138 = vmax.f32 %v3130, 0.0
        %v3139 = vmax.f32 %v3131, 0.0
        %v3140 = vmax.f32 %v3132, 0.0
        %v3141 = vmax.f32 %v3133, 0.0
        %v3142 = vmax.f32 %v3134, 0.0
        %v3143 = vmax.f32 %v3135, 0.0
        %v3144 = vmax.f32 %v3136, 0.0
        %v3145 = vmax.f32 %v3137, 0.0
        %v3146 = vpack.c.bf16 %v3139, %v3138
        %v3147 = vpack.c.bf16 %v3141, %v3140
        %v3148 = vpack.c.bf16 %v3143, %v3142
        %v3149 = vpack.c.bf16 %v3145, %v3144
        %v3150 = vld [vmem:[%s5] sm:$0xf]
        %v3151 = vld [vmem:[%s5 + $0x4] sm:$0xf]
        %v3152 = vld [vmem:[%s5 + $0x8] sm:$0xf]
        %v3153 = vld [vmem:[%s5 + $0xc] sm:$0xf]
        %v3154 = vld [vmem:[%s6] sm:$0x1]
        %v3156 = vlaneseq
        %v3157 = vshrl.u32 %v3156, 7
        %v3158 = vsub.s32 0, %v3157
        %v3159 = vrot.slane %v3154, %v3158
        %v3165 = vunpack.c.l.b16 %v3150
        %v3166 = vunpack.c.l.b16 %v3151
        %v3167 = vunpack.c.l.b16 %v3152
        %v3168 = vunpack.c.l.b16 %v3153
        %v3169 = vpack.c.b16 %v3166, %v3165
        %v3170 = vpack.c.b16 %v3168, %v3167
        %vm3173 = vcmask 261120
        %v3175 = vsel %vm3173, %v3146, 0
        %v3178 = vsel %vm3173, %v3147, 0
        %v3181 = vsel %vm3173, %v3148, 0
        %v3184 = vsel %vm3173, %v3149, 0
        %3186 = vmatprep.subr.bf16.mxu0 0
        %3187 = vmatpush1.bf16.msra.mxu0 %v3169
        %3188 = vmatprep.subr.bf16.mxu0 0
        %3189 = vmatpush1.bf16.msra.mxu0 %v3170
        %3190 = vmatprep.subr.bf16.mxu0 0
        %3191 = vmatpush1.bf16.msra.mxu0 0
        %3192 = vmatprep.subr.bf16.mxu0 0
        %3193 = vmatpush1.bf16.msra.mxu0 0
        %3194 = vmatprep.subr.bf16.mxu0 0
        %3195 = vmatpush1.bf16.msra.mxu0 0
        %3196 = vmatprep.subr.bf16.mxu0 0
        %3197 = vmatpush1.bf16.msra.mxu0 0
        %3198 = vmatprep.subr.bf16.mxu0 0
        %3199 = vmatpush1.bf16.msra.mxu0 0
        %3200 = vmatprep.subr.bf16.mxu0 0
        %3201 = vmatpush1.bf16.msra.mxu0 0
        %3202 = vmatprep.subr.bf16.mxu0 0
        %3203 = vmatpush1.bf16.msra.mxu0 0
        %3204 = vmatprep.subr.bf16.mxu0 0
        %3205 = vmatpush1.bf16.msra.mxu0 0
        %3206 = vmatprep.subr.bf16.mxu0 0
        %3207 = vmatpush1.bf16.msra.mxu0 0
        %3208 = vmatprep.subr.bf16.mxu0 0
        %3209 = vmatpush1.bf16.msra.mxu0 0
        %3210 = vmatprep.subr.bf16.mxu0 0
        %3211 = vmatpush1.bf16.msra.mxu0 0
        %3212 = vmatprep.subr.bf16.mxu0 0
        %3213 = vmatpush1.bf16.msra.mxu0 0
        %3214 = vmatprep.subr.bf16.mxu0 0
        %3215 = vmatpush1.bf16.msra.mxu0 0
        %3216 = vmatprep.subr.bf16.mxu0 0
        %3217 = vmatpush1.bf16.msra.mxu0 0
        %3218 = vmatprep.mubr.bf16.mxu0 0
        %3219 = vmatmul.mubr.bf16.gmra.mrb[0].mxu0 %v3175
        %v3220 = vpop.f32.mrb[0].mxu0
        %v3221 = vadd.f32 %v3159, %v3220
        %v3222 = vpop.f32.mrb[0].mxu0
        %v3223 = vpop.f32.mrb[0].mxu0
        %v3224 = vadd.f32 %v3159, %v3223
        %v3225 = vpop.f32.mrb[0].mxu0
        %3226 = vmatprep.mubr.bf16.mxu0 0
        %3227 = vmatmul.mubr.bf16.gmra.mrb[0].mxu0 %v3178
        %v3228 = vpop.f32.mrb[0].mxu0
        %v3229 = vadd.f32 %v3159, %v3228
        %v3230 = vpop.f32.mrb[0].mxu0
        %v3231 = vpop.f32.mrb[0].mxu0
        %v3232 = vadd.f32 %v3159, %v3231
        %v3233 = vpop.f32.mrb[0].mxu0
        %3234 = vmatprep.mubr.bf16.mxu0 0
        %3235 = vmatmul.mubr.bf16.gmra.mrb[0].mxu0 %v3181
        %v3236 = vpop.f32.mrb[0].mxu0
        %v3237 = vadd.f32 %v3159, %v3236
        %v3238 = vpop.f32.mrb[0].mxu0
        %v3239 = vpop.f32.mrb[0].mxu0
        %v3240 = vadd.f32 %v3159, %v3239
        %v3241 = vpop.f32.mrb[0].mxu0
        %3242 = vmatprep.mubr.bf16.mxu0 0
        %3243 = vmatmul.mubr.bf16.gmra.mrb[0].mxu0 %v3184
        %v3244 = vpop.f32.mrb[0].mxu0
        %v3245 = vadd.f32 %v3159, %v3244
        %v3246 = vpop.f32.mrb[0].mxu0
        %v3247 = vpop.f32.mrb[0].mxu0
        %v3248 = vadd.f32 %v3159, %v3247
        %v3249 = vpop.f32.mrb[0].mxu0
        %3250 = vdwg.mxu0
        %v3251 = vadd.f32 %v3221, %v1782
        %v3252 = vadd.f32 %v3224, %v1783
        %v3253 = vadd.f32 %v3229, %v1784
        %v3254 = vadd.f32 %v3232, %v1785
        %v3255 = vadd.f32 %v3237, %v1786
        %v3256 = vadd.f32 %v3240, %v1787
        %v3257 = vadd.f32 %v3245, %v1788
        %v3258 = vadd.f32 %v3248, %v1789
        %v3259 = vmax.f32 %v3251, 0.0
        %v3260 = vmax.f32 %v3252, 0.0
        %v3261 = vmax.f32 %v3253, 0.0
        %v3262 = vmax.f32 %v3254, 0.0
        %v3263 = vmax.f32 %v3255, 0.0
        %v3264 = vmax.f32 %v3256, 0.0
        %v3265 = vmax.f32 %v3257, 0.0
        %v3266 = vmax.f32 %v3258, 0.0
        %3267 = vst [vmem:[%s432 + $0x8] sm:$0xff] %v3259
        %3268 = vst [vmem:[%s432 + $0x20] sm:$0xff] %v3260
        %3269 = vst [vmem:[%s432 + $0x38] sm:$0xff] %v3261
        %3270 = vst [vmem:[%s432 + $0x50] sm:$0xff] %v3262
        %3271 = vst [vmem:[%s432 + $0x68] sm:$0xff] %v3263
        %3272 = vst [vmem:[%s432 + $0x80] sm:$0xff] %v3264
        %3273 = vst [vmem:[%s432 + $0x98] sm:$0xff] %v3265
        %3274 = vst [vmem:[%s432 + $0xb0] sm:$0xff] %v3266
        %v3275 = vld [vmem:[#allocation2 + $0x7] sm:$0xff]
        %v3276 = vld [vmem:[#allocation2 + $0x1f] sm:$0xff]
        %v3277 = vld [vmem:[#allocation2 + $0x37] sm:$0xff]
        %v3278 = vld [vmem:[#allocation2 + $0x4f] sm:$0xff]
        %v3279 = vld [vmem:[#allocation2 + $0x67] sm:$0xff]
        %v3280 = vld [vmem:[#allocation2 + $0x7f] sm:$0xff]
        %v3281 = vld [vmem:[#allocation2 + $0x97] sm:$0xff]
        %v3282 = vld [vmem:[#allocation2 + $0xaf] sm:$0xff]
        %v3283 = vpack.c.bf16 %v3276, %v3275
        %v3284 = vpack.c.bf16 %v3278, %v3277
        %v3285 = vpack.c.bf16 %v3280, %v3279
        %v3286 = vpack.c.bf16 %v3282, %v3281
        %v3287 = vld [vmem:[%s7] sm:$0xf]
        %v3288 = vld [vmem:[%s7 + $0x4] sm:$0xf]
        %v3289 = vld [vmem:[%s7 + $0x8] sm:$0xf]
        %v3290 = vld [vmem:[%s7 + $0xc] sm:$0xf]
        %v3291 = vld [vmem:[%s7 + $0x10] sm:$0xf]
        %v3292 = vld [vmem:[%s7 + $0x14] sm:$0xf]
        %v3293 = vld [vmem:[%s7 + $0x18] sm:$0xf]
        %v3294 = vld [vmem:[%s7 + $0x1c] sm:$0xf]
        %v3295 = vld [vmem:[%s7 + $0x20] sm:$0xf]
        %v3296 = vld [vmem:[%s7 + $0x24] sm:$0xf]
        %v3297 = vld [vmem:[%s7 + $0x28] sm:$0xf]
        %v3298 = vld [vmem:[%s7 + $0x2c] sm:$0xf]
        %v3299 = vld [vmem:[%s7 + $0x30] sm:$0xf]
        %v3300 = vld [vmem:[%s7 + $0x34] sm:$0xf]
        %v3301 = vld [vmem:[%s7 + $0x38] sm:$0xf]
        %v3302 = vld [vmem:[%s7 + $0x3c] sm:$0xf]
        %v3303 = vld [vmem:[#allocation2 + $0x8] sm:$0xff]
        %v3304 = vld [vmem:[#allocation2 + $0x20] sm:$0xff]
        %v3305 = vld [vmem:[#allocation2 + $0x38] sm:$0xff]
        %v3306 = vld [vmem:[#allocation2 + $0x50] sm:$0xff]
        %v3307 = vld [vmem:[#allocation2 + $0x68] sm:$0xff]
        %v3308 = vld [vmem:[#allocation2 + $0x80] sm:$0xff]
        %v3309 = vld [vmem:[#allocation2 + $0x98] sm:$0xff]
        %v3310 = vld [vmem:[#allocation2 + $0xb0] sm:$0xff]
        %v3311 = vpack.c.bf16 %v3304, %v3303
        %v3312 = vpack.c.bf16 %v3306, %v3305
        %v3313 = vpack.c.bf16 %v3308, %v3307
        %v3314 = vpack.c.bf16 %v3310, %v3309
        %v3315 = vld [vmem:[%s7 + $0x40] sm:$0xf]
        %v3316 = vld [vmem:[%s7 + $0x44] sm:$0xf]
        %v3317 = vld [vmem:[%s7 + $0x48] sm:$0xf]
        %v3318 = vld [vmem:[%s7 + $0x4c] sm:$0xf]
        %v3319 = vld [vmem:[%s7 + $0x50] sm:$0xf]
        %v3320 = vld [vmem:[%s7 + $0x54] sm:$0xf]
        %v3321 = vld [vmem:[%s7 + $0x58] sm:$0xf]
        %v3322 = vld [vmem:[%s7 + $0x5c] sm:$0xf]
        %v3323 = vld [vmem:[%s7 + $0x60] sm:$0xf]
        %v3324 = vld [vmem:[%s7 + $0x64] sm:$0xf]
        %v3325 = vld [vmem:[%s7 + $0x68] sm:$0xf]
        %v3326 = vld [vmem:[%s7 + $0x6c] sm:$0xf]
        %v3327 = vld [vmem:[%s7 + $0x70] sm:$0xf]
        %v3328 = vld [vmem:[%s7 + $0x74] sm:$0xf]
        %v3329 = vld [vmem:[%s7 + $0x78] sm:$0xf]
        %v3330 = vld [vmem:[%s7 + $0x7c] sm:$0xf]
        %v3347 = vunpack.c.l.b16 %v3315
        %v3348 = vunpack.c.l.b16 %v3316
        %v3349 = vunpack.c.l.b16 %v3317
        %v3350 = vunpack.c.l.b16 %v3318
        %v3351 = vunpack.c.l.b16 %v3319
        %v3352 = vunpack.c.l.b16 %v3320
        %v3353 = vunpack.c.l.b16 %v3321
        %v3354 = vunpack.c.l.b16 %v3322
        %v3355 = vunpack.c.l.b16 %v3323
        %v3356 = vunpack.c.l.b16 %v3324
        %v3357 = vunpack.c.l.b16 %v3325
        %v3358 = vunpack.c.l.b16 %v3326
        %v3359 = vunpack.c.l.b16 %v3327
        %v3360 = vunpack.c.l.b16 %v3328
        %v3361 = vunpack.c.l.b16 %v3329
        %v3362 = vunpack.c.l.b16 %v3330
        %v3363 = vpack.c.b16 %v3348, %v3347
        %v3364 = vpack.c.b16 %v3350, %v3349
        %v3365 = vpack.c.b16 %v3352, %v3351
        %v3366 = vpack.c.b16 %v3354, %v3353
        %v3367 = vpack.c.b16 %v3356, %v3355
        %v3368 = vpack.c.b16 %v3358, %v3357
        %v3369 = vpack.c.b16 %v3360, %v3359
        %v3370 = vpack.c.b16 %v3362, %v3361
        %3379 = vmatprep.subr.bf16.mxu0 0
        %3380 = vmatpush1.bf16.msra.mxu0 %v3363
        %3381 = vmatprep.subr.bf16.mxu0 0
        %3382 = vmatpush1.bf16.msra.mxu0 %v3364
        %3383 = vmatprep.subr.bf16.mxu0 0
        %3384 = vmatpush1.bf16.msra.mxu0 %v3365
        %3385 = vmatprep.subr.bf16.mxu0 0
        %3386 = vmatpush1.bf16.msra.mxu0 %v3366
        %3387 = vmatprep.subr.bf16.mxu0 0
        %3388 = vmatpush1.bf16.msra.mxu0 %v3367
        %3389 = vmatprep.subr.bf16.mxu0 0
        %3390 = vmatpush1.bf16.msra.mxu0 %v3368
        %3391 = vmatprep.subr.bf16.mxu0 0
        %3392 = vmatpush1.bf16.msra.mxu0 %v3369
        %3393 = vmatprep.subr.bf16.mxu0 0
        %3394 = vmatpush1.bf16.msra.mxu0 %v3370
        %3395 = vmatprep.subr.bf16.mxu0 0
        %3396 = vmatpush1.bf16.msra.mxu0 0
        %3397 = vmatprep.subr.bf16.mxu0 0
        %3398 = vmatpush1.bf16.msra.mxu0 0
        %3399 = vmatprep.subr.bf16.mxu0 0
        %3400 = vmatpush1.bf16.msra.mxu0 0
        %3401 = vmatprep.subr.bf16.mxu0 0
        %3402 = vmatpush1.bf16.msra.mxu0 0
        %3403 = vmatprep.subr.bf16.mxu0 0
        %3404 = vmatpush1.bf16.msra.mxu0 0
        %3405 = vmatprep.subr.bf16.mxu0 0
        %3406 = vmatpush1.bf16.msra.mxu0 0
        %3407 = vmatprep.subr.bf16.mxu0 0
        %3408 = vmatpush1.bf16.msra.mxu0 0
        %3409 = vmatprep.subr.bf16.mxu0 0
        %3410 = vmatpush1.bf16.msra.mxu0 0
        %3411 = vmatprep.mubr.bf16.mxu0 0
        %3412 = vmatmul.mubr.bf16.gmra.mrb[0].mxu0 %v3311
        %v3413 = vpop.f32.mrb[0].mxu0
        %v3414 = vadd.f32 0.0, %v3413
        %v3415 = vpop.f32.mrb[0].mxu0
        %v3416 = vpop.f32.mrb[0].mxu0
        %v3417 = vadd.f32 0.0, %v3416
        %v3418 = vpop.f32.mrb[0].mxu0
        %3419 = vmatprep.mubr.bf16.mxu0 0
        %3420 = vmatmul.mubr.bf16.gmra.mrb[0].mxu0 %v3312
        %v3421 = vpop.f32.mrb[0].mxu0
        %v3422 = vadd.f32 0.0, %v3421
        %v3423 = vpop.f32.mrb[0].mxu0
        %v3424 = vpop.f32.mrb[0].mxu0
        %v3425 = vadd.f32 0.0, %v3424
        %v3426 = vpop.f32.mrb[0].mxu0
        %3427 = vmatprep.mubr.bf16.mxu0 0
        %3428 = vmatmul.mubr.bf16.gmra.mrb[0].mxu0 %v3313
        %v3429 = vpop.f32.mrb[0].mxu0
        %v3430 = vadd.f32 0.0, %v3429
        %v3431 = vpop.f32.mrb[0].mxu0
        %v3432 = vpop.f32.mrb[0].mxu0
        %v3433 = vadd.f32 0.0, %v3432
        %v3434 = vpop.f32.mrb[0].mxu0
        %3435 = vmatprep.mubr.bf16.mxu0 0
        %3436 = vmatmul.mubr.bf16.gmra.mrb[0].mxu0 %v3314
        %v3437 = vpop.f32.mrb[0].mxu0
        %v3438 = vadd.f32 0.0, %v3437
        %v3439 = vpop.f32.mrb[0].mxu0
        %v3440 = vpop.f32.mrb[0].mxu0
        %v3441 = vadd.f32 0.0, %v3440
        %v3442 = vpop.f32.mrb[0].mxu0
        %3443 = vdwg.mxu0
        %v3460 = vunpack.c.l.b16 %v3287
        %v3461 = vunpack.c.l.b16 %v3288
        %v3462 = vunpack.c.l.b16 %v3289
        %v3463 = vunpack.c.l.b16 %v3290
        %v3464 = vunpack.c.l.b16 %v3291
        %v3465 = vunpack.c.l.b16 %v3292
        %v3466 = vunpack.c.l.b16 %v3293
        %v3467 = vunpack.c.l.b16 %v3294
        %v3468 = vunpack.c.l.b16 %v3295
        %v3469 = vunpack.c.l.b16 %v3296
        %v3470 = vunpack.c.l.b16 %v3297
        %v3471 = vunpack.c.l.b16 %v3298
        %v3472 = vunpack.c.l.b16 %v3299
        %v3473 = vunpack.c.l.b16 %v3300
        %v3474 = vunpack.c.l.b16 %v3301
        %v3475 = vunpack.c.l.b16 %v3302
        %v3476 = vpack.c.b16 %v3461, %v3460
        %v3477 = vpack.c.b16 %v3463, %v3462
        %v3478 = vpack.c.b16 %v3465, %v3464
        %v3479 = vpack.c.b16 %v3467, %v3466
        %v3480 = vpack.c.b16 %v3469, %v3468
        %v3481 = vpack.c.b16 %v3471, %v3470
        %v3482 = vpack.c.b16 %v3473, %v3472
        %v3483 = vpack.c.b16 %v3475, %v3474
        %3492 = vmatprep.subr.bf16.mxu0 0
        %3493 = vmatpush1.bf16.msra.mxu0 %v3476
        %3494 = vmatprep.subr.bf16.mxu0 0
        %3495 = vmatpush1.bf16.msra.mxu0 %v3477
        %3496 = vmatprep.subr.bf16.mxu0 0
        %3497 = vmatpush1.bf16.msra.mxu0 %v3478
        %3498 = vmatprep.subr.bf16.mxu0 0
        %3499 = vmatpush1.bf16.msra.mxu0 %v3479
        %3500 = vmatprep.subr.bf16.mxu0 0
        %3501 = vmatpush1.bf16.msra.mxu0 %v3480
        %3502 = vmatprep.subr.bf16.mxu0 0
        %3503 = vmatpush1.bf16.msra.mxu0 %v3481
        %3504 = vmatprep.subr.bf16.mxu0 0
        %3505 = vmatpush1.bf16.msra.mxu0 %v3482
        %3506 = vmatprep.subr.bf16.mxu0 0
        %3507 = vmatpush1.bf16.msra.mxu0 %v3483
        %3508 = vmatprep.subr.bf16.mxu0 0
        %3509 = vmatpush1.bf16.msra.mxu0 0
        %3510 = vmatprep.subr.bf16.mxu0 0
        %3511 = vmatpush1.bf16.msra.mxu0 0
        %3512 = vmatprep.subr.bf16.mxu0 0
        %3513 = vmatpush1.bf16.msra.mxu0 0
        %3514 = vmatprep.subr.bf16.mxu0 0
        %3515 = vmatpush1.bf16.msra.mxu0 0
        %3516 = vmatprep.subr.bf16.mxu0 0
        %3517 = vmatpush1.bf16.msra.mxu0 0
        %3518 = vmatprep.subr.bf16.mxu0 0
        %3519 = vmatpush1.bf16.msra.mxu0 0
        %3520 = vmatprep.subr.bf16.mxu0 0
        %3521 = vmatpush1.bf16.msra.mxu0 0
        %3522 = vmatprep.subr.bf16.mxu0 0
        %3523 = vmatpush1.bf16.msra.mxu0 0
        %3524 = vmatprep.mubr.bf16.mxu0 0
        %3525 = vmatmul.mubr.bf16.gmra.mrb[0].mxu0 %v3283
        %v3526 = vpop.f32.mrb[0].mxu0
        %v3527 = vadd.f32 %v3414, %v3526
        %v3528 = vpop.f32.mrb[0].mxu0
        %v3529 = vpop.f32.mrb[0].mxu0
        %v3530 = vadd.f32 %v3417, %v3529
        %v3531 = vpop.f32.mrb[0].mxu0
        %3532 = vmatprep.mubr.bf16.mxu0 0
        %3533 = vmatmul.mubr.bf16.gmra.mrb[0].mxu0 %v3284
        %v3534 = vpop.f32.mrb[0].mxu0
        %v3535 = vadd.f32 %v3422, %v3534
        %v3536 = vpop.f32.mrb[0].mxu0
        %v3537 = vpop.f32.mrb[0].mxu0
        %v3538 = vadd.f32 %v3425, %v3537
        %v3539 = vpop.f32.mrb[0].mxu0
        %3540 = vmatprep.mubr.bf16.mxu0 0
        %3541 = vmatmul.mubr.bf16.gmra.mrb[0].mxu0 %v3285
        %v3542 = vpop.f32.mrb[0].mxu0
        %v3543 = vadd.f32 %v3430, %v3542
        %v3544 = vpop.f32.mrb[0].mxu0
        %v3545 = vpop.f32.mrb[0].mxu0
        %v3546 = vadd.f32 %v3433, %v3545
        %v3547 = vpop.f32.mrb[0].mxu0
        %3548 = vmatprep.mubr.bf16.mxu0 0
        %3549 = vmatmul.mubr.bf16.gmra.mrb[0].mxu0 %v3286
        %v3550 = vpop.f32.mrb[0].mxu0
        %v3551 = vadd.f32 %v3438, %v3550
        %v3552 = vpop.f32.mrb[0].mxu0
        %v3553 = vpop.f32.mrb[0].mxu0
        %v3554 = vadd.f32 %v3441, %v3553
        %v3555 = vpop.f32.mrb[0].mxu0
        %3556 = vdwg.mxu0
        %v3557 = vld [vmem:[#allocation2 + $0x9] sm:$0xff]
        %v3558 = vld [vmem:[#allocation2 + $0x21] sm:$0xff]
        %v3559 = vld [vmem:[#allocation2 + $0x39] sm:$0xff]
        %v3560 = vld [vmem:[#allocation2 + $0x51] sm:$0xff]
        %v3561 = vld [vmem:[#allocation2 + $0x69] sm:$0xff]
        %v3562 = vld [vmem:[#allocation2 + $0x81] sm:$0xff]
        %v3563 = vld [vmem:[#allocation2 + $0x99] sm:$0xff]
        %v3564 = vld [vmem:[#allocation2 + $0xb1] sm:$0xff]
        %v3565 = vpack.c.bf16 %v3558, %v3557
        %v3566 = vpack.c.bf16 %v3560, %v3559
        %v3567 = vpack.c.bf16 %v3562, %v3561
        %v3568 = vpack.c.bf16 %v3564, %v3563
        %v3569 = vld [vmem:[%s7 + $0x80] sm:$0xf]
        %v3570 = vld [vmem:[%s7 + $0x84] sm:$0xf]
        %v3571 = vld [vmem:[%s7 + $0x88] sm:$0xf]
        %v3572 = vld [vmem:[%s7 + $0x8c] sm:$0xf]
        %v3573 = vld [vmem:[%s7 + $0x90] sm:$0xf]
        %v3574 = vld [vmem:[%s7 + $0x94] sm:$0xf]
        %v3575 = vld [vmem:[%s7 + $0x98] sm:$0xf]
        %v3576 = vld [vmem:[%s7 + $0x9c] sm:$0xf]
        %v3577 = vld [vmem:[%s7 + $0xa0] sm:$0xf]
        %v3578 = vld [vmem:[%s7 + $0xa4] sm:$0xf]
        %v3579 = vld [vmem:[%s7 + $0xa8] sm:$0xf]
        %v3580 = vld [vmem:[%s7 + $0xac] sm:$0xf]
        %v3581 = vld [vmem:[%s7 + $0xb0] sm:$0xf]
        %v3582 = vld [vmem:[%s7 + $0xb4] sm:$0xf]
        %v3583 = vld [vmem:[%s7 + $0xb8] sm:$0xf]
        %v3584 = vld [vmem:[%s7 + $0xbc] sm:$0xf]
        %v3601 = vunpack.c.l.b16 %v3569
        %v3602 = vunpack.c.l.b16 %v3570
        %v3603 = vunpack.c.l.b16 %v3571
        %v3604 = vunpack.c.l.b16 %v3572
        %v3605 = vunpack.c.l.b16 %v3573
        %v3606 = vunpack.c.l.b16 %v3574
        %v3607 = vunpack.c.l.b16 %v3575
        %v3608 = vunpack.c.l.b16 %v3576
        %v3609 = vunpack.c.l.b16 %v3577
        %v3610 = vunpack.c.l.b16 %v3578
        %v3611 = vunpack.c.l.b16 %v3579
        %v3612 = vunpack.c.l.b16 %v3580
        %v3613 = vunpack.c.l.b16 %v3581
        %v3614 = vunpack.c.l.b16 %v3582
        %v3615 = vunpack.c.l.b16 %v3583
        %v3616 = vunpack.c.l.b16 %v3584
        %v3617 = vpack.c.b16 %v3602, %v3601
        %v3618 = vpack.c.b16 %v3604, %v3603
        %v3619 = vpack.c.b16 %v3606, %v3605
        %v3620 = vpack.c.b16 %v3608, %v3607
        %v3621 = vpack.c.b16 %v3610, %v3609
        %v3622 = vpack.c.b16 %v3612, %v3611
        %v3623 = vpack.c.b16 %v3614, %v3613
        %v3624 = vpack.c.b16 %v3616, %v3615
        %3633 = vmatprep.subr.bf16.mxu0 0
        %3634 = vmatpush1.bf16.msra.mxu0 %v3617
        %3635 = vmatprep.subr.bf16.mxu0 0
        %3636 = vmatpush1.bf16.msra.mxu0 %v3618
        %3637 = vmatprep.subr.bf16.mxu0 0
        %3638 = vmatpush1.bf16.msra.mxu0 %v3619
        %3639 = vmatprep.subr.bf16.mxu0 0
        %3640 = vmatpush1.bf16.msra.mxu0 %v3620
        %3641 = vmatprep.subr.bf16.mxu0 0
        %3642 = vmatpush1.bf16.msra.mxu0 %v3621
        %3643 = vmatprep.subr.bf16.mxu0 0
        %3644 = vmatpush1.bf16.msra.mxu0 %v3622
        %3645 = vmatprep.subr.bf16.mxu0 0
        %3646 = vmatpush1.bf16.msra.mxu0 %v3623
        %3647 = vmatprep.subr.bf16.mxu0 0
        %3648 = vmatpush1.bf16.msra.mxu0 %v3624
        %3649 = vmatprep.subr.bf16.mxu0 0
        %3650 = vmatpush1.bf16.msra.mxu0 0
        %3651 = vmatprep.subr.bf16.mxu0 0
        %3652 = vmatpush1.bf16.msra.mxu0 0
        %3653 = vmatprep.subr.bf16.mxu0 0
        %3654 = vmatpush1.bf16.msra.mxu0 0
        %3655 = vmatprep.subr.bf16.mxu0 0
        %3656 = vmatpush1.bf16.msra.mxu0 0
        %3657 = vmatprep.subr.bf16.mxu0 0
        %3658 = vmatpush1.bf16.msra.mxu0 0
        %3659 = vmatprep.subr.bf16.mxu0 0
        %3660 = vmatpush1.bf16.msra.mxu0 0
        %3661 = vmatprep.subr.bf16.mxu0 0
        %3662 = vmatpush1.bf16.msra.mxu0 0
        %3663 = vmatprep.subr.bf16.mxu0 0
        %3664 = vmatpush1.bf16.msra.mxu0 0
        %3665 = vmatprep.mubr.bf16.mxu0 0
        %3666 = vmatmul.mubr.bf16.gmra.mrb[0].mxu0 %v3565
        %v3667 = vpop.f32.mrb[0].mxu0
        %v3668 = vadd.f32 0.0, %v3667
        %v3669 = vpop.f32.mrb[0].mxu0
        %v3670 = vpop.f32.mrb[0].mxu0
        %v3671 = vadd.f32 0.0, %v3670
        %v3672 = vpop.f32.mrb[0].mxu0
        %3673 = vmatprep.mubr.bf16.mxu0 0
        %3674 = vmatmul.mubr.bf16.gmra.mrb[0].mxu0 %v3566
        %v3675 = vpop.f32.mrb[0].mxu0
        %v3676 = vadd.f32 0.0, %v3675
        %v3677 = vpop.f32.mrb[0].mxu0
        %v3678 = vpop.f32.mrb[0].mxu0
        %v3679 = vadd.f32 0.0, %v3678
        %v3680 = vpop.f32.mrb[0].mxu0
        %3681 = vmatprep.mubr.bf16.mxu0 0
        %3682 = vmatmul.mubr.bf16.gmra.mrb[0].mxu0 %v3567
        %v3683 = vpop.f32.mrb[0].mxu0
        %v3684 = vadd.f32 0.0, %v3683
        %v3685 = vpop.f32.mrb[0].mxu0
        %v3686 = vpop.f32.mrb[0].mxu0
        %v3687 = vadd.f32 0.0, %v3686
        %v3688 = vpop.f32.mrb[0].mxu0
        %3689 = vmatprep.mubr.bf16.mxu0 0
        %3690 = vmatmul.mubr.bf16.gmra.mrb[0].mxu0 %v3568
        %v3691 = vpop.f32.mrb[0].mxu0
        %v3692 = vadd.f32 0.0, %v3691
        %v3693 = vpop.f32.mrb[0].mxu0
        %v3694 = vpop.f32.mrb[0].mxu0
        %v3695 = vadd.f32 0.0, %v3694
        %v3696 = vpop.f32.mrb[0].mxu0
        %3697 = vdwg.mxu0
        %v3698 = vadd.f32 %v3527, %v3668
        %v3699 = vadd.f32 %v3530, %v3671
        %v3700 = vadd.f32 %v3535, %v3676
        %v3701 = vadd.f32 %v3538, %v3679
        %v3702 = vadd.f32 %v3543, %v3684
        %v3703 = vadd.f32 %v3546, %v3687
        %v3704 = vadd.f32 %v3551, %v3692
        %v3705 = vadd.f32 %v3554, %v3695
        %v3706 = vld [vmem:[%s432 + $0x7] sm:$0xff]
        %v3707 = vld [vmem:[%s432 + $0x1f] sm:$0xff]
        %v3708 = vld [vmem:[%s432 + $0x37] sm:$0xff]
        %v3709 = vld [vmem:[%s432 + $0x4f] sm:$0xff]
        %v3710 = vld [vmem:[%s432 + $0x67] sm:$0xff]
        %v3711 = vld [vmem:[%s432 + $0x7f] sm:$0xff]
        %v3712 = vld [vmem:[%s432 + $0x97] sm:$0xff]
        %v3713 = vld [vmem:[%s432 + $0xaf] sm:$0xff]
        %v3714 = vpack.c.bf16 %v3707, %v3706
        %v3715 = vpack.c.bf16 %v3709, %v3708
        %v3716 = vpack.c.bf16 %v3711, %v3710
        %v3717 = vpack.c.bf16 %v3713, %v3712
        %v3718 = vld [vmem:[%s7 + $0xc0] sm:$0xf]
        %v3719 = vld [vmem:[%s7 + $0xc4] sm:$0xf]
        %v3720 = vld [vmem:[%s7 + $0xc8] sm:$0xf]
        %v3721 = vld [vmem:[%s7 + $0xcc] sm:$0xf]
        %v3722 = vld [vmem:[%s7 + $0xd0] sm:$0xf]
        %v3723 = vld [vmem:[%s7 + $0xd4] sm:$0xf]
        %v3724 = vld [vmem:[%s7 + $0xd8] sm:$0xf]
        %v3725 = vld [vmem:[%s7 + $0xdc] sm:$0xf]
        %v3726 = vld [vmem:[%s7 + $0xe0] sm:$0xf]
        %v3727 = vld [vmem:[%s7 + $0xe4] sm:$0xf]
        %v3728 = vld [vmem:[%s7 + $0xe8] sm:$0xf]
        %v3729 = vld [vmem:[%s7 + $0xec] sm:$0xf]
        %v3730 = vld [vmem:[%s7 + $0xf0] sm:$0xf]
        %v3731 = vld [vmem:[%s7 + $0xf4] sm:$0xf]
        %v3732 = vld [vmem:[%s7 + $0xf8] sm:$0xf]
        %v3733 = vld [vmem:[%s7 + $0xfc] sm:$0xf]
        %v3750 = vunpack.c.l.b16 %v3718
        %v3751 = vunpack.c.l.b16 %v3719
        %v3752 = vunpack.c.l.b16 %v3720
        %v3753 = vunpack.c.l.b16 %v3721
        %v3754 = vunpack.c.l.b16 %v3722
        %v3755 = vunpack.c.l.b16 %v3723
        %v3756 = vunpack.c.l.b16 %v3724
        %v3757 = vunpack.c.l.b16 %v3725
        %v3758 = vunpack.c.l.b16 %v3726
        %v3759 = vunpack.c.l.b16 %v3727
        %v3760 = vunpack.c.l.b16 %v3728
        %v3761 = vunpack.c.l.b16 %v3729
        %v3762 = vunpack.c.l.b16 %v3730
        %v3763 = vunpack.c.l.b16 %v3731
        %v3764 = vunpack.c.l.b16 %v3732
        %v3765 = vunpack.c.l.b16 %v3733
        %v3766 = vpack.c.b16 %v3751, %v3750
        %v3767 = vpack.c.b16 %v3753, %v3752
        %v3768 = vpack.c.b16 %v3755, %v3754
        %v3769 = vpack.c.b16 %v3757, %v3756
        %v3770 = vpack.c.b16 %v3759, %v3758
        %v3771 = vpack.c.b16 %v3761, %v3760
        %v3772 = vpack.c.b16 %v3763, %v3762
        %v3773 = vpack.c.b16 %v3765, %v3764
        %3782 = vmatprep.subr.bf16.mxu0 0
        %3783 = vmatpush1.bf16.msra.mxu0 %v3766
        %3784 = vmatprep.subr.bf16.mxu0 0
        %3785 = vmatpush1.bf16.msra.mxu0 %v3767
        %3786 = vmatprep.subr.bf16.mxu0 0
        %3787 = vmatpush1.bf16.msra.mxu0 %v3768
        %3788 = vmatprep.subr.bf16.mxu0 0
        %3789 = vmatpush1.bf16.msra.mxu0 %v3769
        %3790 = vmatprep.subr.bf16.mxu0 0
        %3791 = vmatpush1.bf16.msra.mxu0 %v3770
        %3792 = vmatprep.subr.bf16.mxu0 0
        %3793 = vmatpush1.bf16.msra.mxu0 %v3771
        %3794 = vmatprep.subr.bf16.mxu0 0
        %3795 = vmatpush1.bf16.msra.mxu0 %v3772
        %3796 = vmatprep.subr.bf16.mxu0 0
        %3797 = vmatpush1.bf16.msra.mxu0 %v3773
        %3798 = vmatprep.subr.bf16.mxu0 0
        %3799 = vmatpush1.bf16.msra.mxu0 0
        %3800 = vmatprep.subr.bf16.mxu0 0
        %3801 = vmatpush1.bf16.msra.mxu0 0
        %3802 = vmatprep.subr.bf16.mxu0 0
        %3803 = vmatpush1.bf16.msra.mxu0 0
        %3804 = vmatprep.subr.bf16.mxu0 0
        %3805 = vmatpush1.bf16.msra.mxu0 0
        %3806 = vmatprep.subr.bf16.mxu0 0
        %3807 = vmatpush1.bf16.msra.mxu0 0
        %3808 = vmatprep.subr.bf16.mxu0 0
        %3809 = vmatpush1.bf16.msra.mxu0 0
        %3810 = vmatprep.subr.bf16.mxu0 0
        %3811 = vmatpush1.bf16.msra.mxu0 0
        %3812 = vmatprep.subr.bf16.mxu0 0
        %3813 = vmatpush1.bf16.msra.mxu0 0
        %3814 = vmatprep.mubr.bf16.mxu0 0
        %3815 = vmatmul.mubr.bf16.gmra.mrb[0].mxu0 %v3714
        %v3816 = vpop.f32.mrb[0].mxu0
        %v3817 = vadd.f32 0.0, %v3816
        %v3818 = vpop.f32.mrb[0].mxu0
        %v3819 = vpop.f32.mrb[0].mxu0
        %v3820 = vadd.f32 0.0, %v3819
        %v3821 = vpop.f32.mrb[0].mxu0
        %3822 = vmatprep.mubr.bf16.mxu0 0
        %3823 = vmatmul.mubr.bf16.gmra.mrb[0].mxu0 %v3715
        %v3824 = vpop.f32.mrb[0].mxu0
        %v3825 = vadd.f32 0.0, %v3824
        %v3826 = vpop.f32.mrb[0].mxu0
        %v3827 = vpop.f32.mrb[0].mxu0
        %v3828 = vadd.f32 0.0, %v3827
        %v3829 = vpop.f32.mrb[0].mxu0
        %3830 = vmatprep.mubr.bf16.mxu0 0
        %3831 = vmatmul.mubr.bf16.gmra.mrb[0].mxu0 %v3716
        %v3832 = vpop.f32.mrb[0].mxu0
        %v3833 = vadd.f32 0.0, %v3832
        %v3834 = vpop.f32.mrb[0].mxu0
        %v3835 = vpop.f32.mrb[0].mxu0
        %v3836 = vadd.f32 0.0, %v3835
        %v3837 = vpop.f32.mrb[0].mxu0
        %3838 = vmatprep.mubr.bf16.mxu0 0
        %3839 = vmatmul.mubr.bf16.gmra.mrb[0].mxu0 %v3717
        %v3840 = vpop.f32.mrb[0].mxu0
        %v3841 = vadd.f32 0.0, %v3840
        %v3842 = vpop.f32.mrb[0].mxu0
        %v3843 = vpop.f32.mrb[0].mxu0
        %v3844 = vadd.f32 0.0, %v3843
        %v3845 = vpop.f32.mrb[0].mxu0
        %3846 = vdwg.mxu0
        %v3847 = vadd.f32 %v3698, %v3817
        %v3848 = vadd.f32 %v3699, %v3820
        %v3849 = vadd.f32 %v3700, %v3825
        %v3850 = vadd.f32 %v3701, %v3828
        %v3851 = vadd.f32 %v3702, %v3833
        %v3852 = vadd.f32 %v3703, %v3836
        %v3853 = vadd.f32 %v3704, %v3841
        %v3854 = vadd.f32 %v3705, %v3844
        %v3855 = vld [vmem:[%s432 + $0x8] sm:$0xff]
        %v3856 = vld [vmem:[%s432 + $0x20] sm:$0xff]
        %v3857 = vld [vmem:[%s432 + $0x38] sm:$0xff]
        %v3858 = vld [vmem:[%s432 + $0x50] sm:$0xff]
        %v3859 = vld [vmem:[%s432 + $0x68] sm:$0xff]
        %v3860 = vld [vmem:[%s432 + $0x80] sm:$0xff]
        %v3861 = vld [vmem:[%s432 + $0x98] sm:$0xff]
        %v3862 = vld [vmem:[%s432 + $0xb0] sm:$0xff]
        %v3863 = vpack.c.bf16 %v3856, %v3855
        %v3864 = vpack.c.bf16 %v3858, %v3857
        %v3865 = vpack.c.bf16 %v3860, %v3859
        %v3866 = vpack.c.bf16 %v3862, %v3861
        %v3867 = vld [vmem:[%s7 + $0x100] sm:$0xf]
        %v3868 = vld [vmem:[%s7 + $0x104] sm:$0xf]
        %v3869 = vld [vmem:[%s7 + $0x108] sm:$0xf]
        %v3870 = vld [vmem:[%s7 + $0x10c] sm:$0xf]
        %v3871 = vld [vmem:[%s7 + $0x110] sm:$0xf]
        %v3872 = vld [vmem:[%s7 + $0x114] sm:$0xf]
        %v3873 = vld [vmem:[%s7 + $0x118] sm:$0xf]
        %v3874 = vld [vmem:[%s7 + $0x11c] sm:$0xf]
        %v3875 = vld [vmem:[%s7 + $0x120] sm:$0xf]
        %v3876 = vld [vmem:[%s7 + $0x124] sm:$0xf]
        %v3877 = vld [vmem:[%s7 + $0x128] sm:$0xf]
        %v3878 = vld [vmem:[%s7 + $0x12c] sm:$0xf]
        %v3879 = vld [vmem:[%s7 + $0x130] sm:$0xf]
        %v3880 = vld [vmem:[%s7 + $0x134] sm:$0xf]
        %v3881 = vld [vmem:[%s7 + $0x138] sm:$0xf]
        %v3882 = vld [vmem:[%s7 + $0x13c] sm:$0xf]
        %v3899 = vunpack.c.l.b16 %v3867
        %v3900 = vunpack.c.l.b16 %v3868
        %v3901 = vunpack.c.l.b16 %v3869
        %v3902 = vunpack.c.l.b16 %v3870
        %v3903 = vunpack.c.l.b16 %v3871
        %v3904 = vunpack.c.l.b16 %v3872
        %v3905 = vunpack.c.l.b16 %v3873
        %v3906 = vunpack.c.l.b16 %v3874
        %v3907 = vunpack.c.l.b16 %v3875
        %v3908 = vunpack.c.l.b16 %v3876
        %v3909 = vunpack.c.l.b16 %v3877
        %v3910 = vunpack.c.l.b16 %v3878
        %v3911 = vunpack.c.l.b16 %v3879
        %v3912 = vunpack.c.l.b16 %v3880
        %v3913 = vunpack.c.l.b16 %v3881
        %v3914 = vunpack.c.l.b16 %v3882
        %v3915 = vpack.c.b16 %v3900, %v3899
        %v3916 = vpack.c.b16 %v3902, %v3901
        %v3917 = vpack.c.b16 %v3904, %v3903
        %v3918 = vpack.c.b16 %v3906, %v3905
        %v3919 = vpack.c.b16 %v3908, %v3907
        %v3920 = vpack.c.b16 %v3910, %v3909
        %v3921 = vpack.c.b16 %v3912, %v3911
        %v3922 = vpack.c.b16 %v3914, %v3913
        %3931 = vmatprep.subr.bf16.mxu0 0
        %3932 = vmatpush1.bf16.msra.mxu0 %v3915
        %3933 = vmatprep.subr.bf16.mxu0 0
        %3934 = vmatpush1.bf16.msra.mxu0 %v3916
        %3935 = vmatprep.subr.bf16.mxu0 0
        %3936 = vmatpush1.bf16.msra.mxu0 %v3917
        %3937 = vmatprep.subr.bf16.mxu0 0
        %3938 = vmatpush1.bf16.msra.mxu0 %v3918
        %3939 = vmatprep.subr.bf16.mxu0 0
        %3940 = vmatpush1.bf16.msra.mxu0 %v3919
        %3941 = vmatprep.subr.bf16.mxu0 0
        %3942 = vmatpush1.bf16.msra.mxu0 %v3920
        %3943 = vmatprep.subr.bf16.mxu0 0
        %3944 = vmatpush1.bf16.msra.mxu0 %v3921
        %3945 = vmatprep.subr.bf16.mxu0 0
        %3946 = vmatpush1.bf16.msra.mxu0 %v3922
        %3947 = vmatprep.subr.bf16.mxu0 0
        %3948 = vmatpush1.bf16.msra.mxu0 0
        %3949 = vmatprep.subr.bf16.mxu0 0
        %3950 = vmatpush1.bf16.msra.mxu0 0
        %3951 = vmatprep.subr.bf16.mxu0 0
        %3952 = vmatpush1.bf16.msra.mxu0 0
        %3953 = vmatprep.subr.bf16.mxu0 0
        %3954 = vmatpush1.bf16.msra.mxu0 0
        %3955 = vmatprep.subr.bf16.mxu0 0
        %3956 = vmatpush1.bf16.msra.mxu0 0
        %3957 = vmatprep.subr.bf16.mxu0 0
        %3958 = vmatpush1.bf16.msra.mxu0 0
        %3959 = vmatprep.subr.bf16.mxu0 0
        %3960 = vmatpush1.bf16.msra.mxu0 0
        %3961 = vmatprep.subr.bf16.mxu0 0
        %3962 = vmatpush1.bf16.msra.mxu0 0
        %3963 = vmatprep.mubr.bf16.mxu0 0
        %3964 = vmatmul.mubr.bf16.gmra.mrb[0].mxu0 %v3863
        %v3965 = vpop.f32.mrb[0].mxu0
        %v3966 = vadd.f32 0.0, %v3965
        %v3967 = vpop.f32.mrb[0].mxu0
        %v3968 = vpop.f32.mrb[0].mxu0
        %v3969 = vadd.f32 0.0, %v3968
        %v3970 = vpop.f32.mrb[0].mxu0
        %3971 = vmatprep.mubr.bf16.mxu0 0
        %3972 = vmatmul.mubr.bf16.gmra.mrb[0].mxu0 %v3864
        %v3973 = vpop.f32.mrb[0].mxu0
        %v3974 = vadd.f32 0.0, %v3973
        %v3975 = vpop.f32.mrb[0].mxu0
        %v3976 = vpop.f32.mrb[0].mxu0
        %v3977 = vadd.f32 0.0, %v3976
        %v3978 = vpop.f32.mrb[0].mxu0
        %3979 = vmatprep.mubr.bf16.mxu0 0
        %3980 = vmatmul.mubr.bf16.gmra.mrb[0].mxu0 %v3865
        %v3981 = vpop.f32.mrb[0].mxu0
        %v3982 = vadd.f32 0.0, %v3981
        %v3983 = vpop.f32.mrb[0].mxu0
        %v3984 = vpop.f32.mrb[0].mxu0
        %v3985 = vadd.f32 0.0, %v3984
        %v3986 = vpop.f32.mrb[0].mxu0
        %3987 = vmatprep.mubr.bf16.mxu0 0
        %3988 = vmatmul.mubr.bf16.gmra.mrb[0].mxu0 %v3866
        %v3989 = vpop.f32.mrb[0].mxu0
        %v3990 = vadd.f32 0.0, %v3989
        %v3991 = vpop.f32.mrb[0].mxu0
        %v3992 = vpop.f32.mrb[0].mxu0
        %v3993 = vadd.f32 0.0, %v3992
        %v3994 = vpop.f32.mrb[0].mxu0
        %3995 = vdwg.mxu0
        %v3996 = vadd.f32 %v3847, %v3966
        %v3997 = vadd.f32 %v3848, %v3969
        %v3998 = vadd.f32 %v3849, %v3974
        %v3999 = vadd.f32 %v3850, %v3977
        %v4000 = vadd.f32 %v3851, %v3982
        %v4001 = vadd.f32 %v3852, %v3985
        %v4002 = vadd.f32 %v3853, %v3990
        %v4003 = vadd.f32 %v3854, %v3993
        %v4004 = vld [vmem:[%s432 + $0x9] sm:$0xff]
        %v4005 = vld [vmem:[%s432 + $0x21] sm:$0xff]
        %v4006 = vld [vmem:[%s432 + $0x39] sm:$0xff]
        %v4007 = vld [vmem:[%s432 + $0x51] sm:$0xff]
        %v4008 = vld [vmem:[%s432 + $0x69] sm:$0xff]
        %v4009 = vld [vmem:[%s432 + $0x81] sm:$0xff]
        %v4010 = vld [vmem:[%s432 + $0x99] sm:$0xff]
        %v4011 = vld [vmem:[%s432 + $0xb1] sm:$0xff]
        %v4012 = vpack.c.bf16 %v4005, %v4004
        %v4013 = vpack.c.bf16 %v4007, %v4006
        %v4014 = vpack.c.bf16 %v4009, %v4008
        %v4015 = vpack.c.bf16 %v4011, %v4010
        %v4016 = vld [vmem:[%s7 + $0x140] sm:$0xf]
        %v4017 = vld [vmem:[%s7 + $0x144] sm:$0xf]
        %v4018 = vld [vmem:[%s7 + $0x148] sm:$0xf]
        %v4019 = vld [vmem:[%s7 + $0x14c] sm:$0xf]
        %v4020 = vld [vmem:[%s7 + $0x150] sm:$0xf]
        %v4021 = vld [vmem:[%s7 + $0x154] sm:$0xf]
        %v4022 = vld [vmem:[%s7 + $0x158] sm:$0xf]
        %v4023 = vld [vmem:[%s7 + $0x15c] sm:$0xf]
        %v4024 = vld [vmem:[%s7 + $0x160] sm:$0xf]
        %v4025 = vld [vmem:[%s7 + $0x164] sm:$0xf]
        %v4026 = vld [vmem:[%s7 + $0x168] sm:$0xf]
        %v4027 = vld [vmem:[%s7 + $0x16c] sm:$0xf]
        %v4028 = vld [vmem:[%s7 + $0x170] sm:$0xf]
        %v4029 = vld [vmem:[%s7 + $0x174] sm:$0xf]
        %v4030 = vld [vmem:[%s7 + $0x178] sm:$0xf]
        %v4031 = vld [vmem:[%s7 + $0x17c] sm:$0xf]
        %v4048 = vunpack.c.l.b16 %v4016
        %v4049 = vunpack.c.l.b16 %v4017
        %v4050 = vunpack.c.l.b16 %v4018
        %v4051 = vunpack.c.l.b16 %v4019
        %v4052 = vunpack.c.l.b16 %v4020
        %v4053 = vunpack.c.l.b16 %v4021
        %v4054 = vunpack.c.l.b16 %v4022
        %v4055 = vunpack.c.l.b16 %v4023
        %v4056 = vunpack.c.l.b16 %v4024
        %v4057 = vunpack.c.l.b16 %v4025
        %v4058 = vunpack.c.l.b16 %v4026
        %v4059 = vunpack.c.l.b16 %v4027
        %v4060 = vunpack.c.l.b16 %v4028
        %v4061 = vunpack.c.l.b16 %v4029
        %v4062 = vunpack.c.l.b16 %v4030
        %v4063 = vunpack.c.l.b16 %v4031
        %v4064 = vpack.c.b16 %v4049, %v4048
        %v4065 = vpack.c.b16 %v4051, %v4050
        %v4066 = vpack.c.b16 %v4053, %v4052
        %v4067 = vpack.c.b16 %v4055, %v4054
        %v4068 = vpack.c.b16 %v4057, %v4056
        %v4069 = vpack.c.b16 %v4059, %v4058
        %v4070 = vpack.c.b16 %v4061, %v4060
        %v4071 = vpack.c.b16 %v4063, %v4062
        %4080 = vmatprep.subr.bf16.mxu0 0
        %4081 = vmatpush1.bf16.msra.mxu0 %v4064
        %4082 = vmatprep.subr.bf16.mxu0 0
        %4083 = vmatpush1.bf16.msra.mxu0 %v4065
        %4084 = vmatprep.subr.bf16.mxu0 0
        %4085 = vmatpush1.bf16.msra.mxu0 %v4066
        %4086 = vmatprep.subr.bf16.mxu0 0
        %4087 = vmatpush1.bf16.msra.mxu0 %v4067
        %4088 = vmatprep.subr.bf16.mxu0 0
        %4089 = vmatpush1.bf16.msra.mxu0 %v4068
        %4090 = vmatprep.subr.bf16.mxu0 0
        %4091 = vmatpush1.bf16.msra.mxu0 %v4069
        %4092 = vmatprep.subr.bf16.mxu0 0
        %4093 = vmatpush1.bf16.msra.mxu0 %v4070
        %4094 = vmatprep.subr.bf16.mxu0 0
        %4095 = vmatpush1.bf16.msra.mxu0 %v4071
        %4096 = vmatprep.subr.bf16.mxu0 0
        %4097 = vmatpush1.bf16.msra.mxu0 0
        %4098 = vmatprep.subr.bf16.mxu0 0
        %4099 = vmatpush1.bf16.msra.mxu0 0
        %4100 = vmatprep.subr.bf16.mxu0 0
        %4101 = vmatpush1.bf16.msra.mxu0 0
        %4102 = vmatprep.subr.bf16.mxu0 0
        %4103 = vmatpush1.bf16.msra.mxu0 0
        %4104 = vmatprep.subr.bf16.mxu0 0
        %4105 = vmatpush1.bf16.msra.mxu0 0
        %4106 = vmatprep.subr.bf16.mxu0 0
        %4107 = vmatpush1.bf16.msra.mxu0 0
        %4108 = vmatprep.subr.bf16.mxu0 0
        %4109 = vmatpush1.bf16.msra.mxu0 0
        %4110 = vmatprep.subr.bf16.mxu0 0
        %4111 = vmatpush1.bf16.msra.mxu0 0
        %4112 = vmatprep.mubr.bf16.mxu0 0
        %4113 = vmatmul.mubr.bf16.gmra.mrb[0].mxu0 %v4012
        %v4114 = vpop.f32.mrb[0].mxu0
        %v4115 = vadd.f32 0.0, %v4114
        %v4116 = vpop.f32.mrb[0].mxu0
        %v4117 = vpop.f32.mrb[0].mxu0
        %v4118 = vadd.f32 0.0, %v4117
        %v4119 = vpop.f32.mrb[0].mxu0
        %4120 = vmatprep.mubr.bf16.mxu0 0
        %4121 = vmatmul.mubr.bf16.gmra.mrb[0].mxu0 %v4013
        %v4122 = vpop.f32.mrb[0].mxu0
        %v4123 = vadd.f32 0.0, %v4122
        %v4124 = vpop.f32.mrb[0].mxu0
        %v4125 = vpop.f32.mrb[0].mxu0
        %v4126 = vadd.f32 0.0, %v4125
        %v4127 = vpop.f32.mrb[0].mxu0
        %4128 = vmatprep.mubr.bf16.mxu0 0
        %4129 = vmatmul.mubr.bf16.gmra.mrb[0].mxu0 %v4014
        %v4130 = vpop.f32.mrb[0].mxu0
        %v4131 = vadd.f32 0.0, %v4130
        %v4132 = vpop.f32.mrb[0].mxu0
        %v4133 = vpop.f32.mrb[0].mxu0
        %v4134 = vadd.f32 0.0, %v4133
        %v4135 = vpop.f32.mrb[0].mxu0
        %4136 = vmatprep.mubr.bf16.mxu0 0
        %4137 = vmatmul.mubr.bf16.gmra.mrb[0].mxu0 %v4015
        %v4138 = vpop.f32.mrb[0].mxu0
        %v4139 = vadd.f32 0.0, %v4138
        %v4140 = vpop.f32.mrb[0].mxu0
        %v4141 = vpop.f32.mrb[0].mxu0
        %v4142 = vadd.f32 0.0, %v4141
        %v4143 = vpop.f32.mrb[0].mxu0
        %4144 = vdwg.mxu0
        %v4145 = vadd.f32 %v3996, %v4115
        %v4146 = vadd.f32 %v3997, %v4118
        %v4147 = vadd.f32 %v3998, %v4123
        %v4148 = vadd.f32 %v3999, %v4126
        %v4149 = vadd.f32 %v4000, %v4131
        %v4150 = vadd.f32 %v4001, %v4134
        %v4151 = vadd.f32 %v4002, %v4139
        %v4152 = vadd.f32 %v4003, %v4142
        %v4153 = vld [vmem:[%s1319 + $0x7] sm:$0xff]
        %v4154 = vld [vmem:[%s1319 + $0x1f] sm:$0xff]
        %v4155 = vld [vmem:[%s1319 + $0x37] sm:$0xff]
        %v4156 = vld [vmem:[%s1319 + $0x4f] sm:$0xff]
        %v4157 = vld [vmem:[%s1319 + $0x67] sm:$0xff]
        %v4158 = vld [vmem:[%s1319 + $0x7f] sm:$0xff]
        %v4159 = vld [vmem:[%s1319 + $0x97] sm:$0xff]
        %v4160 = vld [vmem:[%s1319 + $0xaf] sm:$0xff]
        %v4161 = vpack.c.bf16 %v4154, %v4153
        %v4162 = vpack.c.bf16 %v4156, %v4155
        %v4163 = vpack.c.bf16 %v4158, %v4157
        %v4164 = vpack.c.bf16 %v4160, %v4159
        %v4165 = vld [vmem:[%s7 + $0x180] sm:$0xf]
        %v4166 = vld [vmem:[%s7 + $0x184] sm:$0xf]
        %v4167 = vld [vmem:[%s7 + $0x188] sm:$0xf]
        %v4168 = vld [vmem:[%s7 + $0x18c] sm:$0xf]
        %v4169 = vld [vmem:[%s7 + $0x190] sm:$0xf]
        %v4170 = vld [vmem:[%s7 + $0x194] sm:$0xf]
        %v4171 = vld [vmem:[%s7 + $0x198] sm:$0xf]
        %v4172 = vld [vmem:[%s7 + $0x19c] sm:$0xf]
        %v4173 = vld [vmem:[%s7 + $0x1a0] sm:$0xf]
        %v4174 = vld [vmem:[%s7 + $0x1a4] sm:$0xf]
        %v4175 = vld [vmem:[%s7 + $0x1a8] sm:$0xf]
        %v4176 = vld [vmem:[%s7 + $0x1ac] sm:$0xf]
        %v4177 = vld [vmem:[%s7 + $0x1b0] sm:$0xf]
        %v4178 = vld [vmem:[%s7 + $0x1b4] sm:$0xf]
        %v4179 = vld [vmem:[%s7 + $0x1b8] sm:$0xf]
        %v4180 = vld [vmem:[%s7 + $0x1bc] sm:$0xf]
        %v4197 = vunpack.c.l.b16 %v4165
        %v4198 = vunpack.c.l.b16 %v4166
        %v4199 = vunpack.c.l.b16 %v4167
        %v4200 = vunpack.c.l.b16 %v4168
        %v4201 = vunpack.c.l.b16 %v4169
        %v4202 = vunpack.c.l.b16 %v4170
        %v4203 = vunpack.c.l.b16 %v4171
        %v4204 = vunpack.c.l.b16 %v4172
        %v4205 = vunpack.c.l.b16 %v4173
        %v4206 = vunpack.c.l.b16 %v4174
        %v4207 = vunpack.c.l.b16 %v4175
        %v4208 = vunpack.c.l.b16 %v4176
        %v4209 = vunpack.c.l.b16 %v4177
        %v4210 = vunpack.c.l.b16 %v4178
        %v4211 = vunpack.c.l.b16 %v4179
        %v4212 = vunpack.c.l.b16 %v4180
        %v4213 = vpack.c.b16 %v4198, %v4197
        %v4214 = vpack.c.b16 %v4200, %v4199
        %v4215 = vpack.c.b16 %v4202, %v4201
        %v4216 = vpack.c.b16 %v4204, %v4203
        %v4217 = vpack.c.b16 %v4206, %v4205
        %v4218 = vpack.c.b16 %v4208, %v4207
        %v4219 = vpack.c.b16 %v4210, %v4209
        %v4220 = vpack.c.b16 %v4212, %v4211
        %4229 = vmatprep.subr.bf16.mxu0 0
        %4230 = vmatpush1.bf16.msra.mxu0 %v4213
        %4231 = vmatprep.subr.bf16.mxu0 0
        %4232 = vmatpush1.bf16.msra.mxu0 %v4214
        %4233 = vmatprep.subr.bf16.mxu0 0
        %4234 = vmatpush1.bf16.msra.mxu0 %v4215
        %4235 = vmatprep.subr.bf16.mxu0 0
        %4236 = vmatpush1.bf16.msra.mxu0 %v4216
        %4237 = vmatprep.subr.bf16.mxu0 0
        %4238 = vmatpush1.bf16.msra.mxu0 %v4217
        %4239 = vmatprep.subr.bf16.mxu0 0
        %4240 = vmatpush1.bf16.msra.mxu0 %v4218
        %4241 = vmatprep.subr.bf16.mxu0 0
        %4242 = vmatpush1.bf16.msra.mxu0 %v4219
        %4243 = vmatprep.subr.bf16.mxu0 0
        %4244 = vmatpush1.bf16.msra.mxu0 %v4220
        %4245 = vmatprep.subr.bf16.mxu0 0
        %4246 = vmatpush1.bf16.msra.mxu0 0
        %4247 = vmatprep.subr.bf16.mxu0 0
        %4248 = vmatpush1.bf16.msra.mxu0 0
        %4249 = vmatprep.subr.bf16.mxu0 0
        %4250 = vmatpush1.bf16.msra.mxu0 0
        %4251 = vmatprep.subr.bf16.mxu0 0
        %4252 = vmatpush1.bf16.msra.mxu0 0
        %4253 = vmatprep.subr.bf16.mxu0 0
        %4254 = vmatpush1.bf16.msra.mxu0 0
        %4255 = vmatprep.subr.bf16.mxu0 0
        %4256 = vmatpush1.bf16.msra.mxu0 0
        %4257 = vmatprep.subr.bf16.mxu0 0
        %4258 = vmatpush1.bf16.msra.mxu0 0
        %4259 = vmatprep.subr.bf16.mxu0 0
        %4260 = vmatpush1.bf16.msra.mxu0 0
        %4261 = vmatprep.mubr.bf16.mxu0 0
        %4262 = vmatmul.mubr.bf16.gmra.mrb[0].mxu0 %v4161
        %v4263 = vpop.f32.mrb[0].mxu0
        %v4264 = vadd.f32 0.0, %v4263
        %v4265 = vpop.f32.mrb[0].mxu0
        %v4266 = vpop.f32.mrb[0].mxu0
        %v4267 = vadd.f32 0.0, %v4266
        %v4268 = vpop.f32.mrb[0].mxu0
        %4269 = vmatprep.mubr.bf16.mxu0 0
        %4270 = vmatmul.mubr.bf16.gmra.mrb[0].mxu0 %v4162
        %v4271 = vpop.f32.mrb[0].mxu0
        %v4272 = vadd.f32 0.0, %v4271
        %v4273 = vpop.f32.mrb[0].mxu0
        %v4274 = vpop.f32.mrb[0].mxu0
        %v4275 = vadd.f32 0.0, %v4274
        %v4276 = vpop.f32.mrb[0].mxu0
        %4277 = vmatprep.mubr.bf16.mxu0 0
        %4278 = vmatmul.mubr.bf16.gmra.mrb[0].mxu0 %v4163
        %v4279 = vpop.f32.mrb[0].mxu0
        %v4280 = vadd.f32 0.0, %v4279
        %v4281 = vpop.f32.mrb[0].mxu0
        %v4282 = vpop.f32.mrb[0].mxu0
        %v4283 = vadd.f32 0.0, %v4282
        %v4284 = vpop.f32.mrb[0].mxu0
        %4285 = vmatprep.mubr.bf16.mxu0 0
        %4286 = vmatmul.mubr.bf16.gmra.mrb[0].mxu0 %v4164
        %v4287 = vpop.f32.mrb[0].mxu0
        %v4288 = vadd.f32 0.0, %v4287
        %v4289 = vpop.f32.mrb[0].mxu0
        %v4290 = vpop.f32.mrb[0].mxu0
        %v4291 = vadd.f32 0.0, %v4290
        %v4292 = vpop.f32.mrb[0].mxu0
        %4293 = vdwg.mxu0
        %v4294 = vadd.f32 %v4145, %v4264
        %v4295 = vadd.f32 %v4146, %v4267
        %v4296 = vadd.f32 %v4147, %v4272
        %v4297 = vadd.f32 %v4148, %v4275
        %v4298 = vadd.f32 %v4149, %v4280
        %v4299 = vadd.f32 %v4150, %v4283
        %v4300 = vadd.f32 %v4151, %v4288
        %v4301 = vadd.f32 %v4152, %v4291
        %v4302 = vld [vmem:[%s1319 + $0x8] sm:$0xff]
        %v4303 = vld [vmem:[%s1319 + $0x20] sm:$0xff]
        %v4304 = vld [vmem:[%s1319 + $0x38] sm:$0xff]
        %v4305 = vld [vmem:[%s1319 + $0x50] sm:$0xff]
        %v4306 = vld [vmem:[%s1319 + $0x68] sm:$0xff]
        %v4307 = vld [vmem:[%s1319 + $0x80] sm:$0xff]
        %v4308 = vld [vmem:[%s1319 + $0x98] sm:$0xff]
        %v4309 = vld [vmem:[%s1319 + $0xb0] sm:$0xff]
        %v4310 = vpack.c.bf16 %v4303, %v4302
        %v4311 = vpack.c.bf16 %v4305, %v4304
        %v4312 = vpack.c.bf16 %v4307, %v4306
        %v4313 = vpack.c.bf16 %v4309, %v4308
        %v4314 = vld [vmem:[%s7 + $0x1c0] sm:$0xf]
        %v4315 = vld [vmem:[%s7 + $0x1c4] sm:$0xf]
        %v4316 = vld [vmem:[%s7 + $0x1c8] sm:$0xf]
        %v4317 = vld [vmem:[%s7 + $0x1cc] sm:$0xf]
        %v4318 = vld [vmem:[%s7 + $0x1d0] sm:$0xf]
        %v4319 = vld [vmem:[%s7 + $0x1d4] sm:$0xf]
        %v4320 = vld [vmem:[%s7 + $0x1d8] sm:$0xf]
        %v4321 = vld [vmem:[%s7 + $0x1dc] sm:$0xf]
        %v4322 = vld [vmem:[%s7 + $0x1e0] sm:$0xf]
        %v4323 = vld [vmem:[%s7 + $0x1e4] sm:$0xf]
        %v4324 = vld [vmem:[%s7 + $0x1e8] sm:$0xf]
        %v4325 = vld [vmem:[%s7 + $0x1ec] sm:$0xf]
        %v4326 = vld [vmem:[%s7 + $0x1f0] sm:$0xf]
        %v4327 = vld [vmem:[%s7 + $0x1f4] sm:$0xf]
        %v4328 = vld [vmem:[%s7 + $0x1f8] sm:$0xf]
        %v4329 = vld [vmem:[%s7 + $0x1fc] sm:$0xf]
        %v4346 = vunpack.c.l.b16 %v4314
        %v4347 = vunpack.c.l.b16 %v4315
        %v4348 = vunpack.c.l.b16 %v4316
        %v4349 = vunpack.c.l.b16 %v4317
        %v4350 = vunpack.c.l.b16 %v4318
        %v4351 = vunpack.c.l.b16 %v4319
        %v4352 = vunpack.c.l.b16 %v4320
        %v4353 = vunpack.c.l.b16 %v4321
        %v4354 = vunpack.c.l.b16 %v4322
        %v4355 = vunpack.c.l.b16 %v4323
        %v4356 = vunpack.c.l.b16 %v4324
        %v4357 = vunpack.c.l.b16 %v4325
        %v4358 = vunpack.c.l.b16 %v4326
        %v4359 = vunpack.c.l.b16 %v4327
        %v4360 = vunpack.c.l.b16 %v4328
        %v4361 = vunpack.c.l.b16 %v4329
        %v4362 = vpack.c.b16 %v4347, %v4346
        %v4363 = vpack.c.b16 %v4349, %v4348
        %v4364 = vpack.c.b16 %v4351, %v4350
        %v4365 = vpack.c.b16 %v4353, %v4352
        %v4366 = vpack.c.b16 %v4355, %v4354
        %v4367 = vpack.c.b16 %v4357, %v4356
        %v4368 = vpack.c.b16 %v4359, %v4358
        %v4369 = vpack.c.b16 %v4361, %v4360
        %4378 = vmatprep.subr.bf16.mxu0 0
        %4379 = vmatpush1.bf16.msra.mxu0 %v4362
        %4380 = vmatprep.subr.bf16.mxu0 0
        %4381 = vmatpush1.bf16.msra.mxu0 %v4363
        %4382 = vmatprep.subr.bf16.mxu0 0
        %4383 = vmatpush1.bf16.msra.mxu0 %v4364
        %4384 = vmatprep.subr.bf16.mxu0 0
        %4385 = vmatpush1.bf16.msra.mxu0 %v4365
        %4386 = vmatprep.subr.bf16.mxu0 0
        %4387 = vmatpush1.bf16.msra.mxu0 %v4366
        %4388 = vmatprep.subr.bf16.mxu0 0
        %4389 = vmatpush1.bf16.msra.mxu0 %v4367
        %4390 = vmatprep.subr.bf16.mxu0 0
        %4391 = vmatpush1.bf16.msra.mxu0 %v4368
        %4392 = vmatprep.subr.bf16.mxu0 0
        %4393 = vmatpush1.bf16.msra.mxu0 %v4369
        %4394 = vmatprep.subr.bf16.mxu0 0
        %4395 = vmatpush1.bf16.msra.mxu0 0
        %4396 = vmatprep.subr.bf16.mxu0 0
        %4397 = vmatpush1.bf16.msra.mxu0 0
        %4398 = vmatprep.subr.bf16.mxu0 0
        %4399 = vmatpush1.bf16.msra.mxu0 0
        %4400 = vmatprep.subr.bf16.mxu0 0
        %4401 = vmatpush1.bf16.msra.mxu0 0
        %4402 = vmatprep.subr.bf16.mxu0 0
        %4403 = vmatpush1.bf16.msra.mxu0 0
        %4404 = vmatprep.subr.bf16.mxu0 0
        %4405 = vmatpush1.bf16.msra.mxu0 0
        %4406 = vmatprep.subr.bf16.mxu0 0
        %4407 = vmatpush1.bf16.msra.mxu0 0
        %4408 = vmatprep.subr.bf16.mxu0 0
        %4409 = vmatpush1.bf16.msra.mxu0 0
        %4410 = vmatprep.mubr.bf16.mxu0 0
        %4411 = vmatmul.mubr.bf16.gmra.mrb[0].mxu0 %v4310
        %v4412 = vpop.f32.mrb[0].mxu0
        %v4413 = vadd.f32 0.0, %v4412
        %v4414 = vpop.f32.mrb[0].mxu0
        %v4415 = vpop.f32.mrb[0].mxu0
        %v4416 = vadd.f32 0.0, %v4415
        %v4417 = vpop.f32.mrb[0].mxu0
        %4418 = vmatprep.mubr.bf16.mxu0 0
        %4419 = vmatmul.mubr.bf16.gmra.mrb[0].mxu0 %v4311
        %v4420 = vpop.f32.mrb[0].mxu0
        %v4421 = vadd.f32 0.0, %v4420
        %v4422 = vpop.f32.mrb[0].mxu0
        %v4423 = vpop.f32.mrb[0].mxu0
        %v4424 = vadd.f32 0.0, %v4423
        %v4425 = vpop.f32.mrb[0].mxu0
        %4426 = vmatprep.mubr.bf16.mxu0 0
        %4427 = vmatmul.mubr.bf16.gmra.mrb[0].mxu0 %v4312
        %v4428 = vpop.f32.mrb[0].mxu0
        %v4429 = vadd.f32 0.0, %v4428
        %v4430 = vpop.f32.mrb[0].mxu0
        %v4431 = vpop.f32.mrb[0].mxu0
        %v4432 = vadd.f32 0.0, %v4431
        %v4433 = vpop.f32.mrb[0].mxu0
        %4434 = vmatprep.mubr.bf16.mxu0 0
        %4435 = vmatmul.mubr.bf16.gmra.mrb[0].mxu0 %v4313
        %v4436 = vpop.f32.mrb[0].mxu0
        %v4437 = vadd.f32 0.0, %v4436
        %v4438 = vpop.f32.mrb[0].mxu0
        %v4439 = vpop.f32.mrb[0].mxu0
        %v4440 = vadd.f32 0.0, %v4439
        %v4441 = vpop.f32.mrb[0].mxu0
        %4442 = vdwg.mxu0
        %v4443 = vadd.f32 %v4294, %v4413
        %v4444 = vadd.f32 %v4295, %v4416
        %v4445 = vadd.f32 %v4296, %v4421
        %v4446 = vadd.f32 %v4297, %v4424
        %v4447 = vadd.f32 %v4298, %v4429
        %v4448 = vadd.f32 %v4299, %v4432
        %v4449 = vadd.f32 %v4300, %v4437
        %v4450 = vadd.f32 %v4301, %v4440
        %v4451 = vld [vmem:[%s1319 + $0x9] sm:$0xff]
        %v4452 = vld [vmem:[%s1319 + $0x21] sm:$0xff]
        %v4453 = vld [vmem:[%s1319 + $0x39] sm:$0xff]
        %v4454 = vld [vmem:[%s1319 + $0x51] sm:$0xff]
        %v4455 = vld [vmem:[%s1319 + $0x69] sm:$0xff]
        %v4456 = vld [vmem:[%s1319 + $0x81] sm:$0xff]
        %v4457 = vld [vmem:[%s1319 + $0x99] sm:$0xff]
        %v4458 = vld [vmem:[%s1319 + $0xb1] sm:$0xff]
        %v4459 = vpack.c.bf16 %v4452, %v4451
        %v4460 = vpack.c.bf16 %v4454, %v4453
        %v4461 = vpack.c.bf16 %v4456, %v4455
        %v4462 = vpack.c.bf16 %v4458, %v4457
        %v4463 = vld [vmem:[%s7 + $0x200] sm:$0xf]
        %v4464 = vld [vmem:[%s7 + $0x204] sm:$0xf]
        %v4465 = vld [vmem:[%s7 + $0x208] sm:$0xf]
        %v4466 = vld [vmem:[%s7 + $0x20c] sm:$0xf]
        %v4467 = vld [vmem:[%s7 + $0x210] sm:$0xf]
        %v4468 = vld [vmem:[%s7 + $0x214] sm:$0xf]
        %v4469 = vld [vmem:[%s7 + $0x218] sm:$0xf]
        %v4470 = vld [vmem:[%s7 + $0x21c] sm:$0xf]
        %v4471 = vld [vmem:[%s7 + $0x220] sm:$0xf]
        %v4472 = vld [vmem:[%s7 + $0x224] sm:$0xf]
        %v4473 = vld [vmem:[%s7 + $0x228] sm:$0xf]
        %v4474 = vld [vmem:[%s7 + $0x22c] sm:$0xf]
        %v4475 = vld [vmem:[%s7 + $0x230] sm:$0xf]
        %v4476 = vld [vmem:[%s7 + $0x234] sm:$0xf]
        %v4477 = vld [vmem:[%s7 + $0x238] sm:$0xf]
        %v4478 = vld [vmem:[%s7 + $0x23c] sm:$0xf]
        %v4495 = vunpack.c.l.b16 %v4463
        %v4496 = vunpack.c.l.b16 %v4464
        %v4497 = vunpack.c.l.b16 %v4465
        %v4498 = vunpack.c.l.b16 %v4466
        %v4499 = vunpack.c.l.b16 %v4467
        %v4500 = vunpack.c.l.b16 %v4468
        %v4501 = vunpack.c.l.b16 %v4469
        %v4502 = vunpack.c.l.b16 %v4470
        %v4503 = vunpack.c.l.b16 %v4471
        %v4504 = vunpack.c.l.b16 %v4472
        %v4505 = vunpack.c.l.b16 %v4473
        %v4506 = vunpack.c.l.b16 %v4474
        %v4507 = vunpack.c.l.b16 %v4475
        %v4508 = vunpack.c.l.b16 %v4476
        %v4509 = vunpack.c.l.b16 %v4477
        %v4510 = vunpack.c.l.b16 %v4478
        %v4511 = vpack.c.b16 %v4496, %v4495
        %v4512 = vpack.c.b16 %v4498, %v4497
        %v4513 = vpack.c.b16 %v4500, %v4499
        %v4514 = vpack.c.b16 %v4502, %v4501
        %v4515 = vpack.c.b16 %v4504, %v4503
        %v4516 = vpack.c.b16 %v4506, %v4505
        %v4517 = vpack.c.b16 %v4508, %v4507
        %v4518 = vpack.c.b16 %v4510, %v4509
        %4527 = vmatprep.subr.bf16.mxu0 0
        %4528 = vmatpush1.bf16.msra.mxu0 %v4511
        %4529 = vmatprep.subr.bf16.mxu0 0
        %4530 = vmatpush1.bf16.msra.mxu0 %v4512
        %4531 = vmatprep.subr.bf16.mxu0 0
        %4532 = vmatpush1.bf16.msra.mxu0 %v4513
        %4533 = vmatprep.subr.bf16.mxu0 0
        %4534 = vmatpush1.bf16.msra.mxu0 %v4514
        %4535 = vmatprep.subr.bf16.mxu0 0
        %4536 = vmatpush1.bf16.msra.mxu0 %v4515
        %4537 = vmatprep.subr.bf16.mxu0 0
        %4538 = vmatpush1.bf16.msra.mxu0 %v4516
        %4539 = vmatprep.subr.bf16.mxu0 0
        %4540 = vmatpush1.bf16.msra.mxu0 %v4517
        %4541 = vmatprep.subr.bf16.mxu0 0
        %4542 = vmatpush1.bf16.msra.mxu0 %v4518
        %4543 = vmatprep.subr.bf16.mxu0 0
        %4544 = vmatpush1.bf16.msra.mxu0 0
        %4545 = vmatprep.subr.bf16.mxu0 0
        %4546 = vmatpush1.bf16.msra.mxu0 0
        %4547 = vmatprep.subr.bf16.mxu0 0
        %4548 = vmatpush1.bf16.msra.mxu0 0
        %4549 = vmatprep.subr.bf16.mxu0 0
        %4550 = vmatpush1.bf16.msra.mxu0 0
        %4551 = vmatprep.subr.bf16.mxu0 0
        %4552 = vmatpush1.bf16.msra.mxu0 0
        %4553 = vmatprep.subr.bf16.mxu0 0
        %4554 = vmatpush1.bf16.msra.mxu0 0
        %4555 = vmatprep.subr.bf16.mxu0 0
        %4556 = vmatpush1.bf16.msra.mxu0 0
        %4557 = vmatprep.subr.bf16.mxu0 0
        %4558 = vmatpush1.bf16.msra.mxu0 0
        %4559 = vmatprep.mubr.bf16.mxu0 0
        %4560 = vmatmul.mubr.bf16.gmra.mrb[0].mxu0 %v4459
        %v4561 = vpop.f32.mrb[0].mxu0
        %v4562 = vadd.f32 0.0, %v4561
        %v4563 = vpop.f32.mrb[0].mxu0
        %v4564 = vpop.f32.mrb[0].mxu0
        %v4565 = vadd.f32 0.0, %v4564
        %v4566 = vpop.f32.mrb[0].mxu0
        %4567 = vmatprep.mubr.bf16.mxu0 0
        %4568 = vmatmul.mubr.bf16.gmra.mrb[0].mxu0 %v4460
        %v4569 = vpop.f32.mrb[0].mxu0
        %v4570 = vadd.f32 0.0, %v4569
        %v4571 = vpop.f32.mrb[0].mxu0
        %v4572 = vpop.f32.mrb[0].mxu0
        %v4573 = vadd.f32 0.0, %v4572
        %v4574 = vpop.f32.mrb[0].mxu0
        %4575 = vmatprep.mubr.bf16.mxu0 0
        %4576 = vmatmul.mubr.bf16.gmra.mrb[0].mxu0 %v4461
        %v4577 = vpop.f32.mrb[0].mxu0
        %v4578 = vadd.f32 0.0, %v4577
        %v4579 = vpop.f32.mrb[0].mxu0
        %v4580 = vpop.f32.mrb[0].mxu0
        %v4581 = vadd.f32 0.0, %v4580
        %v4582 = vpop.f32.mrb[0].mxu0
        %4583 = vmatprep.mubr.bf16.mxu0 0
        %4584 = vmatmul.mubr.bf16.gmra.mrb[0].mxu0 %v4462
        %v4585 = vpop.f32.mrb[0].mxu0
        %v4586 = vadd.f32 0.0, %v4585
        %v4587 = vpop.f32.mrb[0].mxu0
        %v4588 = vpop.f32.mrb[0].mxu0
        %v4589 = vadd.f32 0.0, %v4588
        %v4590 = vpop.f32.mrb[0].mxu0
        %4591 = vdwg.mxu0
        %v4592 = vadd.f32 %v4443, %v4562
        %v4593 = vadd.f32 %v4444, %v4565
        %v4594 = vadd.f32 %v4445, %v4570
        %v4595 = vadd.f32 %v4446, %v4573
        %v4596 = vadd.f32 %v4447, %v4578
        %v4597 = vadd.f32 %v4448, %v4581
        %v4598 = vadd.f32 %v4449, %v4586
        %v4599 = vadd.f32 %v4450, %v4589
        %v4600 = vld [vmem:[%s8] sm:$0x1]
        %v4602 = vlaneseq
        %v4603 = vshrl.u32 %v4602, 7
        %v4604 = vsub.s32 0, %v4603
        %v4605 = vrot.slane %v4600, %v4604
        %v4607 = vadd.f32 %v4592, %v4605
        %v4608 = vadd.f32 %v4593, %v4605
        %v4609 = vadd.f32 %v4594, %v4605
        %v4610 = vadd.f32 %v4595, %v4605
        %v4611 = vadd.f32 %v4596, %v4605
        %v4612 = vadd.f32 %v4597, %v4605
        %v4613 = vadd.f32 %v4598, %v4605
        %v4614 = vadd.f32 %v4599, %v4605
        %v4615 = vmax.f32 %v4607, 0.0
        %v4616 = vmax.f32 %v4608, 0.0
        %v4617 = vmax.f32 %v4609, 0.0
        %v4618 = vmax.f32 %v4610, 0.0
        %v4619 = vmax.f32 %v4611, 0.0
        %v4620 = vmax.f32 %v4612, 0.0
        %v4621 = vmax.f32 %v4613, 0.0
        %v4622 = vmax.f32 %v4614, 0.0
        %v4623 = vpack.c.bf16 %v4616, %v4615
        %v4624 = vpack.c.bf16 %v4618, %v4617
        %v4625 = vpack.c.bf16 %v4620, %v4619
        %v4626 = vpack.c.bf16 %v4622, %v4621
        %v4627 = vld [vmem:[%s9] sm:$0xf]
        %v4628 = vld [vmem:[%s9 + $0x4] sm:$0xf]
        %v4629 = vld [vmem:[%s9 + $0x8] sm:$0xf]
        %v4630 = vld [vmem:[%s9 + $0xc] sm:$0xf]
        %v4631 = vld [vmem:[%s10] sm:$0x1]
        %v4633 = vlaneseq
        %v4634 = vshrl.u32 %v4633, 7
        %v4635 = vsub.s32 0, %v4634
        %v4636 = vrot.slane %v4631, %v4635
        %v4642 = vunpack.c.l.b16 %v4627
        %v4643 = vunpack.c.l.b16 %v4628
        %v4644 = vunpack.c.l.b16 %v4629
        %v4645 = vunpack.c.l.b16 %v4630
        %v4646 = vpack.c.b16 %v4643, %v4642
        %v4647 = vpack.c.b16 %v4645, %v4644
        %v4651 = vsel %vm3173, %v4623, 0
        %v4654 = vsel %vm3173, %v4624, 0
        %v4657 = vsel %vm3173, %v4625, 0
        %v4660 = vsel %vm3173, %v4626, 0
        %4662 = vmatprep.subr.bf16.mxu0 0
        %4663 = vmatpush1.bf16.msra.mxu0 %v4646
        %4664 = vmatprep.subr.bf16.mxu0 0
        %4665 = vmatpush1.bf16.msra.mxu0 %v4647
        %4666 = vmatprep.subr.bf16.mxu0 0
        %4667 = vmatpush1.bf16.msra.mxu0 0
        %4668 = vmatprep.subr.bf16.mxu0 0
        %4669 = vmatpush1.bf16.msra.mxu0 0
        %4670 = vmatprep.subr.bf16.mxu0 0
        %4671 = vmatpush1.bf16.msra.mxu0 0
        %4672 = vmatprep.subr.bf16.mxu0 0
        %4673 = vmatpush1.bf16.msra.mxu0 0
        %4674 = vmatprep.subr.bf16.mxu0 0
        %4675 = vmatpush1.bf16.msra.mxu0 0
        %4676 = vmatprep.subr.bf16.mxu0 0
        %4677 = vmatpush1.bf16.msra.mxu0 0
        %4678 = vmatprep.subr.bf16.mxu0 0
        %4679 = vmatpush1.bf16.msra.mxu0 0
        %4680 = vmatprep.subr.bf16.mxu0 0
        %4681 = vmatpush1.bf16.msra.mxu0 0
        %4682 = vmatprep.subr.bf16.mxu0 0
        %4683 = vmatpush1.bf16.msra.mxu0 0
        %4684 = vmatprep.subr.bf16.mxu0 0
        %4685 = vmatpush1.bf16.msra.mxu0 0
        %4686 = vmatprep.subr.bf16.mxu0 0
        %4687 = vmatpush1.bf16.msra.mxu0 0
        %4688 = vmatprep.subr.bf16.mxu0 0
        %4689 = vmatpush1.bf16.msra.mxu0 0
        %4690 = vmatprep.subr.bf16.mxu0 0
        %4691 = vmatpush1.bf16.msra.mxu0 0
        %4692 = vmatprep.subr.bf16.mxu0 0
        %4693 = vmatpush1.bf16.msra.mxu0 0
        %4694 = vmatprep.mubr.bf16.mxu0 0
        %4695 = vmatmul.mubr.bf16.gmra.mrb[0].mxu0 %v4651
        %v4696 = vpop.f32.mrb[0].mxu0
        %v4697 = vadd.f32 %v4636, %v4696
        %v4698 = vpop.f32.mrb[0].mxu0
        %v4699 = vpop.f32.mrb[0].mxu0
        %v4700 = vadd.f32 %v4636, %v4699
        %v4701 = vpop.f32.mrb[0].mxu0
        %4702 = vmatprep.mubr.bf16.mxu0 0
        %4703 = vmatmul.mubr.bf16.gmra.mrb[0].mxu0 %v4654
        %v4704 = vpop.f32.mrb[0].mxu0
        %v4705 = vadd.f32 %v4636, %v4704
        %v4706 = vpop.f32.mrb[0].mxu0
        %v4707 = vpop.f32.mrb[0].mxu0
        %v4708 = vadd.f32 %v4636, %v4707
        %v4709 = vpop.f32.mrb[0].mxu0
        %4710 = vmatprep.mubr.bf16.mxu0 0
        %4711 = vmatmul.mubr.bf16.gmra.mrb[0].mxu0 %v4657
        %v4712 = vpop.f32.mrb[0].mxu0
        %v4713 = vadd.f32 %v4636, %v4712
        %v4714 = vpop.f32.mrb[0].mxu0
        %v4715 = vpop.f32.mrb[0].mxu0
        %v4716 = vadd.f32 %v4636, %v4715
        %v4717 = vpop.f32.mrb[0].mxu0
        %4718 = vmatprep.mubr.bf16.mxu0 0
        %4719 = vmatmul.mubr.bf16.gmra.mrb[0].mxu0 %v4660
        %v4720 = vpop.f32.mrb[0].mxu0
        %v4721 = vadd.f32 %v4636, %v4720
        %v4722 = vpop.f32.mrb[0].mxu0
        %v4723 = vpop.f32.mrb[0].mxu0
        %v4724 = vadd.f32 %v4636, %v4723
        %v4725 = vpop.f32.mrb[0].mxu0
        %4726 = vdwg.mxu0
        %v4727 = vadd.f32 %v4697, %v3259
        %v4728 = vadd.f32 %v4700, %v3260
        %v4729 = vadd.f32 %v4705, %v3261
        %v4730 = vadd.f32 %v4708, %v3262
        %v4731 = vadd.f32 %v4713, %v3263
        %v4732 = vadd.f32 %v4716, %v3264
        %v4733 = vadd.f32 %v4721, %v3265
        %v4734 = vadd.f32 %v4724, %v3266
        %v4735 = vmax.f32 %v4727, 0.0
        %v4736 = vmax.f32 %v4728, 0.0
        %v4737 = vmax.f32 %v4729, 0.0
        %v4738 = vmax.f32 %v4730, 0.0
        %v4739 = vmax.f32 %v4731, 0.0
        %v4740 = vmax.f32 %v4732, 0.0
        %v4741 = vmax.f32 %v4733, 0.0
        %v4742 = vmax.f32 %v4734, 0.0
        %4743 = vst [vmem:[%s379] sm:$0xff] %v4735
        %4744 = vst [vmem:[%s379 + $0x8] sm:$0xff] %v4736
        %4745 = vst [vmem:[%s379 + $0x10] sm:$0xff] %v4737
        %4746 = vst [vmem:[%s379 + $0x18] sm:$0xff] %v4738
        %4747 = vst [vmem:[%s379 + $0x20] sm:$0xff] %v4739
        %4748 = vst [vmem:[%s379 + $0x28] sm:$0xff] %v4740
        %4749 = vst [vmem:[%s379 + $0x30] sm:$0xff] %v4741
        %4750 = vst [vmem:[%s379 + $0x38] sm:$0xff] %v4742
        %s4751 = sand.u32 %s269, 1
        %s4752 = scalar_lea.sflag [#allocation4], %s4751
        %s4753 = sand.u32 %s269, 1
        %s4754 = smul.addr %s4753, 64
        %s4755 = scalar_lea.vmem [#allocation3], %s4754
        // Predicated region
        $region65: #{deepmind_encoder_forward.5} parent=63 // pred_check
          %p4756 = pneg %p279
        $region66: #{deepmind_encoder_forward.5} parent=63 // pred_check_branch
          %4758 = sbr.rel (%p4756) target = $region68
        $region67: #{deepmind_encoder_forward.5} parent=63 // pred_region
          %s4760 = ssub.s32 1024, 1024
          %4761 = vsyncadd %s4752, %s4760
          %s4762 = smul.addr %s25, 8
          %s4763 = smul.addr %s4762, 128
          %s4764 = scalar_lea.hbm %s11, %s4763
          %s4765 = sshll.u32 %s4755, 4
          %s4766 = int_to_ptr.vmem [resolvable:$true] %s4765
          %4771 = dma.vmem_to_hbm [thread:$0]  %s4766, 1024, %s4764, %s4752, 128, 128, 8
        $region68: #{deepmind_encoder_forward.5} parent=63 // pred_fallthru
          _
      $region64: #{deepmind_encoder_forward.5} parent=5 // pred_fallthru
        _
      %p4772 = scmp.le.s32.totalorder 2, %s20
      // Predicated region
      $region69: #{deepmind_encoder_forward.5} parent=5 // pred_check
        %p4773 = pneg %p4772
      $region70: #{deepmind_encoder_forward.5} parent=5 // pred_check_branch
        %4775 = sbr.rel (%p4773) target = $region72
      $region71: #{deepmind_encoder_forward.5} parent=5 // pred_region
        %s4776 = ssub.s32 %s20, 2
        // Predicated region
        $region73: #{deepmind_encoder_forward.5} parent=71 // pred_check
          %p4777 = pneg %p285
        $region74: #{deepmind_encoder_forward.5} parent=71 // pred_check_branch
          %4779 = sbr.rel (%p4777) target = $region76
        $region75: #{deepmind_encoder_forward.5} parent=71 // pred_region
          %s4780 = sand.u32 %s270, 1
          %s4781 = scalar_lea.sflag [#allocation4], %s4780
          %s4782 = sand.u32 %s270, 1
          %s4783 = smul.addr %s4782, 64
          %s4784 = scalar_lea.vmem [#allocation3], %s4783
          %4785 = dma.done %s4781, 1024
        $region76: #{deepmind_encoder_forward.5} parent=71 // pred_fallthru
          _
      $region72: #{deepmind_encoder_forward.5} parent=5 // pred_fallthru
        _
    $region6: #{deepmind_encoder_forward.5} parent=1 // loop_footer
      %s24 = sadd.s32 1, %s20
    $region7: #{deepmind_encoder_forward.5} parent=1 // loop_footer_branch
      %19 = sbr.rel target = $region3
    $region8: #{deepmind_encoder_forward.5} parent=1 // loop_exit
      _
    %4786 = vsyncpa [#allocation4], 1
    %s4787 = scalar_lea.sflag [#allocation4], 1
    %4788 = vsyncpa %s4787, 1

</llo_original>
